<compile_context>
chip_gen: v6e
topology: v6e:2x2x1
jax: 0.10.0
libtpu: 0.0.40
codegen_flags: <defaults>
</compile_context>

<pallas_src>
import math
import functools

import jax
import jax.numpy as jnp
from jax import lax
from jax.experimental import pallas as pl
from jax.experimental.pallas import tpu as pltpu

# ---------------- config (small, TPU-tile-friendly) ----------------
D_MODEL = 128
D_FF = 256
NUM_HEADS = 4
D_K = D_MODEL // NUM_HEADS
NUM_ENC_LAYERS = 2
NUM_DEC_LAYERS = 2
VOCAB_SIZE = 512
MAX_LEN = 64
LN_EPS = 1e-5


# ---------------- in-kernel helpers ----------------
def _layer_norm(z, g, b):
    # PyTorch LayerNorm semantics: biased variance, eps=1e-5; stats in f32.
    mean = jnp.mean(z, axis=-1, keepdims=True)
    var = jnp.mean(jnp.square(z - mean), axis=-1, keepdims=True)
    return (z - mean) * lax.rsqrt(var + LN_EPS) * g + b


def _attention_core(q, k, v, wo_ref, bo_ref, batch, s_q, s_kv):
    """Per-head attention (batched over batch with einsum) + single concat-heads out-proj.

    q: (B*s_q, D) f32 (1/sqrt(dk) already folded into the Q projection at pack time),
    k, v: (B*s_kv, D) f32.  Per-head lane slices are static; softmax stats stay f32.
    """
    # TODO(synk): mask (masked_fill) path not implemented; reference forward passes mask=None.
    ctx_heads = []
    for h in range(NUM_HEADS):
        lo, hi = h * D_K, (h + 1) * D_K
        qh = q[:, lo:hi].reshape(batch, s_q, D_K).astype(jnp.bfloat16)
        kh = k[:, lo:hi].reshape(batch, s_kv, D_K).astype(jnp.bfloat16)
        vh = v[:, lo:hi].reshape(batch, s_kv, D_K).astype(jnp.bfloat16)
        s = jnp.einsum('bqd,bkd->bqk', qh, kh,
                       preferred_element_type=jnp.float32)          # (B, s_q, s_kv)
        m = jnp.max(s, axis=-1, keepdims=True)
        p = jnp.exp(s - m)
        p = p * pl.reciprocal(jnp.sum(p, axis=-1, keepdims=True), approx=True)
        ctx = jnp.einsum('bqk,bkd->bqd', p.astype(jnp.bfloat16), vh,
                         preferred_element_type=jnp.float32)        # (B, s_q, dk)
        ctx_heads.append(ctx.reshape(batch * s_q, D_K))
    ctx_all = jnp.concatenate(ctx_heads, axis=-1)                   # (M, D) lane-concat heads
    return jnp.dot(ctx_all.astype(jnp.bfloat16), wo_ref[...],
                   preferred_element_type=jnp.float32) + bo_ref[...]


def _self_mha(x, wqkv_ref, bqkv_ref, wo_ref, bo_ref, batch, seq):
    # One fused (M,128)x(128,384) projection instead of 12 N=32 matmuls.
    qkv = jnp.dot(x.astype(jnp.bfloat16), wqkv_ref[...],
                  preferred_element_type=jnp.float32) + bqkv_ref[...]
    q = qkv[:, :D_MODEL]
    k = qkv[:, D_MODEL:2 * D_MODEL]
    v = qkv[:, 2 * D_MODEL:]
    return _attention_core(q, k, v, wo_ref, bo_ref, batch, seq, seq)


def _cross_mha(x_q, x_kv, wq_ref, bq_ref, wkv_ref, bkv_ref, wo_ref, bo_ref,
               batch, s_q, s_kv):
    q = jnp.dot(x_q.astype(jnp.bfloat16), wq_ref[...],
                preferred_element_type=jnp.float32) + bq_ref[...]
    kv = jnp.dot(x_kv.astype(jnp.bfloat16), wkv_ref[...],
                 preferred_element_type=jnp.float32) + bkv_ref[...]
    k = kv[:, :D_MODEL]
    v = kv[:, D_MODEL:]
    return _attention_core(q, k, v, wo_ref, bo_ref, batch, s_q, s_kv)


def _ffn(x, w1_ref, b1_ref, w2_ref, b2_ref):
    h = jnp.dot(x.astype(jnp.bfloat16), w1_ref[...],
                preferred_element_type=jnp.float32) + b1_ref[...]
    h = jnp.maximum(h, 0.0)
    return jnp.dot(h.astype(jnp.bfloat16), w2_ref[...],
                   preferred_element_type=jnp.float32) + b2_ref[...]


# ---------------- fused stack kernels (one gridded call per stack) ----------------
def _encoder_stack_kernel(x_ref,
                          wqkv, bqkv, wo, bo,
                          ln1_g, ln1_b,
                          w1, b1, w2, b2,
                          ln2_g, ln2_b,
                          o_ref, act_ref, *, batch, seq):
    l = pl.program_id(0)

    @pl.when(l == 0)
    def _():
        act_ref[...] = x_ref[...]

    x = act_ref[...]
    attn = _self_mha(x, wqkv, bqkv, wo, bo, batch, seq)
    x1 = _layer_norm(x + attn, ln1_g[...], ln1_b[...])
    ffn = _ffn(x1, w1, b1, w2, b2)
    out = _layer_norm(x1 + ffn, ln2_g[...], ln2_b[...])
    act_ref[...] = out

    @pl.when(l == pl.num_programs(0) - 1)
    def _():
        o_ref[...] = out


def _decoder_stack_kernel(y_ref, enc_ref,
                          s_wqkv, s_bqkv, s_wo, s_bo,
                          ln1_g, ln1_b,
                          c_wq, c_bq, c_wkv, c_bkv, c_wo, c_bo,
                          ln2_g, ln2_b,
                          w1, b1, w2, b2,
                          ln3_g, ln3_b,
                          fc_w, fc_b,
                          logits_ref, act_ref, *, batch, seq_t, seq_s):
    l = pl.program_id(0)

    @pl.when(l == 0)
    def _():
        act_ref[...] = y_ref[...]

    x = act_ref[...]
    enc = enc_ref[...]
    self_attn = _self_mha(x, s_wqkv, s_bqkv, s_wo, s_bo, batch, seq_t)
    x1 = _layer_norm(x + self_attn, ln1_g[...], ln1_b[...])
    cross = _cross_mha(x1, enc, c_wq, c_bq, c_wkv, c_bkv, c_wo, c_bo,
                       batch, seq_t, seq_s)
    x2 = _layer_norm(x1 + cross, ln2_g[...], ln2_b[...])
    ffn = _ffn(x2, w1, b1, w2, b2)
    out = _layer_norm(x2 + ffn, ln3_g[...], ln3_b[...])
    act_ref[...] = out

    # Final vocab projection folded into the last grid step (no separate fc_out call).
    @pl.when(l == pl.num_programs(0) - 1)
    def _():
        logits_ref[...] = jnp.dot(out.astype(jnp.bfloat16), fc_w[...],
                                  preferred_element_type=jnp.float32) + fc_b[...]


# ---------------- pallas_call wrappers ----------------
def _wspec(shape):
    # Stacked per-layer weight: leading layer dim squeezed out of the kernel view.
    return pl.BlockSpec((None,) + shape, lambda l, _s=shape: (l,) + (0,) * len(_s))


def _const_spec(shape):
    # Same block for every grid step -> fetched once, stays VMEM-resident.
    return pl.BlockSpec(shape, lambda l, _s=shape: (0,) * len(_s))


def encoder_stack(x2d, w, batch, seq):
    M, D = x2d.shape
    grid_spec = pltpu.PrefetchScalarGridSpec(
        num_scalar_prefetch=0,
        grid=(NUM_ENC_LAYERS,),
        in_specs=[
            _const_spec((M, D)),                         # x
            _wspec((D_MODEL, 3 * D_MODEL)),              # wqkv
            _wspec((1, 3 * D_MODEL)),                    # bqkv
            _wspec((D_MODEL, D_MODEL)),                  # wo
            _wspec((1, D_MODEL)),                        # bo
            _wspec((1, D_MODEL)), _wspec((1, D_MODEL)),  # ln1 g/b
            _wspec((D_MODEL, D_FF)), _wspec((1, D_FF)),  # ffn w1/b1
            _wspec((D_FF, D_MODEL)), _wspec((1, D_MODEL)),  # ffn w2/b2
            _wspec((1, D_MODEL)), _wspec((1, D_MODEL)),  # ln2 g/b
        ],
        out_specs=_const_spec((M, D)),
        scratch_shapes=[pltpu.VMEM((M, D), jnp.float32)],
    )
    return pl.pallas_call(
        functools.partial(_encoder_stack_kernel, batch=batch, seq=seq),
        out_shape=jax.ShapeDtypeStruct((M, D), jnp.float32),
        grid_spec=grid_spec,
        compiler_params=pltpu.CompilerParams(dimension_semantics=("arbitrary",)),
    )(x2d,
      w["wqkv"], w["bqkv"], w["wo"], w["bo"],
      w["ln1_g"], w["ln1_b"],
      w["w1"], w["b1"], w["w2"], w["b2"],
      w["ln2_g"], w["ln2_b"])


def decoder_stack(y2d, enc2d, w, fc_w, fc_b, batch, seq_t, seq_s):
    M_t, D = y2d.shape
    M_s = enc2d.shape[0]
    grid_spec = pltpu.PrefetchScalarGridSpec(
        num_scalar_prefetch=0,
        grid=(NUM_DEC_LAYERS,),
        in_specs=[
            _const_spec((M_t, D)),                       # y
            _const_spec((M_s, D)),                       # enc output
            _wspec((D_MODEL, 3 * D_MODEL)),              # self wqkv
            _wspec((1, 3 * D_MODEL)),                    # self bqkv
            _wspec((D_MODEL, D_MODEL)),                  # self wo
            _wspec((1, D_MODEL)),                        # self bo
            _wspec((1, D_MODEL)), _wspec((1, D_MODEL)),  # ln1 g/b
            _wspec((D_MODEL, D_MODEL)),                  # cross wq
            _wspec((1, D_MODEL)),                        # cross bq
            _wspec((D_MODEL, 2 * D_MODEL)),              # cross wkv
            _wspec((1, 2 * D_MODEL)),                    # cross bkv
            _wspec((D_MODEL, D_MODEL)),                  # cross wo
            _wspec((1, D_MODEL)),                        # cross bo
            _wspec((1, D_MODEL)), _wspec((1, D_MODEL)),  # ln2 g/b
            _wspec((D_MODEL, D_FF)), _wspec((1, D_FF)),  # ffn w1/b1
            _wspec((D_FF, D_MODEL)), _wspec((1, D_MODEL)),  # ffn w2/b2
            _wspec((1, D_MODEL)), _wspec((1, D_MODEL)),  # ln3 g/b
            _const_spec((D_MODEL, VOCAB_SIZE)),          # fc_out weight
            _const_spec((1, VOCAB_SIZE)),                # fc_out bias
        ],
        out_specs=_const_spec((M_t, VOCAB_SIZE)),
        scratch_shapes=[pltpu.VMEM((M_t, D), jnp.float32)],
    )
    # TODO(synk): for large B*S on v7x, add a "parallel" grid axis over token tiles; at the
    # current microscopic size a second grid axis would only add overhead.
    return pl.pallas_call(
        functools.partial(_decoder_stack_kernel, batch=batch, seq_t=seq_t, seq_s=seq_s),
        out_shape=jax.ShapeDtypeStruct((M_t, VOCAB_SIZE), jnp.float32),
        grid_spec=grid_spec,
        compiler_params=pltpu.CompilerParams(dimension_semantics=("arbitrary",)),
    )(y2d, enc2d,
      w["s_wqkv"], w["s_bqkv"], w["s_wo"], w["s_bo"],
      w["ln1_g"], w["ln1_b"],
      w["c_wq"], w["c_bq"], w["c_wkv"], w["c_bkv"], w["c_wo"], w["c_bo"],
      w["ln2_g"], w["ln2_b"],
      w["w1"], w["b1"], w["w2"], w["b2"],
      w["ln3_g"], w["ln3_b"],
      fc_w, fc_b)


# ---------------- model forward (plain JAX: embedding gather, PE; 2 pallas_calls) ----------------
def transformer_forward(packed, src_tokens, tgt_tokens):
    B, S_src = src_tokens.shape
    _, S_tgt = tgt_tokens.shape
    emb = packed["embedding"]
    # NOTE: reproduces the PyTorch reference exactly: the scale is sqrt(seq_len)
    # because `src.size(-1)` is evaluated on the *token* tensor, not the embedding.
    src = jnp.take(emb, src_tokens, axis=0) * jnp.float32(math.sqrt(S_src))
    tgt = jnp.take(emb, tgt_tokens, axis=0) * jnp.float32(math.sqrt(S_tgt))
    # NOTE: reproduces reference PositionalEncoding: pe has shape (max_len, 1, d_model)
    # and is sliced by x.size(0) == batch, broadcasting over the sequence axis.
    pe = packed["pe"]
    src = src + pe[:B]
    tgt = tgt + pe[:B]
    # TODO(synk): src_mask/tgt_mask not supported (reference driver passes None).
    x = src.reshape(B * S_src, D_MODEL)
    x = encoder_stack(x, packed["encoder"], B, S_src)
    y = tgt.reshape(B * S_tgt, D_MODEL)
    logits = decoder_stack(y, x, packed["decoder"],
                           packed["fc_out_w"], packed["fc_out_b"], B, S_tgt, S_src)
    return logits.reshape(B, S_tgt, VOCAB_SIZE)


# ---------------- deterministic parameter init (PyTorch-style layouts) ----------------
def _init_linear(key, out_f, in_f):
    k1, k2 = jax.random.split(key)
    bound = 1.0 / math.sqrt(in_f)
    w = jax.random.uniform(k1, (out_f, in_f), jnp.float32, -bound, bound)
    b = jax.random.uniform(k2, (out_f,), jnp.float32, -bound, bound)
    return w, b


def _init_mha(key):
    ks = jax.random.split(key, 4)
    wq, bq = _init_linear(ks[0], D_MODEL, D_MODEL)
    wk, bk = _init_linear(ks[1], D_MODEL, D_MODEL)
    wv, bv = _init_linear(ks[2], D_MODEL, D_MODEL)
    wo, bo = _init_linear(ks[3], D_MODEL, D_MODEL)
    return dict(wq=wq, bq=bq, wk=wk, bk=bk, wv=wv, bv=bv, wo=wo, bo=bo)


def _init_enc_layer(key):
    ks = jax.random.split(key, 3)
    w1, b1 = _init_linear(ks[1], D_FF, D_MODEL)
    w2, b2 = _init_linear(ks[2], D_MODEL, D_FF)
    return dict(mha=_init_mha(ks[0]),
                ffn_w1=w1, ffn_b1=b1, ffn_w2=w2, ffn_b2=b2,
                ln1_g=jnp.ones((D_MODEL,), jnp.float32),
                ln1_b=jnp.zeros((D_MODEL,), jnp.float32),
                ln2_g=jnp.ones((D_MODEL,), jnp.float32),
                ln2_b=jnp.zeros((D_MODEL,), jnp.float32))


def _init_dec_layer(key):
    ks = jax.random.split(key, 4)
    w1, b1 = _init_linear(ks[2], D_FF, D_MODEL)
    w2, b2 = _init_linear(ks[3], D_MODEL, D_FF)
    return dict(self_mha=_init_mha(ks[0]), cross_mha=_init_mha(ks[1]),
                ffn_w1=w1, ffn_b1=b1, ffn_w2=w2, ffn_b2=b2,
                ln1_g=jnp.ones((D_MODEL,), jnp.float32),
                ln1_b=jnp.zeros((D_MODEL,), jnp.float32),
                ln2_g=jnp.ones((D_MODEL,), jnp.float32),
                ln2_b=jnp.zeros((D_MODEL,), jnp.float32),
                ln3_g=jnp.ones((D_MODEL,), jnp.float32),
                ln3_b=jnp.zeros((D_MODEL,), jnp.float32))


def _make_pe(max_len, d_model):
    position = jnp.arange(max_len, dtype=jnp.float32)[:, None]
    div_term = jnp.exp(jnp.arange(0, d_model, 2, dtype=jnp.float32)
                       * (-math.log(10000.0) / d_model))
    pe = jnp.zeros((max_len, d_model), jnp.float32)
    pe = pe.at[:, 0::2].set(jnp.sin(position * div_term))
    pe = pe.at[:, 1::2].set(jnp.cos(position * div_term))
    return pe[:, None, :]  # (max_len, 1, d_model) == pe.unsqueeze(0).transpose(0,1)


def init_params(key):
    keys = jax.random.split(key, 2 + NUM_ENC_LAYERS + NUM_DEC_LAYERS)
    emb = jax.random.normal(keys[0], (VOCAB_SIZE, D_MODEL), jnp.float32)
    fc_w, fc_b = _init_linear(keys[1], VOCAB_SIZE, D_MODEL)
    enc = [_init_enc_layer(keys[2 + i]) for i in range(NUM_ENC_LAYERS)]
    dec = [_init_dec_layer(keys[2 + NUM_ENC_LAYERS + i]) for i in range(NUM_DEC_LAYERS)]
    return dict(embedding=emb, pe=_make_pe(MAX_LEN, D_MODEL),
                encoder_layers=enc, decoder_layers=dec,
                fc_out_w=fc_w, fc_out_b=fc_b)


# ---------------- one-time packing: fused QKV / KV, [in,out] bf16, stacked over layers ----------------
def pack_params(params):
    scale = jnp.float32(1.0 / math.sqrt(D_K))   # folded into Q projection (free at runtime)

    def pack_self_mha(p):
        wqkv = jnp.concatenate([p["wq"].T * scale, p["wk"].T, p["wv"].T], axis=1)
        bqkv = jnp.concatenate([p["bq"] * scale, p["bk"], p["bv"]]).reshape(1, 3 * D_MODEL)
        return dict(wqkv=wqkv.astype(jnp.bfloat16),
                    bqkv=bqkv.astype(jnp.float32),
                    wo=p["wo"].T.astype(jnp.bfloat16),
                    bo=p["bo"].reshape(1, D_MODEL).astype(jnp.float32))

    def pack_cross_mha(p):
        return dict(wq=(p["wq"].T * scale).astype(jnp.bfloat16),
                    bq=(p["bq"] * scale).reshape(1, D_MODEL).astype(jnp.float32),
                    wkv=jnp.concatenate([p["wk"].T, p["wv"].T], axis=1).astype(jnp.bfloat16),
                    bkv=jnp.concatenate([p["bk"], p["bv"]]).reshape(1, 2 * D_MODEL).astype(jnp.float32),
                    wo=p["wo"].T.astype(jnp.bfloat16),
                    bo=p["bo"].reshape(1, D_MODEL).astype(jnp.float32))

    def pack_ffn(p):
        return dict(w1=p["ffn_w1"].T.astype(jnp.bfloat16),
                    b1=p["ffn_b1"].reshape(1, -1).astype(jnp.float32),
                    w2=p["ffn_w2"].T.astype(jnp.bfloat16),
                    b2=p["ffn_b2"].reshape(1, -1).astype(jnp.float32))

    def row(v):
        return v.reshape(1, -1).astype(jnp.float32)

    enc_layers = []
    for lp in params["encoder_layers"]:
        m = pack_self_mha(lp["mha"])
        f = pack_ffn(lp)
        enc_layers.append(dict(
            wqkv=m["wqkv"], bqkv=m["bqkv"], wo=m["wo"], bo=m["bo"],
            ln1_g=row(lp["ln1_g"]), ln1_b=row(lp["ln1_b"]),
            w1=f["w1"], b1=f["b1"], w2=f["w2"], b2=f["b2"],
            ln2_g=row(lp["ln2_g"]), ln2_b=row(lp["ln2_b"])))

    dec_layers = []
    for lp in params["decoder_layers"]:
        sm = pack_self_mha(lp["self_mha"])
        cm = pack_cross_mha(lp["cross_mha"])
        f = pack_ffn(lp)
        dec_layers.append(dict(
            s_wqkv=sm["wqkv"], s_bqkv=sm["bqkv"], s_wo=sm["wo"], s_bo=sm["bo"],
            ln1_g=row(lp["ln1_g"]), ln1_b=row(lp["ln1_b"]),
            c_wq=cm["wq"], c_bq=cm["bq"], c_wkv=cm["wkv"], c_bkv=cm["bkv"],
            c_wo=cm["wo"], c_bo=cm["bo"],
            ln2_g=row(lp["ln2_g"]), ln2_b=row(lp["ln2_b"]),
            w1=f["w1"], b1=f["b1"], w2=f["w2"], b2=f["b2"],
            ln3_g=row(lp["ln3_g"]), ln3_b=row(lp["ln3_b"])))

    def stack_layers(layer_dicts):
        return {k: jnp.stack([d[k] for d in layer_dicts], axis=0) for k in layer_dicts[0]}

    return dict(
        embedding=params["embedding"],
        pe=params["pe"],
        encoder=stack_layers(enc_layers),
        decoder=stack_layers(dec_layers),
        fc_out_w=params["fc_out_w"].T.astype(jnp.bfloat16),
        fc_out_b=params["fc_out_b"].reshape(1, -1).astype(jnp.float32),
    )


if __name__ == "__main__":
    root = jax.random.PRNGKey(0)
    k_params, k_src, k_tgt = jax.random.split(root, 3)
    params = init_params(k_params)
    packed = pack_params(params)          # weight transpose/fusion/stacking done once, outside jit

    B, S = 2, 8
    src = jax.random.randint(k_src, (B, S), 0, VOCAB_SIZE, dtype=jnp.int32)
    tgt = jax.random.randint(k_tgt, (B, S), 0, VOCAB_SIZE, dtype=jnp.int32)

    fwd = jax.jit(transformer_forward)
    out = fwd(packed, src, tgt)
    out = jax.block_until_ready(out)

    assert out.shape == (B, S, VOCAB_SIZE)
    assert jnp.all(jnp.isfinite(out))
    print("KERNEL_OK")
</pallas_src>

<mosaic_0001>
module attributes {stable_mosaic.version = 11 : i64} {
  func.func @_encoder_stack_kernel(%arg0: i32, %arg1: memref<16x128xf32, #tpu.memory_space<vmem>>, %arg2: memref<1x128x384xbf16, #tpu.memory_space<vmem>>, %arg3: memref<1x1x384xf32, #tpu.memory_space<vmem>>, %arg4: memref<1x128x128xbf16, #tpu.memory_space<vmem>>, %arg5: memref<1x1x128xf32, #tpu.memory_space<vmem>>, %arg6: memref<1x1x128xf32, #tpu.memory_space<vmem>>, %arg7: memref<1x1x128xf32, #tpu.memory_space<vmem>>, %arg8: memref<1x128x256xbf16, #tpu.memory_space<vmem>>, %arg9: memref<1x1x256xf32, #tpu.memory_space<vmem>>, %arg10: memref<1x256x128xbf16, #tpu.memory_space<vmem>>, %arg11: memref<1x1x128xf32, #tpu.memory_space<vmem>>, %arg12: memref<1x1x128xf32, #tpu.memory_space<vmem>>, %arg13: memref<1x1x128xf32, #tpu.memory_space<vmem>>, %arg14: memref<16x128xf32, #tpu.memory_space<vmem>>, %arg15: memref<16x128xf32, #tpu.memory_space<vmem>>) attributes {dimension_semantics = [#tpu.dimension_semantics<arbitrary>], iteration_bounds = array<i64: 2>, scalar_prefetch = 0 : i64, scratch_operands = 1 : i64, tpu.core_type = #tpu.core_type<tc>, window_params = [{pipeline_mode = #tpu.pipeline_mode<synchronous>, transform_indices = @transform_0, window_bounds = array<i64: 16, 128>}, {transform_indices = @transform_1, window_bounds = array<i64: 1, 128, 384>}, {transform_indices = @transform_2, window_bounds = array<i64: 1, 1, 384>}, {transform_indices = @transform_3, window_bounds = array<i64: 1, 128, 128>}, {transform_indices = @transform_4, window_bounds = array<i64: 1, 1, 128>}, {transform_indices = @transform_5, window_bounds = array<i64: 1, 1, 128>}, {transform_indices = @transform_6, window_bounds = array<i64: 1, 1, 128>}, {transform_indices = @transform_7, window_bounds = array<i64: 1, 128, 256>}, {transform_indices = @transform_8, window_bounds = array<i64: 1, 1, 256>}, {transform_indices = @transform_9, window_bounds = array<i64: 1, 256, 128>}, {transform_indices = @transform_10, window_bounds = array<i64: 1, 1, 128>}, {transform_indices = @transform_11, window_bounds = array<i64: 1, 1, 128>}, {transform_indices = @transform_12, window_bounds = array<i64: 1, 1, 128>}, {pipeline_mode = #tpu.pipeline_mode<synchronous>, transform_indices = @transform_13, window_bounds = array<i64: 16, 128>}]} {
    %c0_i32 = arith.constant 0 : i32
    %0 = arith.cmpi eq, %arg0, %c0_i32 : i32
    %1 = arith.extui %0 : i1 to i32
    %c0_i32_0 = arith.constant 0 : i32
    %2 = arith.cmpi ne, %1, %c0_i32_0 : i32
    scf.if %2 {
      %c0_71 = arith.constant 0 : index
      %c0_72 = arith.constant 0 : index
      %192 = vector.load %arg1[%c0_71, %c0_72] : memref<16x128xf32, #tpu.memory_space<vmem>>, vector<16x128xf32>
      %c0_73 = arith.constant 0 : index
      %c0_74 = arith.constant 0 : index
      %193 = vector.load %arg15[%c0_73, %c0_74] : memref<16x128xf32, #tpu.memory_space<vmem>>, vector<16x128xf32>
      tpu.vector_store %arg15[%c0_73, %c0_74], %192 {strides = array<i32>} : memref<16x128xf32, #tpu.memory_space<vmem>>, vector<16x128xf32>,
    } else {
    }
    %c0 = arith.constant 0 : index
    %c0_1 = arith.constant 0 : index
    %3 = vector.load %arg15[%c0, %c0_1] : memref<16x128xf32, #tpu.memory_space<vmem>>, vector<16x128xf32>
    %4 = arith.truncf %3 : vector<16x128xf32> to vector<16x128xbf16>
    %c0_2 = arith.constant 0 : index
    %c0_3 = arith.constant 0 : index
    %c0_4 = arith.constant 0 : index
    %5 = vector.load %arg2[%c0_2, %c0_3, %c0_4] : memref<1x128x384xbf16, #tpu.memory_space<vmem>>, vector<1x128x384xbf16>
    %6 = vector.shape_cast %5 : vector<1x128x384xbf16> to vector<128x384xbf16>
    %cst = arith.constant dense<0.000000e+00> : vector<16x384xf32>
    %7 = tpu.matmul %4, %6, %cst {dimension_numbers = #tpu.dot_dimension_numbers<[1], [0], [0], [1], [0, 0, 1, 1], [], []>} : vector<16x128xbf16>, vector<128x384xbf16>, vector<16x384xf32> -> vector<16x384xf32>
    %c0_5 = arith.constant 0 : index
    %c0_6 = arith.constant 0 : index
    %c0_7 = arith.constant 0 : index
    %8 = vector.load %arg3[%c0_5, %c0_6, %c0_7] : memref<1x1x384xf32, #tpu.memory_space<vmem>>, vector<1x1x384xf32>
    %9 = vector.shape_cast %8 : vector<1x1x384xf32> to vector<1x384xf32>
    %10 = vector.broadcast %9 : vector<1x384xf32> to vector<16x384xf32>
    %11 = arith.addf %7, %10 : vector<16x384xf32>
    %12 = vector.extract_strided_slice %11 {offsets = [0, 0], sizes = [16, 128], strides = [1, 1]} : vector<16x384xf32> to vector<16x128xf32>
    %13 = vector.extract_strided_slice %11 {offsets = [0, 128], sizes = [16, 128], strides = [1, 1]} : vector<16x384xf32> to vector<16x128xf32>
    %14 = vector.extract_strided_slice %11 {offsets = [0, 256], sizes = [16, 128], strides = [1, 1]} : vector<16x384xf32> to vector<16x128xf32>
    %15 = vector.extract_strided_slice %12 {offsets = [0, 0], sizes = [16, 32], strides = [1, 1]} : vector<16x128xf32> to vector<16x32xf32>
    %16 = vector.shape_cast %15 : vector<16x32xf32> to vector<2x8x32xf32>
    %17 = arith.truncf %16 : vector<2x8x32xf32> to vector<2x8x32xbf16>
    %18 = vector.extract_strided_slice %13 {offsets = [0, 0], sizes = [16, 32], strides = [1, 1]} : vector<16x128xf32> to vector<16x32xf32>
    %19 = vector.shape_cast %18 : vector<16x32xf32> to vector<2x8x32xf32>
    %20 = arith.truncf %19 : vector<2x8x32xf32> to vector<2x8x32xbf16>
    %21 = vector.extract_strided_slice %14 {offsets = [0, 0], sizes = [16, 32], strides = [1, 1]} : vector<16x128xf32> to vector<16x32xf32>
    %22 = vector.shape_cast %21 : vector<16x32xf32> to vector<2x8x32xf32>
    %23 = arith.truncf %22 : vector<2x8x32xf32> to vector<2x8x32xbf16>
    "tpu.trace_start"() <{level = 10 : i32, message = "bqd,bkd->bqk"}> : () -> ()
    %cst_8 = arith.constant dense<0.000000e+00> : vector<2x8x8xf32>
    %24 = tpu.matmul %17, %20, %cst_8 {dimension_numbers = #tpu.dot_dimension_numbers<[2], [2], [1], [1], [0, 0, 0, 1, 1, 1], [0], [0]>} : vector<2x8x32xbf16>, vector<2x8x32xbf16>, vector<2x8x8xf32> -> vector<2x8x8xf32>
    "tpu.trace_stop"() : () -> ()
    %cst_9 = arith.constant dense<0xFF800000> : vector<2x8xf32>
    %25 = vector.multi_reduction <maximumf>, %24, %cst_9 [2] : vector<2x8x8xf32> to vector<2x8xf32>
    %26 = vector.shape_cast %25 : vector<2x8xf32> to vector<2x8x1xf32>
    %27 = vector.broadcast %26 : vector<2x8x1xf32> to vector<2x8x8xf32>
    %28 = arith.subf %24, %27 : vector<2x8x8xf32>
    %29 = math.exp %28 : vector<2x8x8xf32>
    %cst_10 = arith.constant dense<0.000000e+00> : vector<2x8xf32>
    %30 = vector.multi_reduction <add>, %29, %cst_10 [2] : vector<2x8x8xf32> to vector<2x8xf32>
    %31 = vector.shape_cast %30 : vector<2x8xf32> to vector<2x8x1xf32>
    %32 = tpu.reciprocal %31 {approx = true} : vector<2x8x1xf32> -> vector<2x8x1xf32>
    %33 = vector.broadcast %32 : vector<2x8x1xf32> to vector<2x8x8xf32>
    %34 = arith.mulf %29, %33 : vector<2x8x8xf32>
    %35 = arith.truncf %34 : vector<2x8x8xf32> to vector<2x8x8xbf16>
    "tpu.trace_start"() <{level = 10 : i32, message = "bqk,bkd->bqd"}> : () -> ()
    %cst_11 = arith.constant dense<0.000000e+00> : vector<2x8x32xf32>
    %36 = tpu.matmul %35, %23, %cst_11 {dimension_numbers = #tpu.dot_dimension_numbers<[2], [1], [1], [2], [0, 0, 0, 1, 1, 2], [0], [0]>} : vector<2x8x8xbf16>, vector<2x8x32xbf16>, vector<2x8x32xf32> -> vector<2x8x32xf32>
    "tpu.trace_stop"() : () -> ()
    %37 = vector.shape_cast %36 : vector<2x8x32xf32> to vector<16x32xf32>
    %38 = vector.extract_strided_slice %12 {offsets = [0, 32], sizes = [16, 32], strides = [1, 1]} : vector<16x128xf32> to vector<16x32xf32>
    %39 = vector.shape_cast %38 : vector<16x32xf32> to vector<2x8x32xf32>
    %40 = arith.truncf %39 : vector<2x8x32xf32> to vector<2x8x32xbf16>
    %41 = vector.extract_strided_slice %13 {offsets = [0, 32], sizes = [16, 32], strides = [1, 1]} : vector<16x128xf32> to vector<16x32xf32>
    %42 = vector.shape_cast %41 : vector<16x32xf32> to vector<2x8x32xf32>
    %43 = arith.truncf %42 : vector<2x8x32xf32> to vector<2x8x32xbf16>
    %44 = vector.extract_strided_slice %14 {offsets = [0, 32], sizes = [16, 32], strides = [1, 1]} : vector<16x128xf32> to vector<16x32xf32>
    %45 = vector.shape_cast %44 : vector<16x32xf32> to vector<2x8x32xf32>
    %46 = arith.truncf %45 : vector<2x8x32xf32> to vector<2x8x32xbf16>
    "tpu.trace_start"() <{level = 10 : i32, message = "bqd,bkd->bqk"}> : () -> ()
    %cst_12 = arith.constant dense<0.000000e+00> : vector<2x8x8xf32>
    %47 = tpu.matmul %40, %43, %cst_12 {dimension_numbers = #tpu.dot_dimension_numbers<[2], [2], [1], [1], [0, 0, 0, 1, 1, 1], [0], [0]>} : vector<2x8x32xbf16>, vector<2x8x32xbf16>, vector<2x8x8xf32> -> vector<2x8x8xf32>
    "tpu.trace_stop"() : () -> ()
    %cst_13 = arith.constant dense<0xFF800000> : vector<2x8xf32>
    %48 = vector.multi_reduction <maximumf>, %47, %cst_13 [2] : vector<2x8x8xf32> to vector<2x8xf32>
    %49 = vector.shape_cast %48 : vector<2x8xf32> to vector<2x8x1xf32>
    %50 = vector.broadcast %49 : vector<2x8x1xf32> to vector<2x8x8xf32>
    %51 = arith.subf %47, %50 : vector<2x8x8xf32>
    %52 = math.exp %51 : vector<2x8x8xf32>
    %cst_14 = arith.constant dense<0.000000e+00> : vector<2x8xf32>
    %53 = vector.multi_reduction <add>, %52, %cst_14 [2] : vector<2x8x8xf32> to vector<2x8xf32>
    %54 = vector.shape_cast %53 : vector<2x8xf32> to vector<2x8x1xf32>
    %55 = tpu.reciprocal %54 {approx = true} : vector<2x8x1xf32> -> vector<2x8x1xf32>
    %56 = vector.broadcast %55 : vector<2x8x1xf32> to vector<2x8x8xf32>
    %57 = arith.mulf %52, %56 : vector<2x8x8xf32>
    %58 = arith.truncf %57 : vector<2x8x8xf32> to vector<2x8x8xbf16>
    "tpu.trace_start"() <{level = 10 : i32, message = "bqk,bkd->bqd"}> : () -> ()
    %cst_15 = arith.constant dense<0.000000e+00> : vector<2x8x32xf32>
    %59 = tpu.matmul %58, %46, %cst_15 {dimension_numbers = #tpu.dot_dimension_numbers<[2], [1], [1], [2], [0, 0, 0, 1, 1, 2], [0], [0]>} : vector<2x8x8xbf16>, vector<2x8x32xbf16>, vector<2x8x32xf32> -> vector<2x8x32xf32>
    "tpu.trace_stop"() : () -> ()
    %60 = vector.shape_cast %59 : vector<2x8x32xf32> to vector<16x32xf32>
    %61 = vector.extract_strided_slice %12 {offsets = [0, 64], sizes = [16, 32], strides = [1, 1]} : vector<16x128xf32> to vector<16x32xf32>
    %62 = vector.shape_cast %61 : vector<16x32xf32> to vector<2x8x32xf32>
    %63 = arith.truncf %62 : vector<2x8x32xf32> to vector<2x8x32xbf16>
    %64 = vector.extract_strided_slice %13 {offsets = [0, 64], sizes = [16, 32], strides = [1, 1]} : vector<16x128xf32> to vector<16x32xf32>
    %65 = vector.shape_cast %64 : vector<16x32xf32> to vector<2x8x32xf32>
    %66 = arith.truncf %65 : vector<2x8x32xf32> to vector<2x8x32xbf16>
    %67 = vector.extract_strided_slice %14 {offsets = [0, 64], sizes = [16, 32], strides = [1, 1]} : vector<16x128xf32> to vector<16x32xf32>
    %68 = vector.shape_cast %67 : vector<16x32xf32> to vector<2x8x32xf32>
    %69 = arith.truncf %68 : vector<2x8x32xf32> to vector<2x8x32xbf16>
    "tpu.trace_start"() <{level = 10 : i32, message = "bqd,bkd->bqk"}> : () -> ()
    %cst_16 = arith.constant dense<0.000000e+00> : vector<2x8x8xf32>
    %70 = tpu.matmul %63, %66, %cst_16 {dimension_numbers = #tpu.dot_dimension_numbers<[2], [2], [1], [1], [0, 0, 0, 1, 1, 1], [0], [0]>} : vector<2x8x32xbf16>, vector<2x8x32xbf16>, vector<2x8x8xf32> -> vector<2x8x8xf32>
    "tpu.trace_stop"() : () -> ()
    %cst_17 = arith.constant dense<0xFF800000> : vector<2x8xf32>
    %71 = vector.multi_reduction <maximumf>, %70, %cst_17 [2] : vector<2x8x8xf32> to vector<2x8xf32>
    %72 = vector.shape_cast %71 : vector<2x8xf32> to vector<2x8x1xf32>
    %73 = vector.broadcast %72 : vector<2x8x1xf32> to vector<2x8x8xf32>
    %74 = arith.subf %70, %73 : vector<2x8x8xf32>
    %75 = math.exp %74 : vector<2x8x8xf32>
    %cst_18 = arith.constant dense<0.000000e+00> : vector<2x8xf32>
    %76 = vector.multi_reduction <add>, %75, %cst_18 [2] : vector<2x8x8xf32> to vector<2x8xf32>
    %77 = vector.shape_cast %76 : vector<2x8xf32> to vector<2x8x1xf32>
    %78 = tpu.reciprocal %77 {approx = true} : vector<2x8x1xf32> -> vector<2x8x1xf32>
    %79 = vector.broadcast %78 : vector<2x8x1xf32> to vector<2x8x8xf32>
    %80 = arith.mulf %75, %79 : vector<2x8x8xf32>
    %81 = arith.truncf %80 : vector<2x8x8xf32> to vector<2x8x8xbf16>
    "tpu.trace_start"() <{level = 10 : i32, message = "bqk,bkd->bqd"}> : () -> ()
    %cst_19 = arith.constant dense<0.000000e+00> : vector<2x8x32xf32>
    %82 = tpu.matmul %81, %69, %cst_19 {dimension_numbers = #tpu.dot_dimension_numbers<[2], [1], [1], [2], [0, 0, 0, 1, 1, 2], [0], [0]>} : vector<2x8x8xbf16>, vector<2x8x32xbf16>, vector<2x8x32xf32> -> vector<2x8x32xf32>
    "tpu.trace_stop"() : () -> ()
    %83 = vector.shape_cast %82 : vector<2x8x32xf32> to vector<16x32xf32>
    %84 = vector.extract_strided_slice %12 {offsets = [0, 96], sizes = [16, 32], strides = [1, 1]} : vector<16x128xf32> to vector<16x32xf32>
    %85 = vector.shape_cast %84 : vector<16x32xf32> to vector<2x8x32xf32>
    %86 = arith.truncf %85 : vector<2x8x32xf32> to vector<2x8x32xbf16>
    %87 = vector.extract_strided_slice %13 {offsets = [0, 96], sizes = [16, 32], strides = [1, 1]} : vector<16x128xf32> to vector<16x32xf32>
    %88 = vector.shape_cast %87 : vector<16x32xf32> to vector<2x8x32xf32>
    %89 = arith.truncf %88 : vector<2x8x32xf32> to vector<2x8x32xbf16>
    %90 = vector.extract_strided_slice %14 {offsets = [0, 96], sizes = [16, 32], strides = [1, 1]} : vector<16x128xf32> to vector<16x32xf32>
    %91 = vector.shape_cast %90 : vector<16x32xf32> to vector<2x8x32xf32>
    %92 = arith.truncf %91 : vector<2x8x32xf32> to vector<2x8x32xbf16>
    "tpu.trace_start"() <{level = 10 : i32, message = "bqd,bkd->bqk"}> : () -> ()
    %cst_20 = arith.constant dense<0.000000e+00> : vector<2x8x8xf32>
    %93 = tpu.matmul %86, %89, %cst_20 {dimension_numbers = #tpu.dot_dimension_numbers<[2], [2], [1], [1], [0, 0, 0, 1, 1, 1], [0], [0]>} : vector<2x8x32xbf16>, vector<2x8x32xbf16>, vector<2x8x8xf32> -> vector<2x8x8xf32>
    "tpu.trace_stop"() : () -> ()
    %cst_21 = arith.constant dense<0xFF800000> : vector<2x8xf32>
    %94 = vector.multi_reduction <maximumf>, %93, %cst_21 [2] : vector<2x8x8xf32> to vector<2x8xf32>
    %95 = vector.shape_cast %94 : vector<2x8xf32> to vector<2x8x1xf32>
    %96 = vector.broadcast %95 : vector<2x8x1xf32> to vector<2x8x8xf32>
    %97 = arith.subf %93, %96 : vector<2x8x8xf32>
    %98 = math.exp %97 : vector<2x8x8xf32>
    %cst_22 = arith.constant dense<0.000000e+00> : vector<2x8xf32>
    %99 = vector.multi_reduction <add>, %98, %cst_22 [2] : vector<2x8x8xf32> to vector<2x8xf32>
    %100 = vector.shape_cast %99 : vector<2x8xf32> to vector<2x8x1xf32>
    %101 = tpu.reciprocal %100 {approx = true} : vector<2x8x1xf32> -> vector<2x8x1xf32>
    %102 = vector.broadcast %101 : vector<2x8x1xf32> to vector<2x8x8xf32>
    %103 = arith.mulf %98, %102 : vector<2x8x8xf32>
    %104 = arith.truncf %103 : vector<2x8x8xf32> to vector<2x8x8xbf16>
    "tpu.trace_start"() <{level = 10 : i32, message = "bqk,bkd->bqd"}> : () -> ()
    %cst_23 = arith.constant dense<0.000000e+00> : vector<2x8x32xf32>
    %105 = tpu.matmul %104, %92, %cst_23 {dimension_numbers = #tpu.dot_dimension_numbers<[2], [1], [1], [2], [0, 0, 0, 1, 1, 2], [0], [0]>} : vector<2x8x8xbf16>, vector<2x8x32xbf16>, vector<2x8x32xf32> -> vector<2x8x32xf32>
    "tpu.trace_stop"() : () -> ()
    %106 = vector.shape_cast %105 : vector<2x8x32xf32> to vector<16x32xf32>
    %107 = tpu.concatenate %37, %60, %83, %106 in 1 : vector<16x32xf32>, vector<16x32xf32>, vector<16x32xf32>, vector<16x32xf32> -> vector<16x128xf32>
    %108 = arith.truncf %107 : vector<16x128xf32> to vector<16x128xbf16>
    %c0_24 = arith.constant 0 : index
    %c0_25 = arith.constant 0 : index
    %c0_26 = arith.constant 0 : index
    %109 = vector.load %arg4[%c0_24, %c0_25, %c0_26] : memref<1x128x128xbf16, #tpu.memory_space<vmem>>, vector<1x128x128xbf16>
    %110 = vector.shape_cast %109 : vector<1x128x128xbf16> to vector<128x128xbf16>
    %cst_27 = arith.constant dense<0.000000e+00> : vector<16x128xf32>
    %111 = tpu.matmul %108, %110, %cst_27 {dimension_numbers = #tpu.dot_dimension_numbers<[1], [0], [0], [1], [0, 0, 1, 1], [], []>} : vector<16x128xbf16>, vector<128x128xbf16>, vector<16x128xf32> -> vector<16x128xf32>
    %c0_28 = arith.constant 0 : index
    %c0_29 = arith.constant 0 : index
    %c0_30 = arith.constant 0 : index
    %112 = vector.load %arg5[%c0_28, %c0_29, %c0_30] : memref<1x1x128xf32, #tpu.memory_space<vmem>>, vector<1x1x128xf32>
    %113 = vector.shape_cast %112 : vector<1x1x128xf32> to vector<1x128xf32>
    %114 = vector.broadcast %113 : vector<1x128xf32> to vector<16x128xf32>
    %115 = arith.addf %111, %114 : vector<16x128xf32>
    %116 = arith.addf %3, %115 : vector<16x128xf32>
    %c0_31 = arith.constant 0 : index
    %c0_32 = arith.constant 0 : index
    %c0_33 = arith.constant 0 : index
    %117 = vector.load %arg6[%c0_31, %c0_32, %c0_33] : memref<1x1x128xf32, #tpu.memory_space<vmem>>, vector<1x1x128xf32>
    %118 = vector.shape_cast %117 : vector<1x1x128xf32> to vector<1x128xf32>
    %c0_34 = arith.constant 0 : index
    %c0_35 = arith.constant 0 : index
    %c0_36 = arith.constant 0 : index
    %119 = vector.load %arg7[%c0_34, %c0_35, %c0_36] : memref<1x1x128xf32, #tpu.memory_space<vmem>>, vector<1x1x128xf32>
    %120 = vector.shape_cast %119 : vector<1x1x128xf32> to vector<1x128xf32>
    %cst_37 = arith.constant dense<0.000000e+00> : vector<16xf32>
    %121 = vector.multi_reduction <add>, %116, %cst_37 [1] : vector<16x128xf32> to vector<16xf32>
    %122 = vector.shape_cast %121 : vector<16xf32> to vector<16x1xf32>
    %cst_38 = arith.constant 1.280000e+02 : f32
    %123 = vector.broadcast %cst_38 : f32 to vector<16x1xf32>
    %124 = arith.divf %122, %123 : vector<16x1xf32>
    %125 = vector.broadcast %124 : vector<16x1xf32> to vector<16x128xf32>
    %126 = arith.subf %116, %125 : vector<16x128xf32>
    %127 = arith.mulf %126, %126 : vector<16x128xf32>
    %cst_39 = arith.constant dense<0.000000e+00> : vector<16xf32>
    %128 = vector.multi_reduction <add>, %127, %cst_39 [1] : vector<16x128xf32> to vector<16xf32>
    %129 = vector.shape_cast %128 : vector<16xf32> to vector<16x1xf32>
    %cst_40 = arith.constant 1.280000e+02 : f32
    %130 = vector.broadcast %cst_40 : f32 to vector<16x1xf32>
    %131 = arith.divf %129, %130 : vector<16x1xf32>
    %132 = vector.broadcast %124 : vector<16x1xf32> to vector<16x128xf32>
    %133 = arith.subf %116, %132 : vector<16x128xf32>
    %cst_41 = arith.constant 9.99999974E-6 : f32
    %134 = vector.broadcast %cst_41 : f32 to vector<16x1xf32>
    %135 = arith.addf %131, %134 : vector<16x1xf32>
    %136 = math.rsqrt %135 : vector<16x1xf32>
    %137 = vector.broadcast %136 : vector<16x1xf32> to vector<16x128xf32>
    %138 = arith.mulf %133, %137 : vector<16x128xf32>
    %139 = vector.broadcast %118 : vector<1x128xf32> to vector<16x128xf32>
    %140 = arith.mulf %138, %139 : vector<16x128xf32>
    %141 = vector.broadcast %120 : vector<1x128xf32> to vector<16x128xf32>
    %142 = arith.addf %140, %141 : vector<16x128xf32>
    %143 = arith.truncf %142 : vector<16x128xf32> to vector<16x128xbf16>
    %c0_42 = arith.constant 0 : index
    %c0_43 = arith.constant 0 : index
    %c0_44 = arith.constant 0 : index
    %144 = vector.load %arg8[%c0_42, %c0_43, %c0_44] : memref<1x128x256xbf16, #tpu.memory_space<vmem>>, vector<1x128x256xbf16>
    %145 = vector.shape_cast %144 : vector<1x128x256xbf16> to vector<128x256xbf16>
    %cst_45 = arith.constant dense<0.000000e+00> : vector<16x256xf32>
    %146 = tpu.matmul %143, %145, %cst_45 {dimension_numbers = #tpu.dot_dimension_numbers<[1], [0], [0], [1], [0, 0, 1, 1], [], []>} : vector<16x128xbf16>, vector<128x256xbf16>, vector<16x256xf32> -> vector<16x256xf32>
    %c0_46 = arith.constant 0 : index
    %c0_47 = arith.constant 0 : index
    %c0_48 = arith.constant 0 : index
    %147 = vector.load %arg9[%c0_46, %c0_47, %c0_48] : memref<1x1x256xf32, #tpu.memory_space<vmem>>, vector<1x1x256xf32>
    %148 = vector.shape_cast %147 : vector<1x1x256xf32> to vector<1x256xf32>
    %149 = vector.broadcast %148 : vector<1x256xf32> to vector<16x256xf32>
    %150 = arith.addf %146, %149 : vector<16x256xf32>
    %cst_49 = arith.constant 0.000000e+00 : f32
    %151 = vector.broadcast %cst_49 : f32 to vector<16x256xf32>
    %152 = arith.maximumf %150, %151 : vector<16x256xf32>
    %153 = arith.truncf %152 : vector<16x256xf32> to vector<16x256xbf16>
    %c0_50 = arith.constant 0 : index
    %c0_51 = arith.constant 0 : index
    %c0_52 = arith.constant 0 : index
    %154 = vector.load %arg10[%c0_50, %c0_51, %c0_52] : memref<1x256x128xbf16, #tpu.memory_space<vmem>>, vector<1x256x128xbf16>
    %155 = vector.shape_cast %154 : vector<1x256x128xbf16> to vector<256x128xbf16>
    %cst_53 = arith.constant dense<0.000000e+00> : vector<16x128xf32>
    %156 = tpu.matmul %153, %155, %cst_53 {dimension_numbers = #tpu.dot_dimension_numbers<[1], [0], [0], [1], [0, 0, 1, 1], [], []>} : vector<16x256xbf16>, vector<256x128xbf16>, vector<16x128xf32> -> vector<16x128xf32>
    %c0_54 = arith.constant 0 : index
    %c0_55 = arith.constant 0 : index
    %c0_56 = arith.constant 0 : index
    %157 = vector.load %arg11[%c0_54, %c0_55, %c0_56] : memref<1x1x128xf32, #tpu.memory_space<vmem>>, vector<1x1x128xf32>
    %158 = vector.shape_cast %157 : vector<1x1x128xf32> to vector<1x128xf32>
    %159 = vector.broadcast %158 : vector<1x128xf32> to vector<16x128xf32>
    %160 = arith.addf %156, %159 : vector<16x128xf32>
    %161 = arith.addf %142, %160 : vector<16x128xf32>
    %c0_57 = arith.constant 0 : index
    %c0_58 = arith.constant 0 : index
    %c0_59 = arith.constant 0 : index
    %162 = vector.load %arg12[%c0_57, %c0_58, %c0_59] : memref<1x1x128xf32, #tpu.memory_space<vmem>>, vector<1x1x128xf32>
    %163 = vector.shape_cast %162 : vector<1x1x128xf32> to vector<1x128xf32>
    %c0_60 = arith.constant 0 : index
    %c0_61 = arith.constant 0 : index
    %c0_62 = arith.constant 0 : index
    %164 = vector.load %arg13[%c0_60, %c0_61, %c0_62] : memref<1x1x128xf32, #tpu.memory_space<vmem>>, vector<1x1x128xf32>
    %165 = vector.shape_cast %164 : vector<1x1x128xf32> to vector<1x128xf32>
    %cst_63 = arith.constant dense<0.000000e+00> : vector<16xf32>
    %166 = vector.multi_reduction <add>, %161, %cst_63 [1] : vector<16x128xf32> to vector<16xf32>
    %167 = vector.shape_cast %166 : vector<16xf32> to vector<16x1xf32>
    %cst_64 = arith.constant 1.280000e+02 : f32
    %168 = vector.broadcast %cst_64 : f32 to vector<16x1xf32>
    %169 = arith.divf %167, %168 : vector<16x1xf32>
    %170 = vector.broadcast %169 : vector<16x1xf32> to vector<16x128xf32>
    %171 = arith.subf %161, %170 : vector<16x128xf32>
    %172 = arith.mulf %171, %171 : vector<16x128xf32>
    %cst_65 = arith.constant dense<0.000000e+00> : vector<16xf32>
    %173 = vector.multi_reduction <add>, %172, %cst_65 [1] : vector<16x128xf32> to vector<16xf32>
    %174 = vector.shape_cast %173 : vector<16xf32> to vector<16x1xf32>
    %cst_66 = arith.constant 1.280000e+02 : f32
    %175 = vector.broadcast %cst_66 : f32 to vector<16x1xf32>
    %176 = arith.divf %174, %175 : vector<16x1xf32>
    %177 = vector.broadcast %169 : vector<16x1xf32> to vector<16x128xf32>
    %178 = arith.subf %161, %177 : vector<16x128xf32>
    %cst_67 = arith.constant 9.99999974E-6 : f32
    %179 = vector.broadcast %cst_67 : f32 to vector<16x1xf32>
    %180 = arith.addf %176, %179 : vector<16x1xf32>
    %181 = math.rsqrt %180 : vector<16x1xf32>
    %182 = vector.broadcast %181 : vector<16x1xf32> to vector<16x128xf32>
    %183 = arith.mulf %178, %182 : vector<16x128xf32>
    %184 = vector.broadcast %163 : vector<1x128xf32> to vector<16x128xf32>
    %185 = arith.mulf %183, %184 : vector<16x128xf32>
    %186 = vector.broadcast %165 : vector<1x128xf32> to vector<16x128xf32>
    %187 = arith.addf %185, %186 : vector<16x128xf32>
    %c0_68 = arith.constant 0 : index
    %c0_69 = arith.constant 0 : index
    %188 = vector.load %arg15[%c0_68, %c0_69] : memref<16x128xf32, #tpu.memory_space<vmem>>, vector<16x128xf32>
    tpu.vector_store %arg15[%c0_68, %c0_69], %187 {strides = array<i32>} : memref<16x128xf32, #tpu.memory_space<vmem>>, vector<16x128xf32>,
    %c1_i32 = arith.constant 1 : i32
    %189 = arith.cmpi eq, %arg0, %c1_i32 : i32
    %190 = arith.extui %189 : i1 to i32
    %c0_i32_70 = arith.constant 0 : i32
    %191 = arith.cmpi ne, %190, %c0_i32_70 : i32
    scf.if %191 {
      %c0_71 = arith.constant 0 : index
      %c0_72 = arith.constant 0 : index
      %192 = vector.load %arg14[%c0_71, %c0_72] : memref<16x128xf32, #tpu.memory_space<vmem>>, vector<16x128xf32>
      tpu.vector_store %arg14[%c0_71, %c0_72], %187 {strides = array<i32>} : memref<16x128xf32, #tpu.memory_space<vmem>>, vector<16x128xf32>,
    } else {
    }
    return
  }
  func.func @transform_0(%arg0: i32) -> (i32, i32) {
    %c0_i32 = arith.constant 0 : i32
    %c0_i32_0 = arith.constant 0 : i32
    %c0_i32_1 = arith.constant 0 : i32
    return %c0_i32, %c0_i32_0 : i32, i32
  }
  func.func @transform_1(%arg0: i32) -> (i32, i32, i32) {
    %c0_i32 = arith.constant 0 : i32
    %c0_i32_0 = arith.constant 0 : i32
    %c0_i32_1 = arith.constant 0 : i32
    return %arg0, %c0_i32, %c0_i32_0 : i32, i32, i32
  }
  func.func @transform_2(%arg0: i32) -> (i32, i32, i32) {
    %c0_i32 = arith.constant 0 : i32
    %c0_i32_0 = arith.constant 0 : i32
    %c0_i32_1 = arith.constant 0 : i32
    return %arg0, %c0_i32, %c0_i32_0 : i32, i32, i32
  }
  func.func @transform_3(%arg0: i32) -> (i32, i32, i32) {
    %c0_i32 = arith.constant 0 : i32
    %c0_i32_0 = arith.constant 0 : i32
    %c0_i32_1 = arith.constant 0 : i32
    return %arg0, %c0_i32, %c0_i32_0 : i32, i32, i32
  }
  func.func @transform_4(%arg0: i32) -> (i32, i32, i32) {
    %c0_i32 = arith.constant 0 : i32
    %c0_i32_0 = arith.constant 0 : i32
    %c0_i32_1 = arith.constant 0 : i32
    return %arg0, %c0_i32, %c0_i32_0 : i32, i32, i32
  }
  func.func @transform_5(%arg0: i32) -> (i32, i32, i32) {
    %c0_i32 = arith.constant 0 : i32
    %c0_i32_0 = arith.constant 0 : i32
    %c0_i32_1 = arith.constant 0 : i32
    return %arg0, %c0_i32, %c0_i32_0 : i32, i32, i32
  }
  func.func @transform_6(%arg0: i32) -> (i32, i32, i32) {
    %c0_i32 = arith.constant 0 : i32
    %c0_i32_0 = arith.constant 0 : i32
    %c0_i32_1 = arith.constant 0 : i32
    return %arg0, %c0_i32, %c0_i32_0 : i32, i32, i32
  }
  func.func @transform_7(%arg0: i32) -> (i32, i32, i32) {
    %c0_i32 = arith.constant 0 : i32
    %c0_i32_0 = arith.constant 0 : i32
    %c0_i32_1 = arith.constant 0 : i32
    return %arg0, %c0_i32, %c0_i32_0 : i32, i32, i32
  }
  func.func @transform_8(%arg0: i32) -> (i32, i32, i32) {
    %c0_i32 = arith.constant 0 : i32
    %c0_i32_0 = arith.constant 0 : i32
    %c0_i32_1 = arith.constant 0 : i32
    return %arg0, %c0_i32, %c0_i32_0 : i32, i32, i32
  }
  func.func @transform_9(%arg0: i32) -> (i32, i32, i32) {
    %c0_i32 = arith.constant 0 : i32
    %c0_i32_0 = arith.constant 0 : i32
    %c0_i32_1 = arith.constant 0 : i32
    return %arg0, %c0_i32, %c0_i32_0 : i32, i32, i32
  }
  func.func @transform_10(%arg0: i32) -> (i32, i32, i32) {
    %c0_i32 = arith.constant 0 : i32
    %c0_i32_0 = arith.constant 0 : i32
    %c0_i32_1 = arith.constant 0 : i32
    return %arg0, %c0_i32, %c0_i32_0 : i32, i32, i32
  }
  func.func @transform_11(%arg0: i32) -> (i32, i32, i32) {
    %c0_i32 = arith.constant 0 : i32
    %c0_i32_0 = arith.constant 0 : i32
    %c0_i32_1 = arith.constant 0 : i32
    return %arg0, %c0_i32, %c0_i32_0 : i32, i32, i32
  }
  func.func @transform_12(%arg0: i32) -> (i32, i32, i32) {
    %c0_i32 = arith.constant 0 : i32
    %c0_i32_0 = arith.constant 0 : i32
    %c0_i32_1 = arith.constant 0 : i32
    return %arg0, %c0_i32, %c0_i32_0 : i32, i32, i32
  }
  func.func @transform_13(%arg0: i32) -> (i32, i32) {
    %c0_i32 = arith.constant 0 : i32
    %c0_i32_0 = arith.constant 0 : i32
    %c0_i32_1 = arith.constant 0 : i32
    return %c0_i32, %c0_i32_0 : i32, i32
  }
}

module attributes {stable_mosaic.version = 11 : i64} {
  func.func @_decoder_stack_kernel(%arg0: i32, %arg1: memref<16x128xf32, #tpu.memory_space<vmem>>, %arg2: memref<16x128xf32, #tpu.memory_space<vmem>>, %arg3: memref<1x128x384xbf16, #tpu.memory_space<vmem>>, %arg4: memref<1x1x384xf32, #tpu.memory_space<vmem>>, %arg5: memref<1x128x128xbf16, #tpu.memory_space<vmem>>, %arg6: memref<1x1x128xf32, #tpu.memory_space<vmem>>, %arg7: memref<1x1x128xf32, #tpu.memory_space<vmem>>, %arg8: memref<1x1x128xf32, #tpu.memory_space<vmem>>, %arg9: memref<1x128x128xbf16, #tpu.memory_space<vmem>>, %arg10: memref<1x1x128xf32, #tpu.memory_space<vmem>>, %arg11: memref<1x128x256xbf16, #tpu.memory_space<vmem>>, %arg12: memref<1x1x256xf32, #tpu.memory_space<vmem>>, %arg13: memref<1x128x128xbf16, #tpu.memory_space<vmem>>, %arg14: memref<1x1x128xf32, #tpu.memory_space<vmem>>, %arg15: memref<1x1x128xf32, #tpu.memory_space<vmem>>, %arg16: memref<1x1x128xf32, #tpu.memory_space<vmem>>, %arg17: memref<1x128x256xbf16, #tpu.memory_space<vmem>>, %arg18: memref<1x1x256xf32, #tpu.memory_space<vmem>>, %arg19: memref<1x256x128xbf16, #tpu.memory_space<vmem>>, %arg20: memref<1x1x128xf32, #tpu.memory_space<vmem>>, %arg21: memref<1x1x128xf32, #tpu.memory_space<vmem>>, %arg22: memref<1x1x128xf32, #tpu.memory_space<vmem>>, %arg23: memref<128x512xbf16, #tpu.memory_space<vmem>>, %arg24: memref<1x512xf32, #tpu.memory_space<vmem>>, %arg25: memref<16x512xf32, #tpu.memory_space<vmem>>, %arg26: memref<16x128xf32, #tpu.memory_space<vmem>>) attributes {dimension_semantics = [#tpu.dimension_semantics<arbitrary>], iteration_bounds = array<i64: 2>, scalar_prefetch = 0 : i64, scratch_operands = 1 : i64, tpu.core_type = #tpu.core_type<tc>, window_params = [{pipeline_mode = #tpu.pipeline_mode<synchronous>, transform_indices = @transform_0, window_bounds = array<i64: 16, 128>}, {pipeline_mode = #tpu.pipeline_mode<synchronous>, transform_indices = @transform_1, window_bounds = array<i64: 16, 128>}, {transform_indices = @transform_2, window_bounds = array<i64: 1, 128, 384>}, {transform_indices = @transform_3, window_bounds = array<i64: 1, 1, 384>}, {transform_indices = @transform_4, window_bounds = array<i64: 1, 128, 128>}, {transform_indices = @transform_5, window_bounds = array<i64: 1, 1, 128>}, {transform_indices = @transform_6, window_bounds = array<i64: 1, 1, 128>}, {transform_indices = @transform_7, window_bounds = array<i64: 1, 1, 128>}, {transform_indices = @transform_8, window_bounds = array<i64: 1, 128, 128>}, {transform_indices = @transform_9, window_bounds = array<i64: 1, 1, 128>}, {transform_indices = @transform_10, window_bounds = array<i64: 1, 128, 256>}, {transform_indices = @transform_11, window_bounds = array<i64: 1, 1, 256>}, {transform_indices = @transform_12, window_bounds = array<i64: 1, 128, 128>}, {transform_indices = @transform_13, window_bounds = array<i64: 1, 1, 128>}, {transform_indices = @transform_14, window_bounds = array<i64: 1, 1, 128>}, {transform_indices = @transform_15, window_bounds = array<i64: 1, 1, 128>}, {transform_indices = @transform_16, window_bounds = array<i64: 1, 128, 256>}, {transform_indices = @transform_17, window_bounds = array<i64: 1, 1, 256>}, {transform_indices = @transform_18, window_bounds = array<i64: 1, 256, 128>}, {transform_indices = @transform_19, window_bounds = array<i64: 1, 1, 128>}, {transform_indices = @transform_20, window_bounds = array<i64: 1, 1, 128>}, {transform_indices = @transform_21, window_bounds = array<i64: 1, 1, 128>}, {pipeline_mode = #tpu.pipeline_mode<synchronous>, transform_indices = @transform_22, window_bounds = array<i64: 128, 512>}, {pipeline_mode = #tpu.pipeline_mode<synchronous>, transform_indices = @transform_23, window_bounds = array<i64: 1, 512>}, {pipeline_mode = #tpu.pipeline_mode<synchronous>, transform_indices = @transform_24, window_bounds = array<i64: 16, 512>}]} {
    %c0_i32 = arith.constant 0 : i32
    %0 = arith.cmpi eq, %arg0, %c0_i32 : i32
    %1 = arith.extui %0 : i1 to i32
    %c0_i32_0 = arith.constant 0 : i32
    %2 = arith.cmpi ne, %1, %c0_i32_0 : i32
    scf.if %2 {
      %c0_121 = arith.constant 0 : index
      %c0_122 = arith.constant 0 : index
      %339 = vector.load %arg1[%c0_121, %c0_122] : memref<16x128xf32, #tpu.memory_space<vmem>>, vector<16x128xf32>
      %c0_123 = arith.constant 0 : index
      %c0_124 = arith.constant 0 : index
      %340 = vector.load %arg26[%c0_123, %c0_124] : memref<16x128xf32, #tpu.memory_space<vmem>>, vector<16x128xf32>
      tpu.vector_store %arg26[%c0_123, %c0_124], %339 {strides = array<i32>} : memref<16x128xf32, #tpu.memory_space<vmem>>, vector<16x128xf32>,
    } else {
    }
    %c0 = arith.constant 0 : index
    %c0_1 = arith.constant 0 : index
    %3 = vector.load %arg26[%c0, %c0_1] : memref<16x128xf32, #tpu.memory_space<vmem>>, vector<16x128xf32>
    %c0_2 = arith.constant 0 : index
    %c0_3 = arith.constant 0 : index
    %4 = vector.load %arg2[%c0_2, %c0_3] : memref<16x128xf32, #tpu.memory_space<vmem>>, vector<16x128xf32>
    %5 = arith.truncf %3 : vector<16x128xf32> to vector<16x128xbf16>
    %c0_4 = arith.constant 0 : index
    %c0_5 = arith.constant 0 : index
    %c0_6 = arith.constant 0 : index
    %6 = vector.load %arg3[%c0_4, %c0_5, %c0_6] : memref<1x128x384xbf16, #tpu.memory_space<vmem>>, vector<1x128x384xbf16>
    %7 = vector.shape_cast %6 : vector<1x128x384xbf16> to vector<128x384xbf16>
    %cst = arith.constant dense<0.000000e+00> : vector<16x384xf32>
    %8 = tpu.matmul %5, %7, %cst {dimension_numbers = #tpu.dot_dimension_numbers<[1], [0], [0], [1], [0, 0, 1, 1], [], []>} : vector<16x128xbf16>, vector<128x384xbf16>, vector<16x384xf32> -> vector<16x384xf32>
    %c0_7 = arith.constant 0 : index
    %c0_8 = arith.constant 0 : index
    %c0_9 = arith.constant 0 : index
    %9 = vector.load %arg4[%c0_7, %c0_8, %c0_9] : memref<1x1x384xf32, #tpu.memory_space<vmem>>, vector<1x1x384xf32>
    %10 = vector.shape_cast %9 : vector<1x1x384xf32> to vector<1x384xf32>
    %11 = vector.broadcast %10 : vector<1x384xf32> to vector<16x384xf32>
    %12 = arith.addf %8, %11 : vector<16x384xf32>
    %13 = vector.extract_strided_slice %12 {offsets = [0, 0], sizes = [16, 128], strides = [1, 1]} : vector<16x384xf32> to vector<16x128xf32>
    %14 = vector.extract_strided_slice %12 {offsets = [0, 128], sizes = [16, 128], strides = [1, 1]} : vector<16x384xf32> to vector<16x128xf32>
    %15 = vector.extract_strided_slice %12 {offsets = [0, 256], sizes = [16, 128], strides = [1, 1]} : vector<16x384xf32> to vector<16x128xf32>
    %16 = vector.extract_strided_slice %13 {offsets = [0, 0], sizes = [16, 32], strides = [1, 1]} : vector<16x128xf32> to vector<16x32xf32>
    %17 = vector.shape_cast %16 : vector<16x32xf32> to vector<2x8x32xf32>
    %18 = arith.truncf %17 : vector<2x8x32xf32> to vector<2x8x32xbf16>
    %19 = vector.extract_strided_slice %14 {offsets = [0, 0], sizes = [16, 32], strides = [1, 1]} : vector<16x128xf32> to vector<16x32xf32>
    %20 = vector.shape_cast %19 : vector<16x32xf32> to vector<2x8x32xf32>
    %21 = arith.truncf %20 : vector<2x8x32xf32> to vector<2x8x32xbf16>
    %22 = vector.extract_strided_slice %15 {offsets = [0, 0], sizes = [16, 32], strides = [1, 1]} : vector<16x128xf32> to vector<16x32xf32>
    %23 = vector.shape_cast %22 : vector<16x32xf32> to vector<2x8x32xf32>
    %24 = arith.truncf %23 : vector<2x8x32xf32> to vector<2x8x32xbf16>
    "tpu.trace_start"() <{level = 10 : i32, message = "bqd,bkd->bqk"}> : () -> ()
    %cst_10 = arith.constant dense<0.000000e+00> : vector<2x8x8xf32>
    %25 = tpu.matmul %18, %21, %cst_10 {dimension_numbers = #tpu.dot_dimension_numbers<[2], [2], [1], [1], [0, 0, 0, 1, 1, 1], [0], [0]>} : vector<2x8x32xbf16>, vector<2x8x32xbf16>, vector<2x8x8xf32> -> vector<2x8x8xf32>
    "tpu.trace_stop"() : () -> ()
    %cst_11 = arith.constant dense<0xFF800000> : vector<2x8xf32>
    %26 = vector.multi_reduction <maximumf>, %25, %cst_11 [2] : vector<2x8x8xf32> to vector<2x8xf32>
    %27 = vector.shape_cast %26 : vector<2x8xf32> to vector<2x8x1xf32>
    %28 = vector.broadcast %27 : vector<2x8x1xf32> to vector<2x8x8xf32>
    %29 = arith.subf %25, %28 : vector<2x8x8xf32>
    %30 = math.exp %29 : vector<2x8x8xf32>
    %cst_12 = arith.constant dense<0.000000e+00> : vector<2x8xf32>
    %31 = vector.multi_reduction <add>, %30, %cst_12 [2] : vector<2x8x8xf32> to vector<2x8xf32>
    %32 = vector.shape_cast %31 : vector<2x8xf32> to vector<2x8x1xf32>
    %33 = tpu.reciprocal %32 {approx = true} : vector<2x8x1xf32> -> vector<2x8x1xf32>
    %34 = vector.broadcast %33 : vector<2x8x1xf32> to vector<2x8x8xf32>
    %35 = arith.mulf %30, %34 : vector<2x8x8xf32>
    %36 = arith.truncf %35 : vector<2x8x8xf32> to vector<2x8x8xbf16>
    "tpu.trace_start"() <{level = 10 : i32, message = "bqk,bkd->bqd"}> : () -> ()
    %cst_13 = arith.constant dense<0.000000e+00> : vector<2x8x32xf32>
    %37 = tpu.matmul %36, %24, %cst_13 {dimension_numbers = #tpu.dot_dimension_numbers<[2], [1], [1], [2], [0, 0, 0, 1, 1, 2], [0], [0]>} : vector<2x8x8xbf16>, vector<2x8x32xbf16>, vector<2x8x32xf32> -> vector<2x8x32xf32>
    "tpu.trace_stop"() : () -> ()
    %38 = vector.shape_cast %37 : vector<2x8x32xf32> to vector<16x32xf32>
    %39 = vector.extract_strided_slice %13 {offsets = [0, 32], sizes = [16, 32], strides = [1, 1]} : vector<16x128xf32> to vector<16x32xf32>
    %40 = vector.shape_cast %39 : vector<16x32xf32> to vector<2x8x32xf32>
    %41 = arith.truncf %40 : vector<2x8x32xf32> to vector<2x8x32xbf16>
    %42 = vector.extract_strided_slice %14 {offsets = [0, 32], sizes = [16, 32], strides = [1, 1]} : vector<16x128xf32> to vector<16x32xf32>
    %43 = vector.shape_cast %42 : vector<16x32xf32> to vector<2x8x32xf32>
    %44 = arith.truncf %43 : vector<2x8x32xf32> to vector<2x8x32xbf16>
    %45 = vector.extract_strided_slice %15 {offsets = [0, 32], sizes = [16, 32], strides = [1, 1]} : vector<16x128xf32> to vector<16x32xf32>
    %46 = vector.shape_cast %45 : vector<16x32xf32> to vector<2x8x32xf32>
    %47 = arith.truncf %46 : vector<2x8x32xf32> to vector<2x8x32xbf16>
    "tpu.trace_start"() <{level = 10 : i32, message = "bqd,bkd->bqk"}> : () -> ()
    %cst_14 = arith.constant dense<0.000000e+00> : vector<2x8x8xf32>
    %48 = tpu.matmul %41, %44, %cst_14 {dimension_numbers = #tpu.dot_dimension_numbers<[2], [2], [1], [1], [0, 0, 0, 1, 1, 1], [0], [0]>} : vector<2x8x32xbf16>, vector<2x8x32xbf16>, vector<2x8x8xf32> -> vector<2x8x8xf32>
    "tpu.trace_stop"() : () -> ()
    %cst_15 = arith.constant dense<0xFF800000> : vector<2x8xf32>
    %49 = vector.multi_reduction <maximumf>, %48, %cst_15 [2] : vector<2x8x8xf32> to vector<2x8xf32>
    %50 = vector.shape_cast %49 : vector<2x8xf32> to vector<2x8x1xf32>
    %51 = vector.broadcast %50 : vector<2x8x1xf32> to vector<2x8x8xf32>
    %52 = arith.subf %48, %51 : vector<2x8x8xf32>
    %53 = math.exp %52 : vector<2x8x8xf32>
    %cst_16 = arith.constant dense<0.000000e+00> : vector<2x8xf32>
    %54 = vector.multi_reduction <add>, %53, %cst_16 [2] : vector<2x8x8xf32> to vector<2x8xf32>
    %55 = vector.shape_cast %54 : vector<2x8xf32> to vector<2x8x1xf32>
    %56 = tpu.reciprocal %55 {approx = true} : vector<2x8x1xf32> -> vector<2x8x1xf32>
    %57 = vector.broadcast %56 : vector<2x8x1xf32> to vector<2x8x8xf32>
    %58 = arith.mulf %53, %57 : vector<2x8x8xf32>
    %59 = arith.truncf %58 : vector<2x8x8xf32> to vector<2x8x8xbf16>
    "tpu.trace_start"() <{level = 10 : i32, message = "bqk,bkd->bqd"}> : () -> ()
    %cst_17 = arith.constant dense<0.000000e+00> : vector<2x8x32xf32>
    %60 = tpu.matmul %59, %47, %cst_17 {dimension_numbers = #tpu.dot_dimension_numbers<[2], [1], [1], [2], [0, 0, 0, 1, 1, 2], [0], [0]>} : vector<2x8x8xbf16>, vector<2x8x32xbf16>, vector<2x8x32xf32> -> vector<2x8x32xf32>
    "tpu.trace_stop"() : () -> ()
    %61 = vector.shape_cast %60 : vector<2x8x32xf32> to vector<16x32xf32>
    %62 = vector.extract_strided_slice %13 {offsets = [0, 64], sizes = [16, 32], strides = [1, 1]} : vector<16x128xf32> to vector<16x32xf32>
    %63 = vector.shape_cast %62 : vector<16x32xf32> to vector<2x8x32xf32>
    %64 = arith.truncf %63 : vector<2x8x32xf32> to vector<2x8x32xbf16>
    %65 = vector.extract_strided_slice %14 {offsets = [0, 64], sizes = [16, 32], strides = [1, 1]} : vector<16x128xf32> to vector<16x32xf32>
    %66 = vector.shape_cast %65 : vector<16x32xf32> to vector<2x8x32xf32>
    %67 = arith.truncf %66 : vector<2x8x32xf32> to vector<2x8x32xbf16>
    %68 = vector.extract_strided_slice %15 {offsets = [0, 64], sizes = [16, 32], strides = [1, 1]} : vector<16x128xf32> to vector<16x32xf32>
    %69 = vector.shape_cast %68 : vector<16x32xf32> to vector<2x8x32xf32>
    %70 = arith.truncf %69 : vector<2x8x32xf32> to vector<2x8x32xbf16>
    "tpu.trace_start"() <{level = 10 : i32, message = "bqd,bkd->bqk"}> : () -> ()
    %cst_18 = arith.constant dense<0.000000e+00> : vector<2x8x8xf32>
    %71 = tpu.matmul %64, %67, %cst_18 {dimension_numbers = #tpu.dot_dimension_numbers<[2], [2], [1], [1], [0, 0, 0, 1, 1, 1], [0], [0]>} : vector<2x8x32xbf16>, vector<2x8x32xbf16>, vector<2x8x8xf32> -> vector<2x8x8xf32>
    "tpu.trace_stop"() : () -> ()
    %cst_19 = arith.constant dense<0xFF800000> : vector<2x8xf32>
    %72 = vector.multi_reduction <maximumf>, %71, %cst_19 [2] : vector<2x8x8xf32> to vector<2x8xf32>
    %73 = vector.shape_cast %72 : vector<2x8xf32> to vector<2x8x1xf32>
    %74 = vector.broadcast %73 : vector<2x8x1xf32> to vector<2x8x8xf32>
    %75 = arith.subf %71, %74 : vector<2x8x8xf32>
    %76 = math.exp %75 : vector<2x8x8xf32>
    %cst_20 = arith.constant dense<0.000000e+00> : vector<2x8xf32>
    %77 = vector.multi_reduction <add>, %76, %cst_20 [2] : vector<2x8x8xf32> to vector<2x8xf32>
    %78 = vector.shape_cast %77 : vector<2x8xf32> to vector<2x8x1xf32>
    %79 = tpu.reciprocal %78 {approx = true} : vector<2x8x1xf32> -> vector<2x8x1xf32>
    %80 = vector.broadcast %79 : vector<2x8x1xf32> to vector<2x8x8xf32>
    %81 = arith.mulf %76, %80 : vector<2x8x8xf32>
    %82 = arith.truncf %81 : vector<2x8x8xf32> to vector<2x8x8xbf16>
    "tpu.trace_start"() <{level = 10 : i32, message = "bqk,bkd->bqd"}> : () -> ()
    %cst_21 = arith.constant dense<0.000000e+00> : vector<2x8x32xf32>
    %83 = tpu.matmul %82, %70, %cst_21 {dimension_numbers = #tpu.dot_dimension_numbers<[2], [1], [1], [2], [0, 0, 0, 1, 1, 2], [0], [0]>} : vector<2x8x8xbf16>, vector<2x8x32xbf16>, vector<2x8x32xf32> -> vector<2x8x32xf32>
    "tpu.trace_stop"() : () -> ()
    %84 = vector.shape_cast %83 : vector<2x8x32xf32> to vector<16x32xf32>
    %85 = vector.extract_strided_slice %13 {offsets = [0, 96], sizes = [16, 32], strides = [1, 1]} : vector<16x128xf32> to vector<16x32xf32>
    %86 = vector.shape_cast %85 : vector<16x32xf32> to vector<2x8x32xf32>
    %87 = arith.truncf %86 : vector<2x8x32xf32> to vector<2x8x32xbf16>
    %88 = vector.extract_strided_slice %14 {offsets = [0, 96], sizes = [16, 32], strides = [1, 1]} : vector<16x128xf32> to vector<16x32xf32>
    %89 = vector.shape_cast %88 : vector<16x32xf32> to vector<2x8x32xf32>
    %90 = arith.truncf %89 : vector<2x8x32xf32> to vector<2x8x32xbf16>
    %91 = vector.extract_strided_slice %15 {offsets = [0, 96], sizes = [16, 32], strides = [1, 1]} : vector<16x128xf32> to vector<16x32xf32>
    %92 = vector.shape_cast %91 : vector<16x32xf32> to vector<2x8x32xf32>
    %93 = arith.truncf %92 : vector<2x8x32xf32> to vector<2x8x32xbf16>
    "tpu.trace_start"() <{level = 10 : i32, message = "bqd,bkd->bqk"}> : () -> ()
    %cst_22 = arith.constant dense<0.000000e+00> : vector<2x8x8xf32>
    %94 = tpu.matmul %87, %90, %cst_22 {dimension_numbers = #tpu.dot_dimension_numbers<[2], [2], [1], [1], [0, 0, 0, 1, 1, 1], [0], [0]>} : vector<2x8x32xbf16>, vector<2x8x32xbf16>, vector<2x8x8xf32> -> vector<2x8x8xf32>
    "tpu.trace_stop"() : () -> ()
    %cst_23 = arith.constant dense<0xFF800000> : vector<2x8xf32>
    %95 = vector.multi_reduction <maximumf>, %94, %cst_23 [2] : vector<2x8x8xf32> to vector<2x8xf32>
    %96 = vector.shape_cast %95 : vector<2x8xf32> to vector<2x8x1xf32>
    %97 = vector.broadcast %96 : vector<2x8x1xf32> to vector<2x8x8xf32>
    %98 = arith.subf %94, %97 : vector<2x8x8xf32>
    %99 = math.exp %98 : vector<2x8x8xf32>
    %cst_24 = arith.constant dense<0.000000e+00> : vector<2x8xf32>
    %100 = vector.multi_reduction <add>, %99, %cst_24 [2] : vector<2x8x8xf32> to vector<2x8xf32>
    %101 = vector.shape_cast %100 : vector<2x8xf32> to vector<2x8x1xf32>
    %102 = tpu.reciprocal %101 {approx = true} : vector<2x8x1xf32> -> vector<2x8x1xf32>
    %103 = vector.broadcast %102 : vector<2x8x1xf32> to vector<2x8x8xf32>
    %104 = arith.mulf %99, %103 : vector<2x8x8xf32>
    %105 = arith.truncf %104 : vector<2x8x8xf32> to vector<2x8x8xbf16>
    "tpu.trace_start"() <{level = 10 : i32, message = "bqk,bkd->bqd"}> : () -> ()
    %cst_25 = arith.constant dense<0.000000e+00> : vector<2x8x32xf32>
    %106 = tpu.matmul %105, %93, %cst_25 {dimension_numbers = #tpu.dot_dimension_numbers<[2], [1], [1], [2], [0, 0, 0, 1, 1, 2], [0], [0]>} : vector<2x8x8xbf16>, vector<2x8x32xbf16>, vector<2x8x32xf32> -> vector<2x8x32xf32>
    "tpu.trace_stop"() : () -> ()
    %107 = vector.shape_cast %106 : vector<2x8x32xf32> to vector<16x32xf32>
    %108 = tpu.concatenate %38, %61, %84, %107 in 1 : vector<16x32xf32>, vector<16x32xf32>, vector<16x32xf32>, vector<16x32xf32> -> vector<16x128xf32>
    %109 = arith.truncf %108 : vector<16x128xf32> to vector<16x128xbf16>
    %c0_26 = arith.constant 0 : index
    %c0_27 = arith.constant 0 : index
    %c0_28 = arith.constant 0 : index
    %110 = vector.load %arg5[%c0_26, %c0_27, %c0_28] : memref<1x128x128xbf16, #tpu.memory_space<vmem>>, vector<1x128x128xbf16>
    %111 = vector.shape_cast %110 : vector<1x128x128xbf16> to vector<128x128xbf16>
    %cst_29 = arith.constant dense<0.000000e+00> : vector<16x128xf32>
    %112 = tpu.matmul %109, %111, %cst_29 {dimension_numbers = #tpu.dot_dimension_numbers<[1], [0], [0], [1], [0, 0, 1, 1], [], []>} : vector<16x128xbf16>, vector<128x128xbf16>, vector<16x128xf32> -> vector<16x128xf32>
    %c0_30 = arith.constant 0 : index
    %c0_31 = arith.constant 0 : index
    %c0_32 = arith.constant 0 : index
    %113 = vector.load %arg6[%c0_30, %c0_31, %c0_32] : memref<1x1x128xf32, #tpu.memory_space<vmem>>, vector<1x1x128xf32>
    %114 = vector.shape_cast %113 : vector<1x1x128xf32> to vector<1x128xf32>
    %115 = vector.broadcast %114 : vector<1x128xf32> to vector<16x128xf32>
    %116 = arith.addf %112, %115 : vector<16x128xf32>
    %117 = arith.addf %3, %116 : vector<16x128xf32>
    %c0_33 = arith.constant 0 : index
    %c0_34 = arith.constant 0 : index
    %c0_35 = arith.constant 0 : index
    %118 = vector.load %arg7[%c0_33, %c0_34, %c0_35] : memref<1x1x128xf32, #tpu.memory_space<vmem>>, vector<1x1x128xf32>
    %119 = vector.shape_cast %118 : vector<1x1x128xf32> to vector<1x128xf32>
    %c0_36 = arith.constant 0 : index
    %c0_37 = arith.constant 0 : index
    %c0_38 = arith.constant 0 : index
    %120 = vector.load %arg8[%c0_36, %c0_37, %c0_38] : memref<1x1x128xf32, #tpu.memory_space<vmem>>, vector<1x1x128xf32>
    %121 = vector.shape_cast %120 : vector<1x1x128xf32> to vector<1x128xf32>
    %cst_39 = arith.constant dense<0.000000e+00> : vector<16xf32>
    %122 = vector.multi_reduction <add>, %117, %cst_39 [1] : vector<16x128xf32> to vector<16xf32>
    %123 = vector.shape_cast %122 : vector<16xf32> to vector<16x1xf32>
    %cst_40 = arith.constant 1.280000e+02 : f32
    %124 = vector.broadcast %cst_40 : f32 to vector<16x1xf32>
    %125 = arith.divf %123, %124 : vector<16x1xf32>
    %126 = vector.broadcast %125 : vector<16x1xf32> to vector<16x128xf32>
    %127 = arith.subf %117, %126 : vector<16x128xf32>
    %128 = arith.mulf %127, %127 : vector<16x128xf32>
    %cst_41 = arith.constant dense<0.000000e+00> : vector<16xf32>
    %129 = vector.multi_reduction <add>, %128, %cst_41 [1] : vector<16x128xf32> to vector<16xf32>
    %130 = vector.shape_cast %129 : vector<16xf32> to vector<16x1xf32>
    %cst_42 = arith.constant 1.280000e+02 : f32
    %131 = vector.broadcast %cst_42 : f32 to vector<16x1xf32>
    %132 = arith.divf %130, %131 : vector<16x1xf32>
    %133 = vector.broadcast %125 : vector<16x1xf32> to vector<16x128xf32>
    %134 = arith.subf %117, %133 : vector<16x128xf32>
    %cst_43 = arith.constant 9.99999974E-6 : f32
    %135 = vector.broadcast %cst_43 : f32 to vector<16x1xf32>
    %136 = arith.addf %132, %135 : vector<16x1xf32>
    %137 = math.rsqrt %136 : vector<16x1xf32>
    %138 = vector.broadcast %137 : vector<16x1xf32> to vector<16x128xf32>
    %139 = arith.mulf %134, %138 : vector<16x128xf32>
    %140 = vector.broadcast %119 : vector<1x128xf32> to vector<16x128xf32>
    %141 = arith.mulf %139, %140 : vector<16x128xf32>
    %142 = vector.broadcast %121 : vector<1x128xf32> to vector<16x128xf32>
    %143 = arith.addf %141, %142 : vector<16x128xf32>
    %144 = arith.truncf %143 : vector<16x128xf32> to vector<16x128xbf16>
    %c0_44 = arith.constant 0 : index
    %c0_45 = arith.constant 0 : index
    %c0_46 = arith.constant 0 : index
    %145 = vector.load %arg9[%c0_44, %c0_45, %c0_46] : memref<1x128x128xbf16, #tpu.memory_space<vmem>>, vector<1x128x128xbf16>
    %146 = vector.shape_cast %145 : vector<1x128x128xbf16> to vector<128x128xbf16>
    %cst_47 = arith.constant dense<0.000000e+00> : vector<16x128xf32>
    %147 = tpu.matmul %144, %146, %cst_47 {dimension_numbers = #tpu.dot_dimension_numbers<[1], [0], [0], [1], [0, 0, 1, 1], [], []>} : vector<16x128xbf16>, vector<128x128xbf16>, vector<16x128xf32> -> vector<16x128xf32>
    %c0_48 = arith.constant 0 : index
    %c0_49 = arith.constant 0 : index
    %c0_50 = arith.constant 0 : index
    %148 = vector.load %arg10[%c0_48, %c0_49, %c0_50] : memref<1x1x128xf32, #tpu.memory_space<vmem>>, vector<1x1x128xf32>
    %149 = vector.shape_cast %148 : vector<1x1x128xf32> to vector<1x128xf32>
    %150 = vector.broadcast %149 : vector<1x128xf32> to vector<16x128xf32>
    %151 = arith.addf %147, %150 : vector<16x128xf32>
    %152 = arith.truncf %4 : vector<16x128xf32> to vector<16x128xbf16>
    %c0_51 = arith.constant 0 : index
    %c0_52 = arith.constant 0 : index
    %c0_53 = arith.constant 0 : index
    %153 = vector.load %arg11[%c0_51, %c0_52, %c0_53] : memref<1x128x256xbf16, #tpu.memory_space<vmem>>, vector<1x128x256xbf16>
    %154 = vector.shape_cast %153 : vector<1x128x256xbf16> to vector<128x256xbf16>
    %cst_54 = arith.constant dense<0.000000e+00> : vector<16x256xf32>
    %155 = tpu.matmul %152, %154, %cst_54 {dimension_numbers = #tpu.dot_dimension_numbers<[1], [0], [0], [1], [0, 0, 1, 1], [], []>} : vector<16x128xbf16>, vector<128x256xbf16>, vector<16x256xf32> -> vector<16x256xf32>
    %c0_55 = arith.constant 0 : index
    %c0_56 = arith.constant 0 : index
    %c0_57 = arith.constant 0 : index
    %156 = vector.load %arg12[%c0_55, %c0_56, %c0_57] : memref<1x1x256xf32, #tpu.memory_space<vmem>>, vector<1x1x256xf32>
    %157 = vector.shape_cast %156 : vector<1x1x256xf32> to vector<1x256xf32>
    %158 = vector.broadcast %157 : vector<1x256xf32> to vector<16x256xf32>
    %159 = arith.addf %155, %158 : vector<16x256xf32>
    %160 = vector.extract_strided_slice %159 {offsets = [0, 0], sizes = [16, 128], strides = [1, 1]} : vector<16x256xf32> to vector<16x128xf32>
    %161 = vector.extract_strided_slice %159 {offsets = [0, 128], sizes = [16, 128], strides = [1, 1]} : vector<16x256xf32> to vector<16x128xf32>
    %162 = vector.extract_strided_slice %151 {offsets = [0, 0], sizes = [16, 32], strides = [1, 1]} : vector<16x128xf32> to vector<16x32xf32>
    %163 = vector.shape_cast %162 : vector<16x32xf32> to vector<2x8x32xf32>
    %164 = arith.truncf %163 : vector<2x8x32xf32> to vector<2x8x32xbf16>
    %165 = vector.extract_strided_slice %160 {offsets = [0, 0], sizes = [16, 32], strides = [1, 1]} : vector<16x128xf32> to vector<16x32xf32>
    %166 = vector.shape_cast %165 : vector<16x32xf32> to vector<2x8x32xf32>
    %167 = arith.truncf %166 : vector<2x8x32xf32> to vector<2x8x32xbf16>
    %168 = vector.extract_strided_slice %161 {offsets = [0, 0], sizes = [16, 32], strides = [1, 1]} : vector<16x128xf32> to vector<16x32xf32>
    %169 = vector.shape_cast %168 : vector<16x32xf32> to vector<2x8x32xf32>
    %170 = arith.truncf %169 : vector<2x8x32xf32> to vector<2x8x32xbf16>
    "tpu.trace_start"() <{level = 10 : i32, message = "bqd,bkd->bqk"}> : () -> ()
    %cst_58 = arith.constant dense<0.000000e+00> : vector<2x8x8xf32>
    %171 = tpu.matmul %164, %167, %cst_58 {dimension_numbers = #tpu.dot_dimension_numbers<[2], [2], [1], [1], [0, 0, 0, 1, 1, 1], [0], [0]>} : vector<2x8x32xbf16>, vector<2x8x32xbf16>, vector<2x8x8xf32> -> vector<2x8x8xf32>
    "tpu.trace_stop"() : () -> ()
    %cst_59 = arith.constant dense<0xFF800000> : vector<2x8xf32>
    %172 = vector.multi_reduction <maximumf>, %171, %cst_59 [2] : vector<2x8x8xf32> to vector<2x8xf32>
    %173 = vector.shape_cast %172 : vector<2x8xf32> to vector<2x8x1xf32>
    %174 = vector.broadcast %173 : vector<2x8x1xf32> to vector<2x8x8xf32>
    %175 = arith.subf %171, %174 : vector<2x8x8xf32>
    %176 = math.exp %175 : vector<2x8x8xf32>
    %cst_60 = arith.constant dense<0.000000e+00> : vector<2x8xf32>
    %177 = vector.multi_reduction <add>, %176, %cst_60 [2] : vector<2x8x8xf32> to vector<2x8xf32>
    %178 = vector.shape_cast %177 : vector<2x8xf32> to vector<2x8x1xf32>
    %179 = tpu.reciprocal %178 {approx = true} : vector<2x8x1xf32> -> vector<2x8x1xf32>
    %180 = vector.broadcast %179 : vector<2x8x1xf32> to vector<2x8x8xf32>
    %181 = arith.mulf %176, %180 : vector<2x8x8xf32>
    %182 = arith.truncf %181 : vector<2x8x8xf32> to vector<2x8x8xbf16>
    "tpu.trace_start"() <{level = 10 : i32, message = "bqk,bkd->bqd"}> : () -> ()
    %cst_61 = arith.constant dense<0.000000e+00> : vector<2x8x32xf32>
    %183 = tpu.matmul %182, %170, %cst_61 {dimension_numbers = #tpu.dot_dimension_numbers<[2], [1], [1], [2], [0, 0, 0, 1, 1, 2], [0], [0]>} : vector<2x8x8xbf16>, vector<2x8x32xbf16>, vector<2x8x32xf32> -> vector<2x8x32xf32>
    "tpu.trace_stop"() : () -> ()
    %184 = vector.shape_cast %183 : vector<2x8x32xf32> to vector<16x32xf32>
    %185 = vector.extract_strided_slice %151 {offsets = [0, 32], sizes = [16, 32], strides = [1, 1]} : vector<16x128xf32> to vector<16x32xf32>
    %186 = vector.shape_cast %185 : vector<16x32xf32> to vector<2x8x32xf32>
    %187 = arith.truncf %186 : vector<2x8x32xf32> to vector<2x8x32xbf16>
    %188 = vector.extract_strided_slice %160 {offsets = [0, 32], sizes = [16, 32], strides = [1, 1]} : vector<16x128xf32> to vector<16x32xf32>
    %189 = vector.shape_cast %188 : vector<16x32xf32> to vector<2x8x32xf32>
    %190 = arith.truncf %189 : vector<2x8x32xf32> to vector<2x8x32xbf16>
    %191 = vector.extract_strided_slice %161 {offsets = [0, 32], sizes = [16, 32], strides = [1, 1]} : vector<16x128xf32> to vector<16x32xf32>
    %192 = vector.shape_cast %191 : vector<16x32xf32> to vector<2x8x32xf32>
    %193 = arith.truncf %192 : vector<2x8x32xf32> to vector<2x8x32xbf16>
    "tpu.trace_start"() <{level = 10 : i32, message = "bqd,bkd->bqk"}> : () -> ()
    %cst_62 = arith.constant dense<0.000000e+00> : vector<2x8x8xf32>
    %194 = tpu.matmul %187, %190, %cst_62 {dimension_numbers = #tpu.dot_dimension_numbers<[2], [2], [1], [1], [0, 0, 0, 1, 1, 1], [0], [0]>} : vector<2x8x32xbf16>, vector<2x8x32xbf16>, vector<2x8x8xf32> -> vector<2x8x8xf32>
    "tpu.trace_stop"() : () -> ()
    %cst_63 = arith.constant dense<0xFF800000> : vector<2x8xf32>
    %195 = vector.multi_reduction <maximumf>, %194, %cst_63 [2] : vector<2x8x8xf32> to vector<2x8xf32>
    %196 = vector.shape_cast %195 : vector<2x8xf32> to vector<2x8x1xf32>
    %197 = vector.broadcast %196 : vector<2x8x1xf32> to vector<2x8x8xf32>
    %198 = arith.subf %194, %197 : vector<2x8x8xf32>
    %199 = math.exp %198 : vector<2x8x8xf32>
    %cst_64 = arith.constant dense<0.000000e+00> : vector<2x8xf32>
    %200 = vector.multi_reduction <add>, %199, %cst_64 [2] : vector<2x8x8xf32> to vector<2x8xf32>
    %201 = vector.shape_cast %200 : vector<2x8xf32> to vector<2x8x1xf32>
    %202 = tpu.reciprocal %201 {approx = true} : vector<2x8x1xf32> -> vector<2x8x1xf32>
    %203 = vector.broadcast %202 : vector<2x8x1xf32> to vector<2x8x8xf32>
    %204 = arith.mulf %199, %203 : vector<2x8x8xf32>
    %205 = arith.truncf %204 : vector<2x8x8xf32> to vector<2x8x8xbf16>
    "tpu.trace_start"() <{level = 10 : i32, message = "bqk,bkd->bqd"}> : () -> ()
    %cst_65 = arith.constant dense<0.000000e+00> : vector<2x8x32xf32>
    %206 = tpu.matmul %205, %193, %cst_65 {dimension_numbers = #tpu.dot_dimension_numbers<[2], [1], [1], [2], [0, 0, 0, 1, 1, 2], [0], [0]>} : vector<2x8x8xbf16>, vector<2x8x32xbf16>, vector<2x8x32xf32> -> vector<2x8x32xf32>
    "tpu.trace_stop"() : () -> ()
    %207 = vector.shape_cast %206 : vector<2x8x32xf32> to vector<16x32xf32>
    %208 = vector.extract_strided_slice %151 {offsets = [0, 64], sizes = [16, 32], strides = [1, 1]} : vector<16x128xf32> to vector<16x32xf32>
    %209 = vector.shape_cast %208 : vector<16x32xf32> to vector<2x8x32xf32>
    %210 = arith.truncf %209 : vector<2x8x32xf32> to vector<2x8x32xbf16>
    %211 = vector.extract_strided_slice %160 {offsets = [0, 64], sizes = [16, 32], strides = [1, 1]} : vector<16x128xf32> to vector<16x32xf32>
    %212 = vector.shape_cast %211 : vector<16x32xf32> to vector<2x8x32xf32>
    %213 = arith.truncf %212 : vector<2x8x32xf32> to vector<2x8x32xbf16>
    %214 = vector.extract_strided_slice %161 {offsets = [0, 64], sizes = [16, 32], strides = [1, 1]} : vector<16x128xf32> to vector<16x32xf32>
    %215 = vector.shape_cast %214 : vector<16x32xf32> to vector<2x8x32xf32>
    %216 = arith.truncf %215 : vector<2x8x32xf32> to vector<2x8x32xbf16>
    "tpu.trace_start"() <{level = 10 : i32, message = "bqd,bkd->bqk"}> : () -> ()
    %cst_66 = arith.constant dense<0.000000e+00> : vector<2x8x8xf32>
    %217 = tpu.matmul %210, %213, %cst_66 {dimension_numbers = #tpu.dot_dimension_numbers<[2], [2], [1], [1], [0, 0, 0, 1, 1, 1], [0], [0]>} : vector<2x8x32xbf16>, vector<2x8x32xbf16>, vector<2x8x8xf32> -> vector<2x8x8xf32>
    "tpu.trace_stop"() : () -> ()
    %cst_67 = arith.constant dense<0xFF800000> : vector<2x8xf32>
    %218 = vector.multi_reduction <maximumf>, %217, %cst_67 [2] : vector<2x8x8xf32> to vector<2x8xf32>
    %219 = vector.shape_cast %218 : vector<2x8xf32> to vector<2x8x1xf32>
    %220 = vector.broadcast %219 : vector<2x8x1xf32> to vector<2x8x8xf32>
    %221 = arith.subf %217, %220 : vector<2x8x8xf32>
    %222 = math.exp %221 : vector<2x8x8xf32>
    %cst_68 = arith.constant dense<0.000000e+00> : vector<2x8xf32>
    %223 = vector.multi_reduction <add>, %222, %cst_68 [2] : vector<2x8x8xf32> to vector<2x8xf32>
    %224 = vector.shape_cast %223 : vector<2x8xf32> to vector<2x8x1xf32>
    %225 = tpu.reciprocal %224 {approx = true} : vector<2x8x1xf32> -> vector<2x8x1xf32>
    %226 = vector.broadcast %225 : vector<2x8x1xf32> to vector<2x8x8xf32>
    %227 = arith.mulf %222, %226 : vector<2x8x8xf32>
    %228 = arith.truncf %227 : vector<2x8x8xf32> to vector<2x8x8xbf16>
    "tpu.trace_start"() <{level = 10 : i32, message = "bqk,bkd->bqd"}> : () -> ()
    %cst_69 = arith.constant dense<0.000000e+00> : vector<2x8x32xf32>
    %229 = tpu.matmul %228, %216, %cst_69 {dimension_numbers = #tpu.dot_dimension_numbers<[2], [1], [1], [2], [0, 0, 0, 1, 1, 2], [0], [0]>} : vector<2x8x8xbf16>, vector<2x8x32xbf16>, vector<2x8x32xf32> -> vector<2x8x32xf32>
    "tpu.trace_stop"() : () -> ()
    %230 = vector.shape_cast %229 : vector<2x8x32xf32> to vector<16x32xf32>
    %231 = vector.extract_strided_slice %151 {offsets = [0, 96], sizes = [16, 32], strides = [1, 1]} : vector<16x128xf32> to vector<16x32xf32>
    %232 = vector.shape_cast %231 : vector<16x32xf32> to vector<2x8x32xf32>
    %233 = arith.truncf %232 : vector<2x8x32xf32> to vector<2x8x32xbf16>
    %234 = vector.extract_strided_slice %160 {offsets = [0, 96], sizes = [16, 32], strides = [1, 1]} : vector<16x128xf32> to vector<16x32xf32>
    %235 = vector.shape_cast %234 : vector<16x32xf32> to vector<2x8x32xf32>
    %236 = arith.truncf %235 : vector<2x8x32xf32> to vector<2x8x32xbf16>
    %237 = vector.extract_strided_slice %161 {offsets = [0, 96], sizes = [16, 32], strides = [1, 1]} : vector<16x128xf32> to vector<16x32xf32>
    %238 = vector.shape_cast %237 : vector<16x32xf32> to vector<2x8x32xf32>
    %239 = arith.truncf %238 : vector<2x8x32xf32> to vector<2x8x32xbf16>
    "tpu.trace_start"() <{level = 10 : i32, message = "bqd,bkd->bqk"}> : () -> ()
    %cst_70 = arith.constant dense<0.000000e+00> : vector<2x8x8xf32>
    %240 = tpu.matmul %233, %236, %cst_70 {dimension_numbers = #tpu.dot_dimension_numbers<[2], [2], [1], [1], [0, 0, 0, 1, 1, 1], [0], [0]>} : vector<2x8x32xbf16>, vector<2x8x32xbf16>, vector<2x8x8xf32> -> vector<2x8x8xf32>
    "tpu.trace_stop"() : () -> ()
    %cst_71 = arith.constant dense<0xFF800000> : vector<2x8xf32>
    %241 = vector.multi_reduction <maximumf>, %240, %cst_71 [2] : vector<2x8x8xf32> to vector<2x8xf32>
    %242 = vector.shape_cast %241 : vector<2x8xf32> to vector<2x8x1xf32>
    %243 = vector.broadcast %242 : vector<2x8x1xf32> to vector<2x8x8xf32>
    %244 = arith.subf %240, %243 : vector<2x8x8xf32>
    %245 = math.exp %244 : vector<2x8x8xf32>
    %cst_72 = arith.constant dense<0.000000e+00> : vector<2x8xf32>
    %246 = vector.multi_reduction <add>, %245, %cst_72 [2] : vector<2x8x8xf32> to vector<2x8xf32>
    %247 = vector.shape_cast %246 : vector<2x8xf32> to vector<2x8x1xf32>
    %248 = tpu.reciprocal %247 {approx = true} : vector<2x8x1xf32> -> vector<2x8x1xf32>
    %249 = vector.broadcast %248 : vector<2x8x1xf32> to vector<2x8x8xf32>
    %250 = arith.mulf %245, %249 : vector<2x8x8xf32>
    %251 = arith.truncf %250 : vector<2x8x8xf32> to vector<2x8x8xbf16>
    "tpu.trace_start"() <{level = 10 : i32, message = "bqk,bkd->bqd"}> : () -> ()
    %cst_73 = arith.constant dense<0.000000e+00> : vector<2x8x32xf32>
    %252 = tpu.matmul %251, %239, %cst_73 {dimension_numbers = #tpu.dot_dimension_numbers<[2], [1], [1], [2], [0, 0, 0, 1, 1, 2], [0], [0]>} : vector<2x8x8xbf16>, vector<2x8x32xbf16>, vector<2x8x32xf32> -> vector<2x8x32xf32>
    "tpu.trace_stop"() : () -> ()
    %253 = vector.shape_cast %252 : vector<2x8x32xf32> to vector<16x32xf32>
    %254 = tpu.concatenate %184, %207, %230, %253 in 1 : vector<16x32xf32>, vector<16x32xf32>, vector<16x32xf32>, vector<16x32xf32> -> vector<16x128xf32>
    %255 = arith.truncf %254 : vector<16x128xf32> to vector<16x128xbf16>
    %c0_74 = arith.constant 0 : index
    %c0_75 = arith.constant 0 : index
    %c0_76 = arith.constant 0 : index
    %256 = vector.load %arg13[%c0_74, %c0_75, %c0_76] : memref<1x128x128xbf16, #tpu.memory_space<vmem>>, vector<1x128x128xbf16>
    %257 = vector.shape_cast %256 : vector<1x128x128xbf16> to vector<128x128xbf16>
    %cst_77 = arith.constant dense<0.000000e+00> : vector<16x128xf32>
    %258 = tpu.matmul %255, %257, %cst_77 {dimension_numbers = #tpu.dot_dimension_numbers<[1], [0], [0], [1], [0, 0, 1, 1], [], []>} : vector<16x128xbf16>, vector<128x128xbf16>, vector<16x128xf32> -> vector<16x128xf32>
    %c0_78 = arith.constant 0 : index
    %c0_79 = arith.constant 0 : index
    %c0_80 = arith.constant 0 : index
    %259 = vector.load %arg14[%c0_78, %c0_79, %c0_80] : memref<1x1x128xf32, #tpu.memory_space<vmem>>, vector<1x1x128xf32>
    %260 = vector.shape_cast %259 : vector<1x1x128xf32> to vector<1x128xf32>
    %261 = vector.broadcast %260 : vector<1x128xf32> to vector<16x128xf32>
    %262 = arith.addf %258, %261 : vector<16x128xf32>
    %263 = arith.addf %143, %262 : vector<16x128xf32>
    %c0_81 = arith.constant 0 : index
    %c0_82 = arith.constant 0 : index
    %c0_83 = arith.constant 0 : index
    %264 = vector.load %arg15[%c0_81, %c0_82, %c0_83] : memref<1x1x128xf32, #tpu.memory_space<vmem>>, vector<1x1x128xf32>
    %265 = vector.shape_cast %264 : vector<1x1x128xf32> to vector<1x128xf32>
    %c0_84 = arith.constant 0 : index
    %c0_85 = arith.constant 0 : index
    %c0_86 = arith.constant 0 : index
    %266 = vector.load %arg16[%c0_84, %c0_85, %c0_86] : memref<1x1x128xf32, #tpu.memory_space<vmem>>, vector<1x1x128xf32>
    %267 = vector.shape_cast %266 : vector<1x1x128xf32> to vector<1x128xf32>
    %cst_87 = arith.constant dense<0.000000e+00> : vector<16xf32>
    %268 = vector.multi_reduction <add>, %263, %cst_87 [1] : vector<16x128xf32> to vector<16xf32>
    %269 = vector.shape_cast %268 : vector<16xf32> to vector<16x1xf32>
    %cst_88 = arith.constant 1.280000e+02 : f32
    %270 = vector.broadcast %cst_88 : f32 to vector<16x1xf32>
    %271 = arith.divf %269, %270 : vector<16x1xf32>
    %272 = vector.broadcast %271 : vector<16x1xf32> to vector<16x128xf32>
    %273 = arith.subf %263, %272 : vector<16x128xf32>
    %274 = arith.mulf %273, %273 : vector<16x128xf32>
    %cst_89 = arith.constant dense<0.000000e+00> : vector<16xf32>
    %275 = vector.multi_reduction <add>, %274, %cst_89 [1] : vector<16x128xf32> to vector<16xf32>
    %276 = vector.shape_cast %275 : vector<16xf32> to vector<16x1xf32>
    %cst_90 = arith.constant 1.280000e+02 : f32
    %277 = vector.broadcast %cst_90 : f32 to vector<16x1xf32>
    %278 = arith.divf %276, %277 : vector<16x1xf32>
    %279 = vector.broadcast %271 : vector<16x1xf32> to vector<16x128xf32>
    %280 = arith.subf %263, %279 : vector<16x128xf32>
    %cst_91 = arith.constant 9.99999974E-6 : f32
    %281 = vector.broadcast %cst_91 : f32 to vector<16x1xf32>
    %282 = arith.addf %278, %281 : vector<16x1xf32>
    %283 = math.rsqrt %282 : vector<16x1xf32>
    %284 = vector.broadcast %283 : vector<16x1xf32> to vector<16x128xf32>
    %285 = arith.mulf %280, %284 : vector<16x128xf32>
    %286 = vector.broadcast %265 : vector<1x128xf32> to vector<16x128xf32>
    %287 = arith.mulf %285, %286 : vector<16x128xf32>
    %288 = vector.broadcast %267 : vector<1x128xf32> to vector<16x128xf32>
    %289 = arith.addf %287, %288 : vector<16x128xf32>
    %290 = arith.truncf %289 : vector<16x128xf32> to vector<16x128xbf16>
    %c0_92 = arith.constant 0 : index
    %c0_93 = arith.constant 0 : index
    %c0_94 = arith.constant 0 : index
    %291 = vector.load %arg17[%c0_92, %c0_93, %c0_94] : memref<1x128x256xbf16, #tpu.memory_space<vmem>>, vector<1x128x256xbf16>
    %292 = vector.shape_cast %291 : vector<1x128x256xbf16> to vector<128x256xbf16>
    %cst_95 = arith.constant dense<0.000000e+00> : vector<16x256xf32>
    %293 = tpu.matmul %290, %292, %cst_95 {dimension_numbers = #tpu.dot_dimension_numbers<[1], [0], [0], [1], [0, 0, 1, 1], [], []>} : vector<16x128xbf16>, vector<128x256xbf16>, vector<16x256xf32> -> vector<16x256xf32>
    %c0_96 = arith.constant 0 : index
    %c0_97 = arith.constant 0 : index
    %c0_98 = arith.constant 0 : index
    %294 = vector.load %arg18[%c0_96, %c0_97, %c0_98] : memref<1x1x256xf32, #tpu.memory_space<vmem>>, vector<1x1x256xf32>
    %295 = vector.shape_cast %294 : vector<1x1x256xf32> to vector<1x256xf32>
    %296 = vector.broadcast %295 : vector<1x256xf32> to vector<16x256xf32>
    %297 = arith.addf %293, %296 : vector<16x256xf32>
    %cst_99 = arith.constant 0.000000e+00 : f32
    %298 = vector.broadcast %cst_99 : f32 to vector<16x256xf32>
    %299 = arith.maximumf %297, %298 : vector<16x256xf32>
    %300 = arith.truncf %299 : vector<16x256xf32> to vector<16x256xbf16>
    %c0_100 = arith.constant 0 : index
    %c0_101 = arith.constant 0 : index
    %c0_102 = arith.constant 0 : index
    %301 = vector.load %arg19[%c0_100, %c0_101, %c0_102] : memref<1x256x128xbf16, #tpu.memory_space<vmem>>, vector<1x256x128xbf16>
    %302 = vector.shape_cast %301 : vector<1x256x128xbf16> to vector<256x128xbf16>
    %cst_103 = arith.constant dense<0.000000e+00> : vector<16x128xf32>
    %303 = tpu.matmul %300, %302, %cst_103 {dimension_numbers = #tpu.dot_dimension_numbers<[1], [0], [0], [1], [0, 0, 1, 1], [], []>} : vector<16x256xbf16>, vector<256x128xbf16>, vector<16x128xf32> -> vector<16x128xf32>
    %c0_104 = arith.constant 0 : index
    %c0_105 = arith.constant 0 : index
    %c0_106 = arith.constant 0 : index
    %304 = vector.load %arg20[%c0_104, %c0_105, %c0_106] : memref<1x1x128xf32, #tpu.memory_space<vmem>>, vector<1x1x128xf32>
    %305 = vector.shape_cast %304 : vector<1x1x128xf32> to vector<1x128xf32>
    %306 = vector.broadcast %305 : vector<1x128xf32> to vector<16x128xf32>
    %307 = arith.addf %303, %306 : vector<16x128xf32>
    %308 = arith.addf %289, %307 : vector<16x128xf32>
    %c0_107 = arith.constant 0 : index
    %c0_108 = arith.constant 0 : index
    %c0_109 = arith.constant 0 : index
    %309 = vector.load %arg21[%c0_107, %c0_108, %c0_109] : memref<1x1x128xf32, #tpu.memory_space<vmem>>, vector<1x1x128xf32>
    %310 = vector.shape_cast %309 : vector<1x1x128xf32> to vector<1x128xf32>
    %c0_110 = arith.constant 0 : index
    %c0_111 = arith.constant 0 : index
    %c0_112 = arith.constant 0 : index
    %311 = vector.load %arg22[%c0_110, %c0_111, %c0_112] : memref<1x1x128xf32, #tpu.memory_space<vmem>>, vector<1x1x128xf32>
    %312 = vector.shape_cast %311 : vector<1x1x128xf32> to vector<1x128xf32>
    %cst_113 = arith.constant dense<0.000000e+00> : vector<16xf32>
    %313 = vector.multi_reduction <add>, %308, %cst_113 [1] : vector<16x128xf32> to vector<16xf32>
    %314 = vector.shape_cast %313 : vector<16xf32> to vector<16x1xf32>
    %cst_114 = arith.constant 1.280000e+02 : f32
    %315 = vector.broadcast %cst_114 : f32 to vector<16x1xf32>
    %316 = arith.divf %314, %315 : vector<16x1xf32>
    %317 = vector.broadcast %316 : vector<16x1xf32> to vector<16x128xf32>
    %318 = arith.subf %308, %317 : vector<16x128xf32>
    %319 = arith.mulf %318, %318 : vector<16x128xf32>
    %cst_115 = arith.constant dense<0.000000e+00> : vector<16xf32>
    %320 = vector.multi_reduction <add>, %319, %cst_115 [1] : vector<16x128xf32> to vector<16xf32>
    %321 = vector.shape_cast %320 : vector<16xf32> to vector<16x1xf32>
    %cst_116 = arith.constant 1.280000e+02 : f32
    %322 = vector.broadcast %cst_116 : f32 to vector<16x1xf32>
    %323 = arith.divf %321, %322 : vector<16x1xf32>
    %324 = vector.broadcast %316 : vector<16x1xf32> to vector<16x128xf32>
    %325 = arith.subf %308, %324 : vector<16x128xf32>
    %cst_117 = arith.constant 9.99999974E-6 : f32
    %326 = vector.broadcast %cst_117 : f32 to vector<16x1xf32>
    %327 = arith.addf %323, %326 : vector<16x1xf32>
    %328 = math.rsqrt %327 : vector<16x1xf32>
    %329 = vector.broadcast %328 : vector<16x1xf32> to vector<16x128xf32>
    %330 = arith.mulf %325, %329 : vector<16x128xf32>
    %331 = vector.broadcast %310 : vector<1x128xf32> to vector<16x128xf32>
    %332 = arith.mulf %330, %331 : vector<16x128xf32>
    %333 = vector.broadcast %312 : vector<1x128xf32> to vector<16x128xf32>
    %334 = arith.addf %332, %333 : vector<16x128xf32>
    %c0_118 = arith.constant 0 : index
    %c0_119 = arith.constant 0 : index
    %335 = vector.load %arg26[%c0_118, %c0_119] : memref<16x128xf32, #tpu.memory_space<vmem>>, vector<16x128xf32>
    tpu.vector_store %arg26[%c0_118, %c0_119], %334 {strides = array<i32>} : memref<16x128xf32, #tpu.memory_space<vmem>>, vector<16x128xf32>,
    %c1_i32 = arith.constant 1 : i32
    %336 = arith.cmpi eq, %arg0, %c1_i32 : i32
    %337 = arith.extui %336 : i1 to i32
    %c0_i32_120 = arith.constant 0 : i32
    %338 = arith.cmpi ne, %337, %c0_i32_120 : i32
    scf.if %338 {
      %339 = arith.truncf %334 : vector<16x128xf32> to vector<16x128xbf16>
      %c0_121 = arith.constant 0 : index
      %c0_122 = arith.constant 0 : index
      %340 = vector.load %arg23[%c0_121, %c0_122] : memref<128x512xbf16, #tpu.memory_space<vmem>>, vector<128x512xbf16>
      %cst_123 = arith.constant dense<0.000000e+00> : vector<16x512xf32>
      %341 = tpu.matmul %339, %340, %cst_123 {dimension_numbers = #tpu.dot_dimension_numbers<[1], [0], [0], [1], [0, 0, 1, 1], [], []>} : vector<16x128xbf16>, vector<128x512xbf16>, vector<16x512xf32> -> vector<16x512xf32>
      %c0_124 = arith.constant 0 : index
      %c0_125 = arith.constant 0 : index
      %342 = vector.load %arg24[%c0_124, %c0_125] : memref<1x512xf32, #tpu.memory_space<vmem>>, vector<1x512xf32>
      %343 = vector.broadcast %342 : vector<1x512xf32> to vector<16x512xf32>
      %344 = arith.addf %341, %343 : vector<16x512xf32>
      %c0_126 = arith.constant 0 : index
      %c0_127 = arith.constant 0 : index
      %345 = vector.load %arg25[%c0_126, %c0_127] : memref<16x512xf32, #tpu.memory_space<vmem>>, vector<16x512xf32>
      tpu.vector_store %arg25[%c0_126, %c0_127], %344 {strides = array<i32>} : memref<16x512xf32, #tpu.memory_space<vmem>>, vector<16x512xf32>,
    } else {
    }
    return
  }
  func.func @transform_0(%arg0: i32) -> (i32, i32) {
    %c0_i32 = arith.constant 0 : i32
    %c0_i32_0 = arith.constant 0 : i32
    %c0_i32_1 = arith.constant 0 : i32
    return %c0_i32, %c0_i32_0 : i32, i32
  }
  func.func @transform_1(%arg0: i32) -> (i32, i32) {
    %c0_i32 = arith.constant 0 : i32
    %c0_i32_0 = arith.constant 0 : i32
    %c0_i32_1 = arith.constant 0 : i32
    return %c0_i32, %c0_i32_0 : i32, i32
  }
  func.func @transform_2(%arg0: i32) -> (i32, i32, i32) {
    %c0_i32 = arith.constant 0 : i32
    %c0_i32_0 = arith.constant 0 : i32
    %c0_i32_1 = arith.constant 0 : i32
    return %arg0, %c0_i32, %c0_i32_0 : i32, i32, i32
  }
  func.func @transform_3(%arg0: i32) -> (i32, i32, i32) {
    %c0_i32 = arith.constant 0 : i32
    %c0_i32_0 = arith.constant 0 : i32
    %c0_i32_1 = arith.constant 0 : i32
    return %arg0, %c0_i32, %c0_i32_0 : i32, i32, i32
  }
  func.func @transform_4(%arg0: i32) -> (i32, i32, i32) {
    %c0_i32 = arith.constant 0 : i32
    %c0_i32_0 = arith.constant 0 : i32
    %c0_i32_1 = arith.constant 0 : i32
    return %arg0, %c0_i32, %c0_i32_0 : i32, i32, i32
  }
  func.func @transform_5(%arg0: i32) -> (i32, i32, i32) {
    %c0_i32 = arith.constant 0 : i32
    %c0_i32_0 = arith.constant 0 : i32
    %c0_i32_1 = arith.constant 0 : i32
    return %arg0, %c0_i32, %c0_i32_0 : i32, i32, i32
  }
  func.func @transform_6(%arg0: i32) -> (i32, i32, i32) {
    %c0_i32 = arith.constant 0 : i32
    %c0_i32_0 = arith.constant 0 : i32
    %c0_i32_1 = arith.constant 0 : i32
    return %arg0, %c0_i32, %c0_i32_0 : i32, i32, i32
  }
  func.func @transform_7(%arg0: i32) -> (i32, i32, i32) {
    %c0_i32 = arith.constant 0 : i32
    %c0_i32_0 = arith.constant 0 : i32
    %c0_i32_1 = arith.constant 0 : i32
    return %arg0, %c0_i32, %c0_i32_0 : i32, i32, i32
  }
  func.func @transform_8(%arg0: i32) -> (i32, i32, i32) {
    %c0_i32 = arith.constant 0 : i32
    %c0_i32_0 = arith.constant 0 : i32
    %c0_i32_1 = arith.constant 0 : i32
    return %arg0, %c0_i32, %c0_i32_0 : i32, i32, i32
  }
  func.func @transform_9(%arg0: i32) -> (i32, i32, i32) {
    %c0_i32 = arith.constant 0 : i32
    %c0_i32_0 = arith.constant 0 : i32
    %c0_i32_1 = arith.constant 0 : i32
    return %arg0, %c0_i32, %c0_i32_0 : i32, i32, i32
  }
  func.func @transform_10(%arg0: i32) -> (i32, i32, i32) {
    %c0_i32 = arith.constant 0 : i32
    %c0_i32_0 = arith.constant 0 : i32
    %c0_i32_1 = arith.constant 0 : i32
    return %arg0, %c0_i32, %c0_i32_0 : i32, i32, i32
  }
  func.func @transform_11(%arg0: i32) -> (i32, i32, i32) {
    %c0_i32 = arith.constant 0 : i32
    %c0_i32_0 = arith.constant 0 : i32
    %c0_i32_1 = arith.constant 0 : i32
    return %arg0, %c0_i32, %c0_i32_0 : i32, i32, i32
  }
  func.func @transform_12(%arg0: i32) -> (i32, i32, i32) {
    %c0_i32 = arith.constant 0 : i32
    %c0_i32_0 = arith.constant 0 : i32
    %c0_i32_1 = arith.constant 0 : i32
    return %arg0, %c0_i32, %c0_i32_0 : i32, i32, i32
  }
  func.func @transform_13(%arg0: i32) -> (i32, i32, i32) {
    %c0_i32 = arith.constant 0 : i32
    %c0_i32_0 = arith.constant 0 : i32
    %c0_i32_1 = arith.constant 0 : i32
    return %arg0, %c0_i32, %c0_i32_0 : i32, i32, i32
  }
  func.func @transform_14(%arg0: i32) -> (i32, i32, i32) {
    %c0_i32 = arith.constant 0 : i32
    %c0_i32_0 = arith.constant 0 : i32
    %c0_i32_1 = arith.constant 0 : i32
    return %arg0, %c0_i32, %c0_i32_0 : i32, i32, i32
  }
  func.func @transform_15(%arg0: i32) -> (i32, i32, i32) {
    %c0_i32 = arith.constant 0 : i32
    %c0_i32_0 = arith.constant 0 : i32
    %c0_i32_1 = arith.constant 0 : i32
    return %arg0, %c0_i32, %c0_i32_0 : i32, i32, i32
  }
  func.func @transform_16(%arg0: i32) -> (i32, i32, i32) {
    %c0_i32 = arith.constant 0 : i32
    %c0_i32_0 = arith.constant 0 : i32
    %c0_i32_1 = arith.constant 0 : i32
    return %arg0, %c0_i32, %c0_i32_0 : i32, i32, i32
  }
  func.func @transform_17(%arg0: i32) -> (i32, i32, i32) {
    %c0_i32 = arith.constant 0 : i32
    %c0_i32_0 = arith.constant 0 : i32
    %c0_i32_1 = arith.constant 0 : i32
    return %arg0, %c0_i32, %c0_i32_0 : i32, i32, i32
  }
  func.func @transform_18(%arg0: i32) -> (i32, i32, i32) {
    %c0_i32 = arith.constant 0 : i32
    %c0_i32_0 = arith.constant 0 : i32
    %c0_i32_1 = arith.constant 0 : i32
    return %arg0, %c0_i32, %c0_i32_0 : i32, i32, i32
  }
  func.func @transform_19(%arg0: i32) -> (i32, i32, i32) {
    %c0_i32 = arith.constant 0 : i32
    %c0_i32_0 = arith.constant 0 : i32
    %c0_i32_1 = arith.constant 0 : i32
    return %arg0, %c0_i32, %c0_i32_0 : i32, i32, i32
  }
  func.func @transform_20(%arg0: i32) -> (i32, i32, i32) {
    %c0_i32 = arith.constant 0 : i32
    %c0_i32_0 = arith.constant 0 : i32
    %c0_i32_1 = arith.constant 0 : i32
    return %arg0, %c0_i32, %c0_i32_0 : i32, i32, i32
  }
  func.func @transform_21(%arg0: i32) -> (i32, i32, i32) {
    %c0_i32 = arith.constant 0 : i32
    %c0_i32_0 = arith.constant 0 : i32
    %c0_i32_1 = arith.constant 0 : i32
    return %arg0, %c0_i32, %c0_i32_0 : i32, i32, i32
  }
  func.func @transform_22(%arg0: i32) -> (i32, i32) {
    %c0_i32 = arith.constant 0 : i32
    %c0_i32_0 = arith.constant 0 : i32
    %c0_i32_1 = arith.constant 0 : i32
    return %c0_i32, %c0_i32_0 : i32, i32
  }
  func.func @transform_23(%arg0: i32) -> (i32, i32) {
    %c0_i32 = arith.constant 0 : i32
    %c0_i32_0 = arith.constant 0 : i32
    %c0_i32_1 = arith.constant 0 : i32
    return %c0_i32, %c0_i32_0 : i32, i32
  }
  func.func @transform_24(%arg0: i32) -> (i32, i32) {
    %c0_i32 = arith.constant 0 : i32
    %c0_i32_0 = arith.constant 0 : i32
    %c0_i32_1 = arith.constant 0 : i32
    return %c0_i32, %c0_i32_0 : i32, i32
  }
}

</mosaic_0001>

<llo_original>
// kernel: transformer_forward.2
$region0: #{transformer_forward.2}
  #allocation0 [shape = 'u32[]', space=smem, size = 0x4, offset = 0x4, fixed_abs, tag = 'smem constant byte address 0x4 - core index']
  #allocation1 [shape = 'u32[144,128]{1,0:T(1,128)}', space=vmem, size = 0x12000, scoped, tag = 'internal scratch']
  #allocation2 [shape = 'f32[16,128]{1,0:T(8,128)}', space=vmem, size = 0x2000, scoped, tag = 'scratch operand']
  %s0 = inlined_call_operand.vmem [shape: f32[16,128], index: 0, kind: input, shape index: {}]
  %s1 = inlined_call_operand.vmem [shape: bf16[2,128,384], index: 1, kind: input, shape index: {}]
  %s2 = inlined_call_operand.hbm [shape: f32[2,1,384], index: 2, kind: input, shape index: {}]
  %s3 = inlined_call_operand.hbm [shape: bf16[2,128,128], index: 3, kind: input, shape index: {}]
  %s4 = inlined_call_operand.hbm [shape: f32[2,1,128], index: 4, kind: input, shape index: {}]
  %s5 = inlined_call_operand.hbm [shape: f32[2,1,128], index: 5, kind: input, shape index: {}]
  %s6 = inlined_call_operand.hbm [shape: f32[2,1,128], index: 6, kind: input, shape index: {}]
  %s7 = inlined_call_operand.hbm [shape: bf16[2,128,256], index: 7, kind: input, shape index: {}]
  %s8 = inlined_call_operand.hbm [shape: f32[2,1,256], index: 8, kind: input, shape index: {}]
  %s9 = inlined_call_operand.hbm [shape: bf16[2,256,128], index: 9, kind: input, shape index: {}]
  %s10 = inlined_call_operand.hbm [shape: f32[2,1,128], index: 10, kind: input, shape index: {}]
  %s11 = inlined_call_operand.hbm [shape: f32[2,1,128], index: 11, kind: input, shape index: {}]
  %s12 = inlined_call_operand.hbm [shape: f32[2,1,128], index: 12, kind: input, shape index: {}]
  %s13 = inlined_call_operand.vmem [shape: f32[16,128], index: 13, kind: output, shape index: {}]
  %s14 = sld [smem:[#allocation0]]
  $region137: #{transformer_forward.2} parent=0
    _
  %s16 = ssub.s32 1, %s14
  %s17 = scalar_select 0, %s16, %s14
  $region1: #{transformer_forward.2} parent=0
    #allocation3 [shape = 'u8[3072]{0}', space=vmem, size = 0xc00, scoped, tag = 'input window, operand 2']
    #allocation4 [shape = 's32[2]{0}', space=sflag, size = 0x8, scoped, tag = 'scoped memory for transformer_forward.2']
    #allocation5 [shape = 'u8[65536]{0}', space=vmem, size = 0x10000, scoped, tag = 'input window, operand 3']
    #allocation6 [shape = 's32[2]{0}', space=sflag, size = 0x8, scoped, tag = 'scoped memory for transformer_forward.2']
    #allocation7 [shape = 'u8[1024]{0}', space=vmem, size = 0x400, scoped, tag = 'input window, operand 4']
    #allocation8 [shape = 'u8[1024]{0}', space=vmem, size = 0x400, scoped, tag = 'input window, operand 5']
    #allocation9 [shape = 's32[2]{0}', space=sflag, size = 0x8, scoped, tag = 'scoped memory for transformer_forward.2']
    #allocation10 [shape = 'u8[1024]{0}', space=vmem, size = 0x400, scoped, tag = 'input window, operand 6']
    #allocation11 [shape = 'u8[131072]{0}', space=vmem, size = 0x20000, scoped, tag = 'input window, operand 7']
    #allocation12 [shape = 's32[2]{0}', space=sflag, size = 0x8, scoped, tag = 'scoped memory for transformer_forward.2']
    #allocation13 [shape = 'u8[2048]{0}', space=vmem, size = 0x800, scoped, tag = 'input window, operand 8']
    #allocation14 [shape = 'u8[131072]{0}', space=vmem, size = 0x20000, scoped, tag = 'input window, operand 9']
    #allocation15 [shape = 's32[2]{0}', space=sflag, size = 0x8, scoped, tag = 'scoped memory for transformer_forward.2']
    #allocation16 [shape = 'u8[1024]{0}', space=vmem, size = 0x400, scoped, tag = 'input window, operand 10']
    #allocation17 [shape = 'u8[1024]{0}', space=vmem, size = 0x400, scoped, tag = 'input window, operand 11']
    #allocation18 [shape = 's32[2]{0}', space=sflag, size = 0x8, scoped, tag = 'scoped memory for transformer_forward.2']
    #allocation19 [shape = 'u8[1024]{0}', space=vmem, size = 0x400, scoped, tag = 'input window, operand 12']
    %18 = vsyncpa [#allocation4], 0
    %s19 = scalar_lea.sflag [#allocation4], 1
    %20 = vsyncpa %s19, 0
    %21 = vsyncpa [#allocation6], 0
    %s22 = scalar_lea.sflag [#allocation6], 1
    %23 = vsyncpa %s22, 0
    %24 = vsyncpa [#allocation9], 0
    %s25 = scalar_lea.sflag [#allocation9], 1
    %26 = vsyncpa %s25, 0
    %27 = vsyncpa [#allocation12], 0
    %s28 = scalar_lea.sflag [#allocation12], 1
    %29 = vsyncpa %s28, 0
    %30 = vsyncpa [#allocation15], 0
    %s31 = scalar_lea.sflag [#allocation15], 1
    %32 = vsyncpa %s31, 0
    %33 = vsyncpa [#allocation18], 0
    %s34 = scalar_lea.sflag [#allocation18], 1
    %35 = vsyncpa %s34, 0
    loop: start=0, step=1, limit=4
    $region2: #{transformer_forward.2} parent=1 // loop_pre_header
      _
    $region3: #{transformer_forward.2} parent=1 // loop_header
      %s37 = sphi 0, %s41
      %p38 = scmp.ge.s32.totalorder %s37, 4
      %s45 = sphi 0, %s45
      %s47 = sphi 0, %s45
      %s48 = sphi 0, %s47
      %s62 = sphi 0, %s48
      %s68 = sphi 0, %s70
      %s71 = sphi 0, %s68
      %s72 = sphi 0, %s71
      %s88 = sphi 0, %s72
      %s94 = sphi 0, %s96
      %s97 = sphi 0, %s94
      %s98 = sphi 0, %s97
      %s114 = sphi 0, %s98
      %s120 = sphi 0, %s122
      %s123 = sphi 0, %s120
      %s124 = sphi 0, %s123
      %s140 = sphi 0, %s124
      %s146 = sphi 0, %s148
      %s149 = sphi 0, %s146
      %s150 = sphi 0, %s149
      %s166 = sphi 0, %s150
      %s172 = sphi 0, %s174
      %s175 = sphi 0, %s172
      %s176 = sphi 0, %s175
      %s192 = sphi 0, %s176
      %s198 = sphi 0, %s200
      %s201 = sphi 0, %s198
      %s202 = sphi 0, %s201
      %s218 = sphi 0, %s202
      %s224 = sphi 0, %s226
      %s227 = sphi 0, %s224
      %s228 = sphi 0, %s227
      %s244 = sphi 0, %s228
      %s250 = sphi 0, %s252
      %s253 = sphi 0, %s250
      %s254 = sphi 0, %s253
      %s270 = sphi 0, %s254
      %s276 = sphi 0, %s278
      %s279 = sphi 0, %s276
      %s280 = sphi 0, %s279
      %s296 = sphi 0, %s280
      %s302 = sphi 0, %s304
      %s305 = sphi 0, %s302
      %s306 = sphi 0, %s305
      %s322 = sphi 0, %s306
      %s328 = sphi 0, %s330
      %s331 = sphi 0, %s328
      %s332 = sphi 0, %s331
      %s348 = sphi 0, %s332
      %s354 = sphi 0, %s356
      %s357 = sphi 0, %s354
      %s358 = sphi 0, %s357
      %s374 = sphi 0, %s358
      %s378 = sphi 0, %s378
      %s380 = sphi 0, %s378
      %s381 = sphi 0, %s380
      %s395 = sphi 0, %s381
    $region4: #{transformer_forward.2} parent=1 // loop_header_branch
      %40 = sbr.rel (%p38) target = $region8
    $region5: #{transformer_forward.2} parent=1 // loop_body
      %s42 = ssub.s32 %s37, 1
      %s43 = ssub.s32 %s37, 2
      %s44 = sadd.s32 %s37, 1
      %s46 = sadd.s32 %s45, 1
      %p49 = scmp.eq.s32.totalorder %s37, 1
      %p50 = scmp.ne.s32.totalorder %s45, %s47
      %p51 = scmp.eq.s32.totalorder %s37, 0
      %p52 = por %p50, %p51
      %p53 = scmp.ne.s32.totalorder %s45, %s47
      %p54 = scmp.eq.s32.totalorder %s42, 1
      %p55 = por %p53, %p54
      %p56 = scmp.ne.s32.totalorder %s47, %s48
      %p57 = scmp.eq.s32.totalorder %s42, 0
      %p58 = por %p56, %p57
      %p59 = scmp.ne.s32.totalorder %s47, %s48
      %p60 = scmp.eq.s32.totalorder %s43, 1
      %p61 = por %p59, %p60
      %p63 = scmp.ne.s32.totalorder %s48, %s62
      %p64 = scmp.eq.s32.totalorder %s43, 0
      %p65 = por %p63, %p64
      %s66 = ssub.s32 %s37, %s44
      %p67 = scmp.eq.s32.totalorder %s66, 0
      %s69 = sadd.s32 %s68, 1
      %s70 = scalar_select %p67, %s68, %s69
      %p73 = pneg %p67
      %p74 = scmp.eq.s32.totalorder %s37, 1
      %p75 = por %p73, %p74
      %p76 = scmp.ne.s32.totalorder %s68, %s71
      %p77 = scmp.eq.s32.totalorder %s37, 0
      %p78 = por %p76, %p77
      %p79 = scmp.ne.s32.totalorder %s68, %s71
      %p80 = scmp.eq.s32.totalorder %s42, 1
      %p81 = por %p79, %p80
      %p82 = scmp.ne.s32.totalorder %s71, %s72
      %p83 = scmp.eq.s32.totalorder %s42, 0
      %p84 = por %p82, %p83
      %p85 = scmp.ne.s32.totalorder %s71, %s72
      %p86 = scmp.eq.s32.totalorder %s43, 1
      %p87 = por %p85, %p86
      %p89 = scmp.ne.s32.totalorder %s72, %s88
      %p90 = scmp.eq.s32.totalorder %s43, 0
      %p91 = por %p89, %p90
      %s92 = ssub.s32 %s37, %s44
      %p93 = scmp.eq.s32.totalorder %s92, 0
      %s95 = sadd.s32 %s94, 1
      %s96 = scalar_select %p93, %s94, %s95
      %p99 = pneg %p93
      %p100 = scmp.eq.s32.totalorder %s37, 1
      %p101 = por %p99, %p100
      %p102 = scmp.ne.s32.totalorder %s94, %s97
      %p103 = scmp.eq.s32.totalorder %s37, 0
      %p104 = por %p102, %p103
      %p105 = scmp.ne.s32.totalorder %s94, %s97
      %p106 = scmp.eq.s32.totalorder %s42, 1
      %p107 = por %p105, %p106
      %p108 = scmp.ne.s32.totalorder %s97, %s98
      %p109 = scmp.eq.s32.totalorder %s42, 0
      %p110 = por %p108, %p109
      %p111 = scmp.ne.s32.totalorder %s97, %s98
      %p112 = scmp.eq.s32.totalorder %s43, 1
      %p113 = por %p111, %p112
      %p115 = scmp.ne.s32.totalorder %s98, %s114
      %p116 = scmp.eq.s32.totalorder %s43, 0
      %p117 = por %p115, %p116
      %s118 = ssub.s32 %s37, %s44
      %p119 = scmp.eq.s32.totalorder %s118, 0
      %s121 = sadd.s32 %s120, 1
      %s122 = scalar_select %p119, %s120, %s121
      %p125 = pneg %p119
      %p126 = scmp.eq.s32.totalorder %s37, 1
      %p127 = por %p125, %p126
      %p128 = scmp.ne.s32.totalorder %s120, %s123
      %p129 = scmp.eq.s32.totalorder %s37, 0
      %p130 = por %p128, %p129
      %p131 = scmp.ne.s32.totalorder %s120, %s123
      %p132 = scmp.eq.s32.totalorder %s42, 1
      %p133 = por %p131, %p132
      %p134 = scmp.ne.s32.totalorder %s123, %s124
      %p135 = scmp.eq.s32.totalorder %s42, 0
      %p136 = por %p134, %p135
      %p137 = scmp.ne.s32.totalorder %s123, %s124
      %p138 = scmp.eq.s32.totalorder %s43, 1
      %p139 = por %p137, %p138
      %p141 = scmp.ne.s32.totalorder %s124, %s140
      %p142 = scmp.eq.s32.totalorder %s43, 0
      %p143 = por %p141, %p142
      %s144 = ssub.s32 %s37, %s44
      %p145 = scmp.eq.s32.totalorder %s144, 0
      %s147 = sadd.s32 %s146, 1
      %s148 = scalar_select %p145, %s146, %s147
      %p151 = pneg %p145
      %p152 = scmp.eq.s32.totalorder %s37, 1
      %p153 = por %p151, %p152
      %p154 = scmp.ne.s32.totalorder %s146, %s149
      %p155 = scmp.eq.s32.totalorder %s37, 0
      %p156 = por %p154, %p155
      %p157 = scmp.ne.s32.totalorder %s146, %s149
      %p158 = scmp.eq.s32.totalorder %s42, 1
      %p159 = por %p157, %p158
      %p160 = scmp.ne.s32.totalorder %s149, %s150
      %p161 = scmp.eq.s32.totalorder %s42, 0
      %p162 = por %p160, %p161
      %p163 = scmp.ne.s32.totalorder %s149, %s150
      %p164 = scmp.eq.s32.totalorder %s43, 1
      %p165 = por %p163, %p164
      %p167 = scmp.ne.s32.totalorder %s150, %s166
      %p168 = scmp.eq.s32.totalorder %s43, 0
      %p169 = por %p167, %p168
      %s170 = ssub.s32 %s37, %s44
      %p171 = scmp.eq.s32.totalorder %s170, 0
      %s173 = sadd.s32 %s172, 1
      %s174 = scalar_select %p171, %s172, %s173
      %p177 = pneg %p171
      %p178 = scmp.eq.s32.totalorder %s37, 1
      %p179 = por %p177, %p178
      %p180 = scmp.ne.s32.totalorder %s172, %s175
      %p181 = scmp.eq.s32.totalorder %s37, 0
      %p182 = por %p180, %p181
      %p183 = scmp.ne.s32.totalorder %s172, %s175
      %p184 = scmp.eq.s32.totalorder %s42, 1
      %p185 = por %p183, %p184
      %p186 = scmp.ne.s32.totalorder %s175, %s176
      %p187 = scmp.eq.s32.totalorder %s42, 0
      %p188 = por %p186, %p187
      %p189 = scmp.ne.s32.totalorder %s175, %s176
      %p190 = scmp.eq.s32.totalorder %s43, 1
      %p191 = por %p189, %p190
      %p193 = scmp.ne.s32.totalorder %s176, %s192
      %p194 = scmp.eq.s32.totalorder %s43, 0
      %p195 = por %p193, %p194
      %s196 = ssub.s32 %s37, %s44
      %p197 = scmp.eq.s32.totalorder %s196, 0
      %s199 = sadd.s32 %s198, 1
      %s200 = scalar_select %p197, %s198, %s199
      %p203 = pneg %p197
      %p204 = scmp.eq.s32.totalorder %s37, 1
      %p205 = por %p203, %p204
      %p206 = scmp.ne.s32.totalorder %s198, %s201
      %p207 = scmp.eq.s32.totalorder %s37, 0
      %p208 = por %p206, %p207
      %p209 = scmp.ne.s32.totalorder %s198, %s201
      %p210 = scmp.eq.s32.totalorder %s42, 1
      %p211 = por %p209, %p210
      %p212 = scmp.ne.s32.totalorder %s201, %s202
      %p213 = scmp.eq.s32.totalorder %s42, 0
      %p214 = por %p212, %p213
      %p215 = scmp.ne.s32.totalorder %s201, %s202
      %p216 = scmp.eq.s32.totalorder %s43, 1
      %p217 = por %p215, %p216
      %p219 = scmp.ne.s32.totalorder %s202, %s218
      %p220 = scmp.eq.s32.totalorder %s43, 0
      %p221 = por %p219, %p220
      %s222 = ssub.s32 %s37, %s44
      %p223 = scmp.eq.s32.totalorder %s222, 0
      %s225 = sadd.s32 %s224, 1
      %s226 = scalar_select %p223, %s224, %s225
      %p229 = pneg %p223
      %p230 = scmp.eq.s32.totalorder %s37, 1
      %p231 = por %p229, %p230
      %p232 = scmp.ne.s32.totalorder %s224, %s227
      %p233 = scmp.eq.s32.totalorder %s37, 0
      %p234 = por %p232, %p233
      %p235 = scmp.ne.s32.totalorder %s224, %s227
      %p236 = scmp.eq.s32.totalorder %s42, 1
      %p237 = por %p235, %p236
      %p238 = scmp.ne.s32.totalorder %s227, %s228
      %p239 = scmp.eq.s32.totalorder %s42, 0
      %p240 = por %p238, %p239
      %p241 = scmp.ne.s32.totalorder %s227, %s228
      %p242 = scmp.eq.s32.totalorder %s43, 1
      %p243 = por %p241, %p242
      %p245 = scmp.ne.s32.totalorder %s228, %s244
      %p246 = scmp.eq.s32.totalorder %s43, 0
      %p247 = por %p245, %p246
      %s248 = ssub.s32 %s37, %s44
      %p249 = scmp.eq.s32.totalorder %s248, 0
      %s251 = sadd.s32 %s250, 1
      %s252 = scalar_select %p249, %s250, %s251
      %p255 = pneg %p249
      %p256 = scmp.eq.s32.totalorder %s37, 1
      %p257 = por %p255, %p256
      %p258 = scmp.ne.s32.totalorder %s250, %s253
      %p259 = scmp.eq.s32.totalorder %s37, 0
      %p260 = por %p258, %p259
      %p261 = scmp.ne.s32.totalorder %s250, %s253
      %p262 = scmp.eq.s32.totalorder %s42, 1
      %p263 = por %p261, %p262
      %p264 = scmp.ne.s32.totalorder %s253, %s254
      %p265 = scmp.eq.s32.totalorder %s42, 0
      %p266 = por %p264, %p265
      %p267 = scmp.ne.s32.totalorder %s253, %s254
      %p268 = scmp.eq.s32.totalorder %s43, 1
      %p269 = por %p267, %p268
      %p271 = scmp.ne.s32.totalorder %s254, %s270
      %p272 = scmp.eq.s32.totalorder %s43, 0
      %p273 = por %p271, %p272
      %s274 = ssub.s32 %s37, %s44
      %p275 = scmp.eq.s32.totalorder %s274, 0
      %s277 = sadd.s32 %s276, 1
      %s278 = scalar_select %p275, %s276, %s277
      %p281 = pneg %p275
      %p282 = scmp.eq.s32.totalorder %s37, 1
      %p283 = por %p281, %p282
      %p284 = scmp.ne.s32.totalorder %s276, %s279
      %p285 = scmp.eq.s32.totalorder %s37, 0
      %p286 = por %p284, %p285
      %p287 = scmp.ne.s32.totalorder %s276, %s279
      %p288 = scmp.eq.s32.totalorder %s42, 1
      %p289 = por %p287, %p288
      %p290 = scmp.ne.s32.totalorder %s279, %s280
      %p291 = scmp.eq.s32.totalorder %s42, 0
      %p292 = por %p290, %p291
      %p293 = scmp.ne.s32.totalorder %s279, %s280
      %p294 = scmp.eq.s32.totalorder %s43, 1
      %p295 = por %p293, %p294
      %p297 = scmp.ne.s32.totalorder %s280, %s296
      %p298 = scmp.eq.s32.totalorder %s43, 0
      %p299 = por %p297, %p298
      %s300 = ssub.s32 %s37, %s44
      %p301 = scmp.eq.s32.totalorder %s300, 0
      %s303 = sadd.s32 %s302, 1
      %s304 = scalar_select %p301, %s302, %s303
      %p307 = pneg %p301
      %p308 = scmp.eq.s32.totalorder %s37, 1
      %p309 = por %p307, %p308
      %p310 = scmp.ne.s32.totalorder %s302, %s305
      %p311 = scmp.eq.s32.totalorder %s37, 0
      %p312 = por %p310, %p311
      %p313 = scmp.ne.s32.totalorder %s302, %s305
      %p314 = scmp.eq.s32.totalorder %s42, 1
      %p315 = por %p313, %p314
      %p316 = scmp.ne.s32.totalorder %s305, %s306
      %p317 = scmp.eq.s32.totalorder %s42, 0
      %p318 = por %p316, %p317
      %p319 = scmp.ne.s32.totalorder %s305, %s306
      %p320 = scmp.eq.s32.totalorder %s43, 1
      %p321 = por %p319, %p320
      %p323 = scmp.ne.s32.totalorder %s306, %s322
      %p324 = scmp.eq.s32.totalorder %s43, 0
      %p325 = por %p323, %p324
      %s326 = ssub.s32 %s37, %s44
      %p327 = scmp.eq.s32.totalorder %s326, 0
      %s329 = sadd.s32 %s328, 1
      %s330 = scalar_select %p327, %s328, %s329
      %p333 = pneg %p327
      %p334 = scmp.eq.s32.totalorder %s37, 1
      %p335 = por %p333, %p334
      %p336 = scmp.ne.s32.totalorder %s328, %s331
      %p337 = scmp.eq.s32.totalorder %s37, 0
      %p338 = por %p336, %p337
      %p339 = scmp.ne.s32.totalorder %s328, %s331
      %p340 = scmp.eq.s32.totalorder %s42, 1
      %p341 = por %p339, %p340
      %p342 = scmp.ne.s32.totalorder %s331, %s332
      %p343 = scmp.eq.s32.totalorder %s42, 0
      %p344 = por %p342, %p343
      %p345 = scmp.ne.s32.totalorder %s331, %s332
      %p346 = scmp.eq.s32.totalorder %s43, 1
      %p347 = por %p345, %p346
      %p349 = scmp.ne.s32.totalorder %s332, %s348
      %p350 = scmp.eq.s32.totalorder %s43, 0
      %p351 = por %p349, %p350
      %s352 = ssub.s32 %s37, %s44
      %p353 = scmp.eq.s32.totalorder %s352, 0
      %s355 = sadd.s32 %s354, 1
      %s356 = scalar_select %p353, %s354, %s355
      %p359 = pneg %p353
      %p360 = scmp.eq.s32.totalorder %s37, 1
      %p361 = por %p359, %p360
      %p362 = scmp.ne.s32.totalorder %s354, %s357
      %p363 = scmp.eq.s32.totalorder %s37, 0
      %p364 = por %p362, %p363
      %p365 = scmp.ne.s32.totalorder %s354, %s357
      %p366 = scmp.eq.s32.totalorder %s42, 1
      %p367 = por %p365, %p366
      %p368 = scmp.ne.s32.totalorder %s357, %s358
      %p369 = scmp.eq.s32.totalorder %s42, 0
      %p370 = por %p368, %p369
      %p371 = scmp.ne.s32.totalorder %s357, %s358
      %p372 = scmp.eq.s32.totalorder %s43, 1
      %p373 = por %p371, %p372
      %p375 = scmp.ne.s32.totalorder %s358, %s374
      %p376 = scmp.eq.s32.totalorder %s43, 0
      %p377 = por %p375, %p376
      %s379 = sadd.s32 %s378, 1
      %p382 = scmp.eq.s32.totalorder %s37, 1
      %p383 = scmp.ne.s32.totalorder %s378, %s380
      %p384 = scmp.eq.s32.totalorder %s37, 0
      %p385 = por %p383, %p384
      %p386 = scmp.ne.s32.totalorder %s378, %s380
      %p387 = scmp.eq.s32.totalorder %s42, 1
      %p388 = por %p386, %p387
      %p389 = scmp.ne.s32.totalorder %s380, %s381
      %p390 = scmp.eq.s32.totalorder %s42, 0
      %p391 = por %p389, %p390
      %p392 = scmp.ne.s32.totalorder %s380, %s381
      %p393 = scmp.eq.s32.totalorder %s43, 1
      %p394 = por %p392, %p393
      %p396 = scmp.ne.s32.totalorder %s381, %s395
      %p397 = scmp.eq.s32.totalorder %s43, 0
      %p398 = por %p396, %p397
      %p399 = scmp.le.s32.totalorder 1, %s37
      %p400 = scmp.lt.s32.totalorder %s37, 3
      %p401 = pnand %p399, %p400
      %p402 = pneg %p401
      // Predicated region
      $region9: #{transformer_forward.2} parent=5 // pred_check
        _
      $region10: #{transformer_forward.2} parent=5 // pred_check_branch
        %404 = sbr.rel (%p401) target = $region12
      $region11: #{transformer_forward.2} parent=5 // pred_region
        %s405 = ssub.s32 %s37, 1
        // Predicated region
        $region13: #{transformer_forward.2} parent=11 // pred_check
          %p406 = pneg %p58
        $region14: #{transformer_forward.2} parent=11 // pred_check_branch
          %408 = sbr.rel (%p406) target = $region16
        $region15: #{transformer_forward.2} parent=11 // pred_region
          _
        $region16: #{transformer_forward.2} parent=11 // pred_fallthru
          _
      $region12: #{transformer_forward.2} parent=5 // pred_fallthru
        _
      %p409 = scmp.lt.s32.totalorder %s37, 2
      // Predicated region
      $region17: #{transformer_forward.2} parent=5 // pred_check
        %p410 = pneg %p409
      $region18: #{transformer_forward.2} parent=5 // pred_check_branch
        %412 = sbr.rel (%p410) target = $region20
      $region19: #{transformer_forward.2} parent=5 // pred_region
        // Predicated region
        $region21: #{transformer_forward.2} parent=19 // pred_check
          %p413 = pneg %p78
        $region22: #{transformer_forward.2} parent=19 // pred_check_branch
          %415 = sbr.rel (%p413) target = $region24
        $region23: #{transformer_forward.2} parent=19 // pred_region
          %p416 = scmp.lt.s32.totalorder %s37, 1
          %s417 = scalar_select %p416, %s37, 1
          %s418 = smul.addr %s417, 48
          %s419 = smul.addr %s418, 4
          %s420 = scalar_lea.vmem %s1, %s419
        $region24: #{transformer_forward.2} parent=19 // pred_fallthru
          _
        // Predicated region
        $region25: #{transformer_forward.2} parent=19 // pred_check
          %p421 = pneg %p104
        $region26: #{transformer_forward.2} parent=19 // pred_check_branch
          %423 = sbr.rel (%p421) target = $region28
        $region27: #{transformer_forward.2} parent=19 // pred_region
          %s424 = sand.u32 %s94, 1
          %s425 = scalar_lea.sflag [#allocation4], %s424
          %s426 = sand.u32 %s94, 1
          %s427 = smul.addr %s426, 3
          %s428 = scalar_lea.vmem [#allocation3], %s427
          %s430 = ssub.s32 48, 48
          %431 = vsyncadd %s425, %s430
          %s432 = smul.addr %s37, 3
          %s433 = smul.addr %s432, 16
          %s434 = scalar_lea.hbm %s2, %s433
          %s436 = sshll.u32 %s428, 4
          %s437 = int_to_ptr.vmem [resolvable:$true] %s436
          %439 = dma.hbm_to_vmem [thread:$0]  %s434, 48, %s437, %s425
        $region28: #{transformer_forward.2} parent=19 // pred_fallthru
          _
        // Predicated region
        $region29: #{transformer_forward.2} parent=19 // pred_check
          %p440 = pneg %p130
        $region30: #{transformer_forward.2} parent=19 // pred_check_branch
          %442 = sbr.rel (%p440) target = $region32
        $region31: #{transformer_forward.2} parent=19 // pred_region
          %s443 = sand.u32 %s37, 1
          %s444 = scalar_lea.sflag [#allocation6], %s443
          %s445 = sand.u32 %s120, 1
          %s446 = smul.addr %s445, 64
          %s447 = scalar_lea.vmem [#allocation5], %s446
          %s449 = ssub.s32 1024, 1024
          %450 = vsyncadd %s444, %s449
          %s451 = smul.addr %s37, 16
          %s452 = smul.addr %s451, 64
          %s453 = scalar_lea.hbm %s3, %s452
          %s454 = sshll.u32 %s447, 4
          %s455 = int_to_ptr.vmem [resolvable:$true] %s454
          %460 = dma.hbm_to_vmem [thread:$0]  %s453, 1024, %s455, %s444, 64, 64, 4
        $region32: #{transformer_forward.2} parent=19 // pred_fallthru
          _
        // Predicated region
        $region33: #{transformer_forward.2} parent=19 // pred_check
          %p461 = pneg %p156
        $region34: #{transformer_forward.2} parent=19 // pred_check_branch
          %463 = sbr.rel (%p461) target = $region36
        $region35: #{transformer_forward.2} parent=19 // pred_region
          %s464 = sand.u32 %s37, 1
          %s465 = scalar_lea.sflag [#allocation6], %s464
          %s466 = sand.u32 %s146, 1
          %s467 = scalar_lea.vmem [#allocation7], %s466
          %s469 = ssub.s32 16, 16
          %470 = vsyncadd %s465, %s469
          %s471 = smul.addr %s37, 16
          %s472 = scalar_lea.hbm %s4, %s471
          %s474 = sshll.u32 %s467, 4
          %s475 = int_to_ptr.vmem [resolvable:$true] %s474
          %477 = dma.hbm_to_vmem [thread:$0]  %s472, 16, %s475, %s465
        $region36: #{transformer_forward.2} parent=19 // pred_fallthru
          _
        // Predicated region
        $region37: #{transformer_forward.2} parent=19 // pred_check
          %p478 = pneg %p182
        $region38: #{transformer_forward.2} parent=19 // pred_check_branch
          %480 = sbr.rel (%p478) target = $region40
        $region39: #{transformer_forward.2} parent=19 // pred_region
          %s481 = sand.u32 %s37, 1
          %s482 = scalar_lea.sflag [#allocation9], %s481
          %s483 = sand.u32 %s172, 1
          %s484 = scalar_lea.vmem [#allocation8], %s483
          %s486 = ssub.s32 16, 16
          %487 = vsyncadd %s482, %s486
          %s488 = smul.addr %s37, 16
          %s489 = scalar_lea.hbm %s5, %s488
          %s491 = sshll.u32 %s484, 4
          %s492 = int_to_ptr.vmem [resolvable:$true] %s491
          %494 = dma.hbm_to_vmem [thread:$0]  %s489, 16, %s492, %s482
        $region40: #{transformer_forward.2} parent=19 // pred_fallthru
          _
        // Predicated region
        $region41: #{transformer_forward.2} parent=19 // pred_check
          %p495 = pneg %p208
        $region42: #{transformer_forward.2} parent=19 // pred_check_branch
          %497 = sbr.rel (%p495) target = $region44
        $region43: #{transformer_forward.2} parent=19 // pred_region
          %s498 = sand.u32 %s37, 1
          %s499 = scalar_lea.sflag [#allocation9], %s498
          %s500 = sand.u32 %s198, 1
          %s501 = scalar_lea.vmem [#allocation10], %s500
          %s503 = ssub.s32 16, 16
          %504 = vsyncadd %s499, %s503
          %s505 = smul.addr %s37, 16
          %s506 = scalar_lea.hbm %s6, %s505
          %s508 = sshll.u32 %s501, 4
          %s509 = int_to_ptr.vmem [resolvable:$true] %s508
          %511 = dma.hbm_to_vmem [thread:$0]  %s506, 16, %s509, %s499
        $region44: #{transformer_forward.2} parent=19 // pred_fallthru
          _
        // Predicated region
        $region45: #{transformer_forward.2} parent=19 // pred_check
          %p512 = pneg %p234
        $region46: #{transformer_forward.2} parent=19 // pred_check_branch
          %514 = sbr.rel (%p512) target = $region48
        $region47: #{transformer_forward.2} parent=19 // pred_region
          %s515 = sand.u32 %s37, 1
          %s516 = scalar_lea.sflag [#allocation12], %s515
          %s517 = sand.u32 %s224, 1
          %s518 = smul.addr %s517, 128
          %s519 = scalar_lea.vmem [#allocation11], %s518
          %s521 = ssub.s32 2048, 2048
          %522 = vsyncadd %s516, %s521
          %s523 = smul.addr %s37, 32
          %s524 = smul.addr %s523, 64
          %s525 = scalar_lea.hbm %s7, %s524
          %s526 = sshll.u32 %s519, 4
          %s527 = int_to_ptr.vmem [resolvable:$true] %s526
          %532 = dma.hbm_to_vmem [thread:$0]  %s525, 2048, %s527, %s516, 128, 128, 8
        $region48: #{transformer_forward.2} parent=19 // pred_fallthru
          _
        // Predicated region
        $region49: #{transformer_forward.2} parent=19 // pred_check
          %p533 = pneg %p260
        $region50: #{transformer_forward.2} parent=19 // pred_check_branch
          %535 = sbr.rel (%p533) target = $region52
        $region51: #{transformer_forward.2} parent=19 // pred_region
          %s536 = sand.u32 %s37, 1
          %s537 = scalar_lea.sflag [#allocation12], %s536
          %s538 = sand.u32 %s250, 1
          %s539 = smul.addr %s538, 2
          %s540 = scalar_lea.vmem [#allocation13], %s539
          %s542 = ssub.s32 32, 32
          %543 = vsyncadd %s537, %s542
          %s544 = smul.addr %s37, 2
          %s545 = smul.addr %s544, 16
          %s546 = scalar_lea.hbm %s8, %s545
          %s548 = sshll.u32 %s540, 4
          %s549 = int_to_ptr.vmem [resolvable:$true] %s548
          %551 = dma.hbm_to_vmem [thread:$0]  %s546, 32, %s549, %s537
        $region52: #{transformer_forward.2} parent=19 // pred_fallthru
          _
        // Predicated region
        $region53: #{transformer_forward.2} parent=19 // pred_check
          %p552 = pneg %p286
        $region54: #{transformer_forward.2} parent=19 // pred_check_branch
          %554 = sbr.rel (%p552) target = $region56
        $region55: #{transformer_forward.2} parent=19 // pred_region
          %s555 = sand.u32 %s37, 1
          %s556 = scalar_lea.sflag [#allocation15], %s555
          %s557 = sand.u32 %s276, 1
          %s558 = smul.addr %s557, 128
          %s559 = scalar_lea.vmem [#allocation14], %s558
          %s561 = ssub.s32 2048, 2048
          %562 = vsyncadd %s556, %s561
          %s563 = smul.addr %s37, 32
          %s564 = smul.addr %s563, 64
          %s565 = scalar_lea.hbm %s9, %s564
          %s566 = sshll.u32 %s559, 4
          %s567 = int_to_ptr.vmem [resolvable:$true] %s566
          %572 = dma.hbm_to_vmem [thread:$0]  %s565, 2048, %s567, %s556, 64, 64, 4
        $region56: #{transformer_forward.2} parent=19 // pred_fallthru
          _
        // Predicated region
        $region57: #{transformer_forward.2} parent=19 // pred_check
          %p573 = pneg %p312
        $region58: #{transformer_forward.2} parent=19 // pred_check_branch
          %575 = sbr.rel (%p573) target = $region60
        $region59: #{transformer_forward.2} parent=19 // pred_region
          %s576 = sand.u32 %s37, 1
          %s577 = scalar_lea.sflag [#allocation15], %s576
          %s578 = sand.u32 %s302, 1
          %s579 = scalar_lea.vmem [#allocation16], %s578
          %s581 = ssub.s32 16, 16
          %582 = vsyncadd %s577, %s581
          %s583 = smul.addr %s37, 16
          %s584 = scalar_lea.hbm %s10, %s583
          %s586 = sshll.u32 %s579, 4
          %s587 = int_to_ptr.vmem [resolvable:$true] %s586
          %589 = dma.hbm_to_vmem [thread:$0]  %s584, 16, %s587, %s577
        $region60: #{transformer_forward.2} parent=19 // pred_fallthru
          _
        // Predicated region
        $region61: #{transformer_forward.2} parent=19 // pred_check
          %p590 = pneg %p338
        $region62: #{transformer_forward.2} parent=19 // pred_check_branch
          %592 = sbr.rel (%p590) target = $region64
        $region63: #{transformer_forward.2} parent=19 // pred_region
          %s593 = sand.u32 %s37, 1
          %s594 = scalar_lea.sflag [#allocation18], %s593
          %s595 = sand.u32 %s328, 1
          %s596 = scalar_lea.vmem [#allocation17], %s595
          %s598 = ssub.s32 16, 16
          %599 = vsyncadd %s594, %s598
          %s600 = smul.addr %s37, 16
          %s601 = scalar_lea.hbm %s11, %s600
          %s603 = sshll.u32 %s596, 4
          %s604 = int_to_ptr.vmem [resolvable:$true] %s603
          %606 = dma.hbm_to_vmem [thread:$0]  %s601, 16, %s604, %s594
        $region64: #{transformer_forward.2} parent=19 // pred_fallthru
          _
        // Predicated region
        $region65: #{transformer_forward.2} parent=19 // pred_check
          %p607 = pneg %p364
        $region66: #{transformer_forward.2} parent=19 // pred_check_branch
          %609 = sbr.rel (%p607) target = $region68
        $region67: #{transformer_forward.2} parent=19 // pred_region
          %s610 = sand.u32 %s37, 1
          %s611 = scalar_lea.sflag [#allocation18], %s610
          %s612 = sand.u32 %s354, 1
          %s613 = scalar_lea.vmem [#allocation19], %s612
          %s615 = ssub.s32 16, 16
          %616 = vsyncadd %s611, %s615
          %s617 = smul.addr %s37, 16
          %s618 = scalar_lea.hbm %s12, %s617
          %s620 = sshll.u32 %s613, 4
          %s621 = int_to_ptr.vmem [resolvable:$true] %s620
          %623 = dma.hbm_to_vmem [thread:$0]  %s618, 16, %s621, %s611
        $region68: #{transformer_forward.2} parent=19 // pred_fallthru
          _
      $region20: #{transformer_forward.2} parent=5 // pred_fallthru
        _
      %p624 = scmp.le.s32.totalorder 1, %s37
      %p625 = scmp.lt.s32.totalorder %s37, 3
      %p626 = pnand %p624, %p625
      %p627 = pneg %p626
      // Predicated region
      $region69: #{transformer_forward.2} parent=5 // pred_check
        _
      $region70: #{transformer_forward.2} parent=5 // pred_check_branch
        %629 = sbr.rel (%p626) target = $region72
      $region71: #{transformer_forward.2} parent=5 // pred_region
        %s630 = ssub.s32 %s37, 1
        %s631 = sand.u32 %s97, 1
        %s632 = scalar_lea.sflag [#allocation4], %s631
        %s633 = sand.u32 %s97, 1
        %s634 = smul.addr %s633, 3
        %s635 = scalar_lea.vmem [#allocation3], %s634
        // Predicated region
        $region73: #{transformer_forward.2} parent=71 // pred_check
          %p636 = pneg %p110
        $region74: #{transformer_forward.2} parent=71 // pred_check_branch
          %638 = sbr.rel (%p636) target = $region76
        $region75: #{transformer_forward.2} parent=71 // pred_region
          %639 = dma.done %s632, 48
        $region76: #{transformer_forward.2} parent=71 // pred_fallthru
          _
        %s640 = sand.u32 %s42, 1
        %s641 = scalar_lea.sflag [#allocation6], %s640
        %s642 = sand.u32 %s123, 1
        %s643 = smul.addr %s642, 64
        %s644 = scalar_lea.vmem [#allocation5], %s643
        // Predicated region
        $region77: #{transformer_forward.2} parent=71 // pred_check
          %p645 = pneg %p136
        $region78: #{transformer_forward.2} parent=71 // pred_check_branch
          %647 = sbr.rel (%p645) target = $region80
        $region79: #{transformer_forward.2} parent=71 // pred_region
          %648 = dma.done %s641, 1024
        $region80: #{transformer_forward.2} parent=71 // pred_fallthru
          _
        %s649 = sand.u32 %s42, 1
        %s650 = scalar_lea.sflag [#allocation6], %s649
        %s651 = sand.u32 %s149, 1
        %s652 = scalar_lea.vmem [#allocation7], %s651
        // Predicated region
        $region81: #{transformer_forward.2} parent=71 // pred_check
          %p653 = pneg %p162
        $region82: #{transformer_forward.2} parent=71 // pred_check_branch
          %655 = sbr.rel (%p653) target = $region84
        $region83: #{transformer_forward.2} parent=71 // pred_region
          %656 = dma.done %s650, 16
        $region84: #{transformer_forward.2} parent=71 // pred_fallthru
          _
        %s657 = sand.u32 %s42, 1
        %s658 = scalar_lea.sflag [#allocation9], %s657
        %s659 = sand.u32 %s175, 1
        %s660 = scalar_lea.vmem [#allocation8], %s659
        // Predicated region
        $region85: #{transformer_forward.2} parent=71 // pred_check
          %p661 = pneg %p188
        $region86: #{transformer_forward.2} parent=71 // pred_check_branch
          %663 = sbr.rel (%p661) target = $region88
        $region87: #{transformer_forward.2} parent=71 // pred_region
          %664 = dma.done %s658, 16
        $region88: #{transformer_forward.2} parent=71 // pred_fallthru
          _
        %s665 = sand.u32 %s42, 1
        %s666 = scalar_lea.sflag [#allocation9], %s665
        %s667 = sand.u32 %s201, 1
        %s668 = scalar_lea.vmem [#allocation10], %s667
        // Predicated region
        $region89: #{transformer_forward.2} parent=71 // pred_check
          %p669 = pneg %p214
        $region90: #{transformer_forward.2} parent=71 // pred_check_branch
          %671 = sbr.rel (%p669) target = $region92
        $region91: #{transformer_forward.2} parent=71 // pred_region
          %672 = dma.done %s666, 16
        $region92: #{transformer_forward.2} parent=71 // pred_fallthru
          _
        %s673 = sand.u32 %s42, 1
        %s674 = scalar_lea.sflag [#allocation12], %s673
        %s675 = sand.u32 %s227, 1
        %s676 = smul.addr %s675, 128
        %s677 = scalar_lea.vmem [#allocation11], %s676
        // Predicated region
        $region93: #{transformer_forward.2} parent=71 // pred_check
          %p678 = pneg %p240
        $region94: #{transformer_forward.2} parent=71 // pred_check_branch
          %680 = sbr.rel (%p678) target = $region96
        $region95: #{transformer_forward.2} parent=71 // pred_region
          %681 = dma.done %s674, 2048
        $region96: #{transformer_forward.2} parent=71 // pred_fallthru
          _
        %s682 = sand.u32 %s42, 1
        %s683 = scalar_lea.sflag [#allocation12], %s682
        %s684 = sand.u32 %s253, 1
        %s685 = smul.addr %s684, 2
        %s686 = scalar_lea.vmem [#allocation13], %s685
        // Predicated region
        $region97: #{transformer_forward.2} parent=71 // pred_check
          %p687 = pneg %p266
        $region98: #{transformer_forward.2} parent=71 // pred_check_branch
          %689 = sbr.rel (%p687) target = $region100
        $region99: #{transformer_forward.2} parent=71 // pred_region
          %690 = dma.done %s683, 32
        $region100: #{transformer_forward.2} parent=71 // pred_fallthru
          _
        %s691 = sand.u32 %s42, 1
        %s692 = scalar_lea.sflag [#allocation15], %s691
        %s693 = sand.u32 %s279, 1
        %s694 = smul.addr %s693, 128
        %s695 = scalar_lea.vmem [#allocation14], %s694
        // Predicated region
        $region101: #{transformer_forward.2} parent=71 // pred_check
          %p696 = pneg %p292
        $region102: #{transformer_forward.2} parent=71 // pred_check_branch
          %698 = sbr.rel (%p696) target = $region104
        $region103: #{transformer_forward.2} parent=71 // pred_region
          %699 = dma.done %s692, 2048
        $region104: #{transformer_forward.2} parent=71 // pred_fallthru
          _
        %s700 = sand.u32 %s42, 1
        %s701 = scalar_lea.sflag [#allocation15], %s700
        %s702 = sand.u32 %s305, 1
        %s703 = scalar_lea.vmem [#allocation16], %s702
        // Predicated region
        $region105: #{transformer_forward.2} parent=71 // pred_check
          %p704 = pneg %p318
        $region106: #{transformer_forward.2} parent=71 // pred_check_branch
          %706 = sbr.rel (%p704) target = $region108
        $region107: #{transformer_forward.2} parent=71 // pred_region
          %707 = dma.done %s701, 16
        $region108: #{transformer_forward.2} parent=71 // pred_fallthru
          _
        %s708 = sand.u32 %s42, 1
        %s709 = scalar_lea.sflag [#allocation18], %s708
        %s710 = sand.u32 %s331, 1
        %s711 = scalar_lea.vmem [#allocation17], %s710
        // Predicated region
        $region109: #{transformer_forward.2} parent=71 // pred_check
          %p712 = pneg %p344
        $region110: #{transformer_forward.2} parent=71 // pred_check_branch
          %714 = sbr.rel (%p712) target = $region112
        $region111: #{transformer_forward.2} parent=71 // pred_region
          %715 = dma.done %s709, 16
        $region112: #{transformer_forward.2} parent=71 // pred_fallthru
          _
        %s716 = sand.u32 %s42, 1
        %s717 = scalar_lea.sflag [#allocation18], %s716
        %s718 = sand.u32 %s357, 1
        %s719 = scalar_lea.vmem [#allocation19], %s718
        // Predicated region
        $region113: #{transformer_forward.2} parent=71 // pred_check
          %p720 = pneg %p370
        $region114: #{transformer_forward.2} parent=71 // pred_check_branch
          %722 = sbr.rel (%p720) target = $region116
        $region115: #{transformer_forward.2} parent=71 // pred_region
          %723 = dma.done %s717, 16
        $region116: #{transformer_forward.2} parent=71 // pred_fallthru
          _
        %p724 = pneg %p58
        %p725 = pneg %p55
        %p726 = scmp.lt.s32.totalorder %s42, 1
        %s727 = scalar_select %p726, %s42, 1
        %s728 = smul.addr %s727, 48
        %s729 = smul.addr %s728, 4
        %s730 = scalar_lea.vmem %s1, %s729
        %p731 = pneg %p84
        %p732 = pneg %p81
        %s733 = sand.u32 %s97, 1
        %s734 = scalar_lea.sflag [#allocation4], %s733
        %s735 = sand.u32 %s97, 1
        %s736 = smul.addr %s735, 3
        %s737 = scalar_lea.vmem [#allocation3], %s736
        %p738 = pneg %p110
        %p739 = pneg %p107
        %s740 = sand.u32 %s42, 1
        %s741 = scalar_lea.sflag [#allocation6], %s740
        %s742 = sand.u32 %s123, 1
        %s743 = smul.addr %s742, 64
        %s744 = scalar_lea.vmem [#allocation5], %s743
        %p745 = pneg %p136
        %p746 = pneg %p133
        %s747 = sand.u32 %s42, 1
        %s748 = scalar_lea.sflag [#allocation6], %s747
        %s749 = sand.u32 %s149, 1
        %s750 = scalar_lea.vmem [#allocation7], %s749
        %p751 = pneg %p162
        %p752 = pneg %p159
        %s753 = sand.u32 %s42, 1
        %s754 = scalar_lea.sflag [#allocation9], %s753
        %s755 = sand.u32 %s175, 1
        %s756 = scalar_lea.vmem [#allocation8], %s755
        %p757 = pneg %p188
        %p758 = pneg %p185
        %s759 = sand.u32 %s42, 1
        %s760 = scalar_lea.sflag [#allocation9], %s759
        %s761 = sand.u32 %s201, 1
        %s762 = scalar_lea.vmem [#allocation10], %s761
        %p763 = pneg %p214
        %p764 = pneg %p211
        %s765 = sand.u32 %s42, 1
        %s766 = scalar_lea.sflag [#allocation12], %s765
        %s767 = sand.u32 %s227, 1
        %s768 = smul.addr %s767, 128
        %s769 = scalar_lea.vmem [#allocation11], %s768
        %p770 = pneg %p240
        %p771 = pneg %p237
        %s772 = sand.u32 %s42, 1
        %s773 = scalar_lea.sflag [#allocation12], %s772
        %s774 = sand.u32 %s253, 1
        %s775 = smul.addr %s774, 2
        %s776 = scalar_lea.vmem [#allocation13], %s775
        %p777 = pneg %p266
        %p778 = pneg %p263
        %s779 = sand.u32 %s42, 1
        %s780 = scalar_lea.sflag [#allocation15], %s779
        %s781 = sand.u32 %s279, 1
        %s782 = smul.addr %s781, 128
        %s783 = scalar_lea.vmem [#allocation14], %s782
        %p784 = pneg %p292
        %p785 = pneg %p289
        %s786 = sand.u32 %s42, 1
        %s787 = scalar_lea.sflag [#allocation15], %s786
        %s788 = sand.u32 %s305, 1
        %s789 = scalar_lea.vmem [#allocation16], %s788
        %p790 = pneg %p318
        %p791 = pneg %p315
        %s792 = sand.u32 %s42, 1
        %s793 = scalar_lea.sflag [#allocation18], %s792
        %s794 = sand.u32 %s331, 1
        %s795 = scalar_lea.vmem [#allocation17], %s794
        %p796 = pneg %p344
        %p797 = pneg %p341
        %s798 = sand.u32 %s42, 1
        %s799 = scalar_lea.sflag [#allocation18], %s798
        %s800 = sand.u32 %s357, 1
        %s801 = scalar_lea.vmem [#allocation19], %s800
        %p802 = pneg %p370
        %p803 = pneg %p367
        %p804 = pneg %p391
        %p805 = pneg %p388
        %p806 = scmp.lt.s32.totalorder %s42, 1
        %s807 = scalar_select %p806, %s42, 1
        %s808 = smul.addr %s807, 48
        %s809 = smul.addr %s808, 4
        %s810 = scalar_lea.vmem %s1, %s809
        %p812 = scmp.eq.s32.totalorder %s42, 0
        // Predicated region
        $region117: #{transformer_forward.2} parent=71 // pred_check
          %p813 = pneg %p812
        $region118: #{transformer_forward.2} parent=71 // pred_check_branch
          %815 = sbr.rel (%p813) target = $region120
        $region119: #{transformer_forward.2} parent=71 // pred_region
          %v816 = vld [vmem:[%s0] sm:$0xff]
          %v817 = vld [vmem:[%s0 + $0x8] sm:$0xff]
          %818 = vst [vmem:[#allocation2] sm:$0xff] %v816
          %819 = vst [vmem:[#allocation2 + $0x8] sm:$0xff] %v817
        $region120: #{transformer_forward.2} parent=71 // pred_fallthru
          _
        %v820 = vld [vmem:[#allocation2] sm:$0xff]
        %v821 = vld [vmem:[#allocation2 + $0x8] sm:$0xff]
        %v822 = vpack.c.bf16 %v821, %v820
        %v823 = vld [vmem:[%s810] sm:$0xff]
        %v824 = vld [vmem:[%s810 + $0x8] sm:$0xf]
        %v825 = vld [vmem:[%s810 + $0xc] sm:$0xff]
        %v826 = vld [vmem:[%s810 + $0x14] sm:$0xf]
        %v827 = vld [vmem:[%s810 + $0x18] sm:$0xff]
        %v828 = vld [vmem:[%s810 + $0x20] sm:$0xf]
        %v829 = vld [vmem:[%s810 + $0x24] sm:$0xff]
        %v830 = vld [vmem:[%s810 + $0x2c] sm:$0xf]
        %v831 = vld [vmem:[%s810 + $0x30] sm:$0xff]
        %v832 = vld [vmem:[%s810 + $0x38] sm:$0xf]
        %v833 = vld [vmem:[%s810 + $0x3c] sm:$0xff]
        %v834 = vld [vmem:[%s810 + $0x44] sm:$0xf]
        %v835 = vld [vmem:[%s810 + $0x48] sm:$0xff]
        %v836 = vld [vmem:[%s810 + $0x50] sm:$0xf]
        %v837 = vld [vmem:[%s810 + $0x54] sm:$0xff]
        %v838 = vld [vmem:[%s810 + $0x5c] sm:$0xf]
        %v839 = vld [vmem:[%s810 + $0x60] sm:$0xff]
        %v840 = vld [vmem:[%s810 + $0x68] sm:$0xf]
        %v841 = vld [vmem:[%s810 + $0x6c] sm:$0xff]
        %v842 = vld [vmem:[%s810 + $0x74] sm:$0xf]
        %v843 = vld [vmem:[%s810 + $0x78] sm:$0xff]
        %v844 = vld [vmem:[%s810 + $0x80] sm:$0xf]
        %v845 = vld [vmem:[%s810 + $0x84] sm:$0xff]
        %v846 = vld [vmem:[%s810 + $0x8c] sm:$0xf]
        %v847 = vld [vmem:[%s810 + $0x90] sm:$0xff]
        %v848 = vld [vmem:[%s810 + $0x98] sm:$0xf]
        %v849 = vld [vmem:[%s810 + $0x9c] sm:$0xff]
        %v850 = vld [vmem:[%s810 + $0xa4] sm:$0xf]
        %v851 = vld [vmem:[%s810 + $0xa8] sm:$0xff]
        %v852 = vld [vmem:[%s810 + $0xb0] sm:$0xf]
        %v853 = vld [vmem:[%s810 + $0xb4] sm:$0xff]
        %v854 = vld [vmem:[%s810 + $0xbc] sm:$0xf]
        %v855 = vld [vmem:[%s635] sm:$0x7]
        %v857 = vlaneseq
        %v858 = vshrl.u32 %v857, 7
        %v859 = vsub.s32 0, %v858
        %v860 = vrot.slane %v855, %v859
        %v861 = vlaneseq
        %v862 = vshrl.u32 %v861, 7
        %v863 = vsub.s32 1, %v862
        %v864 = vrot.slane %v855, %v863
        %v865 = vlaneseq
        %v866 = vshrl.u32 %v865, 7
        %v867 = vsub.s32 2, %v866
        %v868 = vrot.slane %v855, %v867
        %v904 = vunpack.c.l.b16 %v823
        %v905 = vunpack.c.h.b16 %v823
        %v906 = vunpack.c.l.b16 %v824
        %v907 = vunpack.c.l.b16 %v825
        %v908 = vunpack.c.h.b16 %v825
        %v909 = vunpack.c.l.b16 %v826
        %v910 = vunpack.c.l.b16 %v827
        %v911 = vunpack.c.h.b16 %v827
        %v912 = vunpack.c.l.b16 %v828
        %v913 = vunpack.c.l.b16 %v829
        %v914 = vunpack.c.h.b16 %v829
        %v915 = vunpack.c.l.b16 %v830
        %v916 = vunpack.c.l.b16 %v831
        %v917 = vunpack.c.h.b16 %v831
        %v918 = vunpack.c.l.b16 %v832
        %v919 = vunpack.c.l.b16 %v833
        %v920 = vunpack.c.h.b16 %v833
        %v921 = vunpack.c.l.b16 %v834
        %v922 = vunpack.c.l.b16 %v835
        %v923 = vunpack.c.h.b16 %v835
        %v924 = vunpack.c.l.b16 %v836
        %v925 = vunpack.c.l.b16 %v837
        %v926 = vunpack.c.h.b16 %v837
        %v927 = vunpack.c.l.b16 %v838
        %v928 = vunpack.c.l.b16 %v839
        %v929 = vunpack.c.h.b16 %v839
        %v930 = vunpack.c.l.b16 %v840
        %v931 = vunpack.c.l.b16 %v841
        %v932 = vunpack.c.h.b16 %v841
        %v933 = vunpack.c.l.b16 %v842
        %v934 = vunpack.c.l.b16 %v843
        %v935 = vunpack.c.h.b16 %v843
        %v936 = vunpack.c.l.b16 %v844
        %v937 = vunpack.c.l.b16 %v845
        %v938 = vunpack.c.h.b16 %v845
        %v939 = vunpack.c.l.b16 %v846
        %v940 = vunpack.c.l.b16 %v847
        %v941 = vunpack.c.h.b16 %v847
        %v942 = vunpack.c.l.b16 %v848
        %v943 = vunpack.c.l.b16 %v849
        %v944 = vunpack.c.h.b16 %v849
        %v945 = vunpack.c.l.b16 %v850
        %v946 = vunpack.c.l.b16 %v851
        %v947 = vunpack.c.h.b16 %v851
        %v948 = vunpack.c.l.b16 %v852
        %v949 = vunpack.c.l.b16 %v853
        %v950 = vunpack.c.h.b16 %v853
        %v951 = vunpack.c.l.b16 %v854
        %v952 = vpack.c.b16 %v907, %v904
        %v953 = vpack.c.b16 %v908, %v905
        %v954 = vpack.c.b16 %v909, %v906
        %v955 = vpack.c.b16 %v913, %v910
        %v956 = vpack.c.b16 %v914, %v911
        %v957 = vpack.c.b16 %v915, %v912
        %v958 = vpack.c.b16 %v919, %v916
        %v959 = vpack.c.b16 %v920, %v917
        %v960 = vpack.c.b16 %v921, %v918
        %v961 = vpack.c.b16 %v925, %v922
        %v962 = vpack.c.b16 %v926, %v923
        %v963 = vpack.c.b16 %v927, %v924
        %v964 = vpack.c.b16 %v931, %v928
        %v965 = vpack.c.b16 %v932, %v929
        %v966 = vpack.c.b16 %v933, %v930
        %v967 = vpack.c.b16 %v937, %v934
        %v968 = vpack.c.b16 %v938, %v935
        %v969 = vpack.c.b16 %v939, %v936
        %v970 = vpack.c.b16 %v943, %v940
        %v971 = vpack.c.b16 %v944, %v941
        %v972 = vpack.c.b16 %v945, %v942
        %v973 = vpack.c.b16 %v949, %v946
        %v974 = vpack.c.b16 %v950, %v947
        %v975 = vpack.c.b16 %v951, %v948
        %1000 = vmatprep.subr.bf16.mxu0 %v974
        %1001 = vmatpush1.bf16.msra.mxu0 %v973
        %1002 = vmatprep.subr.bf16.mxu0 %v971
        %1003 = vmatpush1.bf16.msra.mxu0 %v970
        %1004 = vmatprep.subr.bf16.mxu0 %v968
        %1005 = vmatpush1.bf16.msra.mxu0 %v967
        %1006 = vmatprep.subr.bf16.mxu0 %v965
        %1007 = vmatpush1.bf16.msra.mxu0 %v964
        %1008 = vmatprep.subr.bf16.mxu0 %v962
        %1009 = vmatpush1.bf16.msra.mxu0 %v961
        %1010 = vmatprep.subr.bf16.mxu0 %v959
        %1011 = vmatpush1.bf16.msra.mxu0 %v958
        %1012 = vmatprep.subr.bf16.mxu0 %v956
        %1013 = vmatpush1.bf16.msra.mxu0 %v955
        %1014 = vmatprep.subr.bf16.mxu0 %v953
        %1015 = vmatpush1.bf16.msra.mxu0 %v952
        %1016 = vmatprep.subr.bf16.mxu0 0
        %1017 = vmatpush2.bf16.msra.mxu0 0
        %1018 = vmatprep.subr.bf16.mxu0 0
        %1019 = vmatpush2.bf16.msra.mxu0 0
        %1020 = vmatprep.subr.bf16.mxu0 0
        %1021 = vmatpush2.bf16.msra.mxu0 0
        %1022 = vmatprep.subr.bf16.mxu0 0
        %1023 = vmatpush2.bf16.msra.mxu0 0
        %1024 = vmatprep.subr.bf16.mxu0 0
        %1025 = vmatpush2.bf16.msra.mxu0 0
        %1026 = vmatprep.subr.bf16.mxu0 0
        %1027 = vmatpush2.bf16.msra.mxu0 0
        %1028 = vmatprep.subr.bf16.mxu0 0
        %1029 = vmatpush2.bf16.msra.mxu0 0
        %1030 = vmatprep.subr.bf16.mxu0 0
        %1031 = vmatpush2.bf16.msra.mxu0 0
        %1032 = vmatprep.mubr.bf16.mxu0 0
        %1033 = vmatmul.mubr.bf16.gmra.mxu0 %v822
        %v1034 = vpop.f32.mrf.mxu0
        %v1035 = vadd.f32 %v860, %v1034
        %v1036 = vpop.f32.mrf.mxu0
        %v1037 = vadd.f32 %v864, %v1036
        %v1038 = vpop.f32.mrf.mxu0
        %v1039 = vadd.f32 %v860, %v1038
        %v1040 = vpop.f32.mrf.mxu0
        %v1041 = vadd.f32 %v864, %v1040
        %1042 = vdwg.mxu0
        %1043 = vmatprep.subr.bf16.mxu0 0
        %1044 = vmatpush1.bf16.msra.mxu0 %v975
        %1045 = vmatprep.subr.bf16.mxu0 0
        %1046 = vmatpush1.bf16.msra.mxu0 %v972
        %1047 = vmatprep.subr.bf16.mxu0 0
        %1048 = vmatpush1.bf16.msra.mxu0 %v969
        %1049 = vmatprep.subr.bf16.mxu0 0
        %1050 = vmatpush1.bf16.msra.mxu0 %v966
        %1051 = vmatprep.subr.bf16.mxu0 0
        %1052 = vmatpush1.bf16.msra.mxu0 %v963
        %1053 = vmatprep.subr.bf16.mxu0 0
        %1054 = vmatpush1.bf16.msra.mxu0 %v960
        %1055 = vmatprep.subr.bf16.mxu0 0
        %1056 = vmatpush1.bf16.msra.mxu0 %v957
        %1057 = vmatprep.subr.bf16.mxu0 0
        %1058 = vmatpush1.bf16.msra.mxu0 %v954
        %1059 = vmatprep.subr.bf16.mxu0 0
        %1060 = vmatpush2.bf16.msra.mxu0 0
        %1061 = vmatprep.subr.bf16.mxu0 0
        %1062 = vmatpush2.bf16.msra.mxu0 0
        %1063 = vmatprep.subr.bf16.mxu0 0
        %1064 = vmatpush2.bf16.msra.mxu0 0
        %1065 = vmatprep.subr.bf16.mxu0 0
        %1066 = vmatpush2.bf16.msra.mxu0 0
        %1067 = vmatprep.subr.bf16.mxu0 0
        %1068 = vmatpush2.bf16.msra.mxu0 0
        %1069 = vmatprep.subr.bf16.mxu0 0
        %1070 = vmatpush2.bf16.msra.mxu0 0
        %1071 = vmatprep.subr.bf16.mxu0 0
        %1072 = vmatpush2.bf16.msra.mxu0 0
        %1073 = vmatprep.subr.bf16.mxu0 0
        %1074 = vmatpush2.bf16.msra.mxu0 0
        %1075 = vmatprep.mubr.bf16.mxu0 0
        %1076 = vmatmul.mubr.bf16.gmra.mxu0 %v822
        %v1077 = vpop.f32.mrf.mxu0
        %v1078 = vadd.f32 %v868, %v1077
        %v1079 = vpop.f32.mrf.mxu0
        %v1080 = vpop.f32.mrf.mxu0
        %v1081 = vadd.f32 %v868, %v1080
        %v1082 = vpop.f32.mrf.mxu0
        %1083 = vdwg.mxu0
        %v1084 = vpack.c.bf16 %v1035, %v1035
        %v1085 = vpack.c.bf16 %v1039, %v1039
        %v1086 = vpack.c.bf16 %v1037, %v1037
        %v1087 = vpack.c.bf16 %v1041, %v1041
        %v1088 = vpack.c.bf16 %v1078, %v1078
        %v1089 = vpack.c.bf16 %v1081, %v1081
        %vm1090 = vcmask 261120
        %v1092 = vsel %vm1090, %v1084, 0
        %v1095 = vsel %vm1090, %v1086, 0
        %1097 = vmatprep.subr.bf16.mxu0 0
        %1098 = vmatpush1.bf16.xpose.msra.mxu0 0
        %1099 = vmatprep.subr.bf16.mxu0 0
        %1100 = vmatpush1.bf16.xpose.msra.mxu0 0
        %1101 = vmatprep.subr.bf16.mxu0 0
        %1102 = vmatpush1.bf16.xpose.msra.mxu0 0
        %1103 = vmatprep.subr.bf16.mxu0 0
        %1104 = vmatpush1.bf16.xpose.msra.mxu0 0
        %1105 = vmatprep.subr.bf16.mxu0 0
        %1106 = vmatpush1.bf16.xpose.msra.mxu0 0
        %1107 = vmatprep.subr.bf16.mxu0 0
        %1108 = vmatpush1.bf16.xpose.msra.mxu0 0
        %1109 = vmatprep.subr.bf16.mxu0 0
        %1110 = vmatpush1.bf16.xpose.msra.mxu0 0
        %1111 = vmatprep.subr.bf16.mxu0 0
        %1112 = vmatpush1.bf16.xpose.msra.mxu0 %v1095
        %1113 = vmatprep.subr.bf16.mxu0 0
        %1114 = vmatpush2.bf16.xpose.msra.mxu0 0
        %1115 = vmatprep.subr.bf16.mxu0 0
        %1116 = vmatpush2.bf16.xpose.msra.mxu0 0
        %1117 = vmatprep.subr.bf16.mxu0 0
        %1118 = vmatpush2.bf16.xpose.msra.mxu0 0
        %1119 = vmatprep.subr.bf16.mxu0 0
        %1120 = vmatpush2.bf16.xpose.msra.mxu0 0
        %1121 = vmatprep.subr.bf16.mxu0 0
        %1122 = vmatpush2.bf16.xpose.msra.mxu0 0
        %1123 = vmatprep.subr.bf16.mxu0 0
        %1124 = vmatpush2.bf16.xpose.msra.mxu0 0
        %1125 = vmatprep.subr.bf16.mxu0 0
        %1126 = vmatpush2.bf16.xpose.msra.mxu0 0
        %1127 = vmatprep.subr.bf16.mxu0 0
        %1128 = vmatpush2.bf16.xpose.msra.mxu0 0
        %1129 = vmatprep.mubr.bf16.mxu0 0
        %1130 = vmatmul.mubr.bf16.gmra.mxu0 %v1092
        %v1131 = vpop.f32.mrf.mxu0
        %v1132 = vadd.f32 0.0, %v1131
        %v1133 = vpop.f32.mrf.mxu0
        %v1134 = vpop.f32.mrf.mxu0
        %v1135 = vpop.f32.mrf.mxu0
        %1136 = vdwg.mxu0
        %v1138 = vsel %vm1090, %v1085, 0
        %v1141 = vsel %vm1090, %v1087, 0
        %1143 = vmatprep.subr.bf16.mxu0 0
        %1144 = vmatpush1.bf16.xpose.msra.mxu0 0
        %1145 = vmatprep.subr.bf16.mxu0 0
        %1146 = vmatpush1.bf16.xpose.msra.mxu0 0
        %1147 = vmatprep.subr.bf16.mxu0 0
        %1148 = vmatpush1.bf16.xpose.msra.mxu0 0
        %1149 = vmatprep.subr.bf16.mxu0 0
        %1150 = vmatpush1.bf16.xpose.msra.mxu0 0
        %1151 = vmatprep.subr.bf16.mxu0 0
        %1152 = vmatpush1.bf16.xpose.msra.mxu0 0
        %1153 = vmatprep.subr.bf16.mxu0 0
        %1154 = vmatpush1.bf16.xpose.msra.mxu0 0
        %1155 = vmatprep.subr.bf16.mxu0 0
        %1156 = vmatpush1.bf16.xpose.msra.mxu0 0
        %1157 = vmatprep.subr.bf16.mxu0 0
        %1158 = vmatpush1.bf16.xpose.msra.mxu0 %v1141
        %1159 = vmatprep.subr.bf16.mxu0 0
        %1160 = vmatpush2.bf16.xpose.msra.mxu0 0
        %1161 = vmatprep.subr.bf16.mxu0 0
        %1162 = vmatpush2.bf16.xpose.msra.mxu0 0
        %1163 = vmatprep.subr.bf16.mxu0 0
        %1164 = vmatpush2.bf16.xpose.msra.mxu0 0
        %1165 = vmatprep.subr.bf16.mxu0 0
        %1166 = vmatpush2.bf16.xpose.msra.mxu0 0
        %1167 = vmatprep.subr.bf16.mxu0 0
        %1168 = vmatpush2.bf16.xpose.msra.mxu0 0
        %1169 = vmatprep.subr.bf16.mxu0 0
        %1170 = vmatpush2.bf16.xpose.msra.mxu0 0
        %1171 = vmatprep.subr.bf16.mxu0 0
        %1172 = vmatpush2.bf16.xpose.msra.mxu0 0
        %1173 = vmatprep.subr.bf16.mxu0 0
        %1174 = vmatpush2.bf16.xpose.msra.mxu0 0
        %1175 = vmatprep.mubr.bf16.mxu0 0
        %1176 = vmatmul.mubr.bf16.gmra.mxu0 %v1138
        %v1177 = vpop.f32.mrf.mxu0
        %v1178 = vadd.f32 0.0, %v1177
        %v1179 = vpop.f32.mrf.mxu0
        %v1180 = vpop.f32.mrf.mxu0
        %v1181 = vpop.f32.mrf.mxu0
        %1182 = vdwg.mxu0
        %vm1183 = vcmask 64512
        %v1184 = vsel %vm1183, %v1132, -inf
        %1185 = vmax.xlane.f32.xlu0 %v1184
        %v1186 = vpop.xlane.xlu0 %1185
        %v1187 = vsel %vm1183, %v1178, -inf
        %1188 = vmax.xlane.f32.xlu0 %v1187
        %v1189 = vpop.xlane.xlu0 %1188
        %v1190 = vsub.f32 %v1132, %v1186
        %v1191 = vsub.f32 %v1178, %v1189
        %v1192 = vmul.f32 %v1190, 1.442695
        %v1193 = vpow.pop %v1192
        %v1194 = vmul.f32 %v1191, 1.442695
        %v1195 = vpow.pop %v1194
        %v1196 = vsel %vm1183, %v1193, 0.0
        %1197 = vadd.xlane.f32.xlu0 %v1196
        %v1198 = vpop.xlane.xlu0 %1197
        %v1199 = vsel %vm1183, %v1195, 0.0
        %1200 = vadd.xlane.f32.xlu0 %v1199
        %v1201 = vpop.xlane.xlu0 %1200
        %v1202 = vrcp.pop %v1198
        %v1203 = vrcp.pop %v1201
        %v1204 = vmul.f32 %v1193, %v1202
        %v1205 = vmul.f32 %v1195, %v1203
        %v1206 = vpack.c.bf16 %v1204, %v1204
        %v1207 = vpack.c.bf16 %v1205, %v1205
        %v1209 = vsel %vm1183, %v1206, 0
        %vm1211 = vcmask 1043456
        %v1213 = vsel %vm1211, %v1088, 0
        %1215 = vmatprep.subr.bf16.mxu0 0
        %1216 = vmatpush1.bf16.msra.mxu0 0
        %1217 = vmatprep.subr.bf16.mxu0 0
        %1218 = vmatpush1.bf16.msra.mxu0 0
        %1219 = vmatprep.subr.bf16.mxu0 0
        %1220 = vmatpush1.bf16.msra.mxu0 0
        %1221 = vmatprep.subr.bf16.mxu0 0
        %1222 = vmatpush1.bf16.msra.mxu0 0
        %1223 = vmatprep.subr.bf16.mxu0 0
        %1224 = vmatpush1.bf16.msra.mxu0 0
        %1225 = vmatprep.subr.bf16.mxu0 0
        %1226 = vmatpush1.bf16.msra.mxu0 0
        %1227 = vmatprep.subr.bf16.mxu0 0
        %1228 = vmatpush1.bf16.msra.mxu0 0
        %1229 = vmatprep.subr.bf16.mxu0 0
        %1230 = vmatpush1.bf16.msra.mxu0 %v1213
        %1231 = vmatprep.subr.bf16.mxu0 0
        %1232 = vmatpush2.bf16.msra.mxu0 0
        %1233 = vmatprep.subr.bf16.mxu0 0
        %1234 = vmatpush2.bf16.msra.mxu0 0
        %1235 = vmatprep.subr.bf16.mxu0 0
        %1236 = vmatpush2.bf16.msra.mxu0 0
        %1237 = vmatprep.subr.bf16.mxu0 0
        %1238 = vmatpush2.bf16.msra.mxu0 0
        %1239 = vmatprep.subr.bf16.mxu0 0
        %1240 = vmatpush2.bf16.msra.mxu0 0
        %1241 = vmatprep.subr.bf16.mxu0 0
        %1242 = vmatpush2.bf16.msra.mxu0 0
        %1243 = vmatprep.subr.bf16.mxu0 0
        %1244 = vmatpush2.bf16.msra.mxu0 0
        %1245 = vmatprep.subr.bf16.mxu0 0
        %1246 = vmatpush2.bf16.msra.mxu0 0
        %1247 = vmatprep.mubr.bf16.mxu0 0
        %1248 = vmatmul.mubr.bf16.gmra.mxu0 %v1209
        %v1249 = vpop.f32.mrf.mxu0
        %v1250 = vadd.f32 0.0, %v1249
        %v1251 = vpop.f32.mrf.mxu0
        %v1252 = vpop.f32.mrf.mxu0
        %v1253 = vpop.f32.mrf.mxu0
        %1254 = vdwg.mxu0
        %v1256 = vsel %vm1183, %v1207, 0
        %v1259 = vsel %vm1211, %v1089, 0
        %1261 = vmatprep.subr.bf16.mxu0 0
        %1262 = vmatpush1.bf16.msra.mxu0 0
        %1263 = vmatprep.subr.bf16.mxu0 0
        %1264 = vmatpush1.bf16.msra.mxu0 0
        %1265 = vmatprep.subr.bf16.mxu0 0
        %1266 = vmatpush1.bf16.msra.mxu0 0
        %1267 = vmatprep.subr.bf16.mxu0 0
        %1268 = vmatpush1.bf16.msra.mxu0 0
        %1269 = vmatprep.subr.bf16.mxu0 0
        %1270 = vmatpush1.bf16.msra.mxu0 0
        %1271 = vmatprep.subr.bf16.mxu0 0
        %1272 = vmatpush1.bf16.msra.mxu0 0
        %1273 = vmatprep.subr.bf16.mxu0 0
        %1274 = vmatpush1.bf16.msra.mxu0 0
        %1275 = vmatprep.subr.bf16.mxu0 0
        %1276 = vmatpush1.bf16.msra.mxu0 %v1259
        %1277 = vmatprep.subr.bf16.mxu0 0
        %1278 = vmatpush2.bf16.msra.mxu0 0
        %1279 = vmatprep.subr.bf16.mxu0 0
        %1280 = vmatpush2.bf16.msra.mxu0 0
        %1281 = vmatprep.subr.bf16.mxu0 0
        %1282 = vmatpush2.bf16.msra.mxu0 0
        %1283 = vmatprep.subr.bf16.mxu0 0
        %1284 = vmatpush2.bf16.msra.mxu0 0
        %1285 = vmatprep.subr.bf16.mxu0 0
        %1286 = vmatpush2.bf16.msra.mxu0 0
        %1287 = vmatprep.subr.bf16.mxu0 0
        %1288 = vmatpush2.bf16.msra.mxu0 0
        %1289 = vmatprep.subr.bf16.mxu0 0
        %1290 = vmatpush2.bf16.msra.mxu0 0
        %1291 = vmatprep.subr.bf16.mxu0 0
        %1292 = vmatpush2.bf16.msra.mxu0 0
        %1293 = vmatprep.mubr.bf16.mxu0 0
        %1294 = vmatmul.mubr.bf16.gmra.mxu0 %v1256
        %v1295 = vpop.f32.mrf.mxu0
        %v1296 = vadd.f32 0.0, %v1295
        %v1297 = vpop.f32.mrf.mxu0
        %v1298 = vpop.f32.mrf.mxu0
        %v1299 = vpop.f32.mrf.mxu0
        %1300 = vdwg.mxu0
        %1302 = vrot.lane.b32.xlu0 %v1084, 96
        %v1303 = vpop.permute.xlu0 %1302
        %1305 = vrot.lane.b32.xlu0 %v1086, 96
        %v1306 = vpop.permute.xlu0 %1305
        %v1308 = vsel %vm1090, %v1303, 0
        %v1311 = vsel %vm1090, %v1306, 0
        %1313 = vmatprep.subr.bf16.mxu0 0
        %1314 = vmatpush1.bf16.xpose.msra.mxu0 0
        %1315 = vmatprep.subr.bf16.mxu0 0
        %1316 = vmatpush1.bf16.xpose.msra.mxu0 0
        %1317 = vmatprep.subr.bf16.mxu0 0
        %1318 = vmatpush1.bf16.xpose.msra.mxu0 0
        %1319 = vmatprep.subr.bf16.mxu0 0
        %1320 = vmatpush1.bf16.xpose.msra.mxu0 0
        %1321 = vmatprep.subr.bf16.mxu0 0
        %1322 = vmatpush1.bf16.xpose.msra.mxu0 0
        %1323 = vmatprep.subr.bf16.mxu0 0
        %1324 = vmatpush1.bf16.xpose.msra.mxu0 0
        %1325 = vmatprep.subr.bf16.mxu0 0
        %1326 = vmatpush1.bf16.xpose.msra.mxu0 0
        %1327 = vmatprep.subr.bf16.mxu0 0
        %1328 = vmatpush1.bf16.xpose.msra.mxu0 %v1311
        %1329 = vmatprep.subr.bf16.mxu0 0
        %1330 = vmatpush2.bf16.xpose.msra.mxu0 0
        %1331 = vmatprep.subr.bf16.mxu0 0
        %1332 = vmatpush2.bf16.xpose.msra.mxu0 0
        %1333 = vmatprep.subr.bf16.mxu0 0
        %1334 = vmatpush2.bf16.xpose.msra.mxu0 0
        %1335 = vmatprep.subr.bf16.mxu0 0
        %1336 = vmatpush2.bf16.xpose.msra.mxu0 0
        %1337 = vmatprep.subr.bf16.mxu0 0
        %1338 = vmatpush2.bf16.xpose.msra.mxu0 0
        %1339 = vmatprep.subr.bf16.mxu0 0
        %1340 = vmatpush2.bf16.xpose.msra.mxu0 0
        %1341 = vmatprep.subr.bf16.mxu0 0
        %1342 = vmatpush2.bf16.xpose.msra.mxu0 0
        %1343 = vmatprep.subr.bf16.mxu0 0
        %1344 = vmatpush2.bf16.xpose.msra.mxu0 0
        %1345 = vmatprep.mubr.bf16.mxu0 0
        %1346 = vmatmul.mubr.bf16.gmra.mxu0 %v1308
        %v1347 = vpop.f32.mrf.mxu0
        %v1348 = vadd.f32 0.0, %v1347
        %v1349 = vpop.f32.mrf.mxu0
        %v1350 = vpop.f32.mrf.mxu0
        %v1351 = vpop.f32.mrf.mxu0
        %1352 = vdwg.mxu0
        %1354 = vrot.lane.b32.xlu0 %v1085, 96
        %v1355 = vpop.permute.xlu0 %1354
        %1357 = vrot.lane.b32.xlu0 %v1087, 96
        %v1358 = vpop.permute.xlu0 %1357
        %v1360 = vsel %vm1090, %v1355, 0
        %v1363 = vsel %vm1090, %v1358, 0
        %1365 = vmatprep.subr.bf16.mxu0 0
        %1366 = vmatpush1.bf16.xpose.msra.mxu0 0
        %1367 = vmatprep.subr.bf16.mxu0 0
        %1368 = vmatpush1.bf16.xpose.msra.mxu0 0
        %1369 = vmatprep.subr.bf16.mxu0 0
        %1370 = vmatpush1.bf16.xpose.msra.mxu0 0
        %1371 = vmatprep.subr.bf16.mxu0 0
        %1372 = vmatpush1.bf16.xpose.msra.mxu0 0
        %1373 = vmatprep.subr.bf16.mxu0 0
        %1374 = vmatpush1.bf16.xpose.msra.mxu0 0
        %1375 = vmatprep.subr.bf16.mxu0 0
        %1376 = vmatpush1.bf16.xpose.msra.mxu0 0
        %1377 = vmatprep.subr.bf16.mxu0 0
        %1378 = vmatpush1.bf16.xpose.msra.mxu0 0
        %1379 = vmatprep.subr.bf16.mxu0 0
        %1380 = vmatpush1.bf16.xpose.msra.mxu0 %v1363
        %1381 = vmatprep.subr.bf16.mxu0 0
        %1382 = vmatpush2.bf16.xpose.msra.mxu0 0
        %1383 = vmatprep.subr.bf16.mxu0 0
        %1384 = vmatpush2.bf16.xpose.msra.mxu0 0
        %1385 = vmatprep.subr.bf16.mxu0 0
        %1386 = vmatpush2.bf16.xpose.msra.mxu0 0
        %1387 = vmatprep.subr.bf16.mxu0 0
        %1388 = vmatpush2.bf16.xpose.msra.mxu0 0
        %1389 = vmatprep.subr.bf16.mxu0 0
        %1390 = vmatpush2.bf16.xpose.msra.mxu0 0
        %1391 = vmatprep.subr.bf16.mxu0 0
        %1392 = vmatpush2.bf16.xpose.msra.mxu0 0
        %1393 = vmatprep.subr.bf16.mxu0 0
        %1394 = vmatpush2.bf16.xpose.msra.mxu0 0
        %1395 = vmatprep.subr.bf16.mxu0 0
        %1396 = vmatpush2.bf16.xpose.msra.mxu0 0
        %1397 = vmatprep.mubr.bf16.mxu0 0
        %1398 = vmatmul.mubr.bf16.gmra.mxu0 %v1360
        %v1399 = vpop.f32.mrf.mxu0
        %v1400 = vadd.f32 0.0, %v1399
        %v1401 = vpop.f32.mrf.mxu0
        %v1402 = vpop.f32.mrf.mxu0
        %v1403 = vpop.f32.mrf.mxu0
        %1404 = vdwg.mxu0
        %v1405 = vsel %vm1183, %v1348, -inf
        %1406 = vmax.xlane.f32.xlu0 %v1405
        %v1407 = vpop.xlane.xlu0 %1406
        %v1408 = vsel %vm1183, %v1400, -inf
        %1409 = vmax.xlane.f32.xlu0 %v1408
        %v1410 = vpop.xlane.xlu0 %1409
        %v1411 = vsub.f32 %v1348, %v1407
        %v1412 = vsub.f32 %v1400, %v1410
        %v1413 = vmul.f32 %v1411, 1.442695
        %v1414 = vpow.pop %v1413
        %v1415 = vmul.f32 %v1412, 1.442695
        %v1416 = vpow.pop %v1415
        %v1417 = vsel %vm1183, %v1414, 0.0
        %1418 = vadd.xlane.f32.xlu0 %v1417
        %v1419 = vpop.xlane.xlu0 %1418
        %v1420 = vsel %vm1183, %v1416, 0.0
        %1421 = vadd.xlane.f32.xlu0 %v1420
        %v1422 = vpop.xlane.xlu0 %1421
        %v1423 = vrcp.pop %v1419
        %v1424 = vrcp.pop %v1422
        %v1425 = vmul.f32 %v1414, %v1423
        %v1426 = vmul.f32 %v1416, %v1424
        %v1427 = vpack.c.bf16 %v1425, %v1425
        %v1428 = vpack.c.bf16 %v1426, %v1426
        %1430 = vrot.lane.b32.xlu0 %v1088, 96
        %v1431 = vpop.permute.xlu0 %1430
        %v1433 = vsel %vm1183, %v1427, 0
        %v1436 = vsel %vm1211, %v1431, 0
        %1438 = vmatprep.subr.bf16.mxu0 0
        %1439 = vmatpush1.bf16.msra.mxu0 0
        %1440 = vmatprep.subr.bf16.mxu0 0
        %1441 = vmatpush1.bf16.msra.mxu0 0
        %1442 = vmatprep.subr.bf16.mxu0 0
        %1443 = vmatpush1.bf16.msra.mxu0 0
        %1444 = vmatprep.subr.bf16.mxu0 0
        %1445 = vmatpush1.bf16.msra.mxu0 0
        %1446 = vmatprep.subr.bf16.mxu0 0
        %1447 = vmatpush1.bf16.msra.mxu0 0
        %1448 = vmatprep.subr.bf16.mxu0 0
        %1449 = vmatpush1.bf16.msra.mxu0 0
        %1450 = vmatprep.subr.bf16.mxu0 0
        %1451 = vmatpush1.bf16.msra.mxu0 0
        %1452 = vmatprep.subr.bf16.mxu0 0
        %1453 = vmatpush1.bf16.msra.mxu0 %v1436
        %1454 = vmatprep.subr.bf16.mxu0 0
        %1455 = vmatpush2.bf16.msra.mxu0 0
        %1456 = vmatprep.subr.bf16.mxu0 0
        %1457 = vmatpush2.bf16.msra.mxu0 0
        %1458 = vmatprep.subr.bf16.mxu0 0
        %1459 = vmatpush2.bf16.msra.mxu0 0
        %1460 = vmatprep.subr.bf16.mxu0 0
        %1461 = vmatpush2.bf16.msra.mxu0 0
        %1462 = vmatprep.subr.bf16.mxu0 0
        %1463 = vmatpush2.bf16.msra.mxu0 0
        %1464 = vmatprep.subr.bf16.mxu0 0
        %1465 = vmatpush2.bf16.msra.mxu0 0
        %1466 = vmatprep.subr.bf16.mxu0 0
        %1467 = vmatpush2.bf16.msra.mxu0 0
        %1468 = vmatprep.subr.bf16.mxu0 0
        %1469 = vmatpush2.bf16.msra.mxu0 0
        %1470 = vmatprep.mubr.bf16.mxu0 0
        %1471 = vmatmul.mubr.bf16.gmra.mxu0 %v1433
        %v1472 = vpop.f32.mrf.mxu0
        %v1473 = vadd.f32 0.0, %v1472
        %v1474 = vpop.f32.mrf.mxu0
        %v1475 = vpop.f32.mrf.mxu0
        %v1476 = vpop.f32.mrf.mxu0
        %1477 = vdwg.mxu0
        %1479 = vrot.lane.b32.xlu0 %v1089, 96
        %v1480 = vpop.permute.xlu0 %1479
        %v1482 = vsel %vm1183, %v1428, 0
        %v1485 = vsel %vm1211, %v1480, 0
        %1487 = vmatprep.subr.bf16.mxu0 0
        %1488 = vmatpush1.bf16.msra.mxu0 0
        %1489 = vmatprep.subr.bf16.mxu0 0
        %1490 = vmatpush1.bf16.msra.mxu0 0
        %1491 = vmatprep.subr.bf16.mxu0 0
        %1492 = vmatpush1.bf16.msra.mxu0 0
        %1493 = vmatprep.subr.bf16.mxu0 0
        %1494 = vmatpush1.bf16.msra.mxu0 0
        %1495 = vmatprep.subr.bf16.mxu0 0
        %1496 = vmatpush1.bf16.msra.mxu0 0
        %1497 = vmatprep.subr.bf16.mxu0 0
        %1498 = vmatpush1.bf16.msra.mxu0 0
        %1499 = vmatprep.subr.bf16.mxu0 0
        %1500 = vmatpush1.bf16.msra.mxu0 0
        %1501 = vmatprep.subr.bf16.mxu0 0
        %1502 = vmatpush1.bf16.msra.mxu0 %v1485
        %1503 = vmatprep.subr.bf16.mxu0 0
        %1504 = vmatpush2.bf16.msra.mxu0 0
        %1505 = vmatprep.subr.bf16.mxu0 0
        %1506 = vmatpush2.bf16.msra.mxu0 0
        %1507 = vmatprep.subr.bf16.mxu0 0
        %1508 = vmatpush2.bf16.msra.mxu0 0
        %1509 = vmatprep.subr.bf16.mxu0 0
        %1510 = vmatpush2.bf16.msra.mxu0 0
        %1511 = vmatprep.subr.bf16.mxu0 0
        %1512 = vmatpush2.bf16.msra.mxu0 0
        %1513 = vmatprep.subr.bf16.mxu0 0
        %1514 = vmatpush2.bf16.msra.mxu0 0
        %1515 = vmatprep.subr.bf16.mxu0 0
        %1516 = vmatpush2.bf16.msra.mxu0 0
        %1517 = vmatprep.subr.bf16.mxu0 0
        %1518 = vmatpush2.bf16.msra.mxu0 0
        %1519 = vmatprep.mubr.bf16.mxu0 0
        %1520 = vmatmul.mubr.bf16.gmra.mxu0 %v1482
        %v1521 = vpop.f32.mrf.mxu0
        %v1522 = vadd.f32 0.0, %v1521
        %v1523 = vpop.f32.mrf.mxu0
        %v1524 = vpop.f32.mrf.mxu0
        %v1525 = vpop.f32.mrf.mxu0
        %1526 = vdwg.mxu0
        %1527 = vrot.lane.b32.xlu0 %v1084, 64
        %v1528 = vpop.permute.xlu0 %1527
        %1529 = vrot.lane.b32.xlu0 %v1086, 64
        %v1530 = vpop.permute.xlu0 %1529
        %v1532 = vsel %vm1090, %v1528, 0
        %v1535 = vsel %vm1090, %v1530, 0
        %1537 = vmatprep.subr.bf16.mxu0 0
        %1538 = vmatpush1.bf16.xpose.msra.mxu0 0
        %1539 = vmatprep.subr.bf16.mxu0 0
        %1540 = vmatpush1.bf16.xpose.msra.mxu0 0
        %1541 = vmatprep.subr.bf16.mxu0 0
        %1542 = vmatpush1.bf16.xpose.msra.mxu0 0
        %1543 = vmatprep.subr.bf16.mxu0 0
        %1544 = vmatpush1.bf16.xpose.msra.mxu0 0
        %1545 = vmatprep.subr.bf16.mxu0 0
        %1546 = vmatpush1.bf16.xpose.msra.mxu0 0
        %1547 = vmatprep.subr.bf16.mxu0 0
        %1548 = vmatpush1.bf16.xpose.msra.mxu0 0
        %1549 = vmatprep.subr.bf16.mxu0 0
        %1550 = vmatpush1.bf16.xpose.msra.mxu0 0
        %1551 = vmatprep.subr.bf16.mxu0 0
        %1552 = vmatpush1.bf16.xpose.msra.mxu0 %v1535
        %1553 = vmatprep.subr.bf16.mxu0 0
        %1554 = vmatpush2.bf16.xpose.msra.mxu0 0
        %1555 = vmatprep.subr.bf16.mxu0 0
        %1556 = vmatpush2.bf16.xpose.msra.mxu0 0
        %1557 = vmatprep.subr.bf16.mxu0 0
        %1558 = vmatpush2.bf16.xpose.msra.mxu0 0
        %1559 = vmatprep.subr.bf16.mxu0 0
        %1560 = vmatpush2.bf16.xpose.msra.mxu0 0
        %1561 = vmatprep.subr.bf16.mxu0 0
        %1562 = vmatpush2.bf16.xpose.msra.mxu0 0
        %1563 = vmatprep.subr.bf16.mxu0 0
        %1564 = vmatpush2.bf16.xpose.msra.mxu0 0
        %1565 = vmatprep.subr.bf16.mxu0 0
        %1566 = vmatpush2.bf16.xpose.msra.mxu0 0
        %1567 = vmatprep.subr.bf16.mxu0 0
        %1568 = vmatpush2.bf16.xpose.msra.mxu0 0
        %1569 = vmatprep.mubr.bf16.mxu0 0
        %1570 = vmatmul.mubr.bf16.gmra.mxu0 %v1532
        %v1571 = vpop.f32.mrf.mxu0
        %v1572 = vadd.f32 0.0, %v1571
        %v1573 = vpop.f32.mrf.mxu0
        %v1574 = vpop.f32.mrf.mxu0
        %v1575 = vpop.f32.mrf.mxu0
        %1576 = vdwg.mxu0
        %1577 = vrot.lane.b32.xlu0 %v1085, 64
        %v1578 = vpop.permute.xlu0 %1577
        %1579 = vrot.lane.b32.xlu0 %v1087, 64
        %v1580 = vpop.permute.xlu0 %1579
        %v1582 = vsel %vm1090, %v1578, 0
        %v1585 = vsel %vm1090, %v1580, 0
        %1587 = vmatprep.subr.bf16.mxu0 0
        %1588 = vmatpush1.bf16.xpose.msra.mxu0 0
        %1589 = vmatprep.subr.bf16.mxu0 0
        %1590 = vmatpush1.bf16.xpose.msra.mxu0 0
        %1591 = vmatprep.subr.bf16.mxu0 0
        %1592 = vmatpush1.bf16.xpose.msra.mxu0 0
        %1593 = vmatprep.subr.bf16.mxu0 0
        %1594 = vmatpush1.bf16.xpose.msra.mxu0 0
        %1595 = vmatprep.subr.bf16.mxu0 0
        %1596 = vmatpush1.bf16.xpose.msra.mxu0 0
        %1597 = vmatprep.subr.bf16.mxu0 0
        %1598 = vmatpush1.bf16.xpose.msra.mxu0 0
        %1599 = vmatprep.subr.bf16.mxu0 0
        %1600 = vmatpush1.bf16.xpose.msra.mxu0 0
        %1601 = vmatprep.subr.bf16.mxu0 0
        %1602 = vmatpush1.bf16.xpose.msra.mxu0 %v1585
        %1603 = vmatprep.subr.bf16.mxu0 0
        %1604 = vmatpush2.bf16.xpose.msra.mxu0 0
        %1605 = vmatprep.subr.bf16.mxu0 0
        %1606 = vmatpush2.bf16.xpose.msra.mxu0 0
        %1607 = vmatprep.subr.bf16.mxu0 0
        %1608 = vmatpush2.bf16.xpose.msra.mxu0 0
        %1609 = vmatprep.subr.bf16.mxu0 0
        %1610 = vmatpush2.bf16.xpose.msra.mxu0 0
        %1611 = vmatprep.subr.bf16.mxu0 0
        %1612 = vmatpush2.bf16.xpose.msra.mxu0 0
        %1613 = vmatprep.subr.bf16.mxu0 0
        %1614 = vmatpush2.bf16.xpose.msra.mxu0 0
        %1615 = vmatprep.subr.bf16.mxu0 0
        %1616 = vmatpush2.bf16.xpose.msra.mxu0 0
        %1617 = vmatprep.subr.bf16.mxu0 0
        %1618 = vmatpush2.bf16.xpose.msra.mxu0 0
        %1619 = vmatprep.mubr.bf16.mxu0 0
        %1620 = vmatmul.mubr.bf16.gmra.mxu0 %v1582
        %v1621 = vpop.f32.mrf.mxu0
        %v1622 = vadd.f32 0.0, %v1621
        %v1623 = vpop.f32.mrf.mxu0
        %v1624 = vpop.f32.mrf.mxu0
        %v1625 = vpop.f32.mrf.mxu0
        %1626 = vdwg.mxu0
        %v1627 = vsel %vm1183, %v1572, -inf
        %1628 = vmax.xlane.f32.xlu0 %v1627
        %v1629 = vpop.xlane.xlu0 %1628
        %v1630 = vsel %vm1183, %v1622, -inf
        %1631 = vmax.xlane.f32.xlu0 %v1630
        %v1632 = vpop.xlane.xlu0 %1631
        %v1633 = vsub.f32 %v1572, %v1629
        %v1634 = vsub.f32 %v1622, %v1632
        %v1635 = vmul.f32 %v1633, 1.442695
        %v1636 = vpow.pop %v1635
        %v1637 = vmul.f32 %v1634, 1.442695
        %v1638 = vpow.pop %v1637
        %v1639 = vsel %vm1183, %v1636, 0.0
        %1640 = vadd.xlane.f32.xlu0 %v1639
        %v1641 = vpop.xlane.xlu0 %1640
        %v1642 = vsel %vm1183, %v1638, 0.0
        %1643 = vadd.xlane.f32.xlu0 %v1642
        %v1644 = vpop.xlane.xlu0 %1643
        %v1645 = vrcp.pop %v1641
        %v1646 = vrcp.pop %v1644
        %v1647 = vmul.f32 %v1636, %v1645
        %v1648 = vmul.f32 %v1638, %v1646
        %v1649 = vpack.c.bf16 %v1647, %v1647
        %v1650 = vpack.c.bf16 %v1648, %v1648
        %1651 = vrot.lane.b32.xlu0 %v1088, 64
        %v1652 = vpop.permute.xlu0 %1651
        %v1654 = vsel %vm1183, %v1649, 0
        %v1657 = vsel %vm1211, %v1652, 0
        %1659 = vmatprep.subr.bf16.mxu0 0
        %1660 = vmatpush1.bf16.msra.mxu0 0
        %1661 = vmatprep.subr.bf16.mxu0 0
        %1662 = vmatpush1.bf16.msra.mxu0 0
        %1663 = vmatprep.subr.bf16.mxu0 0
        %1664 = vmatpush1.bf16.msra.mxu0 0
        %1665 = vmatprep.subr.bf16.mxu0 0
        %1666 = vmatpush1.bf16.msra.mxu0 0
        %1667 = vmatprep.subr.bf16.mxu0 0
        %1668 = vmatpush1.bf16.msra.mxu0 0
        %1669 = vmatprep.subr.bf16.mxu0 0
        %1670 = vmatpush1.bf16.msra.mxu0 0
        %1671 = vmatprep.subr.bf16.mxu0 0
        %1672 = vmatpush1.bf16.msra.mxu0 0
        %1673 = vmatprep.subr.bf16.mxu0 0
        %1674 = vmatpush1.bf16.msra.mxu0 %v1657
        %1675 = vmatprep.subr.bf16.mxu0 0
        %1676 = vmatpush2.bf16.msra.mxu0 0
        %1677 = vmatprep.subr.bf16.mxu0 0
        %1678 = vmatpush2.bf16.msra.mxu0 0
        %1679 = vmatprep.subr.bf16.mxu0 0
        %1680 = vmatpush2.bf16.msra.mxu0 0
        %1681 = vmatprep.subr.bf16.mxu0 0
        %1682 = vmatpush2.bf16.msra.mxu0 0
        %1683 = vmatprep.subr.bf16.mxu0 0
        %1684 = vmatpush2.bf16.msra.mxu0 0
        %1685 = vmatprep.subr.bf16.mxu0 0
        %1686 = vmatpush2.bf16.msra.mxu0 0
        %1687 = vmatprep.subr.bf16.mxu0 0
        %1688 = vmatpush2.bf16.msra.mxu0 0
        %1689 = vmatprep.subr.bf16.mxu0 0
        %1690 = vmatpush2.bf16.msra.mxu0 0
        %1691 = vmatprep.mubr.bf16.mxu0 0
        %1692 = vmatmul.mubr.bf16.gmra.mxu0 %v1654
        %v1693 = vpop.f32.mrf.mxu0
        %v1694 = vadd.f32 0.0, %v1693
        %v1695 = vpop.f32.mrf.mxu0
        %v1696 = vpop.f32.mrf.mxu0
        %v1697 = vpop.f32.mrf.mxu0
        %1698 = vdwg.mxu0
        %1699 = vrot.lane.b32.xlu0 %v1089, 64
        %v1700 = vpop.permute.xlu0 %1699
        %v1702 = vsel %vm1183, %v1650, 0
        %v1705 = vsel %vm1211, %v1700, 0
        %1707 = vmatprep.subr.bf16.mxu0 0
        %1708 = vmatpush1.bf16.msra.mxu0 0
        %1709 = vmatprep.subr.bf16.mxu0 0
        %1710 = vmatpush1.bf16.msra.mxu0 0
        %1711 = vmatprep.subr.bf16.mxu0 0
        %1712 = vmatpush1.bf16.msra.mxu0 0
        %1713 = vmatprep.subr.bf16.mxu0 0
        %1714 = vmatpush1.bf16.msra.mxu0 0
        %1715 = vmatprep.subr.bf16.mxu0 0
        %1716 = vmatpush1.bf16.msra.mxu0 0
        %1717 = vmatprep.subr.bf16.mxu0 0
        %1718 = vmatpush1.bf16.msra.mxu0 0
        %1719 = vmatprep.subr.bf16.mxu0 0
        %1720 = vmatpush1.bf16.msra.mxu0 0
        %1721 = vmatprep.subr.bf16.mxu0 0
        %1722 = vmatpush1.bf16.msra.mxu0 %v1705
        %1723 = vmatprep.subr.bf16.mxu0 0
        %1724 = vmatpush2.bf16.msra.mxu0 0
        %1725 = vmatprep.subr.bf16.mxu0 0
        %1726 = vmatpush2.bf16.msra.mxu0 0
        %1727 = vmatprep.subr.bf16.mxu0 0
        %1728 = vmatpush2.bf16.msra.mxu0 0
        %1729 = vmatprep.subr.bf16.mxu0 0
        %1730 = vmatpush2.bf16.msra.mxu0 0
        %1731 = vmatprep.subr.bf16.mxu0 0
        %1732 = vmatpush2.bf16.msra.mxu0 0
        %1733 = vmatprep.subr.bf16.mxu0 0
        %1734 = vmatpush2.bf16.msra.mxu0 0
        %1735 = vmatprep.subr.bf16.mxu0 0
        %1736 = vmatpush2.bf16.msra.mxu0 0
        %1737 = vmatprep.subr.bf16.mxu0 0
        %1738 = vmatpush2.bf16.msra.mxu0 0
        %1739 = vmatprep.mubr.bf16.mxu0 0
        %1740 = vmatmul.mubr.bf16.gmra.mxu0 %v1702
        %v1741 = vpop.f32.mrf.mxu0
        %v1742 = vadd.f32 0.0, %v1741
        %v1743 = vpop.f32.mrf.mxu0
        %v1744 = vpop.f32.mrf.mxu0
        %v1745 = vpop.f32.mrf.mxu0
        %1746 = vdwg.mxu0
        %1747 = vrot.lane.b32.xlu0 %v1084, 32
        %v1748 = vpop.permute.xlu0 %1747
        %1749 = vrot.lane.b32.xlu0 %v1086, 32
        %v1750 = vpop.permute.xlu0 %1749
        %v1752 = vsel %vm1090, %v1748, 0
        %v1755 = vsel %vm1090, %v1750, 0
        %1757 = vmatprep.subr.bf16.mxu0 0
        %1758 = vmatpush1.bf16.xpose.msra.mxu0 0
        %1759 = vmatprep.subr.bf16.mxu0 0
        %1760 = vmatpush1.bf16.xpose.msra.mxu0 0
        %1761 = vmatprep.subr.bf16.mxu0 0
        %1762 = vmatpush1.bf16.xpose.msra.mxu0 0
        %1763 = vmatprep.subr.bf16.mxu0 0
        %1764 = vmatpush1.bf16.xpose.msra.mxu0 0
        %1765 = vmatprep.subr.bf16.mxu0 0
        %1766 = vmatpush1.bf16.xpose.msra.mxu0 0
        %1767 = vmatprep.subr.bf16.mxu0 0
        %1768 = vmatpush1.bf16.xpose.msra.mxu0 0
        %1769 = vmatprep.subr.bf16.mxu0 0
        %1770 = vmatpush1.bf16.xpose.msra.mxu0 0
        %1771 = vmatprep.subr.bf16.mxu0 0
        %1772 = vmatpush1.bf16.xpose.msra.mxu0 %v1755
        %1773 = vmatprep.subr.bf16.mxu0 0
        %1774 = vmatpush2.bf16.xpose.msra.mxu0 0
        %1775 = vmatprep.subr.bf16.mxu0 0
        %1776 = vmatpush2.bf16.xpose.msra.mxu0 0
        %1777 = vmatprep.subr.bf16.mxu0 0
        %1778 = vmatpush2.bf16.xpose.msra.mxu0 0
        %1779 = vmatprep.subr.bf16.mxu0 0
        %1780 = vmatpush2.bf16.xpose.msra.mxu0 0
        %1781 = vmatprep.subr.bf16.mxu0 0
        %1782 = vmatpush2.bf16.xpose.msra.mxu0 0
        %1783 = vmatprep.subr.bf16.mxu0 0
        %1784 = vmatpush2.bf16.xpose.msra.mxu0 0
        %1785 = vmatprep.subr.bf16.mxu0 0
        %1786 = vmatpush2.bf16.xpose.msra.mxu0 0
        %1787 = vmatprep.subr.bf16.mxu0 0
        %1788 = vmatpush2.bf16.xpose.msra.mxu0 0
        %1789 = vmatprep.mubr.bf16.mxu0 0
        %1790 = vmatmul.mubr.bf16.gmra.mxu0 %v1752
        %v1791 = vpop.f32.mrf.mxu0
        %v1792 = vadd.f32 0.0, %v1791
        %v1793 = vpop.f32.mrf.mxu0
        %v1794 = vpop.f32.mrf.mxu0
        %v1795 = vpop.f32.mrf.mxu0
        %1796 = vdwg.mxu0
        %1797 = vrot.lane.b32.xlu0 %v1085, 32
        %v1798 = vpop.permute.xlu0 %1797
        %1799 = vrot.lane.b32.xlu0 %v1087, 32
        %v1800 = vpop.permute.xlu0 %1799
        %v1802 = vsel %vm1090, %v1798, 0
        %v1805 = vsel %vm1090, %v1800, 0
        %1807 = vmatprep.subr.bf16.mxu0 0
        %1808 = vmatpush1.bf16.xpose.msra.mxu0 0
        %1809 = vmatprep.subr.bf16.mxu0 0
        %1810 = vmatpush1.bf16.xpose.msra.mxu0 0
        %1811 = vmatprep.subr.bf16.mxu0 0
        %1812 = vmatpush1.bf16.xpose.msra.mxu0 0
        %1813 = vmatprep.subr.bf16.mxu0 0
        %1814 = vmatpush1.bf16.xpose.msra.mxu0 0
        %1815 = vmatprep.subr.bf16.mxu0 0
        %1816 = vmatpush1.bf16.xpose.msra.mxu0 0
        %1817 = vmatprep.subr.bf16.mxu0 0
        %1818 = vmatpush1.bf16.xpose.msra.mxu0 0
        %1819 = vmatprep.subr.bf16.mxu0 0
        %1820 = vmatpush1.bf16.xpose.msra.mxu0 0
        %1821 = vmatprep.subr.bf16.mxu0 0
        %1822 = vmatpush1.bf16.xpose.msra.mxu0 %v1805
        %1823 = vmatprep.subr.bf16.mxu0 0
        %1824 = vmatpush2.bf16.xpose.msra.mxu0 0
        %1825 = vmatprep.subr.bf16.mxu0 0
        %1826 = vmatpush2.bf16.xpose.msra.mxu0 0
        %1827 = vmatprep.subr.bf16.mxu0 0
        %1828 = vmatpush2.bf16.xpose.msra.mxu0 0
        %1829 = vmatprep.subr.bf16.mxu0 0
        %1830 = vmatpush2.bf16.xpose.msra.mxu0 0
        %1831 = vmatprep.subr.bf16.mxu0 0
        %1832 = vmatpush2.bf16.xpose.msra.mxu0 0
        %1833 = vmatprep.subr.bf16.mxu0 0
        %1834 = vmatpush2.bf16.xpose.msra.mxu0 0
        %1835 = vmatprep.subr.bf16.mxu0 0
        %1836 = vmatpush2.bf16.xpose.msra.mxu0 0
        %1837 = vmatprep.subr.bf16.mxu0 0
        %1838 = vmatpush2.bf16.xpose.msra.mxu0 0
        %1839 = vmatprep.mubr.bf16.mxu0 0
        %1840 = vmatmul.mubr.bf16.gmra.mxu0 %v1802
        %v1841 = vpop.f32.mrf.mxu0
        %v1842 = vadd.f32 0.0, %v1841
        %v1843 = vpop.f32.mrf.mxu0
        %v1844 = vpop.f32.mrf.mxu0
        %v1845 = vpop.f32.mrf.mxu0
        %1846 = vdwg.mxu0
        %v1847 = vsel %vm1183, %v1792, -inf
        %1848 = vmax.xlane.f32.xlu0 %v1847
        %v1849 = vpop.xlane.xlu0 %1848
        %v1850 = vsel %vm1183, %v1842, -inf
        %1851 = vmax.xlane.f32.xlu0 %v1850
        %v1852 = vpop.xlane.xlu0 %1851
        %v1853 = vsub.f32 %v1792, %v1849
        %v1854 = vsub.f32 %v1842, %v1852
        %v1855 = vmul.f32 %v1853, 1.442695
        %v1856 = vpow.pop %v1855
        %v1857 = vmul.f32 %v1854, 1.442695
        %v1858 = vpow.pop %v1857
        %v1859 = vsel %vm1183, %v1856, 0.0
        %1860 = vadd.xlane.f32.xlu0 %v1859
        %v1861 = vpop.xlane.xlu0 %1860
        %v1862 = vsel %vm1183, %v1858, 0.0
        %1863 = vadd.xlane.f32.xlu0 %v1862
        %v1864 = vpop.xlane.xlu0 %1863
        %v1865 = vrcp.pop %v1861
        %v1866 = vrcp.pop %v1864
        %v1867 = vmul.f32 %v1856, %v1865
        %v1868 = vmul.f32 %v1858, %v1866
        %v1869 = vpack.c.bf16 %v1867, %v1867
        %v1870 = vpack.c.bf16 %v1868, %v1868
        %1871 = vrot.lane.b32.xlu0 %v1088, 32
        %v1872 = vpop.permute.xlu0 %1871
        %v1874 = vsel %vm1183, %v1869, 0
        %v1877 = vsel %vm1211, %v1872, 0
        %1879 = vmatprep.subr.bf16.mxu0 0
        %1880 = vmatpush1.bf16.msra.mxu0 0
        %1881 = vmatprep.subr.bf16.mxu0 0
        %1882 = vmatpush1.bf16.msra.mxu0 0
        %1883 = vmatprep.subr.bf16.mxu0 0
        %1884 = vmatpush1.bf16.msra.mxu0 0
        %1885 = vmatprep.subr.bf16.mxu0 0
        %1886 = vmatpush1.bf16.msra.mxu0 0
        %1887 = vmatprep.subr.bf16.mxu0 0
        %1888 = vmatpush1.bf16.msra.mxu0 0
        %1889 = vmatprep.subr.bf16.mxu0 0
        %1890 = vmatpush1.bf16.msra.mxu0 0
        %1891 = vmatprep.subr.bf16.mxu0 0
        %1892 = vmatpush1.bf16.msra.mxu0 0
        %1893 = vmatprep.subr.bf16.mxu0 0
        %1894 = vmatpush1.bf16.msra.mxu0 %v1877
        %1895 = vmatprep.subr.bf16.mxu0 0
        %1896 = vmatpush2.bf16.msra.mxu0 0
        %1897 = vmatprep.subr.bf16.mxu0 0
        %1898 = vmatpush2.bf16.msra.mxu0 0
        %1899 = vmatprep.subr.bf16.mxu0 0
        %1900 = vmatpush2.bf16.msra.mxu0 0
        %1901 = vmatprep.subr.bf16.mxu0 0
        %1902 = vmatpush2.bf16.msra.mxu0 0
        %1903 = vmatprep.subr.bf16.mxu0 0
        %1904 = vmatpush2.bf16.msra.mxu0 0
        %1905 = vmatprep.subr.bf16.mxu0 0
        %1906 = vmatpush2.bf16.msra.mxu0 0
        %1907 = vmatprep.subr.bf16.mxu0 0
        %1908 = vmatpush2.bf16.msra.mxu0 0
        %1909 = vmatprep.subr.bf16.mxu0 0
        %1910 = vmatpush2.bf16.msra.mxu0 0
        %1911 = vmatprep.mubr.bf16.mxu0 0
        %1912 = vmatmul.mubr.bf16.gmra.mxu0 %v1874
        %v1913 = vpop.f32.mrf.mxu0
        %v1914 = vadd.f32 0.0, %v1913
        %v1915 = vpop.f32.mrf.mxu0
        %v1916 = vpop.f32.mrf.mxu0
        %v1917 = vpop.f32.mrf.mxu0
        %1918 = vdwg.mxu0
        %1919 = vrot.lane.b32.xlu0 %v1089, 32
        %v1920 = vpop.permute.xlu0 %1919
        %v1922 = vsel %vm1183, %v1870, 0
        %v1925 = vsel %vm1211, %v1920, 0
        %1927 = vmatprep.subr.bf16.mxu0 0
        %1928 = vmatpush1.bf16.msra.mxu0 0
        %1929 = vmatprep.subr.bf16.mxu0 0
        %1930 = vmatpush1.bf16.msra.mxu0 0
        %1931 = vmatprep.subr.bf16.mxu0 0
        %1932 = vmatpush1.bf16.msra.mxu0 0
        %1933 = vmatprep.subr.bf16.mxu0 0
        %1934 = vmatpush1.bf16.msra.mxu0 0
        %1935 = vmatprep.subr.bf16.mxu0 0
        %1936 = vmatpush1.bf16.msra.mxu0 0
        %1937 = vmatprep.subr.bf16.mxu0 0
        %1938 = vmatpush1.bf16.msra.mxu0 0
        %1939 = vmatprep.subr.bf16.mxu0 0
        %1940 = vmatpush1.bf16.msra.mxu0 0
        %1941 = vmatprep.subr.bf16.mxu0 0
        %1942 = vmatpush1.bf16.msra.mxu0 %v1925
        %1943 = vmatprep.subr.bf16.mxu0 0
        %1944 = vmatpush2.bf16.msra.mxu0 0
        %1945 = vmatprep.subr.bf16.mxu0 0
        %1946 = vmatpush2.bf16.msra.mxu0 0
        %1947 = vmatprep.subr.bf16.mxu0 0
        %1948 = vmatpush2.bf16.msra.mxu0 0
        %1949 = vmatprep.subr.bf16.mxu0 0
        %1950 = vmatpush2.bf16.msra.mxu0 0
        %1951 = vmatprep.subr.bf16.mxu0 0
        %1952 = vmatpush2.bf16.msra.mxu0 0
        %1953 = vmatprep.subr.bf16.mxu0 0
        %1954 = vmatpush2.bf16.msra.mxu0 0
        %1955 = vmatprep.subr.bf16.mxu0 0
        %1956 = vmatpush2.bf16.msra.mxu0 0
        %1957 = vmatprep.subr.bf16.mxu0 0
        %1958 = vmatpush2.bf16.msra.mxu0 0
        %1959 = vmatprep.mubr.bf16.mxu0 0
        %1960 = vmatmul.mubr.bf16.gmra.mxu0 %v1922
        %v1961 = vpop.f32.mrf.mxu0
        %v1962 = vadd.f32 0.0, %v1961
        %v1963 = vpop.f32.mrf.mxu0
        %v1964 = vpop.f32.mrf.mxu0
        %v1965 = vpop.f32.mrf.mxu0
        %1966 = vdwg.mxu0
        %1969 = vrot.lane.b32.xlu0 %v1473, 32
        %v1970 = vpop.permute.xlu0 %1969
        %1971 = vrot.lane.b32.xlu0 %v1522, 32
        %v1972 = vpop.permute.xlu0 %1971
        %1977 = vrot.lane.b32.xlu0 %v1694, 64
        %v1978 = vpop.permute.xlu0 %1977
        %1979 = vrot.lane.b32.xlu0 %v1742, 64
        %v1980 = vpop.permute.xlu0 %1979
        %1985 = vrot.lane.b32.xlu0 %v1914, 96
        %v1986 = vpop.permute.xlu0 %1985
        %1987 = vrot.lane.b32.xlu0 %v1962, 96
        %v1988 = vpop.permute.xlu0 %1987
        %v1991 = vsel %vm1090, %v1250, %v1970
        %v1992 = vsel %vm1090, %v1296, %v1972
        %vm1993 = vcmask 523264
        %v1994 = vsel %vm1993, %v1991, %v1978
        %v1995 = vsel %vm1993, %v1992, %v1980
        %vm1996 = vcmask 785408
        %v1997 = vsel %vm1996, %v1994, %v1986
        %v1998 = vsel %vm1996, %v1995, %v1988
        %v1999 = vpack.c.bf16 %v1998, %v1997
        %v2000 = vld [vmem:[%s644] sm:$0xf]
        %v2001 = vld [vmem:[%s644 + $0x4] sm:$0xf]
        %v2002 = vld [vmem:[%s644 + $0x8] sm:$0xf]
        %v2003 = vld [vmem:[%s644 + $0xc] sm:$0xf]
        %v2004 = vld [vmem:[%s644 + $0x10] sm:$0xf]
        %v2005 = vld [vmem:[%s644 + $0x14] sm:$0xf]
        %v2006 = vld [vmem:[%s644 + $0x18] sm:$0xf]
        %v2007 = vld [vmem:[%s644 + $0x1c] sm:$0xf]
        %v2008 = vld [vmem:[%s644 + $0x20] sm:$0xf]
        %v2009 = vld [vmem:[%s644 + $0x24] sm:$0xf]
        %v2010 = vld [vmem:[%s644 + $0x28] sm:$0xf]
        %v2011 = vld [vmem:[%s644 + $0x2c] sm:$0xf]
        %v2012 = vld [vmem:[%s644 + $0x30] sm:$0xf]
        %v2013 = vld [vmem:[%s644 + $0x34] sm:$0xf]
        %v2014 = vld [vmem:[%s644 + $0x38] sm:$0xf]
        %v2015 = vld [vmem:[%s644 + $0x3c] sm:$0xf]
        %v2016 = vld [vmem:[%s652] sm:$0x1]
        %v2018 = vlaneseq
        %v2019 = vshrl.u32 %v2018, 7
        %v2020 = vsub.s32 0, %v2019
        %v2021 = vrot.slane %v2016, %v2020
        %v2039 = vunpack.c.l.b16 %v2000
        %v2040 = vunpack.c.l.b16 %v2001
        %v2041 = vunpack.c.l.b16 %v2002
        %v2042 = vunpack.c.l.b16 %v2003
        %v2043 = vunpack.c.l.b16 %v2004
        %v2044 = vunpack.c.l.b16 %v2005
        %v2045 = vunpack.c.l.b16 %v2006
        %v2046 = vunpack.c.l.b16 %v2007
        %v2047 = vunpack.c.l.b16 %v2008
        %v2048 = vunpack.c.l.b16 %v2009
        %v2049 = vunpack.c.l.b16 %v2010
        %v2050 = vunpack.c.l.b16 %v2011
        %v2051 = vunpack.c.l.b16 %v2012
        %v2052 = vunpack.c.l.b16 %v2013
        %v2053 = vunpack.c.l.b16 %v2014
        %v2054 = vunpack.c.l.b16 %v2015
        %v2055 = vpack.c.b16 %v2040, %v2039
        %v2056 = vpack.c.b16 %v2042, %v2041
        %v2057 = vpack.c.b16 %v2044, %v2043
        %v2058 = vpack.c.b16 %v2046, %v2045
        %v2059 = vpack.c.b16 %v2048, %v2047
        %v2060 = vpack.c.b16 %v2050, %v2049
        %v2061 = vpack.c.b16 %v2052, %v2051
        %v2062 = vpack.c.b16 %v2054, %v2053
        %2071 = vmatprep.subr.bf16.mxu0 0
        %2072 = vmatpush1.bf16.msra.mxu0 %v2062
        %2073 = vmatprep.subr.bf16.mxu0 0
        %2074 = vmatpush1.bf16.msra.mxu0 %v2061
        %2075 = vmatprep.subr.bf16.mxu0 0
        %2076 = vmatpush1.bf16.msra.mxu0 %v2060
        %2077 = vmatprep.subr.bf16.mxu0 0
        %2078 = vmatpush1.bf16.msra.mxu0 %v2059
        %2079 = vmatprep.subr.bf16.mxu0 0
        %2080 = vmatpush1.bf16.msra.mxu0 %v2058
        %2081 = vmatprep.subr.bf16.mxu0 0
        %2082 = vmatpush1.bf16.msra.mxu0 %v2057
        %2083 = vmatprep.subr.bf16.mxu0 0
        %2084 = vmatpush1.bf16.msra.mxu0 %v2056
        %2085 = vmatprep.subr.bf16.mxu0 0
        %2086 = vmatpush1.bf16.msra.mxu0 %v2055
        %2087 = vmatprep.subr.bf16.mxu0 0
        %2088 = vmatpush2.bf16.msra.mxu0 0
        %2089 = vmatprep.subr.bf16.mxu0 0
        %2090 = vmatpush2.bf16.msra.mxu0 0
        %2091 = vmatprep.subr.bf16.mxu0 0
        %2092 = vmatpush2.bf16.msra.mxu0 0
        %2093 = vmatprep.subr.bf16.mxu0 0
        %2094 = vmatpush2.bf16.msra.mxu0 0
        %2095 = vmatprep.subr.bf16.mxu0 0
        %2096 = vmatpush2.bf16.msra.mxu0 0
        %2097 = vmatprep.subr.bf16.mxu0 0
        %2098 = vmatpush2.bf16.msra.mxu0 0
        %2099 = vmatprep.subr.bf16.mxu0 0
        %2100 = vmatpush2.bf16.msra.mxu0 0
        %2101 = vmatprep.subr.bf16.mxu0 0
        %2102 = vmatpush2.bf16.msra.mxu0 0
        %2103 = vmatprep.mubr.bf16.mxu0 0
        %2104 = vmatmul.mubr.bf16.gmra.mxu0 %v1999
        %v2105 = vpop.f32.mrf.mxu0
        %v2106 = vadd.f32 %v2021, %v2105
        %v2107 = vpop.f32.mrf.mxu0
        %v2108 = vpop.f32.mrf.mxu0
        %v2109 = vadd.f32 %v2021, %v2108
        %v2110 = vpop.f32.mrf.mxu0
        %2111 = vdwg.mxu0
        %v2112 = vadd.f32 %v820, %v2106
        %v2113 = vadd.f32 %v821, %v2109
        %v2114 = vld [vmem:[%s660] sm:$0x1]
        %v2115 = vld [vmem:[%s668] sm:$0x1]
        %2116 = vadd.xlane.f32.xlu0 %v2112
        %v2117 = vpop.xlane.xlu0 %2116
        %2118 = vadd.xlane.f32.xlu0 %v2113
        %v2119 = vpop.xlane.xlu0 %2118
        %v2120 = vrcp.pop 128.0
        %v2121 = vmul.f32 %v2117, %v2120
        %v2122 = vmul.f32 %v2119, %v2120
        %v2123 = vsub.f32 %v2112, %v2121
        %v2124 = vsub.f32 %v2113, %v2122
        %v2125 = vmul.f32 %v2123, %v2123
        %v2126 = vmul.f32 %v2124, %v2124
        %2127 = vadd.xlane.f32.xlu0 %v2125
        %v2128 = vpop.xlane.xlu0 %2127
        %2129 = vadd.xlane.f32.xlu0 %v2126
        %v2130 = vpop.xlane.xlu0 %2129
        %v2131 = vmul.f32 %v2128, %v2120
        %v2132 = vmul.f32 %v2130, %v2120
        %v2133 = vadd.f32 %v2131, 1e-05
        %v2134 = vadd.f32 %v2132, 1e-05
        %v2135 = vrsqrt.pop %v2133
        %v2136 = vrsqrt.pop %v2134
        %v2137 = vmul.f32 %v2123, %v2135
        %v2138 = vmul.f32 %v2124, %v2136
        %v2140 = vlaneseq
        %v2141 = vshrl.u32 %v2140, 7
        %v2142 = vsub.s32 0, %v2141
        %v2143 = vrot.slane %v2114, %v2142
        %v2145 = vmul.f32 %v2137, %v2143
        %v2146 = vmul.f32 %v2138, %v2143
        %v2148 = vlaneseq
        %v2149 = vshrl.u32 %v2148, 7
        %v2150 = vsub.s32 0, %v2149
        %v2151 = vrot.slane %v2115, %v2150
        %v2153 = vadd.f32 %v2145, %v2151
        %v2154 = vadd.f32 %v2146, %v2151
        %v2155 = vpack.c.bf16 %v2154, %v2153
        %v2156 = vld [vmem:[%s677] sm:$0xff]
        %v2157 = vld [vmem:[%s677 + $0x8] sm:$0xff]
        %v2158 = vld [vmem:[%s677 + $0x10] sm:$0xff]
        %v2159 = vld [vmem:[%s677 + $0x18] sm:$0xff]
        %v2160 = vld [vmem:[%s677 + $0x20] sm:$0xff]
        %v2161 = vld [vmem:[%s677 + $0x28] sm:$0xff]
        %v2162 = vld [vmem:[%s677 + $0x30] sm:$0xff]
        %v2163 = vld [vmem:[%s677 + $0x38] sm:$0xff]
        %v2164 = vld [vmem:[%s677 + $0x40] sm:$0xff]
        %v2165 = vld [vmem:[%s677 + $0x48] sm:$0xff]
        %v2166 = vld [vmem:[%s677 + $0x50] sm:$0xff]
        %v2167 = vld [vmem:[%s677 + $0x58] sm:$0xff]
        %v2168 = vld [vmem:[%s677 + $0x60] sm:$0xff]
        %v2169 = vld [vmem:[%s677 + $0x68] sm:$0xff]
        %v2170 = vld [vmem:[%s677 + $0x70] sm:$0xff]
        %v2171 = vld [vmem:[%s677 + $0x78] sm:$0xff]
        %v2172 = vld [vmem:[%s686] sm:$0x3]
        %v2174 = vlaneseq
        %v2175 = vshrl.u32 %v2174, 7
        %v2176 = vsub.s32 0, %v2175
        %v2177 = vrot.slane %v2172, %v2176
        %v2178 = vlaneseq
        %v2179 = vshrl.u32 %v2178, 7
        %v2180 = vsub.s32 1, %v2179
        %v2181 = vrot.slane %v2172, %v2180
        %v2200 = vunpack.c.l.b16 %v2156
        %v2201 = vunpack.c.h.b16 %v2156
        %v2202 = vunpack.c.l.b16 %v2157
        %v2203 = vunpack.c.h.b16 %v2157
        %v2204 = vunpack.c.l.b16 %v2158
        %v2205 = vunpack.c.h.b16 %v2158
        %v2206 = vunpack.c.l.b16 %v2159
        %v2207 = vunpack.c.h.b16 %v2159
        %v2208 = vunpack.c.l.b16 %v2160
        %v2209 = vunpack.c.h.b16 %v2160
        %v2210 = vunpack.c.l.b16 %v2161
        %v2211 = vunpack.c.h.b16 %v2161
        %v2212 = vunpack.c.l.b16 %v2162
        %v2213 = vunpack.c.h.b16 %v2162
        %v2214 = vunpack.c.l.b16 %v2163
        %v2215 = vunpack.c.h.b16 %v2163
        %v2216 = vunpack.c.l.b16 %v2164
        %v2217 = vunpack.c.h.b16 %v2164
        %v2218 = vunpack.c.l.b16 %v2165
        %v2219 = vunpack.c.h.b16 %v2165
        %v2220 = vunpack.c.l.b16 %v2166
        %v2221 = vunpack.c.h.b16 %v2166
        %v2222 = vunpack.c.l.b16 %v2167
        %v2223 = vunpack.c.h.b16 %v2167
        %v2224 = vunpack.c.l.b16 %v2168
        %v2225 = vunpack.c.h.b16 %v2168
        %v2226 = vunpack.c.l.b16 %v2169
        %v2227 = vunpack.c.h.b16 %v2169
        %v2228 = vunpack.c.l.b16 %v2170
        %v2229 = vunpack.c.h.b16 %v2170
        %v2230 = vunpack.c.l.b16 %v2171
        %v2231 = vunpack.c.h.b16 %v2171
        %v2232 = vpack.c.b16 %v2202, %v2200
        %v2233 = vpack.c.b16 %v2203, %v2201
        %v2234 = vpack.c.b16 %v2206, %v2204
        %v2235 = vpack.c.b16 %v2207, %v2205
        %v2236 = vpack.c.b16 %v2210, %v2208
        %v2237 = vpack.c.b16 %v2211, %v2209
        %v2238 = vpack.c.b16 %v2214, %v2212
        %v2239 = vpack.c.b16 %v2215, %v2213
        %v2240 = vpack.c.b16 %v2218, %v2216
        %v2241 = vpack.c.b16 %v2219, %v2217
        %v2242 = vpack.c.b16 %v2222, %v2220
        %v2243 = vpack.c.b16 %v2223, %v2221
        %v2244 = vpack.c.b16 %v2226, %v2224
        %v2245 = vpack.c.b16 %v2227, %v2225
        %v2246 = vpack.c.b16 %v2230, %v2228
        %v2247 = vpack.c.b16 %v2231, %v2229
        %2264 = vmatprep.subr.bf16.mxu0 %v2247
        %2265 = vmatpush1.bf16.msra.mxu0 %v2246
        %2266 = vmatprep.subr.bf16.mxu0 %v2245
        %2267 = vmatpush1.bf16.msra.mxu0 %v2244
        %2268 = vmatprep.subr.bf16.mxu0 %v2243
        %2269 = vmatpush1.bf16.msra.mxu0 %v2242
        %2270 = vmatprep.subr.bf16.mxu0 %v2241
        %2271 = vmatpush1.bf16.msra.mxu0 %v2240
        %2272 = vmatprep.subr.bf16.mxu0 %v2239
        %2273 = vmatpush1.bf16.msra.mxu0 %v2238
        %2274 = vmatprep.subr.bf16.mxu0 %v2237
        %2275 = vmatpush1.bf16.msra.mxu0 %v2236
        %2276 = vmatprep.subr.bf16.mxu0 %v2235
        %2277 = vmatpush1.bf16.msra.mxu0 %v2234
        %2278 = vmatprep.subr.bf16.mxu0 %v2233
        %2279 = vmatpush1.bf16.msra.mxu0 %v2232
        %2280 = vmatprep.subr.bf16.mxu0 0
        %2281 = vmatpush2.bf16.msra.mxu0 0
        %2282 = vmatprep.subr.bf16.mxu0 0
        %2283 = vmatpush2.bf16.msra.mxu0 0
        %2284 = vmatprep.subr.bf16.mxu0 0
        %2285 = vmatpush2.bf16.msra.mxu0 0
        %2286 = vmatprep.subr.bf16.mxu0 0
        %2287 = vmatpush2.bf16.msra.mxu0 0
        %2288 = vmatprep.subr.bf16.mxu0 0
        %2289 = vmatpush2.bf16.msra.mxu0 0
        %2290 = vmatprep.subr.bf16.mxu0 0
        %2291 = vmatpush2.bf16.msra.mxu0 0
        %2292 = vmatprep.subr.bf16.mxu0 0
        %2293 = vmatpush2.bf16.msra.mxu0 0
        %2294 = vmatprep.subr.bf16.mxu0 0
        %2295 = vmatpush2.bf16.msra.mxu0 0
        %2296 = vmatprep.mubr.bf16.mxu0 0
        %2297 = vmatmul.mubr.bf16.gmra.mxu0 %v2155
        %v2298 = vpop.f32.mrf.mxu0
        %v2299 = vadd.f32 %v2177, %v2298
        %v2300 = vpop.f32.mrf.mxu0
        %v2301 = vadd.f32 %v2181, %v2300
        %v2302 = vpop.f32.mrf.mxu0
        %v2303 = vadd.f32 %v2177, %v2302
        %v2304 = vpop.f32.mrf.mxu0
        %v2305 = vadd.f32 %v2181, %v2304
        %2306 = vdwg.mxu0
        %v2307 = vmax.f32 %v2299, 0.0
        %v2308 = vmax.f32 %v2301, 0.0
        %v2309 = vmax.f32 %v2303, 0.0
        %v2310 = vmax.f32 %v2305, 0.0
        %v2311 = vpack.c.bf16 %v2309, %v2307
        %v2312 = vpack.c.bf16 %v2310, %v2308
        %v2313 = vld [vmem:[%s695] sm:$0xf]
        %v2314 = vld [vmem:[%s695 + $0x4] sm:$0xf]
        %v2315 = vld [vmem:[%s695 + $0x8] sm:$0xf]
        %v2316 = vld [vmem:[%s695 + $0xc] sm:$0xf]
        %v2317 = vld [vmem:[%s695 + $0x10] sm:$0xf]
        %v2318 = vld [vmem:[%s695 + $0x14] sm:$0xf]
        %v2319 = vld [vmem:[%s695 + $0x18] sm:$0xf]
        %v2320 = vld [vmem:[%s695 + $0x1c] sm:$0xf]
        %v2321 = vld [vmem:[%s695 + $0x20] sm:$0xf]
        %v2322 = vld [vmem:[%s695 + $0x24] sm:$0xf]
        %v2323 = vld [vmem:[%s695 + $0x28] sm:$0xf]
        %v2324 = vld [vmem:[%s695 + $0x2c] sm:$0xf]
        %v2325 = vld [vmem:[%s695 + $0x30] sm:$0xf]
        %v2326 = vld [vmem:[%s695 + $0x34] sm:$0xf]
        %v2327 = vld [vmem:[%s695 + $0x38] sm:$0xf]
        %v2328 = vld [vmem:[%s695 + $0x3c] sm:$0xf]
        %v2329 = vld [vmem:[%s695 + $0x40] sm:$0xf]
        %v2330 = vld [vmem:[%s695 + $0x44] sm:$0xf]
        %v2331 = vld [vmem:[%s695 + $0x48] sm:$0xf]
        %v2332 = vld [vmem:[%s695 + $0x4c] sm:$0xf]
        %v2333 = vld [vmem:[%s695 + $0x50] sm:$0xf]
        %v2334 = vld [vmem:[%s695 + $0x54] sm:$0xf]
        %v2335 = vld [vmem:[%s695 + $0x58] sm:$0xf]
        %v2336 = vld [vmem:[%s695 + $0x5c] sm:$0xf]
        %v2337 = vld [vmem:[%s695 + $0x60] sm:$0xf]
        %v2338 = vld [vmem:[%s695 + $0x64] sm:$0xf]
        %v2339 = vld [vmem:[%s695 + $0x68] sm:$0xf]
        %v2340 = vld [vmem:[%s695 + $0x6c] sm:$0xf]
        %v2341 = vld [vmem:[%s695 + $0x70] sm:$0xf]
        %v2342 = vld [vmem:[%s695 + $0x74] sm:$0xf]
        %v2343 = vld [vmem:[%s695 + $0x78] sm:$0xf]
        %v2344 = vld [vmem:[%s695 + $0x7c] sm:$0xf]
        %v2345 = vld [vmem:[%s703] sm:$0x1]
        %v2347 = vlaneseq
        %v2348 = vshrl.u32 %v2347, 7
        %v2349 = vsub.s32 0, %v2348
        %v2350 = vrot.slane %v2345, %v2349
        %v2384 = vunpack.c.l.b16 %v2313
        %v2385 = vunpack.c.l.b16 %v2314
        %v2386 = vunpack.c.l.b16 %v2315
        %v2387 = vunpack.c.l.b16 %v2316
        %v2388 = vunpack.c.l.b16 %v2317
        %v2389 = vunpack.c.l.b16 %v2318
        %v2390 = vunpack.c.l.b16 %v2319
        %v2391 = vunpack.c.l.b16 %v2320
        %v2392 = vunpack.c.l.b16 %v2321
        %v2393 = vunpack.c.l.b16 %v2322
        %v2394 = vunpack.c.l.b16 %v2323
        %v2395 = vunpack.c.l.b16 %v2324
        %v2396 = vunpack.c.l.b16 %v2325
        %v2397 = vunpack.c.l.b16 %v2326
        %v2398 = vunpack.c.l.b16 %v2327
        %v2399 = vunpack.c.l.b16 %v2328
        %v2400 = vunpack.c.l.b16 %v2329
        %v2401 = vunpack.c.l.b16 %v2330
        %v2402 = vunpack.c.l.b16 %v2331
        %v2403 = vunpack.c.l.b16 %v2332
        %v2404 = vunpack.c.l.b16 %v2333
        %v2405 = vunpack.c.l.b16 %v2334
        %v2406 = vunpack.c.l.b16 %v2335
        %v2407 = vunpack.c.l.b16 %v2336
        %v2408 = vunpack.c.l.b16 %v2337
        %v2409 = vunpack.c.l.b16 %v2338
        %v2410 = vunpack.c.l.b16 %v2339
        %v2411 = vunpack.c.l.b16 %v2340
        %v2412 = vunpack.c.l.b16 %v2341
        %v2413 = vunpack.c.l.b16 %v2342
        %v2414 = vunpack.c.l.b16 %v2343
        %v2415 = vunpack.c.l.b16 %v2344
        %v2416 = vpack.c.b16 %v2385, %v2384
        %v2417 = vpack.c.b16 %v2387, %v2386
        %v2418 = vpack.c.b16 %v2389, %v2388
        %v2419 = vpack.c.b16 %v2391, %v2390
        %v2420 = vpack.c.b16 %v2393, %v2392
        %v2421 = vpack.c.b16 %v2395, %v2394
        %v2422 = vpack.c.b16 %v2397, %v2396
        %v2423 = vpack.c.b16 %v2399, %v2398
        %v2424 = vpack.c.b16 %v2401, %v2400
        %v2425 = vpack.c.b16 %v2403, %v2402
        %v2426 = vpack.c.b16 %v2405, %v2404
        %v2427 = vpack.c.b16 %v2407, %v2406
        %v2428 = vpack.c.b16 %v2409, %v2408
        %v2429 = vpack.c.b16 %v2411, %v2410
        %v2430 = vpack.c.b16 %v2413, %v2412
        %v2431 = vpack.c.b16 %v2415, %v2414
        %2448 = vmatprep.subr.bf16.mxu0 0
        %2449 = vmatpush1.bf16.msra.mxu0 %v2423
        %2450 = vmatprep.subr.bf16.mxu0 0
        %2451 = vmatpush1.bf16.msra.mxu0 %v2422
        %2452 = vmatprep.subr.bf16.mxu0 0
        %2453 = vmatpush1.bf16.msra.mxu0 %v2421
        %2454 = vmatprep.subr.bf16.mxu0 0
        %2455 = vmatpush1.bf16.msra.mxu0 %v2420
        %2456 = vmatprep.subr.bf16.mxu0 0
        %2457 = vmatpush1.bf16.msra.mxu0 %v2419
        %2458 = vmatprep.subr.bf16.mxu0 0
        %2459 = vmatpush1.bf16.msra.mxu0 %v2418
        %2460 = vmatprep.subr.bf16.mxu0 0
        %2461 = vmatpush1.bf16.msra.mxu0 %v2417
        %2462 = vmatprep.subr.bf16.mxu0 0
        %2463 = vmatpush1.bf16.msra.mxu0 %v2416
        %2464 = vmatprep.subr.bf16.mxu0 0
        %2465 = vmatpush2.bf16.msra.mxu0 %v2431
        %2466 = vmatprep.subr.bf16.mxu0 0
        %2467 = vmatpush2.bf16.msra.mxu0 %v2430
        %2468 = vmatprep.subr.bf16.mxu0 0
        %2469 = vmatpush2.bf16.msra.mxu0 %v2429
        %2470 = vmatprep.subr.bf16.mxu0 0
        %2471 = vmatpush2.bf16.msra.mxu0 %v2428
        %2472 = vmatprep.subr.bf16.mxu0 0
        %2473 = vmatpush2.bf16.msra.mxu0 %v2427
        %2474 = vmatprep.subr.bf16.mxu0 0
        %2475 = vmatpush2.bf16.msra.mxu0 %v2426
        %2476 = vmatprep.subr.bf16.mxu0 0
        %2477 = vmatpush2.bf16.msra.mxu0 %v2425
        %2478 = vmatprep.subr.bf16.mxu0 0
        %2479 = vmatpush2.bf16.msra.mxu0 %v2424
        %2480 = vmatprep.mubr.bf16.mxu0 %v2312
        %2481 = vmatmul.mubr.bf16.gmra.mxu0 %v2311
        %v2482 = vpop.f32.mrf.mxu0
        %v2483 = vadd.f32 %v2350, %v2482
        %v2484 = vpop.f32.mrf.mxu0
        %v2485 = vpop.f32.mrf.mxu0
        %v2486 = vadd.f32 %v2350, %v2485
        %v2487 = vpop.f32.mrf.mxu0
        %2488 = vdwg.mxu0
        %v2489 = vadd.f32 %v2153, %v2483
        %v2490 = vadd.f32 %v2154, %v2486
        %v2491 = vld [vmem:[%s711] sm:$0x1]
        %v2492 = vld [vmem:[%s719] sm:$0x1]
        %2493 = vadd.xlane.f32.xlu0 %v2489
        %v2494 = vpop.xlane.xlu0 %2493
        %2495 = vadd.xlane.f32.xlu0 %v2490
        %v2496 = vpop.xlane.xlu0 %2495
        %v2497 = vmul.f32 %v2494, %v2120
        %v2498 = vmul.f32 %v2496, %v2120
        %v2499 = vsub.f32 %v2489, %v2497
        %v2500 = vsub.f32 %v2490, %v2498
        %v2501 = vmul.f32 %v2499, %v2499
        %v2502 = vmul.f32 %v2500, %v2500
        %2503 = vadd.xlane.f32.xlu0 %v2501
        %v2504 = vpop.xlane.xlu0 %2503
        %2505 = vadd.xlane.f32.xlu0 %v2502
        %v2506 = vpop.xlane.xlu0 %2505
        %v2507 = vmul.f32 %v2504, %v2120
        %v2508 = vmul.f32 %v2506, %v2120
        %v2509 = vadd.f32 %v2507, 1e-05
        %v2510 = vadd.f32 %v2508, 1e-05
        %v2511 = vrsqrt.pop %v2509
        %v2512 = vrsqrt.pop %v2510
        %v2513 = vmul.f32 %v2499, %v2511
        %v2514 = vmul.f32 %v2500, %v2512
        %v2516 = vlaneseq
        %v2517 = vshrl.u32 %v2516, 7
        %v2518 = vsub.s32 0, %v2517
        %v2519 = vrot.slane %v2491, %v2518
        %v2521 = vmul.f32 %v2513, %v2519
        %v2522 = vmul.f32 %v2514, %v2519
        %v2524 = vlaneseq
        %v2525 = vshrl.u32 %v2524, 7
        %v2526 = vsub.s32 0, %v2525
        %v2527 = vrot.slane %v2492, %v2526
        %v2529 = vadd.f32 %v2521, %v2527
        %v2530 = vadd.f32 %v2522, %v2527
        %2531 = vst [vmem:[#allocation2] sm:$0xff] %v2529
        %2532 = vst [vmem:[#allocation2 + $0x8] sm:$0xff] %v2530
        %p2533 = scmp.eq.s32.totalorder %s42, 1
        // Predicated region
        $region121: #{transformer_forward.2} parent=71 // pred_check
          %p2534 = pneg %p2533
        $region122: #{transformer_forward.2} parent=71 // pred_check_branch
          %2536 = sbr.rel (%p2534) target = $region124
        $region123: #{transformer_forward.2} parent=71 // pred_region
          %2537 = vst [vmem:[%s13] sm:$0xff] %v2529
          %2538 = vst [vmem:[%s13 + $0x8] sm:$0xff] %v2530
        $region124: #{transformer_forward.2} parent=71 // pred_fallthru
          _
        // Predicated region
        $region125: #{transformer_forward.2} parent=71 // pred_check
          %p2539 = pneg %p388
        $region126: #{transformer_forward.2} parent=71 // pred_check_branch
          %2541 = sbr.rel (%p2539) target = $region128
        $region127: #{transformer_forward.2} parent=71 // pred_region
          _
        $region128: #{transformer_forward.2} parent=71 // pred_fallthru
          _
        // Predicated region
        $region129: #{transformer_forward.2} parent=71 // pred_check
          %p2542 = pneg %p388
        $region130: #{transformer_forward.2} parent=71 // pred_check_branch
          %2544 = sbr.rel (%p2542) target = $region132
        $region131: #{transformer_forward.2} parent=71 // pred_region
          _
        $region132: #{transformer_forward.2} parent=71 // pred_fallthru
          _
      $region72: #{transformer_forward.2} parent=5 // pred_fallthru
        _
      %p2545 = scmp.le.s32.totalorder 2, %s37
      // Predicated region
      $region133: #{transformer_forward.2} parent=5 // pred_check
        %p2546 = pneg %p2545
      $region134: #{transformer_forward.2} parent=5 // pred_check_branch
        %2548 = sbr.rel (%p2546) target = $region136
      $region135: #{transformer_forward.2} parent=5 // pred_region
        %s2549 = ssub.s32 %s37, 2
      $region136: #{transformer_forward.2} parent=5 // pred_fallthru
        _
    $region6: #{transformer_forward.2} parent=1 // loop_footer
      %s41 = sadd.s32 1, %s37
    $region7: #{transformer_forward.2} parent=1 // loop_footer_branch
      %36 = sbr.rel target = $region3
    $region8: #{transformer_forward.2} parent=1 // loop_exit
      _
    %2550 = vsyncpa [#allocation4], 1
    %s2551 = scalar_lea.sflag [#allocation4], 1
    %2552 = vsyncpa %s2551, 1
    %2553 = vsyncpa [#allocation6], 1
    %s2554 = scalar_lea.sflag [#allocation6], 1
    %2555 = vsyncpa %s2554, 1
    %2556 = vsyncpa [#allocation9], 1
    %s2557 = scalar_lea.sflag [#allocation9], 1
    %2558 = vsyncpa %s2557, 1
    %2559 = vsyncpa [#allocation12], 1
    %s2560 = scalar_lea.sflag [#allocation12], 1
    %2561 = vsyncpa %s2560, 1
    %2562 = vsyncpa [#allocation15], 1
    %s2563 = scalar_lea.sflag [#allocation15], 1
    %2564 = vsyncpa %s2563, 1
    %2565 = vsyncpa [#allocation18], 1
    %s2566 = scalar_lea.sflag [#allocation18], 1
    %2567 = vsyncpa %s2566, 1

// kernel: transformer_forward.3
$region0: #{transformer_forward.3}
  #allocation0 [shape = 'u32[]', space=smem, size = 0x4, offset = 0x4, fixed_abs, tag = 'smem constant byte address 0x4 - core index']
  #allocation1 [shape = 'u32[144,128]{1,0:T(1,128)}', space=vmem, size = 0x12000, scoped, tag = 'internal scratch']
  #allocation2 [shape = 'f32[16,128]{1,0:T(8,128)}', space=vmem, size = 0x2000, scoped, tag = 'scratch operand']
  %s0 = inlined_call_operand.vmem [shape: f32[16,128], index: 0, kind: input, shape index: {}]
  %s1 = inlined_call_operand.vmem [shape: f32[16,128], index: 1, kind: input, shape index: {}]
  %s2 = inlined_call_operand.vmem [shape: bf16[2,128,384], index: 2, kind: input, shape index: {}]
  %s3 = inlined_call_operand.hbm [shape: f32[2,1,384], index: 3, kind: input, shape index: {}]
  %s4 = inlined_call_operand.hbm [shape: bf16[2,128,128], index: 4, kind: input, shape index: {}]
  %s5 = inlined_call_operand.hbm [shape: f32[2,1,128], index: 5, kind: input, shape index: {}]
  %s6 = inlined_call_operand.hbm [shape: f32[2,1,128], index: 6, kind: input, shape index: {}]
  %s7 = inlined_call_operand.hbm [shape: f32[2,1,128], index: 7, kind: input, shape index: {}]
  %s8 = inlined_call_operand.hbm [shape: bf16[2,128,128], index: 8, kind: input, shape index: {}]
  %s9 = inlined_call_operand.hbm [shape: f32[2,1,128], index: 9, kind: input, shape index: {}]
  %s10 = inlined_call_operand.vmem [shape: bf16[2,128,256], index: 10, kind: input, shape index: {}]
  %s11 = inlined_call_operand.vmem [shape: f32[2,1,256], index: 11, kind: input, shape index: {}]
  %s12 = inlined_call_operand.hbm [shape: bf16[2,128,128], index: 12, kind: input, shape index: {}]
  %s13 = inlined_call_operand.hbm [shape: f32[2,1,128], index: 13, kind: input, shape index: {}]
  %s14 = inlined_call_operand.hbm [shape: f32[2,1,128], index: 14, kind: input, shape index: {}]
  %s15 = inlined_call_operand.hbm [shape: f32[2,1,128], index: 15, kind: input, shape index: {}]
  %s16 = inlined_call_operand.vmem [shape: bf16[2,128,256], index: 16, kind: input, shape index: {}]
  %s17 = inlined_call_operand.hbm [shape: f32[2,1,256], index: 17, kind: input, shape index: {}]
  %s18 = inlined_call_operand.vmem [shape: bf16[2,256,128], index: 18, kind: input, shape index: {}]
  %s19 = inlined_call_operand.hbm [shape: f32[2,1,128], index: 19, kind: input, shape index: {}]
  %s20 = inlined_call_operand.hbm [shape: f32[2,1,128], index: 20, kind: input, shape index: {}]
  %s21 = inlined_call_operand.hbm [shape: f32[2,1,128], index: 21, kind: input, shape index: {}]
  %s22 = inlined_call_operand.hbm [shape: bf16[128,512], index: 22, kind: input, shape index: {}]
  %s23 = inlined_call_operand.hbm [shape: f32[1,512], index: 23, kind: input, shape index: {}]
  %s24 = inlined_call_operand.hbm [shape: f32[16,512], index: 24, kind: output, shape index: {}]
  %s25 = sld [smem:[#allocation0]]
  $region205: #{transformer_forward.3} parent=0
    _
  %s27 = ssub.s32 1, %s25
  %s28 = scalar_select 0, %s27, %s25
  $region1: #{transformer_forward.3} parent=0
    #allocation3 [shape = 'u8[3072]{0}', space=vmem, size = 0xc00, scoped, tag = 'input window, operand 3']
    #allocation4 [shape = 's32[2]{0}', space=sflag, size = 0x8, scoped, tag = 'scoped memory for transformer_forward.3']
    #allocation5 [shape = 's32[2]{0}', space=sflag, size = 0x8, scoped, tag = 'scoped memory for transformer_forward.3']
    #allocation6 [shape = 'u8[65536]{0}', space=vmem, size = 0x10000, scoped, tag = 'input window, operand 4']
    #allocation7 [shape = 's32[2]{0}', space=sflag, size = 0x8, scoped, tag = 'scoped memory for transformer_forward.3']
    #allocation8 [shape = 'u8[1024]{0}', space=vmem, size = 0x400, scoped, tag = 'input window, operand 5']
    #allocation9 [shape = 'u8[1024]{0}', space=vmem, size = 0x400, scoped, tag = 'input window, operand 6']
    #allocation10 [shape = 's32[2]{0}', space=sflag, size = 0x8, scoped, tag = 'scoped memory for transformer_forward.3']
    #allocation11 [shape = 'u8[1024]{0}', space=vmem, size = 0x400, scoped, tag = 'input window, operand 7']
    #allocation12 [shape = 'u8[65536]{0}', space=vmem, size = 0x10000, scoped, tag = 'input window, operand 8']
    #allocation13 [shape = 's32[2]{0}', space=sflag, size = 0x8, scoped, tag = 'scoped memory for transformer_forward.3']
    #allocation14 [shape = 'u8[1024]{0}', space=vmem, size = 0x400, scoped, tag = 'input window, operand 9']
    #allocation15 [shape = 'u8[65536]{0}', space=vmem, size = 0x10000, scoped, tag = 'input window, operand 12']
    #allocation16 [shape = 's32[2]{0}', space=sflag, size = 0x8, scoped, tag = 'scoped memory for transformer_forward.3']
    #allocation17 [shape = 'u8[1024]{0}', space=vmem, size = 0x400, scoped, tag = 'input window, operand 13']
    #allocation18 [shape = 'u8[1024]{0}', space=vmem, size = 0x400, scoped, tag = 'input window, operand 14']
    #allocation19 [shape = 's32[2]{0}', space=sflag, size = 0x8, scoped, tag = 'scoped memory for transformer_forward.3']
    #allocation20 [shape = 'u8[1024]{0}', space=vmem, size = 0x400, scoped, tag = 'input window, operand 15']
    #allocation21 [shape = 'u8[2048]{0}', space=vmem, size = 0x800, scoped, tag = 'input window, operand 17']
    #allocation22 [shape = 's32[2]{0}', space=sflag, size = 0x8, scoped, tag = 'scoped memory for transformer_forward.3']
    #allocation23 [shape = 'u8[1024]{0}', space=vmem, size = 0x400, scoped, tag = 'input window, operand 19']
    #allocation24 [shape = 'u8[1024]{0}', space=vmem, size = 0x400, scoped, tag = 'input window, operand 20']
    #allocation25 [shape = 's32[2]{0}', space=sflag, size = 0x8, scoped, tag = 'scoped memory for transformer_forward.3']
    #allocation26 [shape = 'u8[1024]{0}', space=vmem, size = 0x400, scoped, tag = 'input window, operand 21']
    #allocation27 [shape = 'u8[131072]{0}', space=vmem, size = 0x20000, scoped, tag = 'input window, operand 22, single buffered']
    #allocation28 [shape = 's32[1]{0}', space=sflag, size = 0x4, scoped, tag = 'scoped memory for transformer_forward.3']
    #allocation29 [shape = 'u8[2048]{0}', space=vmem, size = 0x800, scoped, tag = 'input window, operand 23, single buffered']
    #allocation30 [shape = 'u8[32768]{0}', space=vmem, size = 0x8000, scoped, tag = 'output window, operand 0, single buffered']
    %29 = vsyncpa [#allocation4], 0
    %s30 = scalar_lea.sflag [#allocation4], 1
    %31 = vsyncpa %s30, 0
    %32 = vsyncpa [#allocation7], 0
    %s33 = scalar_lea.sflag [#allocation7], 1
    %34 = vsyncpa %s33, 0
    %35 = vsyncpa [#allocation10], 0
    %s36 = scalar_lea.sflag [#allocation10], 1
    %37 = vsyncpa %s36, 0
    %38 = vsyncpa [#allocation13], 0
    %s39 = scalar_lea.sflag [#allocation13], 1
    %40 = vsyncpa %s39, 0
    %41 = vsyncpa [#allocation16], 0
    %s42 = scalar_lea.sflag [#allocation16], 1
    %43 = vsyncpa %s42, 0
    %44 = vsyncpa [#allocation19], 0
    %s45 = scalar_lea.sflag [#allocation19], 1
    %46 = vsyncpa %s45, 0
    %47 = vsyncpa [#allocation22], 0
    %s48 = scalar_lea.sflag [#allocation22], 1
    %49 = vsyncpa %s48, 0
    %50 = vsyncpa [#allocation25], 0
    %s51 = scalar_lea.sflag [#allocation25], 1
    %52 = vsyncpa %s51, 0
    %53 = vsyncpa [#allocation28], 0
    %54 = vsyncpa [#allocation5], 0
    loop: start=0, step=1, limit=4
    $region2: #{transformer_forward.3} parent=1 // loop_pre_header
      _
    $region3: #{transformer_forward.3} parent=1 // loop_header
      %s56 = sphi 0, %s60
      %p57 = scmp.ge.s32.totalorder %s56, 4
      %s64 = sphi 0, %s64
      %s66 = sphi 0, %s64
      %s67 = sphi 0, %s66
      %s81 = sphi 0, %s67
      %s85 = sphi 0, %s85
      %s87 = sphi 0, %s85
      %s88 = sphi 0, %s87
      %s102 = sphi 0, %s88
      %s108 = sphi 0, %s110
      %s111 = sphi 0, %s108
      %s112 = sphi 0, %s111
      %s128 = sphi 0, %s112
      %s134 = sphi 0, %s136
      %s137 = sphi 0, %s134
      %s138 = sphi 0, %s137
      %s154 = sphi 0, %s138
      %s160 = sphi 0, %s162
      %s163 = sphi 0, %s160
      %s164 = sphi 0, %s163
      %s180 = sphi 0, %s164
      %s186 = sphi 0, %s188
      %s189 = sphi 0, %s186
      %s190 = sphi 0, %s189
      %s206 = sphi 0, %s190
      %s212 = sphi 0, %s214
      %s215 = sphi 0, %s212
      %s216 = sphi 0, %s215
      %s232 = sphi 0, %s216
      %s238 = sphi 0, %s240
      %s241 = sphi 0, %s238
      %s242 = sphi 0, %s241
      %s258 = sphi 0, %s242
      %s264 = sphi 0, %s266
      %s267 = sphi 0, %s264
      %s268 = sphi 0, %s267
      %s284 = sphi 0, %s268
      %s290 = sphi 0, %s292
      %s293 = sphi 0, %s290
      %s294 = sphi 0, %s293
      %s310 = sphi 0, %s294
      %s316 = sphi 0, %s318
      %s319 = sphi 0, %s316
      %s320 = sphi 0, %s319
      %s336 = sphi 0, %s320
      %s342 = sphi 0, %s344
      %s345 = sphi 0, %s342
      %s346 = sphi 0, %s345
      %s362 = sphi 0, %s346
      %s368 = sphi 0, %s370
      %s371 = sphi 0, %s368
      %s372 = sphi 0, %s371
      %s388 = sphi 0, %s372
      %s394 = sphi 0, %s396
      %s397 = sphi 0, %s394
      %s398 = sphi 0, %s397
      %s414 = sphi 0, %s398
      %s420 = sphi 0, %s422
      %s423 = sphi 0, %s420
      %s424 = sphi 0, %s423
      %s440 = sphi 0, %s424
      %s446 = sphi 0, %s448
      %s449 = sphi 0, %s446
      %s450 = sphi 0, %s449
      %s466 = sphi 0, %s450
      %s472 = sphi 0, %s474
      %s475 = sphi 0, %s472
      %s476 = sphi 0, %s475
      %s492 = sphi 0, %s476
      %s498 = sphi 0, %s500
      %s501 = sphi 0, %s498
      %s502 = sphi 0, %s501
      %s518 = sphi 0, %s502
      %s524 = sphi 0, %s526
      %s527 = sphi 0, %s524
      %s528 = sphi 0, %s527
      %s544 = sphi 0, %s528
      %s550 = sphi 0, %s552
      %s553 = sphi 0, %s550
      %s554 = sphi 0, %s553
      %s570 = sphi 0, %s554
      %s576 = sphi 0, %s578
      %s579 = sphi 0, %s576
      %s580 = sphi 0, %s579
      %s596 = sphi 0, %s580
      %s602 = sphi 0, %s604
      %s605 = sphi 0, %s602
      %s606 = sphi 0, %s605
      %s622 = sphi 0, %s606
      %s626 = sphi 0, %s626
      %s628 = sphi 0, %s626
      %s629 = sphi 0, %s628
      %s643 = sphi 0, %s629
      %s647 = sphi 0, %s647
      %s649 = sphi 0, %s647
      %s650 = sphi 0, %s649
      %s664 = sphi 0, %s650
      %s668 = sphi 0, %s668
      %s670 = sphi 0, %s668
      %s671 = sphi 0, %s670
      %s685 = sphi 0, %s671
    $region4: #{transformer_forward.3} parent=1 // loop_header_branch
      %59 = sbr.rel (%p57) target = $region8
    $region5: #{transformer_forward.3} parent=1 // loop_body
      %s61 = ssub.s32 %s56, 1
      %s62 = ssub.s32 %s56, 2
      %s63 = sadd.s32 %s56, 1
      %s65 = sadd.s32 %s64, 1
      %p68 = scmp.eq.s32.totalorder %s56, 1
      %p69 = scmp.ne.s32.totalorder %s64, %s66
      %p70 = scmp.eq.s32.totalorder %s56, 0
      %p71 = por %p69, %p70
      %p72 = scmp.ne.s32.totalorder %s64, %s66
      %p73 = scmp.eq.s32.totalorder %s61, 1
      %p74 = por %p72, %p73
      %p75 = scmp.ne.s32.totalorder %s66, %s67
      %p76 = scmp.eq.s32.totalorder %s61, 0
      %p77 = por %p75, %p76
      %p78 = scmp.ne.s32.totalorder %s66, %s67
      %p79 = scmp.eq.s32.totalorder %s62, 1
      %p80 = por %p78, %p79
      %p82 = scmp.ne.s32.totalorder %s67, %s81
      %p83 = scmp.eq.s32.totalorder %s62, 0
      %p84 = por %p82, %p83
      %s86 = sadd.s32 %s85, 1
      %p89 = scmp.eq.s32.totalorder %s56, 1
      %p90 = scmp.ne.s32.totalorder %s85, %s87
      %p91 = scmp.eq.s32.totalorder %s56, 0
      %p92 = por %p90, %p91
      %p93 = scmp.ne.s32.totalorder %s85, %s87
      %p94 = scmp.eq.s32.totalorder %s61, 1
      %p95 = por %p93, %p94
      %p96 = scmp.ne.s32.totalorder %s87, %s88
      %p97 = scmp.eq.s32.totalorder %s61, 0
      %p98 = por %p96, %p97
      %p99 = scmp.ne.s32.totalorder %s87, %s88
      %p100 = scmp.eq.s32.totalorder %s62, 1
      %p101 = por %p99, %p100
      %p103 = scmp.ne.s32.totalorder %s88, %s102
      %p104 = scmp.eq.s32.totalorder %s62, 0
      %p105 = por %p103, %p104
      %s106 = ssub.s32 %s56, %s63
      %p107 = scmp.eq.s32.totalorder %s106, 0
      %s109 = sadd.s32 %s108, 1
      %s110 = scalar_select %p107, %s108, %s109
      %p113 = pneg %p107
      %p114 = scmp.eq.s32.totalorder %s56, 1
      %p115 = por %p113, %p114
      %p116 = scmp.ne.s32.totalorder %s108, %s111
      %p117 = scmp.eq.s32.totalorder %s56, 0
      %p118 = por %p116, %p117
      %p119 = scmp.ne.s32.totalorder %s108, %s111
      %p120 = scmp.eq.s32.totalorder %s61, 1
      %p121 = por %p119, %p120
      %p122 = scmp.ne.s32.totalorder %s111, %s112
      %p123 = scmp.eq.s32.totalorder %s61, 0
      %p124 = por %p122, %p123
      %p125 = scmp.ne.s32.totalorder %s111, %s112
      %p126 = scmp.eq.s32.totalorder %s62, 1
      %p127 = por %p125, %p126
      %p129 = scmp.ne.s32.totalorder %s112, %s128
      %p130 = scmp.eq.s32.totalorder %s62, 0
      %p131 = por %p129, %p130
      %s132 = ssub.s32 %s56, %s63
      %p133 = scmp.eq.s32.totalorder %s132, 0
      %s135 = sadd.s32 %s134, 1
      %s136 = scalar_select %p133, %s134, %s135
      %p139 = pneg %p133
      %p140 = scmp.eq.s32.totalorder %s56, 1
      %p141 = por %p139, %p140
      %p142 = scmp.ne.s32.totalorder %s134, %s137
      %p143 = scmp.eq.s32.totalorder %s56, 0
      %p144 = por %p142, %p143
      %p145 = scmp.ne.s32.totalorder %s134, %s137
      %p146 = scmp.eq.s32.totalorder %s61, 1
      %p147 = por %p145, %p146
      %p148 = scmp.ne.s32.totalorder %s137, %s138
      %p149 = scmp.eq.s32.totalorder %s61, 0
      %p150 = por %p148, %p149
      %p151 = scmp.ne.s32.totalorder %s137, %s138
      %p152 = scmp.eq.s32.totalorder %s62, 1
      %p153 = por %p151, %p152
      %p155 = scmp.ne.s32.totalorder %s138, %s154
      %p156 = scmp.eq.s32.totalorder %s62, 0
      %p157 = por %p155, %p156
      %s158 = ssub.s32 %s56, %s63
      %p159 = scmp.eq.s32.totalorder %s158, 0
      %s161 = sadd.s32 %s160, 1
      %s162 = scalar_select %p159, %s160, %s161
      %p165 = pneg %p159
      %p166 = scmp.eq.s32.totalorder %s56, 1
      %p167 = por %p165, %p166
      %p168 = scmp.ne.s32.totalorder %s160, %s163
      %p169 = scmp.eq.s32.totalorder %s56, 0
      %p170 = por %p168, %p169
      %p171 = scmp.ne.s32.totalorder %s160, %s163
      %p172 = scmp.eq.s32.totalorder %s61, 1
      %p173 = por %p171, %p172
      %p174 = scmp.ne.s32.totalorder %s163, %s164
      %p175 = scmp.eq.s32.totalorder %s61, 0
      %p176 = por %p174, %p175
      %p177 = scmp.ne.s32.totalorder %s163, %s164
      %p178 = scmp.eq.s32.totalorder %s62, 1
      %p179 = por %p177, %p178
      %p181 = scmp.ne.s32.totalorder %s164, %s180
      %p182 = scmp.eq.s32.totalorder %s62, 0
      %p183 = por %p181, %p182
      %s184 = ssub.s32 %s56, %s63
      %p185 = scmp.eq.s32.totalorder %s184, 0
      %s187 = sadd.s32 %s186, 1
      %s188 = scalar_select %p185, %s186, %s187
      %p191 = pneg %p185
      %p192 = scmp.eq.s32.totalorder %s56, 1
      %p193 = por %p191, %p192
      %p194 = scmp.ne.s32.totalorder %s186, %s189
      %p195 = scmp.eq.s32.totalorder %s56, 0
      %p196 = por %p194, %p195
      %p197 = scmp.ne.s32.totalorder %s186, %s189
      %p198 = scmp.eq.s32.totalorder %s61, 1
      %p199 = por %p197, %p198
      %p200 = scmp.ne.s32.totalorder %s189, %s190
      %p201 = scmp.eq.s32.totalorder %s61, 0
      %p202 = por %p200, %p201
      %p203 = scmp.ne.s32.totalorder %s189, %s190
      %p204 = scmp.eq.s32.totalorder %s62, 1
      %p205 = por %p203, %p204
      %p207 = scmp.ne.s32.totalorder %s190, %s206
      %p208 = scmp.eq.s32.totalorder %s62, 0
      %p209 = por %p207, %p208
      %s210 = ssub.s32 %s56, %s63
      %p211 = scmp.eq.s32.totalorder %s210, 0
      %s213 = sadd.s32 %s212, 1
      %s214 = scalar_select %p211, %s212, %s213
      %p217 = pneg %p211
      %p218 = scmp.eq.s32.totalorder %s56, 1
      %p219 = por %p217, %p218
      %p220 = scmp.ne.s32.totalorder %s212, %s215
      %p221 = scmp.eq.s32.totalorder %s56, 0
      %p222 = por %p220, %p221
      %p223 = scmp.ne.s32.totalorder %s212, %s215
      %p224 = scmp.eq.s32.totalorder %s61, 1
      %p225 = por %p223, %p224
      %p226 = scmp.ne.s32.totalorder %s215, %s216
      %p227 = scmp.eq.s32.totalorder %s61, 0
      %p228 = por %p226, %p227
      %p229 = scmp.ne.s32.totalorder %s215, %s216
      %p230 = scmp.eq.s32.totalorder %s62, 1
      %p231 = por %p229, %p230
      %p233 = scmp.ne.s32.totalorder %s216, %s232
      %p234 = scmp.eq.s32.totalorder %s62, 0
      %p235 = por %p233, %p234
      %s236 = ssub.s32 %s56, %s63
      %p237 = scmp.eq.s32.totalorder %s236, 0
      %s239 = sadd.s32 %s238, 1
      %s240 = scalar_select %p237, %s238, %s239
      %p243 = pneg %p237
      %p244 = scmp.eq.s32.totalorder %s56, 1
      %p245 = por %p243, %p244
      %p246 = scmp.ne.s32.totalorder %s238, %s241
      %p247 = scmp.eq.s32.totalorder %s56, 0
      %p248 = por %p246, %p247
      %p249 = scmp.ne.s32.totalorder %s238, %s241
      %p250 = scmp.eq.s32.totalorder %s61, 1
      %p251 = por %p249, %p250
      %p252 = scmp.ne.s32.totalorder %s241, %s242
      %p253 = scmp.eq.s32.totalorder %s61, 0
      %p254 = por %p252, %p253
      %p255 = scmp.ne.s32.totalorder %s241, %s242
      %p256 = scmp.eq.s32.totalorder %s62, 1
      %p257 = por %p255, %p256
      %p259 = scmp.ne.s32.totalorder %s242, %s258
      %p260 = scmp.eq.s32.totalorder %s62, 0
      %p261 = por %p259, %p260
      %s262 = ssub.s32 %s56, %s63
      %p263 = scmp.eq.s32.totalorder %s262, 0
      %s265 = sadd.s32 %s264, 1
      %s266 = scalar_select %p263, %s264, %s265
      %p269 = pneg %p263
      %p270 = scmp.eq.s32.totalorder %s56, 1
      %p271 = por %p269, %p270
      %p272 = scmp.ne.s32.totalorder %s264, %s267
      %p273 = scmp.eq.s32.totalorder %s56, 0
      %p274 = por %p272, %p273
      %p275 = scmp.ne.s32.totalorder %s264, %s267
      %p276 = scmp.eq.s32.totalorder %s61, 1
      %p277 = por %p275, %p276
      %p278 = scmp.ne.s32.totalorder %s267, %s268
      %p279 = scmp.eq.s32.totalorder %s61, 0
      %p280 = por %p278, %p279
      %p281 = scmp.ne.s32.totalorder %s267, %s268
      %p282 = scmp.eq.s32.totalorder %s62, 1
      %p283 = por %p281, %p282
      %p285 = scmp.ne.s32.totalorder %s268, %s284
      %p286 = scmp.eq.s32.totalorder %s62, 0
      %p287 = por %p285, %p286
      %s288 = ssub.s32 %s56, %s63
      %p289 = scmp.eq.s32.totalorder %s288, 0
      %s291 = sadd.s32 %s290, 1
      %s292 = scalar_select %p289, %s290, %s291
      %p295 = pneg %p289
      %p296 = scmp.eq.s32.totalorder %s56, 1
      %p297 = por %p295, %p296
      %p298 = scmp.ne.s32.totalorder %s290, %s293
      %p299 = scmp.eq.s32.totalorder %s56, 0
      %p300 = por %p298, %p299
      %p301 = scmp.ne.s32.totalorder %s290, %s293
      %p302 = scmp.eq.s32.totalorder %s61, 1
      %p303 = por %p301, %p302
      %p304 = scmp.ne.s32.totalorder %s293, %s294
      %p305 = scmp.eq.s32.totalorder %s61, 0
      %p306 = por %p304, %p305
      %p307 = scmp.ne.s32.totalorder %s293, %s294
      %p308 = scmp.eq.s32.totalorder %s62, 1
      %p309 = por %p307, %p308
      %p311 = scmp.ne.s32.totalorder %s294, %s310
      %p312 = scmp.eq.s32.totalorder %s62, 0
      %p313 = por %p311, %p312
      %s314 = ssub.s32 %s56, %s63
      %p315 = scmp.eq.s32.totalorder %s314, 0
      %s317 = sadd.s32 %s316, 1
      %s318 = scalar_select %p315, %s316, %s317
      %p321 = pneg %p315
      %p322 = scmp.eq.s32.totalorder %s56, 1
      %p323 = por %p321, %p322
      %p324 = scmp.ne.s32.totalorder %s316, %s319
      %p325 = scmp.eq.s32.totalorder %s56, 0
      %p326 = por %p324, %p325
      %p327 = scmp.ne.s32.totalorder %s316, %s319
      %p328 = scmp.eq.s32.totalorder %s61, 1
      %p329 = por %p327, %p328
      %p330 = scmp.ne.s32.totalorder %s319, %s320
      %p331 = scmp.eq.s32.totalorder %s61, 0
      %p332 = por %p330, %p331
      %p333 = scmp.ne.s32.totalorder %s319, %s320
      %p334 = scmp.eq.s32.totalorder %s62, 1
      %p335 = por %p333, %p334
      %p337 = scmp.ne.s32.totalorder %s320, %s336
      %p338 = scmp.eq.s32.totalorder %s62, 0
      %p339 = por %p337, %p338
      %s340 = ssub.s32 %s56, %s63
      %p341 = scmp.eq.s32.totalorder %s340, 0
      %s343 = sadd.s32 %s342, 1
      %s344 = scalar_select %p341, %s342, %s343
      %p347 = pneg %p341
      %p348 = scmp.eq.s32.totalorder %s56, 1
      %p349 = por %p347, %p348
      %p350 = scmp.ne.s32.totalorder %s342, %s345
      %p351 = scmp.eq.s32.totalorder %s56, 0
      %p352 = por %p350, %p351
      %p353 = scmp.ne.s32.totalorder %s342, %s345
      %p354 = scmp.eq.s32.totalorder %s61, 1
      %p355 = por %p353, %p354
      %p356 = scmp.ne.s32.totalorder %s345, %s346
      %p357 = scmp.eq.s32.totalorder %s61, 0
      %p358 = por %p356, %p357
      %p359 = scmp.ne.s32.totalorder %s345, %s346
      %p360 = scmp.eq.s32.totalorder %s62, 1
      %p361 = por %p359, %p360
      %p363 = scmp.ne.s32.totalorder %s346, %s362
      %p364 = scmp.eq.s32.totalorder %s62, 0
      %p365 = por %p363, %p364
      %s366 = ssub.s32 %s56, %s63
      %p367 = scmp.eq.s32.totalorder %s366, 0
      %s369 = sadd.s32 %s368, 1
      %s370 = scalar_select %p367, %s368, %s369
      %p373 = pneg %p367
      %p374 = scmp.eq.s32.totalorder %s56, 1
      %p375 = por %p373, %p374
      %p376 = scmp.ne.s32.totalorder %s368, %s371
      %p377 = scmp.eq.s32.totalorder %s56, 0
      %p378 = por %p376, %p377
      %p379 = scmp.ne.s32.totalorder %s368, %s371
      %p380 = scmp.eq.s32.totalorder %s61, 1
      %p381 = por %p379, %p380
      %p382 = scmp.ne.s32.totalorder %s371, %s372
      %p383 = scmp.eq.s32.totalorder %s61, 0
      %p384 = por %p382, %p383
      %p385 = scmp.ne.s32.totalorder %s371, %s372
      %p386 = scmp.eq.s32.totalorder %s62, 1
      %p387 = por %p385, %p386
      %p389 = scmp.ne.s32.totalorder %s372, %s388
      %p390 = scmp.eq.s32.totalorder %s62, 0
      %p391 = por %p389, %p390
      %s392 = ssub.s32 %s56, %s63
      %p393 = scmp.eq.s32.totalorder %s392, 0
      %s395 = sadd.s32 %s394, 1
      %s396 = scalar_select %p393, %s394, %s395
      %p399 = pneg %p393
      %p400 = scmp.eq.s32.totalorder %s56, 1
      %p401 = por %p399, %p400
      %p402 = scmp.ne.s32.totalorder %s394, %s397
      %p403 = scmp.eq.s32.totalorder %s56, 0
      %p404 = por %p402, %p403
      %p405 = scmp.ne.s32.totalorder %s394, %s397
      %p406 = scmp.eq.s32.totalorder %s61, 1
      %p407 = por %p405, %p406
      %p408 = scmp.ne.s32.totalorder %s397, %s398
      %p409 = scmp.eq.s32.totalorder %s61, 0
      %p410 = por %p408, %p409
      %p411 = scmp.ne.s32.totalorder %s397, %s398
      %p412 = scmp.eq.s32.totalorder %s62, 1
      %p413 = por %p411, %p412
      %p415 = scmp.ne.s32.totalorder %s398, %s414
      %p416 = scmp.eq.s32.totalorder %s62, 0
      %p417 = por %p415, %p416
      %s418 = ssub.s32 %s56, %s63
      %p419 = scmp.eq.s32.totalorder %s418, 0
      %s421 = sadd.s32 %s420, 1
      %s422 = scalar_select %p419, %s420, %s421
      %p425 = pneg %p419
      %p426 = scmp.eq.s32.totalorder %s56, 1
      %p427 = por %p425, %p426
      %p428 = scmp.ne.s32.totalorder %s420, %s423
      %p429 = scmp.eq.s32.totalorder %s56, 0
      %p430 = por %p428, %p429
      %p431 = scmp.ne.s32.totalorder %s420, %s423
      %p432 = scmp.eq.s32.totalorder %s61, 1
      %p433 = por %p431, %p432
      %p434 = scmp.ne.s32.totalorder %s423, %s424
      %p435 = scmp.eq.s32.totalorder %s61, 0
      %p436 = por %p434, %p435
      %p437 = scmp.ne.s32.totalorder %s423, %s424
      %p438 = scmp.eq.s32.totalorder %s62, 1
      %p439 = por %p437, %p438
      %p441 = scmp.ne.s32.totalorder %s424, %s440
      %p442 = scmp.eq.s32.totalorder %s62, 0
      %p443 = por %p441, %p442
      %s444 = ssub.s32 %s56, %s63
      %p445 = scmp.eq.s32.totalorder %s444, 0
      %s447 = sadd.s32 %s446, 1
      %s448 = scalar_select %p445, %s446, %s447
      %p451 = pneg %p445
      %p452 = scmp.eq.s32.totalorder %s56, 1
      %p453 = por %p451, %p452
      %p454 = scmp.ne.s32.totalorder %s446, %s449
      %p455 = scmp.eq.s32.totalorder %s56, 0
      %p456 = por %p454, %p455
      %p457 = scmp.ne.s32.totalorder %s446, %s449
      %p458 = scmp.eq.s32.totalorder %s61, 1
      %p459 = por %p457, %p458
      %p460 = scmp.ne.s32.totalorder %s449, %s450
      %p461 = scmp.eq.s32.totalorder %s61, 0
      %p462 = por %p460, %p461
      %p463 = scmp.ne.s32.totalorder %s449, %s450
      %p464 = scmp.eq.s32.totalorder %s62, 1
      %p465 = por %p463, %p464
      %p467 = scmp.ne.s32.totalorder %s450, %s466
      %p468 = scmp.eq.s32.totalorder %s62, 0
      %p469 = por %p467, %p468
      %s470 = ssub.s32 %s56, %s63
      %p471 = scmp.eq.s32.totalorder %s470, 0
      %s473 = sadd.s32 %s472, 1
      %s474 = scalar_select %p471, %s472, %s473
      %p477 = pneg %p471
      %p478 = scmp.eq.s32.totalorder %s56, 1
      %p479 = por %p477, %p478
      %p480 = scmp.ne.s32.totalorder %s472, %s475
      %p481 = scmp.eq.s32.totalorder %s56, 0
      %p482 = por %p480, %p481
      %p483 = scmp.ne.s32.totalorder %s472, %s475
      %p484 = scmp.eq.s32.totalorder %s61, 1
      %p485 = por %p483, %p484
      %p486 = scmp.ne.s32.totalorder %s475, %s476
      %p487 = scmp.eq.s32.totalorder %s61, 0
      %p488 = por %p486, %p487
      %p489 = scmp.ne.s32.totalorder %s475, %s476
      %p490 = scmp.eq.s32.totalorder %s62, 1
      %p491 = por %p489, %p490
      %p493 = scmp.ne.s32.totalorder %s476, %s492
      %p494 = scmp.eq.s32.totalorder %s62, 0
      %p495 = por %p493, %p494
      %s496 = ssub.s32 %s56, %s63
      %p497 = scmp.eq.s32.totalorder %s496, 0
      %s499 = sadd.s32 %s498, 1
      %s500 = scalar_select %p497, %s498, %s499
      %p503 = pneg %p497
      %p504 = scmp.eq.s32.totalorder %s56, 1
      %p505 = por %p503, %p504
      %p506 = scmp.ne.s32.totalorder %s498, %s501
      %p507 = scmp.eq.s32.totalorder %s56, 0
      %p508 = por %p506, %p507
      %p509 = scmp.ne.s32.totalorder %s498, %s501
      %p510 = scmp.eq.s32.totalorder %s61, 1
      %p511 = por %p509, %p510
      %p512 = scmp.ne.s32.totalorder %s501, %s502
      %p513 = scmp.eq.s32.totalorder %s61, 0
      %p514 = por %p512, %p513
      %p515 = scmp.ne.s32.totalorder %s501, %s502
      %p516 = scmp.eq.s32.totalorder %s62, 1
      %p517 = por %p515, %p516
      %p519 = scmp.ne.s32.totalorder %s502, %s518
      %p520 = scmp.eq.s32.totalorder %s62, 0
      %p521 = por %p519, %p520
      %s522 = ssub.s32 %s56, %s63
      %p523 = scmp.eq.s32.totalorder %s522, 0
      %s525 = sadd.s32 %s524, 1
      %s526 = scalar_select %p523, %s524, %s525
      %p529 = pneg %p523
      %p530 = scmp.eq.s32.totalorder %s56, 1
      %p531 = por %p529, %p530
      %p532 = scmp.ne.s32.totalorder %s524, %s527
      %p533 = scmp.eq.s32.totalorder %s56, 0
      %p534 = por %p532, %p533
      %p535 = scmp.ne.s32.totalorder %s524, %s527
      %p536 = scmp.eq.s32.totalorder %s61, 1
      %p537 = por %p535, %p536
      %p538 = scmp.ne.s32.totalorder %s527, %s528
      %p539 = scmp.eq.s32.totalorder %s61, 0
      %p540 = por %p538, %p539
      %p541 = scmp.ne.s32.totalorder %s527, %s528
      %p542 = scmp.eq.s32.totalorder %s62, 1
      %p543 = por %p541, %p542
      %p545 = scmp.ne.s32.totalorder %s528, %s544
      %p546 = scmp.eq.s32.totalorder %s62, 0
      %p547 = por %p545, %p546
      %s548 = ssub.s32 %s56, %s63
      %p549 = scmp.eq.s32.totalorder %s548, 0
      %s551 = sadd.s32 %s550, 1
      %s552 = scalar_select %p549, %s550, %s551
      %p555 = pneg %p549
      %p556 = scmp.eq.s32.totalorder %s56, 1
      %p557 = por %p555, %p556
      %p558 = scmp.ne.s32.totalorder %s550, %s553
      %p559 = scmp.eq.s32.totalorder %s56, 0
      %p560 = por %p558, %p559
      %p561 = scmp.ne.s32.totalorder %s550, %s553
      %p562 = scmp.eq.s32.totalorder %s61, 1
      %p563 = por %p561, %p562
      %p564 = scmp.ne.s32.totalorder %s553, %s554
      %p565 = scmp.eq.s32.totalorder %s61, 0
      %p566 = por %p564, %p565
      %p567 = scmp.ne.s32.totalorder %s553, %s554
      %p568 = scmp.eq.s32.totalorder %s62, 1
      %p569 = por %p567, %p568
      %p571 = scmp.ne.s32.totalorder %s554, %s570
      %p572 = scmp.eq.s32.totalorder %s62, 0
      %p573 = por %p571, %p572
      %s574 = ssub.s32 %s56, %s63
      %p575 = scmp.eq.s32.totalorder %s574, 0
      %s577 = sadd.s32 %s576, 1
      %s578 = scalar_select %p575, %s576, %s577
      %p581 = pneg %p575
      %p582 = scmp.eq.s32.totalorder %s56, 1
      %p583 = por %p581, %p582
      %p584 = scmp.ne.s32.totalorder %s576, %s579
      %p585 = scmp.eq.s32.totalorder %s56, 0
      %p586 = por %p584, %p585
      %p587 = scmp.ne.s32.totalorder %s576, %s579
      %p588 = scmp.eq.s32.totalorder %s61, 1
      %p589 = por %p587, %p588
      %p590 = scmp.ne.s32.totalorder %s579, %s580
      %p591 = scmp.eq.s32.totalorder %s61, 0
      %p592 = por %p590, %p591
      %p593 = scmp.ne.s32.totalorder %s579, %s580
      %p594 = scmp.eq.s32.totalorder %s62, 1
      %p595 = por %p593, %p594
      %p597 = scmp.ne.s32.totalorder %s580, %s596
      %p598 = scmp.eq.s32.totalorder %s62, 0
      %p599 = por %p597, %p598
      %s600 = ssub.s32 %s56, %s63
      %p601 = scmp.eq.s32.totalorder %s600, 0
      %s603 = sadd.s32 %s602, 1
      %s604 = scalar_select %p601, %s602, %s603
      %p607 = pneg %p601
      %p608 = scmp.eq.s32.totalorder %s56, 1
      %p609 = por %p607, %p608
      %p610 = scmp.ne.s32.totalorder %s602, %s605
      %p611 = scmp.eq.s32.totalorder %s56, 0
      %p612 = por %p610, %p611
      %p613 = scmp.ne.s32.totalorder %s602, %s605
      %p614 = scmp.eq.s32.totalorder %s61, 1
      %p615 = por %p613, %p614
      %p616 = scmp.ne.s32.totalorder %s605, %s606
      %p617 = scmp.eq.s32.totalorder %s61, 0
      %p618 = por %p616, %p617
      %p619 = scmp.ne.s32.totalorder %s605, %s606
      %p620 = scmp.eq.s32.totalorder %s62, 1
      %p621 = por %p619, %p620
      %p623 = scmp.ne.s32.totalorder %s606, %s622
      %p624 = scmp.eq.s32.totalorder %s62, 0
      %p625 = por %p623, %p624
      %s627 = sadd.s32 %s626, 1
      %p630 = scmp.eq.s32.totalorder %s56, 1
      %p631 = scmp.ne.s32.totalorder %s626, %s628
      %p632 = scmp.eq.s32.totalorder %s56, 0
      %p633 = por %p631, %p632
      %p634 = scmp.ne.s32.totalorder %s626, %s628
      %p635 = scmp.eq.s32.totalorder %s61, 1
      %p636 = por %p634, %p635
      %p637 = scmp.ne.s32.totalorder %s628, %s629
      %p638 = scmp.eq.s32.totalorder %s61, 0
      %p639 = por %p637, %p638
      %p640 = scmp.ne.s32.totalorder %s628, %s629
      %p641 = scmp.eq.s32.totalorder %s62, 1
      %p642 = por %p640, %p641
      %p644 = scmp.ne.s32.totalorder %s629, %s643
      %p645 = scmp.eq.s32.totalorder %s62, 0
      %p646 = por %p644, %p645
      %s648 = sadd.s32 %s647, 1
      %p651 = scmp.eq.s32.totalorder %s56, 1
      %p652 = scmp.ne.s32.totalorder %s647, %s649
      %p653 = scmp.eq.s32.totalorder %s56, 0
      %p654 = por %p652, %p653
      %p655 = scmp.ne.s32.totalorder %s647, %s649
      %p656 = scmp.eq.s32.totalorder %s61, 1
      %p657 = por %p655, %p656
      %p658 = scmp.ne.s32.totalorder %s649, %s650
      %p659 = scmp.eq.s32.totalorder %s61, 0
      %p660 = por %p658, %p659
      %p661 = scmp.ne.s32.totalorder %s649, %s650
      %p662 = scmp.eq.s32.totalorder %s62, 1
      %p663 = por %p661, %p662
      %p665 = scmp.ne.s32.totalorder %s650, %s664
      %p666 = scmp.eq.s32.totalorder %s62, 0
      %p667 = por %p665, %p666
      %s669 = sadd.s32 %s668, 1
      %p672 = scmp.eq.s32.totalorder %s56, 1
      %p673 = scmp.ne.s32.totalorder %s668, %s670
      %p674 = scmp.eq.s32.totalorder %s56, 0
      %p675 = por %p673, %p674
      %p676 = scmp.ne.s32.totalorder %s668, %s670
      %p677 = scmp.eq.s32.totalorder %s61, 1
      %p678 = por %p676, %p677
      %p679 = scmp.ne.s32.totalorder %s670, %s671
      %p680 = scmp.eq.s32.totalorder %s61, 0
      %p681 = por %p679, %p680
      %p682 = scmp.ne.s32.totalorder %s670, %s671
      %p683 = scmp.eq.s32.totalorder %s62, 1
      %p684 = por %p682, %p683
      %p686 = scmp.ne.s32.totalorder %s671, %s685
      %p687 = scmp.eq.s32.totalorder %s62, 0
      %p688 = por %p686, %p687
      %p689 = scmp.le.s32.totalorder 1, %s56
      %p690 = scmp.lt.s32.totalorder %s56, 3
      %p691 = pnand %p689, %p690
      %p692 = pneg %p691
      // Predicated region
      $region9: #{transformer_forward.3} parent=5 // pred_check
        _
      $region10: #{transformer_forward.3} parent=5 // pred_check_branch
        %694 = sbr.rel (%p691) target = $region12
      $region11: #{transformer_forward.3} parent=5 // pred_region
        %s695 = ssub.s32 %s56, 1
        // Predicated region
        $region13: #{transformer_forward.3} parent=11 // pred_check
          %p696 = pneg %p77
        $region14: #{transformer_forward.3} parent=11 // pred_check_branch
          %698 = sbr.rel (%p696) target = $region16
        $region15: #{transformer_forward.3} parent=11 // pred_region
          _
        $region16: #{transformer_forward.3} parent=11 // pred_fallthru
          _
        // Predicated region
        $region17: #{transformer_forward.3} parent=11 // pred_check
          %p699 = pneg %p98
        $region18: #{transformer_forward.3} parent=11 // pred_check_branch
          %701 = sbr.rel (%p699) target = $region20
        $region19: #{transformer_forward.3} parent=11 // pred_region
          _
        $region20: #{transformer_forward.3} parent=11 // pred_fallthru
          _
        // Predicated region
        $region21: #{transformer_forward.3} parent=11 // pred_check
          %p702 = pneg %p639
        $region22: #{transformer_forward.3} parent=11 // pred_check_branch
          %704 = sbr.rel (%p702) target = $region24
        $region23: #{transformer_forward.3} parent=11 // pred_region
          %s706 = ssub.s32 4096, 4096
          %707 = vsyncadd [#allocation28], %s706
          %s708 = sshll.u32 [#allocation27], 4
          %s709 = int_to_ptr.vmem [resolvable:$true] %s708
          %714 = dma.hbm_to_vmem [thread:$0]  %s22, 4096, %s709, [#allocation28], 256, 256, 16
        $region24: #{transformer_forward.3} parent=11 // pred_fallthru
          _
        // Predicated region
        $region25: #{transformer_forward.3} parent=11 // pred_check
          %p715 = pneg %p660
        $region26: #{transformer_forward.3} parent=11 // pred_check_branch
          %717 = sbr.rel (%p715) target = $region28
        $region27: #{transformer_forward.3} parent=11 // pred_region
          %s719 = ssub.s32 64, 64
          %720 = vsyncadd [#allocation28], %s719
          %s722 = sshll.u32 [#allocation29], 4
          %s723 = int_to_ptr.vmem [resolvable:$true] %s722
          %725 = dma.hbm_to_vmem [thread:$0]  %s23, 64, %s723, [#allocation28]
        $region28: #{transformer_forward.3} parent=11 // pred_fallthru
          _
      $region12: #{transformer_forward.3} parent=5 // pred_fallthru
        _
      %p726 = scmp.lt.s32.totalorder %s56, 2
      // Predicated region
      $region29: #{transformer_forward.3} parent=5 // pred_check
        %p727 = pneg %p726
      $region30: #{transformer_forward.3} parent=5 // pred_check_branch
        %729 = sbr.rel (%p727) target = $region32
      $region31: #{transformer_forward.3} parent=5 // pred_region
        // Predicated region
        $region33: #{transformer_forward.3} parent=31 // pred_check
          %p730 = pneg %p118
        $region34: #{transformer_forward.3} parent=31 // pred_check_branch
          %732 = sbr.rel (%p730) target = $region36
        $region35: #{transformer_forward.3} parent=31 // pred_region
          %p733 = scmp.lt.s32.totalorder %s56, 1
          %s734 = scalar_select %p733, %s56, 1
          %s735 = smul.addr %s734, 48
          %s736 = smul.addr %s735, 4
          %s737 = scalar_lea.vmem %s2, %s736
        $region36: #{transformer_forward.3} parent=31 // pred_fallthru
          _
        // Predicated region
        $region37: #{transformer_forward.3} parent=31 // pred_check
          %p738 = pneg %p144
        $region38: #{transformer_forward.3} parent=31 // pred_check_branch
          %740 = sbr.rel (%p738) target = $region40
        $region39: #{transformer_forward.3} parent=31 // pred_region
          %s741 = sand.u32 %s134, 1
          %s742 = scalar_lea.sflag [#allocation4], %s741
          %s743 = sand.u32 %s134, 1
          %s744 = smul.addr %s743, 3
          %s745 = scalar_lea.vmem [#allocation3], %s744
          %s747 = ssub.s32 48, 48
          %748 = vsyncadd %s742, %s747
          %s749 = smul.addr %s56, 3
          %s750 = smul.addr %s749, 16
          %s751 = scalar_lea.hbm %s3, %s750
          %s753 = sshll.u32 %s745, 4
          %s754 = int_to_ptr.vmem [resolvable:$true] %s753
          %756 = dma.hbm_to_vmem [thread:$0]  %s751, 48, %s754, %s742
        $region40: #{transformer_forward.3} parent=31 // pred_fallthru
          _
        // Predicated region
        $region41: #{transformer_forward.3} parent=31 // pred_check
          %p757 = pneg %p170
        $region42: #{transformer_forward.3} parent=31 // pred_check_branch
          %759 = sbr.rel (%p757) target = $region44
        $region43: #{transformer_forward.3} parent=31 // pred_region
          %s760 = sand.u32 %s56, 1
          %s761 = scalar_lea.sflag [#allocation7], %s760
          %s762 = sand.u32 %s160, 1
          %s763 = smul.addr %s762, 64
          %s764 = scalar_lea.vmem [#allocation6], %s763
          %s766 = ssub.s32 1024, 1024
          %767 = vsyncadd %s761, %s766
          %s768 = smul.addr %s56, 16
          %s769 = smul.addr %s768, 64
          %s770 = scalar_lea.hbm %s4, %s769
          %s771 = sshll.u32 %s764, 4
          %s772 = int_to_ptr.vmem [resolvable:$true] %s771
          %777 = dma.hbm_to_vmem [thread:$0]  %s770, 1024, %s772, %s761, 64, 64, 4
        $region44: #{transformer_forward.3} parent=31 // pred_fallthru
          _
        // Predicated region
        $region45: #{transformer_forward.3} parent=31 // pred_check
          %p778 = pneg %p196
        $region46: #{transformer_forward.3} parent=31 // pred_check_branch
          %780 = sbr.rel (%p778) target = $region48
        $region47: #{transformer_forward.3} parent=31 // pred_region
          %s781 = sand.u32 %s56, 1
          %s782 = scalar_lea.sflag [#allocation7], %s781
          %s783 = sand.u32 %s186, 1
          %s784 = scalar_lea.vmem [#allocation8], %s783
          %s786 = ssub.s32 16, 16
          %787 = vsyncadd %s782, %s786
          %s788 = smul.addr %s56, 16
          %s789 = scalar_lea.hbm %s5, %s788
          %s791 = sshll.u32 %s784, 4
          %s792 = int_to_ptr.vmem [resolvable:$true] %s791
          %794 = dma.hbm_to_vmem [thread:$0]  %s789, 16, %s792, %s782
        $region48: #{transformer_forward.3} parent=31 // pred_fallthru
          _
        // Predicated region
        $region49: #{transformer_forward.3} parent=31 // pred_check
          %p795 = pneg %p222
        $region50: #{transformer_forward.3} parent=31 // pred_check_branch
          %797 = sbr.rel (%p795) target = $region52
        $region51: #{transformer_forward.3} parent=31 // pred_region
          %s798 = sand.u32 %s56, 1
          %s799 = scalar_lea.sflag [#allocation10], %s798
          %s800 = sand.u32 %s212, 1
          %s801 = scalar_lea.vmem [#allocation9], %s800
          %s803 = ssub.s32 16, 16
          %804 = vsyncadd %s799, %s803
          %s805 = smul.addr %s56, 16
          %s806 = scalar_lea.hbm %s6, %s805
          %s808 = sshll.u32 %s801, 4
          %s809 = int_to_ptr.vmem [resolvable:$true] %s808
          %811 = dma.hbm_to_vmem [thread:$0]  %s806, 16, %s809, %s799
        $region52: #{transformer_forward.3} parent=31 // pred_fallthru
          _
        // Predicated region
        $region53: #{transformer_forward.3} parent=31 // pred_check
          %p812 = pneg %p248
        $region54: #{transformer_forward.3} parent=31 // pred_check_branch
          %814 = sbr.rel (%p812) target = $region56
        $region55: #{transformer_forward.3} parent=31 // pred_region
          %s815 = sand.u32 %s56, 1
          %s816 = scalar_lea.sflag [#allocation10], %s815
          %s817 = sand.u32 %s238, 1
          %s818 = scalar_lea.vmem [#allocation11], %s817
          %s820 = ssub.s32 16, 16
          %821 = vsyncadd %s816, %s820
          %s822 = smul.addr %s56, 16
          %s823 = scalar_lea.hbm %s7, %s822
          %s825 = sshll.u32 %s818, 4
          %s826 = int_to_ptr.vmem [resolvable:$true] %s825
          %828 = dma.hbm_to_vmem [thread:$0]  %s823, 16, %s826, %s816
        $region56: #{transformer_forward.3} parent=31 // pred_fallthru
          _
        // Predicated region
        $region57: #{transformer_forward.3} parent=31 // pred_check
          %p829 = pneg %p274
        $region58: #{transformer_forward.3} parent=31 // pred_check_branch
          %831 = sbr.rel (%p829) target = $region60
        $region59: #{transformer_forward.3} parent=31 // pred_region
          %s832 = sand.u32 %s56, 1
          %s833 = scalar_lea.sflag [#allocation13], %s832
          %s834 = sand.u32 %s264, 1
          %s835 = smul.addr %s834, 64
          %s836 = scalar_lea.vmem [#allocation12], %s835
          %s838 = ssub.s32 1024, 1024
          %839 = vsyncadd %s833, %s838
          %s840 = smul.addr %s56, 16
          %s841 = smul.addr %s840, 64
          %s842 = scalar_lea.hbm %s8, %s841
          %s843 = sshll.u32 %s836, 4
          %s844 = int_to_ptr.vmem [resolvable:$true] %s843
          %849 = dma.hbm_to_vmem [thread:$0]  %s842, 1024, %s844, %s833, 64, 64, 4
        $region60: #{transformer_forward.3} parent=31 // pred_fallthru
          _
        // Predicated region
        $region61: #{transformer_forward.3} parent=31 // pred_check
          %p850 = pneg %p300
        $region62: #{transformer_forward.3} parent=31 // pred_check_branch
          %852 = sbr.rel (%p850) target = $region64
        $region63: #{transformer_forward.3} parent=31 // pred_region
          %s853 = sand.u32 %s56, 1
          %s854 = scalar_lea.sflag [#allocation13], %s853
          %s855 = sand.u32 %s290, 1
          %s856 = scalar_lea.vmem [#allocation14], %s855
          %s858 = ssub.s32 16, 16
          %859 = vsyncadd %s854, %s858
          %s860 = smul.addr %s56, 16
          %s861 = scalar_lea.hbm %s9, %s860
          %s863 = sshll.u32 %s856, 4
          %s864 = int_to_ptr.vmem [resolvable:$true] %s863
          %866 = dma.hbm_to_vmem [thread:$0]  %s861, 16, %s864, %s854
        $region64: #{transformer_forward.3} parent=31 // pred_fallthru
          _
        // Predicated region
        $region65: #{transformer_forward.3} parent=31 // pred_check
          %p867 = pneg %p326
        $region66: #{transformer_forward.3} parent=31 // pred_check_branch
          %869 = sbr.rel (%p867) target = $region68
        $region67: #{transformer_forward.3} parent=31 // pred_region
          %p870 = scmp.lt.s32.totalorder %s56, 1
          %s871 = scalar_select %p870, %s56, 1
          %s872 = smul.addr %s871, 32
          %s873 = smul.addr %s872, 4
          %s874 = scalar_lea.vmem %s10, %s873
        $region68: #{transformer_forward.3} parent=31 // pred_fallthru
          _
        // Predicated region
        $region69: #{transformer_forward.3} parent=31 // pred_check
          %p875 = pneg %p352
        $region70: #{transformer_forward.3} parent=31 // pred_check_branch
          %877 = sbr.rel (%p875) target = $region72
        $region71: #{transformer_forward.3} parent=31 // pred_region
          %p878 = scmp.lt.s32.totalorder %s56, 1
          %s879 = scalar_select %p878, %s56, 1
          %s880 = smul.addr %s879, 2
          %s881 = scalar_lea.vmem %s11, %s880
        $region72: #{transformer_forward.3} parent=31 // pred_fallthru
          _
        // Predicated region
        $region73: #{transformer_forward.3} parent=31 // pred_check
          %p882 = pneg %p378
        $region74: #{transformer_forward.3} parent=31 // pred_check_branch
          %884 = sbr.rel (%p882) target = $region76
        $region75: #{transformer_forward.3} parent=31 // pred_region
          %s885 = sand.u32 %s56, 1
          %s886 = scalar_lea.sflag [#allocation16], %s885
          %s887 = sand.u32 %s368, 1
          %s888 = smul.addr %s887, 64
          %s889 = scalar_lea.vmem [#allocation15], %s888
          %s891 = ssub.s32 1024, 1024
          %892 = vsyncadd %s886, %s891
          %s893 = smul.addr %s56, 16
          %s894 = smul.addr %s893, 64
          %s895 = scalar_lea.hbm %s12, %s894
          %s896 = sshll.u32 %s889, 4
          %s897 = int_to_ptr.vmem [resolvable:$true] %s896
          %902 = dma.hbm_to_vmem [thread:$0]  %s895, 1024, %s897, %s886, 64, 64, 4
        $region76: #{transformer_forward.3} parent=31 // pred_fallthru
          _
        // Predicated region
        $region77: #{transformer_forward.3} parent=31 // pred_check
          %p903 = pneg %p404
        $region78: #{transformer_forward.3} parent=31 // pred_check_branch
          %905 = sbr.rel (%p903) target = $region80
        $region79: #{transformer_forward.3} parent=31 // pred_region
          %s906 = sand.u32 %s56, 1
          %s907 = scalar_lea.sflag [#allocation16], %s906
          %s908 = sand.u32 %s394, 1
          %s909 = scalar_lea.vmem [#allocation17], %s908
          %s911 = ssub.s32 16, 16
          %912 = vsyncadd %s907, %s911
          %s913 = smul.addr %s56, 16
          %s914 = scalar_lea.hbm %s13, %s913
          %s916 = sshll.u32 %s909, 4
          %s917 = int_to_ptr.vmem [resolvable:$true] %s916
          %919 = dma.hbm_to_vmem [thread:$0]  %s914, 16, %s917, %s907
        $region80: #{transformer_forward.3} parent=31 // pred_fallthru
          _
        // Predicated region
        $region81: #{transformer_forward.3} parent=31 // pred_check
          %p920 = pneg %p430
        $region82: #{transformer_forward.3} parent=31 // pred_check_branch
          %922 = sbr.rel (%p920) target = $region84
        $region83: #{transformer_forward.3} parent=31 // pred_region
          %s923 = sand.u32 %s56, 1
          %s924 = scalar_lea.sflag [#allocation19], %s923
          %s925 = sand.u32 %s420, 1
          %s926 = scalar_lea.vmem [#allocation18], %s925
          %s928 = ssub.s32 16, 16
          %929 = vsyncadd %s924, %s928
          %s930 = smul.addr %s56, 16
          %s931 = scalar_lea.hbm %s14, %s930
          %s933 = sshll.u32 %s926, 4
          %s934 = int_to_ptr.vmem [resolvable:$true] %s933
          %936 = dma.hbm_to_vmem [thread:$0]  %s931, 16, %s934, %s924
        $region84: #{transformer_forward.3} parent=31 // pred_fallthru
          _
        // Predicated region
        $region85: #{transformer_forward.3} parent=31 // pred_check
          %p937 = pneg %p456
        $region86: #{transformer_forward.3} parent=31 // pred_check_branch
          %939 = sbr.rel (%p937) target = $region88
        $region87: #{transformer_forward.3} parent=31 // pred_region
          %s940 = sand.u32 %s56, 1
          %s941 = scalar_lea.sflag [#allocation19], %s940
          %s942 = sand.u32 %s446, 1
          %s943 = scalar_lea.vmem [#allocation20], %s942
          %s945 = ssub.s32 16, 16
          %946 = vsyncadd %s941, %s945
          %s947 = smul.addr %s56, 16
          %s948 = scalar_lea.hbm %s15, %s947
          %s950 = sshll.u32 %s943, 4
          %s951 = int_to_ptr.vmem [resolvable:$true] %s950
          %953 = dma.hbm_to_vmem [thread:$0]  %s948, 16, %s951, %s941
        $region88: #{transformer_forward.3} parent=31 // pred_fallthru
          _
        // Predicated region
        $region89: #{transformer_forward.3} parent=31 // pred_check
          %p954 = pneg %p482
        $region90: #{transformer_forward.3} parent=31 // pred_check_branch
          %956 = sbr.rel (%p954) target = $region92
        $region91: #{transformer_forward.3} parent=31 // pred_region
          %p957 = scmp.lt.s32.totalorder %s56, 1
          %s958 = scalar_select %p957, %s56, 1
          %s959 = smul.addr %s958, 32
          %s960 = smul.addr %s959, 4
          %s961 = scalar_lea.vmem %s16, %s960
        $region92: #{transformer_forward.3} parent=31 // pred_fallthru
          _
        // Predicated region
        $region93: #{transformer_forward.3} parent=31 // pred_check
          %p962 = pneg %p508
        $region94: #{transformer_forward.3} parent=31 // pred_check_branch
          %964 = sbr.rel (%p962) target = $region96
        $region95: #{transformer_forward.3} parent=31 // pred_region
          %s965 = sand.u32 %s56, 1
          %s966 = scalar_lea.sflag [#allocation22], %s965
          %s967 = sand.u32 %s498, 1
          %s968 = smul.addr %s967, 2
          %s969 = scalar_lea.vmem [#allocation21], %s968
          %s971 = ssub.s32 32, 32
          %972 = vsyncadd %s966, %s971
          %s973 = smul.addr %s56, 2
          %s974 = smul.addr %s973, 16
          %s975 = scalar_lea.hbm %s17, %s974
          %s977 = sshll.u32 %s969, 4
          %s978 = int_to_ptr.vmem [resolvable:$true] %s977
          %980 = dma.hbm_to_vmem [thread:$0]  %s975, 32, %s978, %s966
        $region96: #{transformer_forward.3} parent=31 // pred_fallthru
          _
        // Predicated region
        $region97: #{transformer_forward.3} parent=31 // pred_check
          %p981 = pneg %p534
        $region98: #{transformer_forward.3} parent=31 // pred_check_branch
          %983 = sbr.rel (%p981) target = $region100
        $region99: #{transformer_forward.3} parent=31 // pred_region
          %p984 = scmp.lt.s32.totalorder %s56, 1
          %s985 = scalar_select %p984, %s56, 1
          %s986 = smul.addr %s985, 32
          %s987 = smul.addr %s986, 4
          %s988 = scalar_lea.vmem %s18, %s987
        $region100: #{transformer_forward.3} parent=31 // pred_fallthru
          _
        // Predicated region
        $region101: #{transformer_forward.3} parent=31 // pred_check
          %p989 = pneg %p560
        $region102: #{transformer_forward.3} parent=31 // pred_check_branch
          %991 = sbr.rel (%p989) target = $region104
        $region103: #{transformer_forward.3} parent=31 // pred_region
          %s992 = sand.u32 %s56, 1
          %s993 = scalar_lea.sflag [#allocation22], %s992
          %s994 = sand.u32 %s550, 1
          %s995 = scalar_lea.vmem [#allocation23], %s994
          %s997 = ssub.s32 16, 16
          %998 = vsyncadd %s993, %s997
          %s999 = smul.addr %s56, 16
          %s1000 = scalar_lea.hbm %s19, %s999
          %s1002 = sshll.u32 %s995, 4
          %s1003 = int_to_ptr.vmem [resolvable:$true] %s1002
          %1005 = dma.hbm_to_vmem [thread:$0]  %s1000, 16, %s1003, %s993
        $region104: #{transformer_forward.3} parent=31 // pred_fallthru
          _
        // Predicated region
        $region105: #{transformer_forward.3} parent=31 // pred_check
          %p1006 = pneg %p586
        $region106: #{transformer_forward.3} parent=31 // pred_check_branch
          %1008 = sbr.rel (%p1006) target = $region108
        $region107: #{transformer_forward.3} parent=31 // pred_region
          %s1009 = sand.u32 %s56, 1
          %s1010 = scalar_lea.sflag [#allocation25], %s1009
          %s1011 = sand.u32 %s576, 1
          %s1012 = scalar_lea.vmem [#allocation24], %s1011
          %s1014 = ssub.s32 16, 16
          %1015 = vsyncadd %s1010, %s1014
          %s1016 = smul.addr %s56, 16
          %s1017 = scalar_lea.hbm %s20, %s1016
          %s1019 = sshll.u32 %s1012, 4
          %s1020 = int_to_ptr.vmem [resolvable:$true] %s1019
          %1022 = dma.hbm_to_vmem [thread:$0]  %s1017, 16, %s1020, %s1010
        $region108: #{transformer_forward.3} parent=31 // pred_fallthru
          _
        // Predicated region
        $region109: #{transformer_forward.3} parent=31 // pred_check
          %p1023 = pneg %p612
        $region110: #{transformer_forward.3} parent=31 // pred_check_branch
          %1025 = sbr.rel (%p1023) target = $region112
        $region111: #{transformer_forward.3} parent=31 // pred_region
          %s1026 = sand.u32 %s56, 1
          %s1027 = scalar_lea.sflag [#allocation25], %s1026
          %s1028 = sand.u32 %s602, 1
          %s1029 = scalar_lea.vmem [#allocation26], %s1028
          %s1031 = ssub.s32 16, 16
          %1032 = vsyncadd %s1027, %s1031
          %s1033 = smul.addr %s56, 16
          %s1034 = scalar_lea.hbm %s21, %s1033
          %s1036 = sshll.u32 %s1029, 4
          %s1037 = int_to_ptr.vmem [resolvable:$true] %s1036
          %1039 = dma.hbm_to_vmem [thread:$0]  %s1034, 16, %s1037, %s1027
        $region112: #{transformer_forward.3} parent=31 // pred_fallthru
          _
      $region32: #{transformer_forward.3} parent=5 // pred_fallthru
        _
      %p1040 = scmp.le.s32.totalorder 1, %s56
      %p1041 = scmp.lt.s32.totalorder %s56, 3
      %p1042 = pnand %p1040, %p1041
      %p1043 = pneg %p1042
      // Predicated region
      $region113: #{transformer_forward.3} parent=5 // pred_check
        _
      $region114: #{transformer_forward.3} parent=5 // pred_check_branch
        %1045 = sbr.rel (%p1042) target = $region116
      $region115: #{transformer_forward.3} parent=5 // pred_region
        %s1046 = ssub.s32 %s56, 1
        %s1047 = sand.u32 %s137, 1
        %s1048 = scalar_lea.sflag [#allocation4], %s1047
        %s1049 = sand.u32 %s137, 1
        %s1050 = smul.addr %s1049, 3
        %s1051 = scalar_lea.vmem [#allocation3], %s1050
        // Predicated region
        $region117: #{transformer_forward.3} parent=115 // pred_check
          %p1052 = pneg %p150
        $region118: #{transformer_forward.3} parent=115 // pred_check_branch
          %1054 = sbr.rel (%p1052) target = $region120
        $region119: #{transformer_forward.3} parent=115 // pred_region
          %1055 = dma.done %s1048, 48
        $region120: #{transformer_forward.3} parent=115 // pred_fallthru
          _
        %s1056 = sand.u32 %s61, 1
        %s1057 = scalar_lea.sflag [#allocation7], %s1056
        %s1058 = sand.u32 %s163, 1
        %s1059 = smul.addr %s1058, 64
        %s1060 = scalar_lea.vmem [#allocation6], %s1059
        // Predicated region
        $region121: #{transformer_forward.3} parent=115 // pred_check
          %p1061 = pneg %p176
        $region122: #{transformer_forward.3} parent=115 // pred_check_branch
          %1063 = sbr.rel (%p1061) target = $region124
        $region123: #{transformer_forward.3} parent=115 // pred_region
          %1064 = dma.done %s1057, 1024
        $region124: #{transformer_forward.3} parent=115 // pred_fallthru
          _
        %s1065 = sand.u32 %s61, 1
        %s1066 = scalar_lea.sflag [#allocation7], %s1065
        %s1067 = sand.u32 %s189, 1
        %s1068 = scalar_lea.vmem [#allocation8], %s1067
        // Predicated region
        $region125: #{transformer_forward.3} parent=115 // pred_check
          %p1069 = pneg %p202
        $region126: #{transformer_forward.3} parent=115 // pred_check_branch
          %1071 = sbr.rel (%p1069) target = $region128
        $region127: #{transformer_forward.3} parent=115 // pred_region
          %1072 = dma.done %s1066, 16
        $region128: #{transformer_forward.3} parent=115 // pred_fallthru
          _
        %s1073 = sand.u32 %s61, 1
        %s1074 = scalar_lea.sflag [#allocation10], %s1073
        %s1075 = sand.u32 %s215, 1
        %s1076 = scalar_lea.vmem [#allocation9], %s1075
        // Predicated region
        $region129: #{transformer_forward.3} parent=115 // pred_check
          %p1077 = pneg %p228
        $region130: #{transformer_forward.3} parent=115 // pred_check_branch
          %1079 = sbr.rel (%p1077) target = $region132
        $region131: #{transformer_forward.3} parent=115 // pred_region
          %1080 = dma.done %s1074, 16
        $region132: #{transformer_forward.3} parent=115 // pred_fallthru
          _
        %s1081 = sand.u32 %s61, 1
        %s1082 = scalar_lea.sflag [#allocation10], %s1081
        %s1083 = sand.u32 %s241, 1
        %s1084 = scalar_lea.vmem [#allocation11], %s1083
        // Predicated region
        $region133: #{transformer_forward.3} parent=115 // pred_check
          %p1085 = pneg %p254
        $region134: #{transformer_forward.3} parent=115 // pred_check_branch
          %1087 = sbr.rel (%p1085) target = $region136
        $region135: #{transformer_forward.3} parent=115 // pred_region
          %1088 = dma.done %s1082, 16
        $region136: #{transformer_forward.3} parent=115 // pred_fallthru
          _
        %s1089 = sand.u32 %s61, 1
        %s1090 = scalar_lea.sflag [#allocation13], %s1089
        %s1091 = sand.u32 %s267, 1
        %s1092 = smul.addr %s1091, 64
        %s1093 = scalar_lea.vmem [#allocation12], %s1092
        // Predicated region
        $region137: #{transformer_forward.3} parent=115 // pred_check
          %p1094 = pneg %p280
        $region138: #{transformer_forward.3} parent=115 // pred_check_branch
          %1096 = sbr.rel (%p1094) target = $region140
        $region139: #{transformer_forward.3} parent=115 // pred_region
          %1097 = dma.done %s1090, 1024
        $region140: #{transformer_forward.3} parent=115 // pred_fallthru
          _
        %s1098 = sand.u32 %s61, 1
        %s1099 = scalar_lea.sflag [#allocation13], %s1098
        %s1100 = sand.u32 %s293, 1
        %s1101 = scalar_lea.vmem [#allocation14], %s1100
        // Predicated region
        $region141: #{transformer_forward.3} parent=115 // pred_check
          %p1102 = pneg %p306
        $region142: #{transformer_forward.3} parent=115 // pred_check_branch
          %1104 = sbr.rel (%p1102) target = $region144
        $region143: #{transformer_forward.3} parent=115 // pred_region
          %1105 = dma.done %s1099, 16
        $region144: #{transformer_forward.3} parent=115 // pred_fallthru
          _
        %s1106 = sand.u32 %s61, 1
        %s1107 = scalar_lea.sflag [#allocation16], %s1106
        %s1108 = sand.u32 %s371, 1
        %s1109 = smul.addr %s1108, 64
        %s1110 = scalar_lea.vmem [#allocation15], %s1109
        // Predicated region
        $region145: #{transformer_forward.3} parent=115 // pred_check
          %p1111 = pneg %p384
        $region146: #{transformer_forward.3} parent=115 // pred_check_branch
          %1113 = sbr.rel (%p1111) target = $region148
        $region147: #{transformer_forward.3} parent=115 // pred_region
          %1114 = dma.done %s1107, 1024
        $region148: #{transformer_forward.3} parent=115 // pred_fallthru
          _
        %s1115 = sand.u32 %s61, 1
        %s1116 = scalar_lea.sflag [#allocation16], %s1115
        %s1117 = sand.u32 %s397, 1
        %s1118 = scalar_lea.vmem [#allocation17], %s1117
        // Predicated region
        $region149: #{transformer_forward.3} parent=115 // pred_check
          %p1119 = pneg %p410
        $region150: #{transformer_forward.3} parent=115 // pred_check_branch
          %1121 = sbr.rel (%p1119) target = $region152
        $region151: #{transformer_forward.3} parent=115 // pred_region
          %1122 = dma.done %s1116, 16
        $region152: #{transformer_forward.3} parent=115 // pred_fallthru
          _
        %s1123 = sand.u32 %s61, 1
        %s1124 = scalar_lea.sflag [#allocation19], %s1123
        %s1125 = sand.u32 %s423, 1
        %s1126 = scalar_lea.vmem [#allocation18], %s1125
        // Predicated region
        $region153: #{transformer_forward.3} parent=115 // pred_check
          %p1127 = pneg %p436
        $region154: #{transformer_forward.3} parent=115 // pred_check_branch
          %1129 = sbr.rel (%p1127) target = $region156
        $region155: #{transformer_forward.3} parent=115 // pred_region
          %1130 = dma.done %s1124, 16
        $region156: #{transformer_forward.3} parent=115 // pred_fallthru
          _
        %s1131 = sand.u32 %s61, 1
        %s1132 = scalar_lea.sflag [#allocation19], %s1131
        %s1133 = sand.u32 %s449, 1
        %s1134 = scalar_lea.vmem [#allocation20], %s1133
        // Predicated region
        $region157: #{transformer_forward.3} parent=115 // pred_check
          %p1135 = pneg %p462
        $region158: #{transformer_forward.3} parent=115 // pred_check_branch
          %1137 = sbr.rel (%p1135) target = $region160
        $region159: #{transformer_forward.3} parent=115 // pred_region
          %1138 = dma.done %s1132, 16
        $region160: #{transformer_forward.3} parent=115 // pred_fallthru
          _
        %s1139 = sand.u32 %s61, 1
        %s1140 = scalar_lea.sflag [#allocation22], %s1139
        %s1141 = sand.u32 %s501, 1
        %s1142 = smul.addr %s1141, 2
        %s1143 = scalar_lea.vmem [#allocation21], %s1142
        // Predicated region
        $region161: #{transformer_forward.3} parent=115 // pred_check
          %p1144 = pneg %p514
        $region162: #{transformer_forward.3} parent=115 // pred_check_branch
          %1146 = sbr.rel (%p1144) target = $region164
        $region163: #{transformer_forward.3} parent=115 // pred_region
          %1147 = dma.done %s1140, 32
        $region164: #{transformer_forward.3} parent=115 // pred_fallthru
          _
        %s1148 = sand.u32 %s61, 1
        %s1149 = scalar_lea.sflag [#allocation22], %s1148
        %s1150 = sand.u32 %s553, 1
        %s1151 = scalar_lea.vmem [#allocation23], %s1150
        // Predicated region
        $region165: #{transformer_forward.3} parent=115 // pred_check
          %p1152 = pneg %p566
        $region166: #{transformer_forward.3} parent=115 // pred_check_branch
          %1154 = sbr.rel (%p1152) target = $region168
        $region167: #{transformer_forward.3} parent=115 // pred_region
          %1155 = dma.done %s1149, 16
        $region168: #{transformer_forward.3} parent=115 // pred_fallthru
          _
        %s1156 = sand.u32 %s61, 1
        %s1157 = scalar_lea.sflag [#allocation25], %s1156
        %s1158 = sand.u32 %s579, 1
        %s1159 = scalar_lea.vmem [#allocation24], %s1158
        // Predicated region
        $region169: #{transformer_forward.3} parent=115 // pred_check
          %p1160 = pneg %p592
        $region170: #{transformer_forward.3} parent=115 // pred_check_branch
          %1162 = sbr.rel (%p1160) target = $region172
        $region171: #{transformer_forward.3} parent=115 // pred_region
          %1163 = dma.done %s1157, 16
        $region172: #{transformer_forward.3} parent=115 // pred_fallthru
          _
        %s1164 = sand.u32 %s61, 1
        %s1165 = scalar_lea.sflag [#allocation25], %s1164
        %s1166 = sand.u32 %s605, 1
        %s1167 = scalar_lea.vmem [#allocation26], %s1166
        // Predicated region
        $region173: #{transformer_forward.3} parent=115 // pred_check
          %p1168 = pneg %p618
        $region174: #{transformer_forward.3} parent=115 // pred_check_branch
          %1170 = sbr.rel (%p1168) target = $region176
        $region175: #{transformer_forward.3} parent=115 // pred_region
          %1171 = dma.done %s1165, 16
        $region176: #{transformer_forward.3} parent=115 // pred_fallthru
          _
        // Predicated region
        $region177: #{transformer_forward.3} parent=115 // pred_check
          %p1172 = pneg %p639
        $region178: #{transformer_forward.3} parent=115 // pred_check_branch
          %1174 = sbr.rel (%p1172) target = $region180
        $region179: #{transformer_forward.3} parent=115 // pred_region
          %1175 = dma.done [#allocation28], 4096
        $region180: #{transformer_forward.3} parent=115 // pred_fallthru
          _
        // Predicated region
        $region181: #{transformer_forward.3} parent=115 // pred_check
          %p1176 = pneg %p660
        $region182: #{transformer_forward.3} parent=115 // pred_check_branch
          %1178 = sbr.rel (%p1176) target = $region184
        $region183: #{transformer_forward.3} parent=115 // pred_region
          %1179 = dma.done [#allocation28], 64
        $region184: #{transformer_forward.3} parent=115 // pred_fallthru
          _
        %p1180 = pneg %p77
        %p1181 = pneg %p74
        %p1182 = pneg %p98
        %p1183 = pneg %p95
        %p1184 = scmp.lt.s32.totalorder %s61, 1
        %s1185 = scalar_select %p1184, %s61, 1
        %s1186 = smul.addr %s1185, 48
        %s1187 = smul.addr %s1186, 4
        %s1188 = scalar_lea.vmem %s2, %s1187
        %p1189 = pneg %p124
        %p1190 = pneg %p121
        %s1191 = sand.u32 %s137, 1
        %s1192 = scalar_lea.sflag [#allocation4], %s1191
        %s1193 = sand.u32 %s137, 1
        %s1194 = smul.addr %s1193, 3
        %s1195 = scalar_lea.vmem [#allocation3], %s1194
        %p1196 = pneg %p150
        %p1197 = pneg %p147
        %s1198 = sand.u32 %s61, 1
        %s1199 = scalar_lea.sflag [#allocation7], %s1198
        %s1200 = sand.u32 %s163, 1
        %s1201 = smul.addr %s1200, 64
        %s1202 = scalar_lea.vmem [#allocation6], %s1201
        %p1203 = pneg %p176
        %p1204 = pneg %p173
        %s1205 = sand.u32 %s61, 1
        %s1206 = scalar_lea.sflag [#allocation7], %s1205
        %s1207 = sand.u32 %s189, 1
        %s1208 = scalar_lea.vmem [#allocation8], %s1207
        %p1209 = pneg %p202
        %p1210 = pneg %p199
        %s1211 = sand.u32 %s61, 1
        %s1212 = scalar_lea.sflag [#allocation10], %s1211
        %s1213 = sand.u32 %s215, 1
        %s1214 = scalar_lea.vmem [#allocation9], %s1213
        %p1215 = pneg %p228
        %p1216 = pneg %p225
        %s1217 = sand.u32 %s61, 1
        %s1218 = scalar_lea.sflag [#allocation10], %s1217
        %s1219 = sand.u32 %s241, 1
        %s1220 = scalar_lea.vmem [#allocation11], %s1219
        %p1221 = pneg %p254
        %p1222 = pneg %p251
        %s1223 = sand.u32 %s61, 1
        %s1224 = scalar_lea.sflag [#allocation13], %s1223
        %s1225 = sand.u32 %s267, 1
        %s1226 = smul.addr %s1225, 64
        %s1227 = scalar_lea.vmem [#allocation12], %s1226
        %p1228 = pneg %p280
        %p1229 = pneg %p277
        %s1230 = sand.u32 %s61, 1
        %s1231 = scalar_lea.sflag [#allocation13], %s1230
        %s1232 = sand.u32 %s293, 1
        %s1233 = scalar_lea.vmem [#allocation14], %s1232
        %p1234 = pneg %p306
        %p1235 = pneg %p303
        %p1236 = scmp.lt.s32.totalorder %s61, 1
        %s1237 = scalar_select %p1236, %s61, 1
        %s1238 = smul.addr %s1237, 32
        %s1239 = smul.addr %s1238, 4
        %s1240 = scalar_lea.vmem %s10, %s1239
        %p1241 = pneg %p332
        %p1242 = pneg %p329
        %p1243 = scmp.lt.s32.totalorder %s61, 1
        %s1244 = scalar_select %p1243, %s61, 1
        %s1245 = smul.addr %s1244, 2
        %s1246 = scalar_lea.vmem %s11, %s1245
        %p1247 = pneg %p358
        %p1248 = pneg %p355
        %s1249 = sand.u32 %s61, 1
        %s1250 = scalar_lea.sflag [#allocation16], %s1249
        %s1251 = sand.u32 %s371, 1
        %s1252 = smul.addr %s1251, 64
        %s1253 = scalar_lea.vmem [#allocation15], %s1252
        %p1254 = pneg %p384
        %p1255 = pneg %p381
        %s1256 = sand.u32 %s61, 1
        %s1257 = scalar_lea.sflag [#allocation16], %s1256
        %s1258 = sand.u32 %s397, 1
        %s1259 = scalar_lea.vmem [#allocation17], %s1258
        %p1260 = pneg %p410
        %p1261 = pneg %p407
        %s1262 = sand.u32 %s61, 1
        %s1263 = scalar_lea.sflag [#allocation19], %s1262
        %s1264 = sand.u32 %s423, 1
        %s1265 = scalar_lea.vmem [#allocation18], %s1264
        %p1266 = pneg %p436
        %p1267 = pneg %p433
        %s1268 = sand.u32 %s61, 1
        %s1269 = scalar_lea.sflag [#allocation19], %s1268
        %s1270 = sand.u32 %s449, 1
        %s1271 = scalar_lea.vmem [#allocation20], %s1270
        %p1272 = pneg %p462
        %p1273 = pneg %p459
        %p1274 = scmp.lt.s32.totalorder %s61, 1
        %s1275 = scalar_select %p1274, %s61, 1
        %s1276 = smul.addr %s1275, 32
        %s1277 = smul.addr %s1276, 4
        %s1278 = scalar_lea.vmem %s16, %s1277
        %p1279 = pneg %p488
        %p1280 = pneg %p485
        %s1281 = sand.u32 %s61, 1
        %s1282 = scalar_lea.sflag [#allocation22], %s1281
        %s1283 = sand.u32 %s501, 1
        %s1284 = smul.addr %s1283, 2
        %s1285 = scalar_lea.vmem [#allocation21], %s1284
        %p1286 = pneg %p514
        %p1287 = pneg %p511
        %p1288 = scmp.lt.s32.totalorder %s61, 1
        %s1289 = scalar_select %p1288, %s61, 1
        %s1290 = smul.addr %s1289, 32
        %s1291 = smul.addr %s1290, 4
        %s1292 = scalar_lea.vmem %s18, %s1291
        %p1293 = pneg %p540
        %p1294 = pneg %p537
        %s1295 = sand.u32 %s61, 1
        %s1296 = scalar_lea.sflag [#allocation22], %s1295
        %s1297 = sand.u32 %s553, 1
        %s1298 = scalar_lea.vmem [#allocation23], %s1297
        %p1299 = pneg %p566
        %p1300 = pneg %p563
        %s1301 = sand.u32 %s61, 1
        %s1302 = scalar_lea.sflag [#allocation25], %s1301
        %s1303 = sand.u32 %s579, 1
        %s1304 = scalar_lea.vmem [#allocation24], %s1303
        %p1305 = pneg %p592
        %p1306 = pneg %p589
        %s1307 = sand.u32 %s61, 1
        %s1308 = scalar_lea.sflag [#allocation25], %s1307
        %s1309 = sand.u32 %s605, 1
        %s1310 = scalar_lea.vmem [#allocation26], %s1309
        %p1311 = pneg %p618
        %p1312 = pneg %p615
        %p1313 = pneg %p639
        %p1314 = pneg %p636
        %p1315 = pneg %p660
        %p1316 = pneg %p657
        %p1317 = pneg %p681
        %p1318 = pneg %p678
        %p1319 = scmp.lt.s32.totalorder %s61, 1
        %s1320 = scalar_select %p1319, %s61, 1
        %s1321 = smul.addr %s1320, 48
        %s1322 = smul.addr %s1321, 4
        %s1323 = scalar_lea.vmem %s2, %s1322
        %p1324 = scmp.lt.s32.totalorder %s61, 1
        %s1325 = scalar_select %p1324, %s61, 1
        %s1326 = smul.addr %s1325, 32
        %s1327 = smul.addr %s1326, 4
        %s1328 = scalar_lea.vmem %s10, %s1327
        %p1329 = scmp.lt.s32.totalorder %s61, 1
        %s1330 = scalar_select %p1329, %s61, 1
        %s1331 = smul.addr %s1330, 2
        %s1332 = scalar_lea.vmem %s11, %s1331
        %p1333 = scmp.lt.s32.totalorder %s61, 1
        %s1334 = scalar_select %p1333, %s61, 1
        %s1335 = smul.addr %s1334, 32
        %s1336 = smul.addr %s1335, 4
        %s1337 = scalar_lea.vmem %s16, %s1336
        %p1338 = scmp.lt.s32.totalorder %s61, 1
        %s1339 = scalar_select %p1338, %s61, 1
        %s1340 = smul.addr %s1339, 32
        %s1341 = smul.addr %s1340, 4
        %s1342 = scalar_lea.vmem %s18, %s1341
        %p1344 = scmp.eq.s32.totalorder %s61, 0
        // Predicated region
        $region185: #{transformer_forward.3} parent=115 // pred_check
          %p1345 = pneg %p1344
        $region186: #{transformer_forward.3} parent=115 // pred_check_branch
          %1347 = sbr.rel (%p1345) target = $region188
        $region187: #{transformer_forward.3} parent=115 // pred_region
          %v1348 = vld [vmem:[%s0] sm:$0xff]
          %v1349 = vld [vmem:[%s0 + $0x8] sm:$0xff]
          %1350 = vst [vmem:[#allocation2] sm:$0xff] %v1348
          %1351 = vst [vmem:[#allocation2 + $0x8] sm:$0xff] %v1349
        $region188: #{transformer_forward.3} parent=115 // pred_fallthru
          _
        %v1352 = vld [vmem:[#allocation2] sm:$0xff]
        %v1353 = vld [vmem:[#allocation2 + $0x8] sm:$0xff]
        %v1354 = vld [vmem:[%s1] sm:$0xff]
        %v1355 = vld [vmem:[%s1 + $0x8] sm:$0xff]
        %v1356 = vpack.c.bf16 %v1353, %v1352
        %v1357 = vld [vmem:[%s1323] sm:$0xff]
        %v1358 = vld [vmem:[%s1323 + $0x8] sm:$0xf]
        %v1359 = vld [vmem:[%s1323 + $0xc] sm:$0xff]
        %v1360 = vld [vmem:[%s1323 + $0x14] sm:$0xf]
        %v1361 = vld [vmem:[%s1323 + $0x18] sm:$0xff]
        %v1362 = vld [vmem:[%s1323 + $0x20] sm:$0xf]
        %v1363 = vld [vmem:[%s1323 + $0x24] sm:$0xff]
        %v1364 = vld [vmem:[%s1323 + $0x2c] sm:$0xf]
        %v1365 = vld [vmem:[%s1323 + $0x30] sm:$0xff]
        %v1366 = vld [vmem:[%s1323 + $0x38] sm:$0xf]
        %v1367 = vld [vmem:[%s1323 + $0x3c] sm:$0xff]
        %v1368 = vld [vmem:[%s1323 + $0x44] sm:$0xf]
        %v1369 = vld [vmem:[%s1323 + $0x48] sm:$0xff]
        %v1370 = vld [vmem:[%s1323 + $0x50] sm:$0xf]
        %v1371 = vld [vmem:[%s1323 + $0x54] sm:$0xff]
        %v1372 = vld [vmem:[%s1323 + $0x5c] sm:$0xf]
        %v1373 = vld [vmem:[%s1323 + $0x60] sm:$0xff]
        %v1374 = vld [vmem:[%s1323 + $0x68] sm:$0xf]
        %v1375 = vld [vmem:[%s1323 + $0x6c] sm:$0xff]
        %v1376 = vld [vmem:[%s1323 + $0x74] sm:$0xf]
        %v1377 = vld [vmem:[%s1323 + $0x78] sm:$0xff]
        %v1378 = vld [vmem:[%s1323 + $0x80] sm:$0xf]
        %v1379 = vld [vmem:[%s1323 + $0x84] sm:$0xff]
        %v1380 = vld [vmem:[%s1323 + $0x8c] sm:$0xf]
        %v1381 = vld [vmem:[%s1323 + $0x90] sm:$0xff]
        %v1382 = vld [vmem:[%s1323 + $0x98] sm:$0xf]
        %v1383 = vld [vmem:[%s1323 + $0x9c] sm:$0xff]
        %v1384 = vld [vmem:[%s1323 + $0xa4] sm:$0xf]
        %v1385 = vld [vmem:[%s1323 + $0xa8] sm:$0xff]
        %v1386 = vld [vmem:[%s1323 + $0xb0] sm:$0xf]
        %v1387 = vld [vmem:[%s1323 + $0xb4] sm:$0xff]
        %v1388 = vld [vmem:[%s1323 + $0xbc] sm:$0xf]
        %v1389 = vld [vmem:[%s1051] sm:$0x7]
        %v1391 = vlaneseq
        %v1392 = vshrl.u32 %v1391, 7
        %v1393 = vsub.s32 0, %v1392
        %v1394 = vrot.slane %v1389, %v1393
        %v1395 = vlaneseq
        %v1396 = vshrl.u32 %v1395, 7
        %v1397 = vsub.s32 1, %v1396
        %v1398 = vrot.slane %v1389, %v1397
        %v1399 = vlaneseq
        %v1400 = vshrl.u32 %v1399, 7
        %v1401 = vsub.s32 2, %v1400
        %v1402 = vrot.slane %v1389, %v1401
        %v1438 = vunpack.c.l.b16 %v1357
        %v1439 = vunpack.c.h.b16 %v1357
        %v1440 = vunpack.c.l.b16 %v1358
        %v1441 = vunpack.c.l.b16 %v1359
        %v1442 = vunpack.c.h.b16 %v1359
        %v1443 = vunpack.c.l.b16 %v1360
        %v1444 = vunpack.c.l.b16 %v1361
        %v1445 = vunpack.c.h.b16 %v1361
        %v1446 = vunpack.c.l.b16 %v1362
        %v1447 = vunpack.c.l.b16 %v1363
        %v1448 = vunpack.c.h.b16 %v1363
        %v1449 = vunpack.c.l.b16 %v1364
        %v1450 = vunpack.c.l.b16 %v1365
        %v1451 = vunpack.c.h.b16 %v1365
        %v1452 = vunpack.c.l.b16 %v1366
        %v1453 = vunpack.c.l.b16 %v1367
        %v1454 = vunpack.c.h.b16 %v1367
        %v1455 = vunpack.c.l.b16 %v1368
        %v1456 = vunpack.c.l.b16 %v1369
        %v1457 = vunpack.c.h.b16 %v1369
        %v1458 = vunpack.c.l.b16 %v1370
        %v1459 = vunpack.c.l.b16 %v1371
        %v1460 = vunpack.c.h.b16 %v1371
        %v1461 = vunpack.c.l.b16 %v1372
        %v1462 = vunpack.c.l.b16 %v1373
        %v1463 = vunpack.c.h.b16 %v1373
        %v1464 = vunpack.c.l.b16 %v1374
        %v1465 = vunpack.c.l.b16 %v1375
        %v1466 = vunpack.c.h.b16 %v1375
        %v1467 = vunpack.c.l.b16 %v1376
        %v1468 = vunpack.c.l.b16 %v1377
        %v1469 = vunpack.c.h.b16 %v1377
        %v1470 = vunpack.c.l.b16 %v1378
        %v1471 = vunpack.c.l.b16 %v1379
        %v1472 = vunpack.c.h.b16 %v1379
        %v1473 = vunpack.c.l.b16 %v1380
        %v1474 = vunpack.c.l.b16 %v1381
        %v1475 = vunpack.c.h.b16 %v1381
        %v1476 = vunpack.c.l.b16 %v1382
        %v1477 = vunpack.c.l.b16 %v1383
        %v1478 = vunpack.c.h.b16 %v1383
        %v1479 = vunpack.c.l.b16 %v1384
        %v1480 = vunpack.c.l.b16 %v1385
        %v1481 = vunpack.c.h.b16 %v1385
        %v1482 = vunpack.c.l.b16 %v1386
        %v1483 = vunpack.c.l.b16 %v1387
        %v1484 = vunpack.c.h.b16 %v1387
        %v1485 = vunpack.c.l.b16 %v1388
        %v1486 = vpack.c.b16 %v1441, %v1438
        %v1487 = vpack.c.b16 %v1442, %v1439
        %v1488 = vpack.c.b16 %v1443, %v1440
        %v1489 = vpack.c.b16 %v1447, %v1444
        %v1490 = vpack.c.b16 %v1448, %v1445
        %v1491 = vpack.c.b16 %v1449, %v1446
        %v1492 = vpack.c.b16 %v1453, %v1450
        %v1493 = vpack.c.b16 %v1454, %v1451
        %v1494 = vpack.c.b16 %v1455, %v1452
        %v1495 = vpack.c.b16 %v1459, %v1456
        %v1496 = vpack.c.b16 %v1460, %v1457
        %v1497 = vpack.c.b16 %v1461, %v1458
        %v1498 = vpack.c.b16 %v1465, %v1462
        %v1499 = vpack.c.b16 %v1466, %v1463
        %v1500 = vpack.c.b16 %v1467, %v1464
        %v1501 = vpack.c.b16 %v1471, %v1468
        %v1502 = vpack.c.b16 %v1472, %v1469
        %v1503 = vpack.c.b16 %v1473, %v1470
        %v1504 = vpack.c.b16 %v1477, %v1474
        %v1505 = vpack.c.b16 %v1478, %v1475
        %v1506 = vpack.c.b16 %v1479, %v1476
        %v1507 = vpack.c.b16 %v1483, %v1480
        %v1508 = vpack.c.b16 %v1484, %v1481
        %v1509 = vpack.c.b16 %v1485, %v1482
        %1534 = vmatprep.subr.bf16.mxu0 %v1508
        %1535 = vmatpush1.bf16.msra.mxu0 %v1507
        %1536 = vmatprep.subr.bf16.mxu0 %v1505
        %1537 = vmatpush1.bf16.msra.mxu0 %v1504
        %1538 = vmatprep.subr.bf16.mxu0 %v1502
        %1539 = vmatpush1.bf16.msra.mxu0 %v1501
        %1540 = vmatprep.subr.bf16.mxu0 %v1499
        %1541 = vmatpush1.bf16.msra.mxu0 %v1498
        %1542 = vmatprep.subr.bf16.mxu0 %v1496
        %1543 = vmatpush1.bf16.msra.mxu0 %v1495
        %1544 = vmatprep.subr.bf16.mxu0 %v1493
        %1545 = vmatpush1.bf16.msra.mxu0 %v1492
        %1546 = vmatprep.subr.bf16.mxu0 %v1490
        %1547 = vmatpush1.bf16.msra.mxu0 %v1489
        %1548 = vmatprep.subr.bf16.mxu0 %v1487
        %1549 = vmatpush1.bf16.msra.mxu0 %v1486
        %1550 = vmatprep.subr.bf16.mxu0 0
        %1551 = vmatpush2.bf16.msra.mxu0 0
        %1552 = vmatprep.subr.bf16.mxu0 0
        %1553 = vmatpush2.bf16.msra.mxu0 0
        %1554 = vmatprep.subr.bf16.mxu0 0
        %1555 = vmatpush2.bf16.msra.mxu0 0
        %1556 = vmatprep.subr.bf16.mxu0 0
        %1557 = vmatpush2.bf16.msra.mxu0 0
        %1558 = vmatprep.subr.bf16.mxu0 0
        %1559 = vmatpush2.bf16.msra.mxu0 0
        %1560 = vmatprep.subr.bf16.mxu0 0
        %1561 = vmatpush2.bf16.msra.mxu0 0
        %1562 = vmatprep.subr.bf16.mxu0 0
        %1563 = vmatpush2.bf16.msra.mxu0 0
        %1564 = vmatprep.subr.bf16.mxu0 0
        %1565 = vmatpush2.bf16.msra.mxu0 0
        %1566 = vmatprep.mubr.bf16.mxu0 0
        %1567 = vmatmul.mubr.bf16.gmra.mxu0 %v1356
        %v1568 = vpop.f32.mrf.mxu0
        %v1569 = vadd.f32 %v1394, %v1568
        %v1570 = vpop.f32.mrf.mxu0
        %v1571 = vadd.f32 %v1398, %v1570
        %v1572 = vpop.f32.mrf.mxu0
        %v1573 = vadd.f32 %v1394, %v1572
        %v1574 = vpop.f32.mrf.mxu0
        %v1575 = vadd.f32 %v1398, %v1574
        %1576 = vdwg.mxu0
        %1577 = vmatprep.subr.bf16.mxu0 0
        %1578 = vmatpush1.bf16.msra.mxu0 %v1509
        %1579 = vmatprep.subr.bf16.mxu0 0
        %1580 = vmatpush1.bf16.msra.mxu0 %v1506
        %1581 = vmatprep.subr.bf16.mxu0 0
        %1582 = vmatpush1.bf16.msra.mxu0 %v1503
        %1583 = vmatprep.subr.bf16.mxu0 0
        %1584 = vmatpush1.bf16.msra.mxu0 %v1500
        %1585 = vmatprep.subr.bf16.mxu0 0
        %1586 = vmatpush1.bf16.msra.mxu0 %v1497
        %1587 = vmatprep.subr.bf16.mxu0 0
        %1588 = vmatpush1.bf16.msra.mxu0 %v1494
        %1589 = vmatprep.subr.bf16.mxu0 0
        %1590 = vmatpush1.bf16.msra.mxu0 %v1491
        %1591 = vmatprep.subr.bf16.mxu0 0
        %1592 = vmatpush1.bf16.msra.mxu0 %v1488
        %1593 = vmatprep.subr.bf16.mxu0 0
        %1594 = vmatpush2.bf16.msra.mxu0 0
        %1595 = vmatprep.subr.bf16.mxu0 0
        %1596 = vmatpush2.bf16.msra.mxu0 0
        %1597 = vmatprep.subr.bf16.mxu0 0
        %1598 = vmatpush2.bf16.msra.mxu0 0
        %1599 = vmatprep.subr.bf16.mxu0 0
        %1600 = vmatpush2.bf16.msra.mxu0 0
        %1601 = vmatprep.subr.bf16.mxu0 0
        %1602 = vmatpush2.bf16.msra.mxu0 0
        %1603 = vmatprep.subr.bf16.mxu0 0
        %1604 = vmatpush2.bf16.msra.mxu0 0
        %1605 = vmatprep.subr.bf16.mxu0 0
        %1606 = vmatpush2.bf16.msra.mxu0 0
        %1607 = vmatprep.subr.bf16.mxu0 0
        %1608 = vmatpush2.bf16.msra.mxu0 0
        %1609 = vmatprep.mubr.bf16.mxu0 0
        %1610 = vmatmul.mubr.bf16.gmra.mxu0 %v1356
        %v1611 = vpop.f32.mrf.mxu0
        %v1612 = vadd.f32 %v1402, %v1611
        %v1613 = vpop.f32.mrf.mxu0
        %v1614 = vpop.f32.mrf.mxu0
        %v1615 = vadd.f32 %v1402, %v1614
        %v1616 = vpop.f32.mrf.mxu0
        %1617 = vdwg.mxu0
        %v1618 = vpack.c.bf16 %v1569, %v1569
        %v1619 = vpack.c.bf16 %v1573, %v1573
        %v1620 = vpack.c.bf16 %v1571, %v1571
        %v1621 = vpack.c.bf16 %v1575, %v1575
        %v1622 = vpack.c.bf16 %v1612, %v1612
        %v1623 = vpack.c.bf16 %v1615, %v1615
        %vm1624 = vcmask 261120
        %v1626 = vsel %vm1624, %v1618, 0
        %v1629 = vsel %vm1624, %v1620, 0
        %1631 = vmatprep.subr.bf16.mxu0 0
        %1632 = vmatpush1.bf16.xpose.msra.mxu0 0
        %1633 = vmatprep.subr.bf16.mxu0 0
        %1634 = vmatpush1.bf16.xpose.msra.mxu0 0
        %1635 = vmatprep.subr.bf16.mxu0 0
        %1636 = vmatpush1.bf16.xpose.msra.mxu0 0
        %1637 = vmatprep.subr.bf16.mxu0 0
        %1638 = vmatpush1.bf16.xpose.msra.mxu0 0
        %1639 = vmatprep.subr.bf16.mxu0 0
        %1640 = vmatpush1.bf16.xpose.msra.mxu0 0
        %1641 = vmatprep.subr.bf16.mxu0 0
        %1642 = vmatpush1.bf16.xpose.msra.mxu0 0
        %1643 = vmatprep.subr.bf16.mxu0 0
        %1644 = vmatpush1.bf16.xpose.msra.mxu0 0
        %1645 = vmatprep.subr.bf16.mxu0 0
        %1646 = vmatpush1.bf16.xpose.msra.mxu0 %v1629
        %1647 = vmatprep.subr.bf16.mxu0 0
        %1648 = vmatpush2.bf16.xpose.msra.mxu0 0
        %1649 = vmatprep.subr.bf16.mxu0 0
        %1650 = vmatpush2.bf16.xpose.msra.mxu0 0
        %1651 = vmatprep.subr.bf16.mxu0 0
        %1652 = vmatpush2.bf16.xpose.msra.mxu0 0
        %1653 = vmatprep.subr.bf16.mxu0 0
        %1654 = vmatpush2.bf16.xpose.msra.mxu0 0
        %1655 = vmatprep.subr.bf16.mxu0 0
        %1656 = vmatpush2.bf16.xpose.msra.mxu0 0
        %1657 = vmatprep.subr.bf16.mxu0 0
        %1658 = vmatpush2.bf16.xpose.msra.mxu0 0
        %1659 = vmatprep.subr.bf16.mxu0 0
        %1660 = vmatpush2.bf16.xpose.msra.mxu0 0
        %1661 = vmatprep.subr.bf16.mxu0 0
        %1662 = vmatpush2.bf16.xpose.msra.mxu0 0
        %1663 = vmatprep.mubr.bf16.mxu0 0
        %1664 = vmatmul.mubr.bf16.gmra.mxu0 %v1626
        %v1665 = vpop.f32.mrf.mxu0
        %v1666 = vadd.f32 0.0, %v1665
        %v1667 = vpop.f32.mrf.mxu0
        %v1668 = vpop.f32.mrf.mxu0
        %v1669 = vpop.f32.mrf.mxu0
        %1670 = vdwg.mxu0
        %v1672 = vsel %vm1624, %v1619, 0
        %v1675 = vsel %vm1624, %v1621, 0
        %1677 = vmatprep.subr.bf16.mxu0 0
        %1678 = vmatpush1.bf16.xpose.msra.mxu0 0
        %1679 = vmatprep.subr.bf16.mxu0 0
        %1680 = vmatpush1.bf16.xpose.msra.mxu0 0
        %1681 = vmatprep.subr.bf16.mxu0 0
        %1682 = vmatpush1.bf16.xpose.msra.mxu0 0
        %1683 = vmatprep.subr.bf16.mxu0 0
        %1684 = vmatpush1.bf16.xpose.msra.mxu0 0
        %1685 = vmatprep.subr.bf16.mxu0 0
        %1686 = vmatpush1.bf16.xpose.msra.mxu0 0
        %1687 = vmatprep.subr.bf16.mxu0 0
        %1688 = vmatpush1.bf16.xpose.msra.mxu0 0
        %1689 = vmatprep.subr.bf16.mxu0 0
        %1690 = vmatpush1.bf16.xpose.msra.mxu0 0
        %1691 = vmatprep.subr.bf16.mxu0 0
        %1692 = vmatpush1.bf16.xpose.msra.mxu0 %v1675
        %1693 = vmatprep.subr.bf16.mxu0 0
        %1694 = vmatpush2.bf16.xpose.msra.mxu0 0
        %1695 = vmatprep.subr.bf16.mxu0 0
        %1696 = vmatpush2.bf16.xpose.msra.mxu0 0
        %1697 = vmatprep.subr.bf16.mxu0 0
        %1698 = vmatpush2.bf16.xpose.msra.mxu0 0
        %1699 = vmatprep.subr.bf16.mxu0 0
        %1700 = vmatpush2.bf16.xpose.msra.mxu0 0
        %1701 = vmatprep.subr.bf16.mxu0 0
        %1702 = vmatpush2.bf16.xpose.msra.mxu0 0
        %1703 = vmatprep.subr.bf16.mxu0 0
        %1704 = vmatpush2.bf16.xpose.msra.mxu0 0
        %1705 = vmatprep.subr.bf16.mxu0 0
        %1706 = vmatpush2.bf16.xpose.msra.mxu0 0
        %1707 = vmatprep.subr.bf16.mxu0 0
        %1708 = vmatpush2.bf16.xpose.msra.mxu0 0
        %1709 = vmatprep.mubr.bf16.mxu0 0
        %1710 = vmatmul.mubr.bf16.gmra.mxu0 %v1672
        %v1711 = vpop.f32.mrf.mxu0
        %v1712 = vadd.f32 0.0, %v1711
        %v1713 = vpop.f32.mrf.mxu0
        %v1714 = vpop.f32.mrf.mxu0
        %v1715 = vpop.f32.mrf.mxu0
        %1716 = vdwg.mxu0
        %vm1717 = vcmask 64512
        %v1718 = vsel %vm1717, %v1666, -inf
        %1719 = vmax.xlane.f32.xlu0 %v1718
        %v1720 = vpop.xlane.xlu0 %1719
        %v1721 = vsel %vm1717, %v1712, -inf
        %1722 = vmax.xlane.f32.xlu0 %v1721
        %v1723 = vpop.xlane.xlu0 %1722
        %v1724 = vsub.f32 %v1666, %v1720
        %v1725 = vsub.f32 %v1712, %v1723
        %v1726 = vmul.f32 %v1724, 1.442695
        %v1727 = vpow.pop %v1726
        %v1728 = vmul.f32 %v1725, 1.442695
        %v1729 = vpow.pop %v1728
        %v1730 = vsel %vm1717, %v1727, 0.0
        %1731 = vadd.xlane.f32.xlu0 %v1730
        %v1732 = vpop.xlane.xlu0 %1731
        %v1733 = vsel %vm1717, %v1729, 0.0
        %1734 = vadd.xlane.f32.xlu0 %v1733
        %v1735 = vpop.xlane.xlu0 %1734
        %v1736 = vrcp.pop %v1732
        %v1737 = vrcp.pop %v1735
        %v1738 = vmul.f32 %v1727, %v1736
        %v1739 = vmul.f32 %v1729, %v1737
        %v1740 = vpack.c.bf16 %v1738, %v1738
        %v1741 = vpack.c.bf16 %v1739, %v1739
        %v1743 = vsel %vm1717, %v1740, 0
        %vm1745 = vcmask 1043456
        %v1747 = vsel %vm1745, %v1622, 0
        %1749 = vmatprep.subr.bf16.mxu0 0
        %1750 = vmatpush1.bf16.msra.mxu0 0
        %1751 = vmatprep.subr.bf16.mxu0 0
        %1752 = vmatpush1.bf16.msra.mxu0 0
        %1753 = vmatprep.subr.bf16.mxu0 0
        %1754 = vmatpush1.bf16.msra.mxu0 0
        %1755 = vmatprep.subr.bf16.mxu0 0
        %1756 = vmatpush1.bf16.msra.mxu0 0
        %1757 = vmatprep.subr.bf16.mxu0 0
        %1758 = vmatpush1.bf16.msra.mxu0 0
        %1759 = vmatprep.subr.bf16.mxu0 0
        %1760 = vmatpush1.bf16.msra.mxu0 0
        %1761 = vmatprep.subr.bf16.mxu0 0
        %1762 = vmatpush1.bf16.msra.mxu0 0
        %1763 = vmatprep.subr.bf16.mxu0 0
        %1764 = vmatpush1.bf16.msra.mxu0 %v1747
        %1765 = vmatprep.subr.bf16.mxu0 0
        %1766 = vmatpush2.bf16.msra.mxu0 0
        %1767 = vmatprep.subr.bf16.mxu0 0
        %1768 = vmatpush2.bf16.msra.mxu0 0
        %1769 = vmatprep.subr.bf16.mxu0 0
        %1770 = vmatpush2.bf16.msra.mxu0 0
        %1771 = vmatprep.subr.bf16.mxu0 0
        %1772 = vmatpush2.bf16.msra.mxu0 0
        %1773 = vmatprep.subr.bf16.mxu0 0
        %1774 = vmatpush2.bf16.msra.mxu0 0
        %1775 = vmatprep.subr.bf16.mxu0 0
        %1776 = vmatpush2.bf16.msra.mxu0 0
        %1777 = vmatprep.subr.bf16.mxu0 0
        %1778 = vmatpush2.bf16.msra.mxu0 0
        %1779 = vmatprep.subr.bf16.mxu0 0
        %1780 = vmatpush2.bf16.msra.mxu0 0
        %1781 = vmatprep.mubr.bf16.mxu0 0
        %1782 = vmatmul.mubr.bf16.gmra.mxu0 %v1743
        %v1783 = vpop.f32.mrf.mxu0
        %v1784 = vadd.f32 0.0, %v1783
        %v1785 = vpop.f32.mrf.mxu0
        %v1786 = vpop.f32.mrf.mxu0
        %v1787 = vpop.f32.mrf.mxu0
        %1788 = vdwg.mxu0
        %v1790 = vsel %vm1717, %v1741, 0
        %v1793 = vsel %vm1745, %v1623, 0
        %1795 = vmatprep.subr.bf16.mxu0 0
        %1796 = vmatpush1.bf16.msra.mxu0 0
        %1797 = vmatprep.subr.bf16.mxu0 0
        %1798 = vmatpush1.bf16.msra.mxu0 0
        %1799 = vmatprep.subr.bf16.mxu0 0
        %1800 = vmatpush1.bf16.msra.mxu0 0
        %1801 = vmatprep.subr.bf16.mxu0 0
        %1802 = vmatpush1.bf16.msra.mxu0 0
        %1803 = vmatprep.subr.bf16.mxu0 0
        %1804 = vmatpush1.bf16.msra.mxu0 0
        %1805 = vmatprep.subr.bf16.mxu0 0
        %1806 = vmatpush1.bf16.msra.mxu0 0
        %1807 = vmatprep.subr.bf16.mxu0 0
        %1808 = vmatpush1.bf16.msra.mxu0 0
        %1809 = vmatprep.subr.bf16.mxu0 0
        %1810 = vmatpush1.bf16.msra.mxu0 %v1793
        %1811 = vmatprep.subr.bf16.mxu0 0
        %1812 = vmatpush2.bf16.msra.mxu0 0
        %1813 = vmatprep.subr.bf16.mxu0 0
        %1814 = vmatpush2.bf16.msra.mxu0 0
        %1815 = vmatprep.subr.bf16.mxu0 0
        %1816 = vmatpush2.bf16.msra.mxu0 0
        %1817 = vmatprep.subr.bf16.mxu0 0
        %1818 = vmatpush2.bf16.msra.mxu0 0
        %1819 = vmatprep.subr.bf16.mxu0 0
        %1820 = vmatpush2.bf16.msra.mxu0 0
        %1821 = vmatprep.subr.bf16.mxu0 0
        %1822 = vmatpush2.bf16.msra.mxu0 0
        %1823 = vmatprep.subr.bf16.mxu0 0
        %1824 = vmatpush2.bf16.msra.mxu0 0
        %1825 = vmatprep.subr.bf16.mxu0 0
        %1826 = vmatpush2.bf16.msra.mxu0 0
        %1827 = vmatprep.mubr.bf16.mxu0 0
        %1828 = vmatmul.mubr.bf16.gmra.mxu0 %v1790
        %v1829 = vpop.f32.mrf.mxu0
        %v1830 = vadd.f32 0.0, %v1829
        %v1831 = vpop.f32.mrf.mxu0
        %v1832 = vpop.f32.mrf.mxu0
        %v1833 = vpop.f32.mrf.mxu0
        %1834 = vdwg.mxu0
        %1836 = vrot.lane.b32.xlu0 %v1618, 96
        %v1837 = vpop.permute.xlu0 %1836
        %1839 = vrot.lane.b32.xlu0 %v1620, 96
        %v1840 = vpop.permute.xlu0 %1839
        %v1842 = vsel %vm1624, %v1837, 0
        %v1845 = vsel %vm1624, %v1840, 0
        %1847 = vmatprep.subr.bf16.mxu0 0
        %1848 = vmatpush1.bf16.xpose.msra.mxu0 0
        %1849 = vmatprep.subr.bf16.mxu0 0
        %1850 = vmatpush1.bf16.xpose.msra.mxu0 0
        %1851 = vmatprep.subr.bf16.mxu0 0
        %1852 = vmatpush1.bf16.xpose.msra.mxu0 0
        %1853 = vmatprep.subr.bf16.mxu0 0
        %1854 = vmatpush1.bf16.xpose.msra.mxu0 0
        %1855 = vmatprep.subr.bf16.mxu0 0
        %1856 = vmatpush1.bf16.xpose.msra.mxu0 0
        %1857 = vmatprep.subr.bf16.mxu0 0
        %1858 = vmatpush1.bf16.xpose.msra.mxu0 0
        %1859 = vmatprep.subr.bf16.mxu0 0
        %1860 = vmatpush1.bf16.xpose.msra.mxu0 0
        %1861 = vmatprep.subr.bf16.mxu0 0
        %1862 = vmatpush1.bf16.xpose.msra.mxu0 %v1845
        %1863 = vmatprep.subr.bf16.mxu0 0
        %1864 = vmatpush2.bf16.xpose.msra.mxu0 0
        %1865 = vmatprep.subr.bf16.mxu0 0
        %1866 = vmatpush2.bf16.xpose.msra.mxu0 0
        %1867 = vmatprep.subr.bf16.mxu0 0
        %1868 = vmatpush2.bf16.xpose.msra.mxu0 0
        %1869 = vmatprep.subr.bf16.mxu0 0
        %1870 = vmatpush2.bf16.xpose.msra.mxu0 0
        %1871 = vmatprep.subr.bf16.mxu0 0
        %1872 = vmatpush2.bf16.xpose.msra.mxu0 0
        %1873 = vmatprep.subr.bf16.mxu0 0
        %1874 = vmatpush2.bf16.xpose.msra.mxu0 0
        %1875 = vmatprep.subr.bf16.mxu0 0
        %1876 = vmatpush2.bf16.xpose.msra.mxu0 0
        %1877 = vmatprep.subr.bf16.mxu0 0
        %1878 = vmatpush2.bf16.xpose.msra.mxu0 0
        %1879 = vmatprep.mubr.bf16.mxu0 0
        %1880 = vmatmul.mubr.bf16.gmra.mxu0 %v1842
        %v1881 = vpop.f32.mrf.mxu0
        %v1882 = vadd.f32 0.0, %v1881
        %v1883 = vpop.f32.mrf.mxu0
        %v1884 = vpop.f32.mrf.mxu0
        %v1885 = vpop.f32.mrf.mxu0
        %1886 = vdwg.mxu0
        %1888 = vrot.lane.b32.xlu0 %v1619, 96
        %v1889 = vpop.permute.xlu0 %1888
        %1891 = vrot.lane.b32.xlu0 %v1621, 96
        %v1892 = vpop.permute.xlu0 %1891
        %v1894 = vsel %vm1624, %v1889, 0
        %v1897 = vsel %vm1624, %v1892, 0
        %1899 = vmatprep.subr.bf16.mxu0 0
        %1900 = vmatpush1.bf16.xpose.msra.mxu0 0
        %1901 = vmatprep.subr.bf16.mxu0 0
        %1902 = vmatpush1.bf16.xpose.msra.mxu0 0
        %1903 = vmatprep.subr.bf16.mxu0 0
        %1904 = vmatpush1.bf16.xpose.msra.mxu0 0
        %1905 = vmatprep.subr.bf16.mxu0 0
        %1906 = vmatpush1.bf16.xpose.msra.mxu0 0
        %1907 = vmatprep.subr.bf16.mxu0 0
        %1908 = vmatpush1.bf16.xpose.msra.mxu0 0
        %1909 = vmatprep.subr.bf16.mxu0 0
        %1910 = vmatpush1.bf16.xpose.msra.mxu0 0
        %1911 = vmatprep.subr.bf16.mxu0 0
        %1912 = vmatpush1.bf16.xpose.msra.mxu0 0
        %1913 = vmatprep.subr.bf16.mxu0 0
        %1914 = vmatpush1.bf16.xpose.msra.mxu0 %v1897
        %1915 = vmatprep.subr.bf16.mxu0 0
        %1916 = vmatpush2.bf16.xpose.msra.mxu0 0
        %1917 = vmatprep.subr.bf16.mxu0 0
        %1918 = vmatpush2.bf16.xpose.msra.mxu0 0
        %1919 = vmatprep.subr.bf16.mxu0 0
        %1920 = vmatpush2.bf16.xpose.msra.mxu0 0
        %1921 = vmatprep.subr.bf16.mxu0 0
        %1922 = vmatpush2.bf16.xpose.msra.mxu0 0
        %1923 = vmatprep.subr.bf16.mxu0 0
        %1924 = vmatpush2.bf16.xpose.msra.mxu0 0
        %1925 = vmatprep.subr.bf16.mxu0 0
        %1926 = vmatpush2.bf16.xpose.msra.mxu0 0
        %1927 = vmatprep.subr.bf16.mxu0 0
        %1928 = vmatpush2.bf16.xpose.msra.mxu0 0
        %1929 = vmatprep.subr.bf16.mxu0 0
        %1930 = vmatpush2.bf16.xpose.msra.mxu0 0
        %1931 = vmatprep.mubr.bf16.mxu0 0
        %1932 = vmatmul.mubr.bf16.gmra.mxu0 %v1894
        %v1933 = vpop.f32.mrf.mxu0
        %v1934 = vadd.f32 0.0, %v1933
        %v1935 = vpop.f32.mrf.mxu0
        %v1936 = vpop.f32.mrf.mxu0
        %v1937 = vpop.f32.mrf.mxu0
        %1938 = vdwg.mxu0
        %v1939 = vsel %vm1717, %v1882, -inf
        %1940 = vmax.xlane.f32.xlu0 %v1939
        %v1941 = vpop.xlane.xlu0 %1940
        %v1942 = vsel %vm1717, %v1934, -inf
        %1943 = vmax.xlane.f32.xlu0 %v1942
        %v1944 = vpop.xlane.xlu0 %1943
        %v1945 = vsub.f32 %v1882, %v1941
        %v1946 = vsub.f32 %v1934, %v1944
        %v1947 = vmul.f32 %v1945, 1.442695
        %v1948 = vpow.pop %v1947
        %v1949 = vmul.f32 %v1946, 1.442695
        %v1950 = vpow.pop %v1949
        %v1951 = vsel %vm1717, %v1948, 0.0
        %1952 = vadd.xlane.f32.xlu0 %v1951
        %v1953 = vpop.xlane.xlu0 %1952
        %v1954 = vsel %vm1717, %v1950, 0.0
        %1955 = vadd.xlane.f32.xlu0 %v1954
        %v1956 = vpop.xlane.xlu0 %1955
        %v1957 = vrcp.pop %v1953
        %v1958 = vrcp.pop %v1956
        %v1959 = vmul.f32 %v1948, %v1957
        %v1960 = vmul.f32 %v1950, %v1958
        %v1961 = vpack.c.bf16 %v1959, %v1959
        %v1962 = vpack.c.bf16 %v1960, %v1960
        %1964 = vrot.lane.b32.xlu0 %v1622, 96
        %v1965 = vpop.permute.xlu0 %1964
        %v1967 = vsel %vm1717, %v1961, 0
        %v1970 = vsel %vm1745, %v1965, 0
        %1972 = vmatprep.subr.bf16.mxu0 0
        %1973 = vmatpush1.bf16.msra.mxu0 0
        %1974 = vmatprep.subr.bf16.mxu0 0
        %1975 = vmatpush1.bf16.msra.mxu0 0
        %1976 = vmatprep.subr.bf16.mxu0 0
        %1977 = vmatpush1.bf16.msra.mxu0 0
        %1978 = vmatprep.subr.bf16.mxu0 0
        %1979 = vmatpush1.bf16.msra.mxu0 0
        %1980 = vmatprep.subr.bf16.mxu0 0
        %1981 = vmatpush1.bf16.msra.mxu0 0
        %1982 = vmatprep.subr.bf16.mxu0 0
        %1983 = vmatpush1.bf16.msra.mxu0 0
        %1984 = vmatprep.subr.bf16.mxu0 0
        %1985 = vmatpush1.bf16.msra.mxu0 0
        %1986 = vmatprep.subr.bf16.mxu0 0
        %1987 = vmatpush1.bf16.msra.mxu0 %v1970
        %1988 = vmatprep.subr.bf16.mxu0 0
        %1989 = vmatpush2.bf16.msra.mxu0 0
        %1990 = vmatprep.subr.bf16.mxu0 0
        %1991 = vmatpush2.bf16.msra.mxu0 0
        %1992 = vmatprep.subr.bf16.mxu0 0
        %1993 = vmatpush2.bf16.msra.mxu0 0
        %1994 = vmatprep.subr.bf16.mxu0 0
        %1995 = vmatpush2.bf16.msra.mxu0 0
        %1996 = vmatprep.subr.bf16.mxu0 0
        %1997 = vmatpush2.bf16.msra.mxu0 0
        %1998 = vmatprep.subr.bf16.mxu0 0
        %1999 = vmatpush2.bf16.msra.mxu0 0
        %2000 = vmatprep.subr.bf16.mxu0 0
        %2001 = vmatpush2.bf16.msra.mxu0 0
        %2002 = vmatprep.subr.bf16.mxu0 0
        %2003 = vmatpush2.bf16.msra.mxu0 0
        %2004 = vmatprep.mubr.bf16.mxu0 0
        %2005 = vmatmul.mubr.bf16.gmra.mxu0 %v1967
        %v2006 = vpop.f32.mrf.mxu0
        %v2007 = vadd.f32 0.0, %v2006
        %v2008 = vpop.f32.mrf.mxu0
        %v2009 = vpop.f32.mrf.mxu0
        %v2010 = vpop.f32.mrf.mxu0
        %2011 = vdwg.mxu0
        %2013 = vrot.lane.b32.xlu0 %v1623, 96
        %v2014 = vpop.permute.xlu0 %2013
        %v2016 = vsel %vm1717, %v1962, 0
        %v2019 = vsel %vm1745, %v2014, 0
        %2021 = vmatprep.subr.bf16.mxu0 0
        %2022 = vmatpush1.bf16.msra.mxu0 0
        %2023 = vmatprep.subr.bf16.mxu0 0
        %2024 = vmatpush1.bf16.msra.mxu0 0
        %2025 = vmatprep.subr.bf16.mxu0 0
        %2026 = vmatpush1.bf16.msra.mxu0 0
        %2027 = vmatprep.subr.bf16.mxu0 0
        %2028 = vmatpush1.bf16.msra.mxu0 0
        %2029 = vmatprep.subr.bf16.mxu0 0
        %2030 = vmatpush1.bf16.msra.mxu0 0
        %2031 = vmatprep.subr.bf16.mxu0 0
        %2032 = vmatpush1.bf16.msra.mxu0 0
        %2033 = vmatprep.subr.bf16.mxu0 0
        %2034 = vmatpush1.bf16.msra.mxu0 0
        %2035 = vmatprep.subr.bf16.mxu0 0
        %2036 = vmatpush1.bf16.msra.mxu0 %v2019
        %2037 = vmatprep.subr.bf16.mxu0 0
        %2038 = vmatpush2.bf16.msra.mxu0 0
        %2039 = vmatprep.subr.bf16.mxu0 0
        %2040 = vmatpush2.bf16.msra.mxu0 0
        %2041 = vmatprep.subr.bf16.mxu0 0
        %2042 = vmatpush2.bf16.msra.mxu0 0
        %2043 = vmatprep.subr.bf16.mxu0 0
        %2044 = vmatpush2.bf16.msra.mxu0 0
        %2045 = vmatprep.subr.bf16.mxu0 0
        %2046 = vmatpush2.bf16.msra.mxu0 0
        %2047 = vmatprep.subr.bf16.mxu0 0
        %2048 = vmatpush2.bf16.msra.mxu0 0
        %2049 = vmatprep.subr.bf16.mxu0 0
        %2050 = vmatpush2.bf16.msra.mxu0 0
        %2051 = vmatprep.subr.bf16.mxu0 0
        %2052 = vmatpush2.bf16.msra.mxu0 0
        %2053 = vmatprep.mubr.bf16.mxu0 0
        %2054 = vmatmul.mubr.bf16.gmra.mxu0 %v2016
        %v2055 = vpop.f32.mrf.mxu0
        %v2056 = vadd.f32 0.0, %v2055
        %v2057 = vpop.f32.mrf.mxu0
        %v2058 = vpop.f32.mrf.mxu0
        %v2059 = vpop.f32.mrf.mxu0
        %2060 = vdwg.mxu0
        %2061 = vrot.lane.b32.xlu0 %v1618, 64
        %v2062 = vpop.permute.xlu0 %2061
        %2063 = vrot.lane.b32.xlu0 %v1620, 64
        %v2064 = vpop.permute.xlu0 %2063
        %v2066 = vsel %vm1624, %v2062, 0
        %v2069 = vsel %vm1624, %v2064, 0
        %2071 = vmatprep.subr.bf16.mxu0 0
        %2072 = vmatpush1.bf16.xpose.msra.mxu0 0
        %2073 = vmatprep.subr.bf16.mxu0 0
        %2074 = vmatpush1.bf16.xpose.msra.mxu0 0
        %2075 = vmatprep.subr.bf16.mxu0 0
        %2076 = vmatpush1.bf16.xpose.msra.mxu0 0
        %2077 = vmatprep.subr.bf16.mxu0 0
        %2078 = vmatpush1.bf16.xpose.msra.mxu0 0
        %2079 = vmatprep.subr.bf16.mxu0 0
        %2080 = vmatpush1.bf16.xpose.msra.mxu0 0
        %2081 = vmatprep.subr.bf16.mxu0 0
        %2082 = vmatpush1.bf16.xpose.msra.mxu0 0
        %2083 = vmatprep.subr.bf16.mxu0 0
        %2084 = vmatpush1.bf16.xpose.msra.mxu0 0
        %2085 = vmatprep.subr.bf16.mxu0 0
        %2086 = vmatpush1.bf16.xpose.msra.mxu0 %v2069
        %2087 = vmatprep.subr.bf16.mxu0 0
        %2088 = vmatpush2.bf16.xpose.msra.mxu0 0
        %2089 = vmatprep.subr.bf16.mxu0 0
        %2090 = vmatpush2.bf16.xpose.msra.mxu0 0
        %2091 = vmatprep.subr.bf16.mxu0 0
        %2092 = vmatpush2.bf16.xpose.msra.mxu0 0
        %2093 = vmatprep.subr.bf16.mxu0 0
        %2094 = vmatpush2.bf16.xpose.msra.mxu0 0
        %2095 = vmatprep.subr.bf16.mxu0 0
        %2096 = vmatpush2.bf16.xpose.msra.mxu0 0
        %2097 = vmatprep.subr.bf16.mxu0 0
        %2098 = vmatpush2.bf16.xpose.msra.mxu0 0
        %2099 = vmatprep.subr.bf16.mxu0 0
        %2100 = vmatpush2.bf16.xpose.msra.mxu0 0
        %2101 = vmatprep.subr.bf16.mxu0 0
        %2102 = vmatpush2.bf16.xpose.msra.mxu0 0
        %2103 = vmatprep.mubr.bf16.mxu0 0
        %2104 = vmatmul.mubr.bf16.gmra.mxu0 %v2066
        %v2105 = vpop.f32.mrf.mxu0
        %v2106 = vadd.f32 0.0, %v2105
        %v2107 = vpop.f32.mrf.mxu0
        %v2108 = vpop.f32.mrf.mxu0
        %v2109 = vpop.f32.mrf.mxu0
        %2110 = vdwg.mxu0
        %2111 = vrot.lane.b32.xlu0 %v1619, 64
        %v2112 = vpop.permute.xlu0 %2111
        %2113 = vrot.lane.b32.xlu0 %v1621, 64
        %v2114 = vpop.permute.xlu0 %2113
        %v2116 = vsel %vm1624, %v2112, 0
        %v2119 = vsel %vm1624, %v2114, 0
        %2121 = vmatprep.subr.bf16.mxu0 0
        %2122 = vmatpush1.bf16.xpose.msra.mxu0 0
        %2123 = vmatprep.subr.bf16.mxu0 0
        %2124 = vmatpush1.bf16.xpose.msra.mxu0 0
        %2125 = vmatprep.subr.bf16.mxu0 0
        %2126 = vmatpush1.bf16.xpose.msra.mxu0 0
        %2127 = vmatprep.subr.bf16.mxu0 0
        %2128 = vmatpush1.bf16.xpose.msra.mxu0 0
        %2129 = vmatprep.subr.bf16.mxu0 0
        %2130 = vmatpush1.bf16.xpose.msra.mxu0 0
        %2131 = vmatprep.subr.bf16.mxu0 0
        %2132 = vmatpush1.bf16.xpose.msra.mxu0 0
        %2133 = vmatprep.subr.bf16.mxu0 0
        %2134 = vmatpush1.bf16.xpose.msra.mxu0 0
        %2135 = vmatprep.subr.bf16.mxu0 0
        %2136 = vmatpush1.bf16.xpose.msra.mxu0 %v2119
        %2137 = vmatprep.subr.bf16.mxu0 0
        %2138 = vmatpush2.bf16.xpose.msra.mxu0 0
        %2139 = vmatprep.subr.bf16.mxu0 0
        %2140 = vmatpush2.bf16.xpose.msra.mxu0 0
        %2141 = vmatprep.subr.bf16.mxu0 0
        %2142 = vmatpush2.bf16.xpose.msra.mxu0 0
        %2143 = vmatprep.subr.bf16.mxu0 0
        %2144 = vmatpush2.bf16.xpose.msra.mxu0 0
        %2145 = vmatprep.subr.bf16.mxu0 0
        %2146 = vmatpush2.bf16.xpose.msra.mxu0 0
        %2147 = vmatprep.subr.bf16.mxu0 0
        %2148 = vmatpush2.bf16.xpose.msra.mxu0 0
        %2149 = vmatprep.subr.bf16.mxu0 0
        %2150 = vmatpush2.bf16.xpose.msra.mxu0 0
        %2151 = vmatprep.subr.bf16.mxu0 0
        %2152 = vmatpush2.bf16.xpose.msra.mxu0 0
        %2153 = vmatprep.mubr.bf16.mxu0 0
        %2154 = vmatmul.mubr.bf16.gmra.mxu0 %v2116
        %v2155 = vpop.f32.mrf.mxu0
        %v2156 = vadd.f32 0.0, %v2155
        %v2157 = vpop.f32.mrf.mxu0
        %v2158 = vpop.f32.mrf.mxu0
        %v2159 = vpop.f32.mrf.mxu0
        %2160 = vdwg.mxu0
        %v2161 = vsel %vm1717, %v2106, -inf
        %2162 = vmax.xlane.f32.xlu0 %v2161
        %v2163 = vpop.xlane.xlu0 %2162
        %v2164 = vsel %vm1717, %v2156, -inf
        %2165 = vmax.xlane.f32.xlu0 %v2164
        %v2166 = vpop.xlane.xlu0 %2165
        %v2167 = vsub.f32 %v2106, %v2163
        %v2168 = vsub.f32 %v2156, %v2166
        %v2169 = vmul.f32 %v2167, 1.442695
        %v2170 = vpow.pop %v2169
        %v2171 = vmul.f32 %v2168, 1.442695
        %v2172 = vpow.pop %v2171
        %v2173 = vsel %vm1717, %v2170, 0.0
        %2174 = vadd.xlane.f32.xlu0 %v2173
        %v2175 = vpop.xlane.xlu0 %2174
        %v2176 = vsel %vm1717, %v2172, 0.0
        %2177 = vadd.xlane.f32.xlu0 %v2176
        %v2178 = vpop.xlane.xlu0 %2177
        %v2179 = vrcp.pop %v2175
        %v2180 = vrcp.pop %v2178
        %v2181 = vmul.f32 %v2170, %v2179
        %v2182 = vmul.f32 %v2172, %v2180
        %v2183 = vpack.c.bf16 %v2181, %v2181
        %v2184 = vpack.c.bf16 %v2182, %v2182
        %2185 = vrot.lane.b32.xlu0 %v1622, 64
        %v2186 = vpop.permute.xlu0 %2185
        %v2188 = vsel %vm1717, %v2183, 0
        %v2191 = vsel %vm1745, %v2186, 0
        %2193 = vmatprep.subr.bf16.mxu0 0
        %2194 = vmatpush1.bf16.msra.mxu0 0
        %2195 = vmatprep.subr.bf16.mxu0 0
        %2196 = vmatpush1.bf16.msra.mxu0 0
        %2197 = vmatprep.subr.bf16.mxu0 0
        %2198 = vmatpush1.bf16.msra.mxu0 0
        %2199 = vmatprep.subr.bf16.mxu0 0
        %2200 = vmatpush1.bf16.msra.mxu0 0
        %2201 = vmatprep.subr.bf16.mxu0 0
        %2202 = vmatpush1.bf16.msra.mxu0 0
        %2203 = vmatprep.subr.bf16.mxu0 0
        %2204 = vmatpush1.bf16.msra.mxu0 0
        %2205 = vmatprep.subr.bf16.mxu0 0
        %2206 = vmatpush1.bf16.msra.mxu0 0
        %2207 = vmatprep.subr.bf16.mxu0 0
        %2208 = vmatpush1.bf16.msra.mxu0 %v2191
        %2209 = vmatprep.subr.bf16.mxu0 0
        %2210 = vmatpush2.bf16.msra.mxu0 0
        %2211 = vmatprep.subr.bf16.mxu0 0
        %2212 = vmatpush2.bf16.msra.mxu0 0
        %2213 = vmatprep.subr.bf16.mxu0 0
        %2214 = vmatpush2.bf16.msra.mxu0 0
        %2215 = vmatprep.subr.bf16.mxu0 0
        %2216 = vmatpush2.bf16.msra.mxu0 0
        %2217 = vmatprep.subr.bf16.mxu0 0
        %2218 = vmatpush2.bf16.msra.mxu0 0
        %2219 = vmatprep.subr.bf16.mxu0 0
        %2220 = vmatpush2.bf16.msra.mxu0 0
        %2221 = vmatprep.subr.bf16.mxu0 0
        %2222 = vmatpush2.bf16.msra.mxu0 0
        %2223 = vmatprep.subr.bf16.mxu0 0
        %2224 = vmatpush2.bf16.msra.mxu0 0
        %2225 = vmatprep.mubr.bf16.mxu0 0
        %2226 = vmatmul.mubr.bf16.gmra.mxu0 %v2188
        %v2227 = vpop.f32.mrf.mxu0
        %v2228 = vadd.f32 0.0, %v2227
        %v2229 = vpop.f32.mrf.mxu0
        %v2230 = vpop.f32.mrf.mxu0
        %v2231 = vpop.f32.mrf.mxu0
        %2232 = vdwg.mxu0
        %2233 = vrot.lane.b32.xlu0 %v1623, 64
        %v2234 = vpop.permute.xlu0 %2233
        %v2236 = vsel %vm1717, %v2184, 0
        %v2239 = vsel %vm1745, %v2234, 0
        %2241 = vmatprep.subr.bf16.mxu0 0
        %2242 = vmatpush1.bf16.msra.mxu0 0
        %2243 = vmatprep.subr.bf16.mxu0 0
        %2244 = vmatpush1.bf16.msra.mxu0 0
        %2245 = vmatprep.subr.bf16.mxu0 0
        %2246 = vmatpush1.bf16.msra.mxu0 0
        %2247 = vmatprep.subr.bf16.mxu0 0
        %2248 = vmatpush1.bf16.msra.mxu0 0
        %2249 = vmatprep.subr.bf16.mxu0 0
        %2250 = vmatpush1.bf16.msra.mxu0 0
        %2251 = vmatprep.subr.bf16.mxu0 0
        %2252 = vmatpush1.bf16.msra.mxu0 0
        %2253 = vmatprep.subr.bf16.mxu0 0
        %2254 = vmatpush1.bf16.msra.mxu0 0
        %2255 = vmatprep.subr.bf16.mxu0 0
        %2256 = vmatpush1.bf16.msra.mxu0 %v2239
        %2257 = vmatprep.subr.bf16.mxu0 0
        %2258 = vmatpush2.bf16.msra.mxu0 0
        %2259 = vmatprep.subr.bf16.mxu0 0
        %2260 = vmatpush2.bf16.msra.mxu0 0
        %2261 = vmatprep.subr.bf16.mxu0 0
        %2262 = vmatpush2.bf16.msra.mxu0 0
        %2263 = vmatprep.subr.bf16.mxu0 0
        %2264 = vmatpush2.bf16.msra.mxu0 0
        %2265 = vmatprep.subr.bf16.mxu0 0
        %2266 = vmatpush2.bf16.msra.mxu0 0
        %2267 = vmatprep.subr.bf16.mxu0 0
        %2268 = vmatpush2.bf16.msra.mxu0 0
        %2269 = vmatprep.subr.bf16.mxu0 0
        %2270 = vmatpush2.bf16.msra.mxu0 0
        %2271 = vmatprep.subr.bf16.mxu0 0
        %2272 = vmatpush2.bf16.msra.mxu0 0
        %2273 = vmatprep.mubr.bf16.mxu0 0
        %2274 = vmatmul.mubr.bf16.gmra.mxu0 %v2236
        %v2275 = vpop.f32.mrf.mxu0
        %v2276 = vadd.f32 0.0, %v2275
        %v2277 = vpop.f32.mrf.mxu0
        %v2278 = vpop.f32.mrf.mxu0
        %v2279 = vpop.f32.mrf.mxu0
        %2280 = vdwg.mxu0
        %2281 = vrot.lane.b32.xlu0 %v1618, 32
        %v2282 = vpop.permute.xlu0 %2281
        %2283 = vrot.lane.b32.xlu0 %v1620, 32
        %v2284 = vpop.permute.xlu0 %2283
        %v2286 = vsel %vm1624, %v2282, 0
        %v2289 = vsel %vm1624, %v2284, 0
        %2291 = vmatprep.subr.bf16.mxu0 0
        %2292 = vmatpush1.bf16.xpose.msra.mxu0 0
        %2293 = vmatprep.subr.bf16.mxu0 0
        %2294 = vmatpush1.bf16.xpose.msra.mxu0 0
        %2295 = vmatprep.subr.bf16.mxu0 0
        %2296 = vmatpush1.bf16.xpose.msra.mxu0 0
        %2297 = vmatprep.subr.bf16.mxu0 0
        %2298 = vmatpush1.bf16.xpose.msra.mxu0 0
        %2299 = vmatprep.subr.bf16.mxu0 0
        %2300 = vmatpush1.bf16.xpose.msra.mxu0 0
        %2301 = vmatprep.subr.bf16.mxu0 0
        %2302 = vmatpush1.bf16.xpose.msra.mxu0 0
        %2303 = vmatprep.subr.bf16.mxu0 0
        %2304 = vmatpush1.bf16.xpose.msra.mxu0 0
        %2305 = vmatprep.subr.bf16.mxu0 0
        %2306 = vmatpush1.bf16.xpose.msra.mxu0 %v2289
        %2307 = vmatprep.subr.bf16.mxu0 0
        %2308 = vmatpush2.bf16.xpose.msra.mxu0 0
        %2309 = vmatprep.subr.bf16.mxu0 0
        %2310 = vmatpush2.bf16.xpose.msra.mxu0 0
        %2311 = vmatprep.subr.bf16.mxu0 0
        %2312 = vmatpush2.bf16.xpose.msra.mxu0 0
        %2313 = vmatprep.subr.bf16.mxu0 0
        %2314 = vmatpush2.bf16.xpose.msra.mxu0 0
        %2315 = vmatprep.subr.bf16.mxu0 0
        %2316 = vmatpush2.bf16.xpose.msra.mxu0 0
        %2317 = vmatprep.subr.bf16.mxu0 0
        %2318 = vmatpush2.bf16.xpose.msra.mxu0 0
        %2319 = vmatprep.subr.bf16.mxu0 0
        %2320 = vmatpush2.bf16.xpose.msra.mxu0 0
        %2321 = vmatprep.subr.bf16.mxu0 0
        %2322 = vmatpush2.bf16.xpose.msra.mxu0 0
        %2323 = vmatprep.mubr.bf16.mxu0 0
        %2324 = vmatmul.mubr.bf16.gmra.mxu0 %v2286
        %v2325 = vpop.f32.mrf.mxu0
        %v2326 = vadd.f32 0.0, %v2325
        %v2327 = vpop.f32.mrf.mxu0
        %v2328 = vpop.f32.mrf.mxu0
        %v2329 = vpop.f32.mrf.mxu0
        %2330 = vdwg.mxu0
        %2331 = vrot.lane.b32.xlu0 %v1619, 32
        %v2332 = vpop.permute.xlu0 %2331
        %2333 = vrot.lane.b32.xlu0 %v1621, 32
        %v2334 = vpop.permute.xlu0 %2333
        %v2336 = vsel %vm1624, %v2332, 0
        %v2339 = vsel %vm1624, %v2334, 0
        %2341 = vmatprep.subr.bf16.mxu0 0
        %2342 = vmatpush1.bf16.xpose.msra.mxu0 0
        %2343 = vmatprep.subr.bf16.mxu0 0
        %2344 = vmatpush1.bf16.xpose.msra.mxu0 0
        %2345 = vmatprep.subr.bf16.mxu0 0
        %2346 = vmatpush1.bf16.xpose.msra.mxu0 0
        %2347 = vmatprep.subr.bf16.mxu0 0
        %2348 = vmatpush1.bf16.xpose.msra.mxu0 0
        %2349 = vmatprep.subr.bf16.mxu0 0
        %2350 = vmatpush1.bf16.xpose.msra.mxu0 0
        %2351 = vmatprep.subr.bf16.mxu0 0
        %2352 = vmatpush1.bf16.xpose.msra.mxu0 0
        %2353 = vmatprep.subr.bf16.mxu0 0
        %2354 = vmatpush1.bf16.xpose.msra.mxu0 0
        %2355 = vmatprep.subr.bf16.mxu0 0
        %2356 = vmatpush1.bf16.xpose.msra.mxu0 %v2339
        %2357 = vmatprep.subr.bf16.mxu0 0
        %2358 = vmatpush2.bf16.xpose.msra.mxu0 0
        %2359 = vmatprep.subr.bf16.mxu0 0
        %2360 = vmatpush2.bf16.xpose.msra.mxu0 0
        %2361 = vmatprep.subr.bf16.mxu0 0
        %2362 = vmatpush2.bf16.xpose.msra.mxu0 0
        %2363 = vmatprep.subr.bf16.mxu0 0
        %2364 = vmatpush2.bf16.xpose.msra.mxu0 0
        %2365 = vmatprep.subr.bf16.mxu0 0
        %2366 = vmatpush2.bf16.xpose.msra.mxu0 0
        %2367 = vmatprep.subr.bf16.mxu0 0
        %2368 = vmatpush2.bf16.xpose.msra.mxu0 0
        %2369 = vmatprep.subr.bf16.mxu0 0
        %2370 = vmatpush2.bf16.xpose.msra.mxu0 0
        %2371 = vmatprep.subr.bf16.mxu0 0
        %2372 = vmatpush2.bf16.xpose.msra.mxu0 0
        %2373 = vmatprep.mubr.bf16.mxu0 0
        %2374 = vmatmul.mubr.bf16.gmra.mxu0 %v2336
        %v2375 = vpop.f32.mrf.mxu0
        %v2376 = vadd.f32 0.0, %v2375
        %v2377 = vpop.f32.mrf.mxu0
        %v2378 = vpop.f32.mrf.mxu0
        %v2379 = vpop.f32.mrf.mxu0
        %2380 = vdwg.mxu0
        %v2381 = vsel %vm1717, %v2326, -inf
        %2382 = vmax.xlane.f32.xlu0 %v2381
        %v2383 = vpop.xlane.xlu0 %2382
        %v2384 = vsel %vm1717, %v2376, -inf
        %2385 = vmax.xlane.f32.xlu0 %v2384
        %v2386 = vpop.xlane.xlu0 %2385
        %v2387 = vsub.f32 %v2326, %v2383
        %v2388 = vsub.f32 %v2376, %v2386
        %v2389 = vmul.f32 %v2387, 1.442695
        %v2390 = vpow.pop %v2389
        %v2391 = vmul.f32 %v2388, 1.442695
        %v2392 = vpow.pop %v2391
        %v2393 = vsel %vm1717, %v2390, 0.0
        %2394 = vadd.xlane.f32.xlu0 %v2393
        %v2395 = vpop.xlane.xlu0 %2394
        %v2396 = vsel %vm1717, %v2392, 0.0
        %2397 = vadd.xlane.f32.xlu0 %v2396
        %v2398 = vpop.xlane.xlu0 %2397
        %v2399 = vrcp.pop %v2395
        %v2400 = vrcp.pop %v2398
        %v2401 = vmul.f32 %v2390, %v2399
        %v2402 = vmul.f32 %v2392, %v2400
        %v2403 = vpack.c.bf16 %v2401, %v2401
        %v2404 = vpack.c.bf16 %v2402, %v2402
        %2405 = vrot.lane.b32.xlu0 %v1622, 32
        %v2406 = vpop.permute.xlu0 %2405
        %v2408 = vsel %vm1717, %v2403, 0
        %v2411 = vsel %vm1745, %v2406, 0
        %2413 = vmatprep.subr.bf16.mxu0 0
        %2414 = vmatpush1.bf16.msra.mxu0 0
        %2415 = vmatprep.subr.bf16.mxu0 0
        %2416 = vmatpush1.bf16.msra.mxu0 0
        %2417 = vmatprep.subr.bf16.mxu0 0
        %2418 = vmatpush1.bf16.msra.mxu0 0
        %2419 = vmatprep.subr.bf16.mxu0 0
        %2420 = vmatpush1.bf16.msra.mxu0 0
        %2421 = vmatprep.subr.bf16.mxu0 0
        %2422 = vmatpush1.bf16.msra.mxu0 0
        %2423 = vmatprep.subr.bf16.mxu0 0
        %2424 = vmatpush1.bf16.msra.mxu0 0
        %2425 = vmatprep.subr.bf16.mxu0 0
        %2426 = vmatpush1.bf16.msra.mxu0 0
        %2427 = vmatprep.subr.bf16.mxu0 0
        %2428 = vmatpush1.bf16.msra.mxu0 %v2411
        %2429 = vmatprep.subr.bf16.mxu0 0
        %2430 = vmatpush2.bf16.msra.mxu0 0
        %2431 = vmatprep.subr.bf16.mxu0 0
        %2432 = vmatpush2.bf16.msra.mxu0 0
        %2433 = vmatprep.subr.bf16.mxu0 0
        %2434 = vmatpush2.bf16.msra.mxu0 0
        %2435 = vmatprep.subr.bf16.mxu0 0
        %2436 = vmatpush2.bf16.msra.mxu0 0
        %2437 = vmatprep.subr.bf16.mxu0 0
        %2438 = vmatpush2.bf16.msra.mxu0 0
        %2439 = vmatprep.subr.bf16.mxu0 0
        %2440 = vmatpush2.bf16.msra.mxu0 0
        %2441 = vmatprep.subr.bf16.mxu0 0
        %2442 = vmatpush2.bf16.msra.mxu0 0
        %2443 = vmatprep.subr.bf16.mxu0 0
        %2444 = vmatpush2.bf16.msra.mxu0 0
        %2445 = vmatprep.mubr.bf16.mxu0 0
        %2446 = vmatmul.mubr.bf16.gmra.mxu0 %v2408
        %v2447 = vpop.f32.mrf.mxu0
        %v2448 = vadd.f32 0.0, %v2447
        %v2449 = vpop.f32.mrf.mxu0
        %v2450 = vpop.f32.mrf.mxu0
        %v2451 = vpop.f32.mrf.mxu0
        %2452 = vdwg.mxu0
        %2453 = vrot.lane.b32.xlu0 %v1623, 32
        %v2454 = vpop.permute.xlu0 %2453
        %v2456 = vsel %vm1717, %v2404, 0
        %v2459 = vsel %vm1745, %v2454, 0
        %2461 = vmatprep.subr.bf16.mxu0 0
        %2462 = vmatpush1.bf16.msra.mxu0 0
        %2463 = vmatprep.subr.bf16.mxu0 0
        %2464 = vmatpush1.bf16.msra.mxu0 0
        %2465 = vmatprep.subr.bf16.mxu0 0
        %2466 = vmatpush1.bf16.msra.mxu0 0
        %2467 = vmatprep.subr.bf16.mxu0 0
        %2468 = vmatpush1.bf16.msra.mxu0 0
        %2469 = vmatprep.subr.bf16.mxu0 0
        %2470 = vmatpush1.bf16.msra.mxu0 0
        %2471 = vmatprep.subr.bf16.mxu0 0
        %2472 = vmatpush1.bf16.msra.mxu0 0
        %2473 = vmatprep.subr.bf16.mxu0 0
        %2474 = vmatpush1.bf16.msra.mxu0 0
        %2475 = vmatprep.subr.bf16.mxu0 0
        %2476 = vmatpush1.bf16.msra.mxu0 %v2459
        %2477 = vmatprep.subr.bf16.mxu0 0
        %2478 = vmatpush2.bf16.msra.mxu0 0
        %2479 = vmatprep.subr.bf16.mxu0 0
        %2480 = vmatpush2.bf16.msra.mxu0 0
        %2481 = vmatprep.subr.bf16.mxu0 0
        %2482 = vmatpush2.bf16.msra.mxu0 0
        %2483 = vmatprep.subr.bf16.mxu0 0
        %2484 = vmatpush2.bf16.msra.mxu0 0
        %2485 = vmatprep.subr.bf16.mxu0 0
        %2486 = vmatpush2.bf16.msra.mxu0 0
        %2487 = vmatprep.subr.bf16.mxu0 0
        %2488 = vmatpush2.bf16.msra.mxu0 0
        %2489 = vmatprep.subr.bf16.mxu0 0
        %2490 = vmatpush2.bf16.msra.mxu0 0
        %2491 = vmatprep.subr.bf16.mxu0 0
        %2492 = vmatpush2.bf16.msra.mxu0 0
        %2493 = vmatprep.mubr.bf16.mxu0 0
        %2494 = vmatmul.mubr.bf16.gmra.mxu0 %v2456
        %v2495 = vpop.f32.mrf.mxu0
        %v2496 = vadd.f32 0.0, %v2495
        %v2497 = vpop.f32.mrf.mxu0
        %v2498 = vpop.f32.mrf.mxu0
        %v2499 = vpop.f32.mrf.mxu0
        %2500 = vdwg.mxu0
        %2503 = vrot.lane.b32.xlu0 %v2007, 32
        %v2504 = vpop.permute.xlu0 %2503
        %2505 = vrot.lane.b32.xlu0 %v2056, 32
        %v2506 = vpop.permute.xlu0 %2505
        %2511 = vrot.lane.b32.xlu0 %v2228, 64
        %v2512 = vpop.permute.xlu0 %2511
        %2513 = vrot.lane.b32.xlu0 %v2276, 64
        %v2514 = vpop.permute.xlu0 %2513
        %2519 = vrot.lane.b32.xlu0 %v2448, 96
        %v2520 = vpop.permute.xlu0 %2519
        %2521 = vrot.lane.b32.xlu0 %v2496, 96
        %v2522 = vpop.permute.xlu0 %2521
        %v2525 = vsel %vm1624, %v1784, %v2504
        %v2526 = vsel %vm1624, %v1830, %v2506
        %vm2527 = vcmask 523264
        %v2528 = vsel %vm2527, %v2525, %v2512
        %v2529 = vsel %vm2527, %v2526, %v2514
        %vm2530 = vcmask 785408
        %v2531 = vsel %vm2530, %v2528, %v2520
        %v2532 = vsel %vm2530, %v2529, %v2522
        %v2533 = vpack.c.bf16 %v2532, %v2531
        %v2534 = vld [vmem:[%s1060] sm:$0xf]
        %v2535 = vld [vmem:[%s1060 + $0x4] sm:$0xf]
        %v2536 = vld [vmem:[%s1060 + $0x8] sm:$0xf]
        %v2537 = vld [vmem:[%s1060 + $0xc] sm:$0xf]
        %v2538 = vld [vmem:[%s1060 + $0x10] sm:$0xf]
        %v2539 = vld [vmem:[%s1060 + $0x14] sm:$0xf]
        %v2540 = vld [vmem:[%s1060 + $0x18] sm:$0xf]
        %v2541 = vld [vmem:[%s1060 + $0x1c] sm:$0xf]
        %v2542 = vld [vmem:[%s1060 + $0x20] sm:$0xf]
        %v2543 = vld [vmem:[%s1060 + $0x24] sm:$0xf]
        %v2544 = vld [vmem:[%s1060 + $0x28] sm:$0xf]
        %v2545 = vld [vmem:[%s1060 + $0x2c] sm:$0xf]
        %v2546 = vld [vmem:[%s1060 + $0x30] sm:$0xf]
        %v2547 = vld [vmem:[%s1060 + $0x34] sm:$0xf]
        %v2548 = vld [vmem:[%s1060 + $0x38] sm:$0xf]
        %v2549 = vld [vmem:[%s1060 + $0x3c] sm:$0xf]
        %v2550 = vld [vmem:[%s1068] sm:$0x1]
        %v2552 = vlaneseq
        %v2553 = vshrl.u32 %v2552, 7
        %v2554 = vsub.s32 0, %v2553
        %v2555 = vrot.slane %v2550, %v2554
        %v2573 = vunpack.c.l.b16 %v2534
        %v2574 = vunpack.c.l.b16 %v2535
        %v2575 = vunpack.c.l.b16 %v2536
        %v2576 = vunpack.c.l.b16 %v2537
        %v2577 = vunpack.c.l.b16 %v2538
        %v2578 = vunpack.c.l.b16 %v2539
        %v2579 = vunpack.c.l.b16 %v2540
        %v2580 = vunpack.c.l.b16 %v2541
        %v2581 = vunpack.c.l.b16 %v2542
        %v2582 = vunpack.c.l.b16 %v2543
        %v2583 = vunpack.c.l.b16 %v2544
        %v2584 = vunpack.c.l.b16 %v2545
        %v2585 = vunpack.c.l.b16 %v2546
        %v2586 = vunpack.c.l.b16 %v2547
        %v2587 = vunpack.c.l.b16 %v2548
        %v2588 = vunpack.c.l.b16 %v2549
        %v2589 = vpack.c.b16 %v2574, %v2573
        %v2590 = vpack.c.b16 %v2576, %v2575
        %v2591 = vpack.c.b16 %v2578, %v2577
        %v2592 = vpack.c.b16 %v2580, %v2579
        %v2593 = vpack.c.b16 %v2582, %v2581
        %v2594 = vpack.c.b16 %v2584, %v2583
        %v2595 = vpack.c.b16 %v2586, %v2585
        %v2596 = vpack.c.b16 %v2588, %v2587
        %2605 = vmatprep.subr.bf16.mxu0 0
        %2606 = vmatpush1.bf16.msra.mxu0 %v2596
        %2607 = vmatprep.subr.bf16.mxu0 0
        %2608 = vmatpush1.bf16.msra.mxu0 %v2595
        %2609 = vmatprep.subr.bf16.mxu0 0
        %2610 = vmatpush1.bf16.msra.mxu0 %v2594
        %2611 = vmatprep.subr.bf16.mxu0 0
        %2612 = vmatpush1.bf16.msra.mxu0 %v2593
        %2613 = vmatprep.subr.bf16.mxu0 0
        %2614 = vmatpush1.bf16.msra.mxu0 %v2592
        %2615 = vmatprep.subr.bf16.mxu0 0
        %2616 = vmatpush1.bf16.msra.mxu0 %v2591
        %2617 = vmatprep.subr.bf16.mxu0 0
        %2618 = vmatpush1.bf16.msra.mxu0 %v2590
        %2619 = vmatprep.subr.bf16.mxu0 0
        %2620 = vmatpush1.bf16.msra.mxu0 %v2589
        %2621 = vmatprep.subr.bf16.mxu0 0
        %2622 = vmatpush2.bf16.msra.mxu0 0
        %2623 = vmatprep.subr.bf16.mxu0 0
        %2624 = vmatpush2.bf16.msra.mxu0 0
        %2625 = vmatprep.subr.bf16.mxu0 0
        %2626 = vmatpush2.bf16.msra.mxu0 0
        %2627 = vmatprep.subr.bf16.mxu0 0
        %2628 = vmatpush2.bf16.msra.mxu0 0
        %2629 = vmatprep.subr.bf16.mxu0 0
        %2630 = vmatpush2.bf16.msra.mxu0 0
        %2631 = vmatprep.subr.bf16.mxu0 0
        %2632 = vmatpush2.bf16.msra.mxu0 0
        %2633 = vmatprep.subr.bf16.mxu0 0
        %2634 = vmatpush2.bf16.msra.mxu0 0
        %2635 = vmatprep.subr.bf16.mxu0 0
        %2636 = vmatpush2.bf16.msra.mxu0 0
        %2637 = vmatprep.mubr.bf16.mxu0 0
        %2638 = vmatmul.mubr.bf16.gmra.mxu0 %v2533
        %v2639 = vpop.f32.mrf.mxu0
        %v2640 = vadd.f32 %v2555, %v2639
        %v2641 = vpop.f32.mrf.mxu0
        %v2642 = vpop.f32.mrf.mxu0
        %v2643 = vadd.f32 %v2555, %v2642
        %v2644 = vpop.f32.mrf.mxu0
        %2645 = vdwg.mxu0
        %v2646 = vadd.f32 %v1352, %v2640
        %v2647 = vadd.f32 %v1353, %v2643
        %v2648 = vld [vmem:[%s1076] sm:$0x1]
        %v2649 = vld [vmem:[%s1084] sm:$0x1]
        %2650 = vadd.xlane.f32.xlu0 %v2646
        %v2651 = vpop.xlane.xlu0 %2650
        %2652 = vadd.xlane.f32.xlu0 %v2647
        %v2653 = vpop.xlane.xlu0 %2652
        %v2654 = vrcp.pop 128.0
        %v2655 = vmul.f32 %v2651, %v2654
        %v2656 = vmul.f32 %v2653, %v2654
        %v2657 = vsub.f32 %v2646, %v2655
        %v2658 = vsub.f32 %v2647, %v2656
        %v2659 = vmul.f32 %v2657, %v2657
        %v2660 = vmul.f32 %v2658, %v2658
        %2661 = vadd.xlane.f32.xlu0 %v2659
        %v2662 = vpop.xlane.xlu0 %2661
        %2663 = vadd.xlane.f32.xlu0 %v2660
        %v2664 = vpop.xlane.xlu0 %2663
        %v2665 = vmul.f32 %v2662, %v2654
        %v2666 = vmul.f32 %v2664, %v2654
        %v2667 = vadd.f32 %v2665, 1e-05
        %v2668 = vadd.f32 %v2666, 1e-05
        %v2669 = vrsqrt.pop %v2667
        %v2670 = vrsqrt.pop %v2668
        %v2671 = vmul.f32 %v2657, %v2669
        %v2672 = vmul.f32 %v2658, %v2670
        %v2674 = vlaneseq
        %v2675 = vshrl.u32 %v2674, 7
        %v2676 = vsub.s32 0, %v2675
        %v2677 = vrot.slane %v2648, %v2676
        %v2679 = vmul.f32 %v2671, %v2677
        %v2680 = vmul.f32 %v2672, %v2677
        %v2682 = vlaneseq
        %v2683 = vshrl.u32 %v2682, 7
        %v2684 = vsub.s32 0, %v2683
        %v2685 = vrot.slane %v2649, %v2684
        %v2687 = vadd.f32 %v2679, %v2685
        %v2688 = vadd.f32 %v2680, %v2685
        %v2689 = vpack.c.bf16 %v2688, %v2687
        %v2690 = vld [vmem:[%s1093] sm:$0xf]
        %v2691 = vld [vmem:[%s1093 + $0x4] sm:$0xf]
        %v2692 = vld [vmem:[%s1093 + $0x8] sm:$0xf]
        %v2693 = vld [vmem:[%s1093 + $0xc] sm:$0xf]
        %v2694 = vld [vmem:[%s1093 + $0x10] sm:$0xf]
        %v2695 = vld [vmem:[%s1093 + $0x14] sm:$0xf]
        %v2696 = vld [vmem:[%s1093 + $0x18] sm:$0xf]
        %v2697 = vld [vmem:[%s1093 + $0x1c] sm:$0xf]
        %v2698 = vld [vmem:[%s1093 + $0x20] sm:$0xf]
        %v2699 = vld [vmem:[%s1093 + $0x24] sm:$0xf]
        %v2700 = vld [vmem:[%s1093 + $0x28] sm:$0xf]
        %v2701 = vld [vmem:[%s1093 + $0x2c] sm:$0xf]
        %v2702 = vld [vmem:[%s1093 + $0x30] sm:$0xf]
        %v2703 = vld [vmem:[%s1093 + $0x34] sm:$0xf]
        %v2704 = vld [vmem:[%s1093 + $0x38] sm:$0xf]
        %v2705 = vld [vmem:[%s1093 + $0x3c] sm:$0xf]
        %v2706 = vld [vmem:[%s1101] sm:$0x1]
        %v2708 = vlaneseq
        %v2709 = vshrl.u32 %v2708, 7
        %v2710 = vsub.s32 0, %v2709
        %v2711 = vrot.slane %v2706, %v2710
        %v2729 = vunpack.c.l.b16 %v2690
        %v2730 = vunpack.c.l.b16 %v2691
        %v2731 = vunpack.c.l.b16 %v2692
        %v2732 = vunpack.c.l.b16 %v2693
        %v2733 = vunpack.c.l.b16 %v2694
        %v2734 = vunpack.c.l.b16 %v2695
        %v2735 = vunpack.c.l.b16 %v2696
        %v2736 = vunpack.c.l.b16 %v2697
        %v2737 = vunpack.c.l.b16 %v2698
        %v2738 = vunpack.c.l.b16 %v2699
        %v2739 = vunpack.c.l.b16 %v2700
        %v2740 = vunpack.c.l.b16 %v2701
        %v2741 = vunpack.c.l.b16 %v2702
        %v2742 = vunpack.c.l.b16 %v2703
        %v2743 = vunpack.c.l.b16 %v2704
        %v2744 = vunpack.c.l.b16 %v2705
        %v2745 = vpack.c.b16 %v2730, %v2729
        %v2746 = vpack.c.b16 %v2732, %v2731
        %v2747 = vpack.c.b16 %v2734, %v2733
        %v2748 = vpack.c.b16 %v2736, %v2735
        %v2749 = vpack.c.b16 %v2738, %v2737
        %v2750 = vpack.c.b16 %v2740, %v2739
        %v2751 = vpack.c.b16 %v2742, %v2741
        %v2752 = vpack.c.b16 %v2744, %v2743
        %2761 = vmatprep.subr.bf16.mxu0 0
        %2762 = vmatpush1.bf16.msra.mxu0 %v2752
        %2763 = vmatprep.subr.bf16.mxu0 0
        %2764 = vmatpush1.bf16.msra.mxu0 %v2751
        %2765 = vmatprep.subr.bf16.mxu0 0
        %2766 = vmatpush1.bf16.msra.mxu0 %v2750
        %2767 = vmatprep.subr.bf16.mxu0 0
        %2768 = vmatpush1.bf16.msra.mxu0 %v2749
        %2769 = vmatprep.subr.bf16.mxu0 0
        %2770 = vmatpush1.bf16.msra.mxu0 %v2748
        %2771 = vmatprep.subr.bf16.mxu0 0
        %2772 = vmatpush1.bf16.msra.mxu0 %v2747
        %2773 = vmatprep.subr.bf16.mxu0 0
        %2774 = vmatpush1.bf16.msra.mxu0 %v2746
        %2775 = vmatprep.subr.bf16.mxu0 0
        %2776 = vmatpush1.bf16.msra.mxu0 %v2745
        %2777 = vmatprep.subr.bf16.mxu0 0
        %2778 = vmatpush2.bf16.msra.mxu0 0
        %2779 = vmatprep.subr.bf16.mxu0 0
        %2780 = vmatpush2.bf16.msra.mxu0 0
        %2781 = vmatprep.subr.bf16.mxu0 0
        %2782 = vmatpush2.bf16.msra.mxu0 0
        %2783 = vmatprep.subr.bf16.mxu0 0
        %2784 = vmatpush2.bf16.msra.mxu0 0
        %2785 = vmatprep.subr.bf16.mxu0 0
        %2786 = vmatpush2.bf16.msra.mxu0 0
        %2787 = vmatprep.subr.bf16.mxu0 0
        %2788 = vmatpush2.bf16.msra.mxu0 0
        %2789 = vmatprep.subr.bf16.mxu0 0
        %2790 = vmatpush2.bf16.msra.mxu0 0
        %2791 = vmatprep.subr.bf16.mxu0 0
        %2792 = vmatpush2.bf16.msra.mxu0 0
        %2793 = vmatprep.mubr.bf16.mxu0 0
        %2794 = vmatmul.mubr.bf16.gmra.mxu0 %v2689
        %v2795 = vpop.f32.mrf.mxu0
        %v2796 = vadd.f32 %v2711, %v2795
        %v2797 = vpop.f32.mrf.mxu0
        %v2798 = vpop.f32.mrf.mxu0
        %v2799 = vadd.f32 %v2711, %v2798
        %v2800 = vpop.f32.mrf.mxu0
        %2801 = vdwg.mxu0
        %v2802 = vpack.c.bf16 %v1355, %v1354
        %v2803 = vld [vmem:[%s1328] sm:$0xff]
        %v2804 = vld [vmem:[%s1328 + $0x8] sm:$0xff]
        %v2805 = vld [vmem:[%s1328 + $0x10] sm:$0xff]
        %v2806 = vld [vmem:[%s1328 + $0x18] sm:$0xff]
        %v2807 = vld [vmem:[%s1328 + $0x20] sm:$0xff]
        %v2808 = vld [vmem:[%s1328 + $0x28] sm:$0xff]
        %v2809 = vld [vmem:[%s1328 + $0x30] sm:$0xff]
        %v2810 = vld [vmem:[%s1328 + $0x38] sm:$0xff]
        %v2811 = vld [vmem:[%s1328 + $0x40] sm:$0xff]
        %v2812 = vld [vmem:[%s1328 + $0x48] sm:$0xff]
        %v2813 = vld [vmem:[%s1328 + $0x50] sm:$0xff]
        %v2814 = vld [vmem:[%s1328 + $0x58] sm:$0xff]
        %v2815 = vld [vmem:[%s1328 + $0x60] sm:$0xff]
        %v2816 = vld [vmem:[%s1328 + $0x68] sm:$0xff]
        %v2817 = vld [vmem:[%s1328 + $0x70] sm:$0xff]
        %v2818 = vld [vmem:[%s1328 + $0x78] sm:$0xff]
        %v2819 = vld [vmem:[%s1332] sm:$0x3]
        %v2821 = vlaneseq
        %v2822 = vshrl.u32 %v2821, 7
        %v2823 = vsub.s32 0, %v2822
        %v2824 = vrot.slane %v2819, %v2823
        %v2825 = vlaneseq
        %v2826 = vshrl.u32 %v2825, 7
        %v2827 = vsub.s32 1, %v2826
        %v2828 = vrot.slane %v2819, %v2827
        %v2847 = vunpack.c.l.b16 %v2803
        %v2848 = vunpack.c.h.b16 %v2803
        %v2849 = vunpack.c.l.b16 %v2804
        %v2850 = vunpack.c.h.b16 %v2804
        %v2851 = vunpack.c.l.b16 %v2805
        %v2852 = vunpack.c.h.b16 %v2805
        %v2853 = vunpack.c.l.b16 %v2806
        %v2854 = vunpack.c.h.b16 %v2806
        %v2855 = vunpack.c.l.b16 %v2807
        %v2856 = vunpack.c.h.b16 %v2807
        %v2857 = vunpack.c.l.b16 %v2808
        %v2858 = vunpack.c.h.b16 %v2808
        %v2859 = vunpack.c.l.b16 %v2809
        %v2860 = vunpack.c.h.b16 %v2809
        %v2861 = vunpack.c.l.b16 %v2810
        %v2862 = vunpack.c.h.b16 %v2810
        %v2863 = vunpack.c.l.b16 %v2811
        %v2864 = vunpack.c.h.b16 %v2811
        %v2865 = vunpack.c.l.b16 %v2812
        %v2866 = vunpack.c.h.b16 %v2812
        %v2867 = vunpack.c.l.b16 %v2813
        %v2868 = vunpack.c.h.b16 %v2813
        %v2869 = vunpack.c.l.b16 %v2814
        %v2870 = vunpack.c.h.b16 %v2814
        %v2871 = vunpack.c.l.b16 %v2815
        %v2872 = vunpack.c.h.b16 %v2815
        %v2873 = vunpack.c.l.b16 %v2816
        %v2874 = vunpack.c.h.b16 %v2816
        %v2875 = vunpack.c.l.b16 %v2817
        %v2876 = vunpack.c.h.b16 %v2817
        %v2877 = vunpack.c.l.b16 %v2818
        %v2878 = vunpack.c.h.b16 %v2818
        %v2879 = vpack.c.b16 %v2849, %v2847
        %v2880 = vpack.c.b16 %v2850, %v2848
        %v2881 = vpack.c.b16 %v2853, %v2851
        %v2882 = vpack.c.b16 %v2854, %v2852
        %v2883 = vpack.c.b16 %v2857, %v2855
        %v2884 = vpack.c.b16 %v2858, %v2856
        %v2885 = vpack.c.b16 %v2861, %v2859
        %v2886 = vpack.c.b16 %v2862, %v2860
        %v2887 = vpack.c.b16 %v2865, %v2863
        %v2888 = vpack.c.b16 %v2866, %v2864
        %v2889 = vpack.c.b16 %v2869, %v2867
        %v2890 = vpack.c.b16 %v2870, %v2868
        %v2891 = vpack.c.b16 %v2873, %v2871
        %v2892 = vpack.c.b16 %v2874, %v2872
        %v2893 = vpack.c.b16 %v2877, %v2875
        %v2894 = vpack.c.b16 %v2878, %v2876
        %2911 = vmatprep.subr.bf16.mxu0 %v2894
        %2912 = vmatpush1.bf16.msra.mxu0 %v2893
        %2913 = vmatprep.subr.bf16.mxu0 %v2892
        %2914 = vmatpush1.bf16.msra.mxu0 %v2891
        %2915 = vmatprep.subr.bf16.mxu0 %v2890
        %2916 = vmatpush1.bf16.msra.mxu0 %v2889
        %2917 = vmatprep.subr.bf16.mxu0 %v2888
        %2918 = vmatpush1.bf16.msra.mxu0 %v2887
        %2919 = vmatprep.subr.bf16.mxu0 %v2886
        %2920 = vmatpush1.bf16.msra.mxu0 %v2885
        %2921 = vmatprep.subr.bf16.mxu0 %v2884
        %2922 = vmatpush1.bf16.msra.mxu0 %v2883
        %2923 = vmatprep.subr.bf16.mxu0 %v2882
        %2924 = vmatpush1.bf16.msra.mxu0 %v2881
        %2925 = vmatprep.subr.bf16.mxu0 %v2880
        %2926 = vmatpush1.bf16.msra.mxu0 %v2879
        %2927 = vmatprep.subr.bf16.mxu0 0
        %2928 = vmatpush2.bf16.msra.mxu0 0
        %2929 = vmatprep.subr.bf16.mxu0 0
        %2930 = vmatpush2.bf16.msra.mxu0 0
        %2931 = vmatprep.subr.bf16.mxu0 0
        %2932 = vmatpush2.bf16.msra.mxu0 0
        %2933 = vmatprep.subr.bf16.mxu0 0
        %2934 = vmatpush2.bf16.msra.mxu0 0
        %2935 = vmatprep.subr.bf16.mxu0 0
        %2936 = vmatpush2.bf16.msra.mxu0 0
        %2937 = vmatprep.subr.bf16.mxu0 0
        %2938 = vmatpush2.bf16.msra.mxu0 0
        %2939 = vmatprep.subr.bf16.mxu0 0
        %2940 = vmatpush2.bf16.msra.mxu0 0
        %2941 = vmatprep.subr.bf16.mxu0 0
        %2942 = vmatpush2.bf16.msra.mxu0 0
        %2943 = vmatprep.mubr.bf16.mxu0 0
        %2944 = vmatmul.mubr.bf16.gmra.mxu0 %v2802
        %v2945 = vpop.f32.mrf.mxu0
        %v2946 = vadd.f32 %v2824, %v2945
        %v2947 = vpop.f32.mrf.mxu0
        %v2948 = vadd.f32 %v2828, %v2947
        %v2949 = vpop.f32.mrf.mxu0
        %v2950 = vadd.f32 %v2824, %v2949
        %v2951 = vpop.f32.mrf.mxu0
        %v2952 = vadd.f32 %v2828, %v2951
        %2953 = vdwg.mxu0
        %v2954 = vpack.c.bf16 %v2796, %v2796
        %v2955 = vpack.c.bf16 %v2799, %v2799
        %v2956 = vpack.c.bf16 %v2946, %v2946
        %v2957 = vpack.c.bf16 %v2950, %v2950
        %v2958 = vpack.c.bf16 %v2948, %v2948
        %v2959 = vpack.c.bf16 %v2952, %v2952
        %v2961 = vsel %vm1624, %v2954, 0
        %v2964 = vsel %vm1624, %v2956, 0
        %2966 = vmatprep.subr.bf16.mxu0 0
        %2967 = vmatpush1.bf16.xpose.msra.mxu0 0
        %2968 = vmatprep.subr.bf16.mxu0 0
        %2969 = vmatpush1.bf16.xpose.msra.mxu0 0
        %2970 = vmatprep.subr.bf16.mxu0 0
        %2971 = vmatpush1.bf16.xpose.msra.mxu0 0
        %2972 = vmatprep.subr.bf16.mxu0 0
        %2973 = vmatpush1.bf16.xpose.msra.mxu0 0
        %2974 = vmatprep.subr.bf16.mxu0 0
        %2975 = vmatpush1.bf16.xpose.msra.mxu0 0
        %2976 = vmatprep.subr.bf16.mxu0 0
        %2977 = vmatpush1.bf16.xpose.msra.mxu0 0
        %2978 = vmatprep.subr.bf16.mxu0 0
        %2979 = vmatpush1.bf16.xpose.msra.mxu0 0
        %2980 = vmatprep.subr.bf16.mxu0 0
        %2981 = vmatpush1.bf16.xpose.msra.mxu0 %v2964
        %2982 = vmatprep.subr.bf16.mxu0 0
        %2983 = vmatpush2.bf16.xpose.msra.mxu0 0
        %2984 = vmatprep.subr.bf16.mxu0 0
        %2985 = vmatpush2.bf16.xpose.msra.mxu0 0
        %2986 = vmatprep.subr.bf16.mxu0 0
        %2987 = vmatpush2.bf16.xpose.msra.mxu0 0
        %2988 = vmatprep.subr.bf16.mxu0 0
        %2989 = vmatpush2.bf16.xpose.msra.mxu0 0
        %2990 = vmatprep.subr.bf16.mxu0 0
        %2991 = vmatpush2.bf16.xpose.msra.mxu0 0
        %2992 = vmatprep.subr.bf16.mxu0 0
        %2993 = vmatpush2.bf16.xpose.msra.mxu0 0
        %2994 = vmatprep.subr.bf16.mxu0 0
        %2995 = vmatpush2.bf16.xpose.msra.mxu0 0
        %2996 = vmatprep.subr.bf16.mxu0 0
        %2997 = vmatpush2.bf16.xpose.msra.mxu0 0
        %2998 = vmatprep.mubr.bf16.mxu0 0
        %2999 = vmatmul.mubr.bf16.gmra.mxu0 %v2961
        %v3000 = vpop.f32.mrf.mxu0
        %v3001 = vadd.f32 0.0, %v3000
        %v3002 = vpop.f32.mrf.mxu0
        %v3003 = vpop.f32.mrf.mxu0
        %v3004 = vpop.f32.mrf.mxu0
        %3005 = vdwg.mxu0
        %v3007 = vsel %vm1624, %v2955, 0
        %v3010 = vsel %vm1624, %v2957, 0
        %3012 = vmatprep.subr.bf16.mxu0 0
        %3013 = vmatpush1.bf16.xpose.msra.mxu0 0
        %3014 = vmatprep.subr.bf16.mxu0 0
        %3015 = vmatpush1.bf16.xpose.msra.mxu0 0
        %3016 = vmatprep.subr.bf16.mxu0 0
        %3017 = vmatpush1.bf16.xpose.msra.mxu0 0
        %3018 = vmatprep.subr.bf16.mxu0 0
        %3019 = vmatpush1.bf16.xpose.msra.mxu0 0
        %3020 = vmatprep.subr.bf16.mxu0 0
        %3021 = vmatpush1.bf16.xpose.msra.mxu0 0
        %3022 = vmatprep.subr.bf16.mxu0 0
        %3023 = vmatpush1.bf16.xpose.msra.mxu0 0
        %3024 = vmatprep.subr.bf16.mxu0 0
        %3025 = vmatpush1.bf16.xpose.msra.mxu0 0
        %3026 = vmatprep.subr.bf16.mxu0 0
        %3027 = vmatpush1.bf16.xpose.msra.mxu0 %v3010
        %3028 = vmatprep.subr.bf16.mxu0 0
        %3029 = vmatpush2.bf16.xpose.msra.mxu0 0
        %3030 = vmatprep.subr.bf16.mxu0 0
        %3031 = vmatpush2.bf16.xpose.msra.mxu0 0
        %3032 = vmatprep.subr.bf16.mxu0 0
        %3033 = vmatpush2.bf16.xpose.msra.mxu0 0
        %3034 = vmatprep.subr.bf16.mxu0 0
        %3035 = vmatpush2.bf16.xpose.msra.mxu0 0
        %3036 = vmatprep.subr.bf16.mxu0 0
        %3037 = vmatpush2.bf16.xpose.msra.mxu0 0
        %3038 = vmatprep.subr.bf16.mxu0 0
        %3039 = vmatpush2.bf16.xpose.msra.mxu0 0
        %3040 = vmatprep.subr.bf16.mxu0 0
        %3041 = vmatpush2.bf16.xpose.msra.mxu0 0
        %3042 = vmatprep.subr.bf16.mxu0 0
        %3043 = vmatpush2.bf16.xpose.msra.mxu0 0
        %3044 = vmatprep.mubr.bf16.mxu0 0
        %3045 = vmatmul.mubr.bf16.gmra.mxu0 %v3007
        %v3046 = vpop.f32.mrf.mxu0
        %v3047 = vadd.f32 0.0, %v3046
        %v3048 = vpop.f32.mrf.mxu0
        %v3049 = vpop.f32.mrf.mxu0
        %v3050 = vpop.f32.mrf.mxu0
        %3051 = vdwg.mxu0
        %v3052 = vsel %vm1717, %v3001, -inf
        %3053 = vmax.xlane.f32.xlu0 %v3052
        %v3054 = vpop.xlane.xlu0 %3053
        %v3055 = vsel %vm1717, %v3047, -inf
        %3056 = vmax.xlane.f32.xlu0 %v3055
        %v3057 = vpop.xlane.xlu0 %3056
        %v3058 = vsub.f32 %v3001, %v3054
        %v3059 = vsub.f32 %v3047, %v3057
        %v3060 = vmul.f32 %v3058, 1.442695
        %v3061 = vpow.pop %v3060
        %v3062 = vmul.f32 %v3059, 1.442695
        %v3063 = vpow.pop %v3062
        %v3064 = vsel %vm1717, %v3061, 0.0
        %3065 = vadd.xlane.f32.xlu0 %v3064
        %v3066 = vpop.xlane.xlu0 %3065
        %v3067 = vsel %vm1717, %v3063, 0.0
        %3068 = vadd.xlane.f32.xlu0 %v3067
        %v3069 = vpop.xlane.xlu0 %3068
        %v3070 = vrcp.pop %v3066
        %v3071 = vrcp.pop %v3069
        %v3072 = vmul.f32 %v3061, %v3070
        %v3073 = vmul.f32 %v3063, %v3071
        %v3074 = vpack.c.bf16 %v3072, %v3072
        %v3075 = vpack.c.bf16 %v3073, %v3073
        %v3077 = vsel %vm1717, %v3074, 0
        %v3080 = vsel %vm1745, %v2958, 0
        %3082 = vmatprep.subr.bf16.mxu0 0
        %3083 = vmatpush1.bf16.msra.mxu0 0
        %3084 = vmatprep.subr.bf16.mxu0 0
        %3085 = vmatpush1.bf16.msra.mxu0 0
        %3086 = vmatprep.subr.bf16.mxu0 0
        %3087 = vmatpush1.bf16.msra.mxu0 0
        %3088 = vmatprep.subr.bf16.mxu0 0
        %3089 = vmatpush1.bf16.msra.mxu0 0
        %3090 = vmatprep.subr.bf16.mxu0 0
        %3091 = vmatpush1.bf16.msra.mxu0 0
        %3092 = vmatprep.subr.bf16.mxu0 0
        %3093 = vmatpush1.bf16.msra.mxu0 0
        %3094 = vmatprep.subr.bf16.mxu0 0
        %3095 = vmatpush1.bf16.msra.mxu0 0
        %3096 = vmatprep.subr.bf16.mxu0 0
        %3097 = vmatpush1.bf16.msra.mxu0 %v3080
        %3098 = vmatprep.subr.bf16.mxu0 0
        %3099 = vmatpush2.bf16.msra.mxu0 0
        %3100 = vmatprep.subr.bf16.mxu0 0
        %3101 = vmatpush2.bf16.msra.mxu0 0
        %3102 = vmatprep.subr.bf16.mxu0 0
        %3103 = vmatpush2.bf16.msra.mxu0 0
        %3104 = vmatprep.subr.bf16.mxu0 0
        %3105 = vmatpush2.bf16.msra.mxu0 0
        %3106 = vmatprep.subr.bf16.mxu0 0
        %3107 = vmatpush2.bf16.msra.mxu0 0
        %3108 = vmatprep.subr.bf16.mxu0 0
        %3109 = vmatpush2.bf16.msra.mxu0 0
        %3110 = vmatprep.subr.bf16.mxu0 0
        %3111 = vmatpush2.bf16.msra.mxu0 0
        %3112 = vmatprep.subr.bf16.mxu0 0
        %3113 = vmatpush2.bf16.msra.mxu0 0
        %3114 = vmatprep.mubr.bf16.mxu0 0
        %3115 = vmatmul.mubr.bf16.gmra.mxu0 %v3077
        %v3116 = vpop.f32.mrf.mxu0
        %v3117 = vadd.f32 0.0, %v3116
        %v3118 = vpop.f32.mrf.mxu0
        %v3119 = vpop.f32.mrf.mxu0
        %v3120 = vpop.f32.mrf.mxu0
        %3121 = vdwg.mxu0
        %v3123 = vsel %vm1717, %v3075, 0
        %v3126 = vsel %vm1745, %v2959, 0
        %3128 = vmatprep.subr.bf16.mxu0 0
        %3129 = vmatpush1.bf16.msra.mxu0 0
        %3130 = vmatprep.subr.bf16.mxu0 0
        %3131 = vmatpush1.bf16.msra.mxu0 0
        %3132 = vmatprep.subr.bf16.mxu0 0
        %3133 = vmatpush1.bf16.msra.mxu0 0
        %3134 = vmatprep.subr.bf16.mxu0 0
        %3135 = vmatpush1.bf16.msra.mxu0 0
        %3136 = vmatprep.subr.bf16.mxu0 0
        %3137 = vmatpush1.bf16.msra.mxu0 0
        %3138 = vmatprep.subr.bf16.mxu0 0
        %3139 = vmatpush1.bf16.msra.mxu0 0
        %3140 = vmatprep.subr.bf16.mxu0 0
        %3141 = vmatpush1.bf16.msra.mxu0 0
        %3142 = vmatprep.subr.bf16.mxu0 0
        %3143 = vmatpush1.bf16.msra.mxu0 %v3126
        %3144 = vmatprep.subr.bf16.mxu0 0
        %3145 = vmatpush2.bf16.msra.mxu0 0
        %3146 = vmatprep.subr.bf16.mxu0 0
        %3147 = vmatpush2.bf16.msra.mxu0 0
        %3148 = vmatprep.subr.bf16.mxu0 0
        %3149 = vmatpush2.bf16.msra.mxu0 0
        %3150 = vmatprep.subr.bf16.mxu0 0
        %3151 = vmatpush2.bf16.msra.mxu0 0
        %3152 = vmatprep.subr.bf16.mxu0 0
        %3153 = vmatpush2.bf16.msra.mxu0 0
        %3154 = vmatprep.subr.bf16.mxu0 0
        %3155 = vmatpush2.bf16.msra.mxu0 0
        %3156 = vmatprep.subr.bf16.mxu0 0
        %3157 = vmatpush2.bf16.msra.mxu0 0
        %3158 = vmatprep.subr.bf16.mxu0 0
        %3159 = vmatpush2.bf16.msra.mxu0 0
        %3160 = vmatprep.mubr.bf16.mxu0 0
        %3161 = vmatmul.mubr.bf16.gmra.mxu0 %v3123
        %v3162 = vpop.f32.mrf.mxu0
        %v3163 = vadd.f32 0.0, %v3162
        %v3164 = vpop.f32.mrf.mxu0
        %v3165 = vpop.f32.mrf.mxu0
        %v3166 = vpop.f32.mrf.mxu0
        %3167 = vdwg.mxu0
        %3169 = vrot.lane.b32.xlu0 %v2954, 96
        %v3170 = vpop.permute.xlu0 %3169
        %3172 = vrot.lane.b32.xlu0 %v2956, 96
        %v3173 = vpop.permute.xlu0 %3172
        %v3175 = vsel %vm1624, %v3170, 0
        %v3178 = vsel %vm1624, %v3173, 0
        %3180 = vmatprep.subr.bf16.mxu0 0
        %3181 = vmatpush1.bf16.xpose.msra.mxu0 0
        %3182 = vmatprep.subr.bf16.mxu0 0
        %3183 = vmatpush1.bf16.xpose.msra.mxu0 0
        %3184 = vmatprep.subr.bf16.mxu0 0
        %3185 = vmatpush1.bf16.xpose.msra.mxu0 0
        %3186 = vmatprep.subr.bf16.mxu0 0
        %3187 = vmatpush1.bf16.xpose.msra.mxu0 0
        %3188 = vmatprep.subr.bf16.mxu0 0
        %3189 = vmatpush1.bf16.xpose.msra.mxu0 0
        %3190 = vmatprep.subr.bf16.mxu0 0
        %3191 = vmatpush1.bf16.xpose.msra.mxu0 0
        %3192 = vmatprep.subr.bf16.mxu0 0
        %3193 = vmatpush1.bf16.xpose.msra.mxu0 0
        %3194 = vmatprep.subr.bf16.mxu0 0
        %3195 = vmatpush1.bf16.xpose.msra.mxu0 %v3178
        %3196 = vmatprep.subr.bf16.mxu0 0
        %3197 = vmatpush2.bf16.xpose.msra.mxu0 0
        %3198 = vmatprep.subr.bf16.mxu0 0
        %3199 = vmatpush2.bf16.xpose.msra.mxu0 0
        %3200 = vmatprep.subr.bf16.mxu0 0
        %3201 = vmatpush2.bf16.xpose.msra.mxu0 0
        %3202 = vmatprep.subr.bf16.mxu0 0
        %3203 = vmatpush2.bf16.xpose.msra.mxu0 0
        %3204 = vmatprep.subr.bf16.mxu0 0
        %3205 = vmatpush2.bf16.xpose.msra.mxu0 0
        %3206 = vmatprep.subr.bf16.mxu0 0
        %3207 = vmatpush2.bf16.xpose.msra.mxu0 0
        %3208 = vmatprep.subr.bf16.mxu0 0
        %3209 = vmatpush2.bf16.xpose.msra.mxu0 0
        %3210 = vmatprep.subr.bf16.mxu0 0
        %3211 = vmatpush2.bf16.xpose.msra.mxu0 0
        %3212 = vmatprep.mubr.bf16.mxu0 0
        %3213 = vmatmul.mubr.bf16.gmra.mxu0 %v3175
        %v3214 = vpop.f32.mrf.mxu0
        %v3215 = vadd.f32 0.0, %v3214
        %v3216 = vpop.f32.mrf.mxu0
        %v3217 = vpop.f32.mrf.mxu0
        %v3218 = vpop.f32.mrf.mxu0
        %3219 = vdwg.mxu0
        %3221 = vrot.lane.b32.xlu0 %v2955, 96
        %v3222 = vpop.permute.xlu0 %3221
        %3224 = vrot.lane.b32.xlu0 %v2957, 96
        %v3225 = vpop.permute.xlu0 %3224
        %v3227 = vsel %vm1624, %v3222, 0
        %v3230 = vsel %vm1624, %v3225, 0
        %3232 = vmatprep.subr.bf16.mxu0 0
        %3233 = vmatpush1.bf16.xpose.msra.mxu0 0
        %3234 = vmatprep.subr.bf16.mxu0 0
        %3235 = vmatpush1.bf16.xpose.msra.mxu0 0
        %3236 = vmatprep.subr.bf16.mxu0 0
        %3237 = vmatpush1.bf16.xpose.msra.mxu0 0
        %3238 = vmatprep.subr.bf16.mxu0 0
        %3239 = vmatpush1.bf16.xpose.msra.mxu0 0
        %3240 = vmatprep.subr.bf16.mxu0 0
        %3241 = vmatpush1.bf16.xpose.msra.mxu0 0
        %3242 = vmatprep.subr.bf16.mxu0 0
        %3243 = vmatpush1.bf16.xpose.msra.mxu0 0
        %3244 = vmatprep.subr.bf16.mxu0 0
        %3245 = vmatpush1.bf16.xpose.msra.mxu0 0
        %3246 = vmatprep.subr.bf16.mxu0 0
        %3247 = vmatpush1.bf16.xpose.msra.mxu0 %v3230
        %3248 = vmatprep.subr.bf16.mxu0 0
        %3249 = vmatpush2.bf16.xpose.msra.mxu0 0
        %3250 = vmatprep.subr.bf16.mxu0 0
        %3251 = vmatpush2.bf16.xpose.msra.mxu0 0
        %3252 = vmatprep.subr.bf16.mxu0 0
        %3253 = vmatpush2.bf16.xpose.msra.mxu0 0
        %3254 = vmatprep.subr.bf16.mxu0 0
        %3255 = vmatpush2.bf16.xpose.msra.mxu0 0
        %3256 = vmatprep.subr.bf16.mxu0 0
        %3257 = vmatpush2.bf16.xpose.msra.mxu0 0
        %3258 = vmatprep.subr.bf16.mxu0 0
        %3259 = vmatpush2.bf16.xpose.msra.mxu0 0
        %3260 = vmatprep.subr.bf16.mxu0 0
        %3261 = vmatpush2.bf16.xpose.msra.mxu0 0
        %3262 = vmatprep.subr.bf16.mxu0 0
        %3263 = vmatpush2.bf16.xpose.msra.mxu0 0
        %3264 = vmatprep.mubr.bf16.mxu0 0
        %3265 = vmatmul.mubr.bf16.gmra.mxu0 %v3227
        %v3266 = vpop.f32.mrf.mxu0
        %v3267 = vadd.f32 0.0, %v3266
        %v3268 = vpop.f32.mrf.mxu0
        %v3269 = vpop.f32.mrf.mxu0
        %v3270 = vpop.f32.mrf.mxu0
        %3271 = vdwg.mxu0
        %v3272 = vsel %vm1717, %v3215, -inf
        %3273 = vmax.xlane.f32.xlu0 %v3272
        %v3274 = vpop.xlane.xlu0 %3273
        %v3275 = vsel %vm1717, %v3267, -inf
        %3276 = vmax.xlane.f32.xlu0 %v3275
        %v3277 = vpop.xlane.xlu0 %3276
        %v3278 = vsub.f32 %v3215, %v3274
        %v3279 = vsub.f32 %v3267, %v3277
        %v3280 = vmul.f32 %v3278, 1.442695
        %v3281 = vpow.pop %v3280
        %v3282 = vmul.f32 %v3279, 1.442695
        %v3283 = vpow.pop %v3282
        %v3284 = vsel %vm1717, %v3281, 0.0
        %3285 = vadd.xlane.f32.xlu0 %v3284
        %v3286 = vpop.xlane.xlu0 %3285
        %v3287 = vsel %vm1717, %v3283, 0.0
        %3288 = vadd.xlane.f32.xlu0 %v3287
        %v3289 = vpop.xlane.xlu0 %3288
        %v3290 = vrcp.pop %v3286
        %v3291 = vrcp.pop %v3289
        %v3292 = vmul.f32 %v3281, %v3290
        %v3293 = vmul.f32 %v3283, %v3291
        %v3294 = vpack.c.bf16 %v3292, %v3292
        %v3295 = vpack.c.bf16 %v3293, %v3293
        %3297 = vrot.lane.b32.xlu0 %v2958, 96
        %v3298 = vpop.permute.xlu0 %3297
        %v3300 = vsel %vm1717, %v3294, 0
        %v3303 = vsel %vm1745, %v3298, 0
        %3305 = vmatprep.subr.bf16.mxu0 0
        %3306 = vmatpush1.bf16.msra.mxu0 0
        %3307 = vmatprep.subr.bf16.mxu0 0
        %3308 = vmatpush1.bf16.msra.mxu0 0
        %3309 = vmatprep.subr.bf16.mxu0 0
        %3310 = vmatpush1.bf16.msra.mxu0 0
        %3311 = vmatprep.subr.bf16.mxu0 0
        %3312 = vmatpush1.bf16.msra.mxu0 0
        %3313 = vmatprep.subr.bf16.mxu0 0
        %3314 = vmatpush1.bf16.msra.mxu0 0
        %3315 = vmatprep.subr.bf16.mxu0 0
        %3316 = vmatpush1.bf16.msra.mxu0 0
        %3317 = vmatprep.subr.bf16.mxu0 0
        %3318 = vmatpush1.bf16.msra.mxu0 0
        %3319 = vmatprep.subr.bf16.mxu0 0
        %3320 = vmatpush1.bf16.msra.mxu0 %v3303
        %3321 = vmatprep.subr.bf16.mxu0 0
        %3322 = vmatpush2.bf16.msra.mxu0 0
        %3323 = vmatprep.subr.bf16.mxu0 0
        %3324 = vmatpush2.bf16.msra.mxu0 0
        %3325 = vmatprep.subr.bf16.mxu0 0
        %3326 = vmatpush2.bf16.msra.mxu0 0
        %3327 = vmatprep.subr.bf16.mxu0 0
        %3328 = vmatpush2.bf16.msra.mxu0 0
        %3329 = vmatprep.subr.bf16.mxu0 0
        %3330 = vmatpush2.bf16.msra.mxu0 0
        %3331 = vmatprep.subr.bf16.mxu0 0
        %3332 = vmatpush2.bf16.msra.mxu0 0
        %3333 = vmatprep.subr.bf16.mxu0 0
        %3334 = vmatpush2.bf16.msra.mxu0 0
        %3335 = vmatprep.subr.bf16.mxu0 0
        %3336 = vmatpush2.bf16.msra.mxu0 0
        %3337 = vmatprep.mubr.bf16.mxu0 0
        %3338 = vmatmul.mubr.bf16.gmra.mxu0 %v3300
        %v3339 = vpop.f32.mrf.mxu0
        %v3340 = vadd.f32 0.0, %v3339
        %v3341 = vpop.f32.mrf.mxu0
        %v3342 = vpop.f32.mrf.mxu0
        %v3343 = vpop.f32.mrf.mxu0
        %3344 = vdwg.mxu0
        %3346 = vrot.lane.b32.xlu0 %v2959, 96
        %v3347 = vpop.permute.xlu0 %3346
        %v3349 = vsel %vm1717, %v3295, 0
        %v3352 = vsel %vm1745, %v3347, 0
        %3354 = vmatprep.subr.bf16.mxu0 0
        %3355 = vmatpush1.bf16.msra.mxu0 0
        %3356 = vmatprep.subr.bf16.mxu0 0
        %3357 = vmatpush1.bf16.msra.mxu0 0
        %3358 = vmatprep.subr.bf16.mxu0 0
        %3359 = vmatpush1.bf16.msra.mxu0 0
        %3360 = vmatprep.subr.bf16.mxu0 0
        %3361 = vmatpush1.bf16.msra.mxu0 0
        %3362 = vmatprep.subr.bf16.mxu0 0
        %3363 = vmatpush1.bf16.msra.mxu0 0
        %3364 = vmatprep.subr.bf16.mxu0 0
        %3365 = vmatpush1.bf16.msra.mxu0 0
        %3366 = vmatprep.subr.bf16.mxu0 0
        %3367 = vmatpush1.bf16.msra.mxu0 0
        %3368 = vmatprep.subr.bf16.mxu0 0
        %3369 = vmatpush1.bf16.msra.mxu0 %v3352
        %3370 = vmatprep.subr.bf16.mxu0 0
        %3371 = vmatpush2.bf16.msra.mxu0 0
        %3372 = vmatprep.subr.bf16.mxu0 0
        %3373 = vmatpush2.bf16.msra.mxu0 0
        %3374 = vmatprep.subr.bf16.mxu0 0
        %3375 = vmatpush2.bf16.msra.mxu0 0
        %3376 = vmatprep.subr.bf16.mxu0 0
        %3377 = vmatpush2.bf16.msra.mxu0 0
        %3378 = vmatprep.subr.bf16.mxu0 0
        %3379 = vmatpush2.bf16.msra.mxu0 0
        %3380 = vmatprep.subr.bf16.mxu0 0
        %3381 = vmatpush2.bf16.msra.mxu0 0
        %3382 = vmatprep.subr.bf16.mxu0 0
        %3383 = vmatpush2.bf16.msra.mxu0 0
        %3384 = vmatprep.subr.bf16.mxu0 0
        %3385 = vmatpush2.bf16.msra.mxu0 0
        %3386 = vmatprep.mubr.bf16.mxu0 0
        %3387 = vmatmul.mubr.bf16.gmra.mxu0 %v3349
        %v3388 = vpop.f32.mrf.mxu0
        %v3389 = vadd.f32 0.0, %v3388
        %v3390 = vpop.f32.mrf.mxu0
        %v3391 = vpop.f32.mrf.mxu0
        %v3392 = vpop.f32.mrf.mxu0
        %3393 = vdwg.mxu0
        %3394 = vrot.lane.b32.xlu0 %v2954, 64
        %v3395 = vpop.permute.xlu0 %3394
        %3396 = vrot.lane.b32.xlu0 %v2956, 64
        %v3397 = vpop.permute.xlu0 %3396
        %v3399 = vsel %vm1624, %v3395, 0
        %v3402 = vsel %vm1624, %v3397, 0
        %3404 = vmatprep.subr.bf16.mxu0 0
        %3405 = vmatpush1.bf16.xpose.msra.mxu0 0
        %3406 = vmatprep.subr.bf16.mxu0 0
        %3407 = vmatpush1.bf16.xpose.msra.mxu0 0
        %3408 = vmatprep.subr.bf16.mxu0 0
        %3409 = vmatpush1.bf16.xpose.msra.mxu0 0
        %3410 = vmatprep.subr.bf16.mxu0 0
        %3411 = vmatpush1.bf16.xpose.msra.mxu0 0
        %3412 = vmatprep.subr.bf16.mxu0 0
        %3413 = vmatpush1.bf16.xpose.msra.mxu0 0
        %3414 = vmatprep.subr.bf16.mxu0 0
        %3415 = vmatpush1.bf16.xpose.msra.mxu0 0
        %3416 = vmatprep.subr.bf16.mxu0 0
        %3417 = vmatpush1.bf16.xpose.msra.mxu0 0
        %3418 = vmatprep.subr.bf16.mxu0 0
        %3419 = vmatpush1.bf16.xpose.msra.mxu0 %v3402
        %3420 = vmatprep.subr.bf16.mxu0 0
        %3421 = vmatpush2.bf16.xpose.msra.mxu0 0
        %3422 = vmatprep.subr.bf16.mxu0 0
        %3423 = vmatpush2.bf16.xpose.msra.mxu0 0
        %3424 = vmatprep.subr.bf16.mxu0 0
        %3425 = vmatpush2.bf16.xpose.msra.mxu0 0
        %3426 = vmatprep.subr.bf16.mxu0 0
        %3427 = vmatpush2.bf16.xpose.msra.mxu0 0
        %3428 = vmatprep.subr.bf16.mxu0 0
        %3429 = vmatpush2.bf16.xpose.msra.mxu0 0
        %3430 = vmatprep.subr.bf16.mxu0 0
        %3431 = vmatpush2.bf16.xpose.msra.mxu0 0
        %3432 = vmatprep.subr.bf16.mxu0 0
        %3433 = vmatpush2.bf16.xpose.msra.mxu0 0
        %3434 = vmatprep.subr.bf16.mxu0 0
        %3435 = vmatpush2.bf16.xpose.msra.mxu0 0
        %3436 = vmatprep.mubr.bf16.mxu0 0
        %3437 = vmatmul.mubr.bf16.gmra.mxu0 %v3399
        %v3438 = vpop.f32.mrf.mxu0
        %v3439 = vadd.f32 0.0, %v3438
        %v3440 = vpop.f32.mrf.mxu0
        %v3441 = vpop.f32.mrf.mxu0
        %v3442 = vpop.f32.mrf.mxu0
        %3443 = vdwg.mxu0
        %3444 = vrot.lane.b32.xlu0 %v2955, 64
        %v3445 = vpop.permute.xlu0 %3444
        %3446 = vrot.lane.b32.xlu0 %v2957, 64
        %v3447 = vpop.permute.xlu0 %3446
        %v3449 = vsel %vm1624, %v3445, 0
        %v3452 = vsel %vm1624, %v3447, 0
        %3454 = vmatprep.subr.bf16.mxu0 0
        %3455 = vmatpush1.bf16.xpose.msra.mxu0 0
        %3456 = vmatprep.subr.bf16.mxu0 0
        %3457 = vmatpush1.bf16.xpose.msra.mxu0 0
        %3458 = vmatprep.subr.bf16.mxu0 0
        %3459 = vmatpush1.bf16.xpose.msra.mxu0 0
        %3460 = vmatprep.subr.bf16.mxu0 0
        %3461 = vmatpush1.bf16.xpose.msra.mxu0 0
        %3462 = vmatprep.subr.bf16.mxu0 0
        %3463 = vmatpush1.bf16.xpose.msra.mxu0 0
        %3464 = vmatprep.subr.bf16.mxu0 0
        %3465 = vmatpush1.bf16.xpose.msra.mxu0 0
        %3466 = vmatprep.subr.bf16.mxu0 0
        %3467 = vmatpush1.bf16.xpose.msra.mxu0 0
        %3468 = vmatprep.subr.bf16.mxu0 0
        %3469 = vmatpush1.bf16.xpose.msra.mxu0 %v3452
        %3470 = vmatprep.subr.bf16.mxu0 0
        %3471 = vmatpush2.bf16.xpose.msra.mxu0 0
        %3472 = vmatprep.subr.bf16.mxu0 0
        %3473 = vmatpush2.bf16.xpose.msra.mxu0 0
        %3474 = vmatprep.subr.bf16.mxu0 0
        %3475 = vmatpush2.bf16.xpose.msra.mxu0 0
        %3476 = vmatprep.subr.bf16.mxu0 0
        %3477 = vmatpush2.bf16.xpose.msra.mxu0 0
        %3478 = vmatprep.subr.bf16.mxu0 0
        %3479 = vmatpush2.bf16.xpose.msra.mxu0 0
        %3480 = vmatprep.subr.bf16.mxu0 0
        %3481 = vmatpush2.bf16.xpose.msra.mxu0 0
        %3482 = vmatprep.subr.bf16.mxu0 0
        %3483 = vmatpush2.bf16.xpose.msra.mxu0 0
        %3484 = vmatprep.subr.bf16.mxu0 0
        %3485 = vmatpush2.bf16.xpose.msra.mxu0 0
        %3486 = vmatprep.mubr.bf16.mxu0 0
        %3487 = vmatmul.mubr.bf16.gmra.mxu0 %v3449
        %v3488 = vpop.f32.mrf.mxu0
        %v3489 = vadd.f32 0.0, %v3488
        %v3490 = vpop.f32.mrf.mxu0
        %v3491 = vpop.f32.mrf.mxu0
        %v3492 = vpop.f32.mrf.mxu0
        %3493 = vdwg.mxu0
        %v3494 = vsel %vm1717, %v3439, -inf
        %3495 = vmax.xlane.f32.xlu0 %v3494
        %v3496 = vpop.xlane.xlu0 %3495
        %v3497 = vsel %vm1717, %v3489, -inf
        %3498 = vmax.xlane.f32.xlu0 %v3497
        %v3499 = vpop.xlane.xlu0 %3498
        %v3500 = vsub.f32 %v3439, %v3496
        %v3501 = vsub.f32 %v3489, %v3499
        %v3502 = vmul.f32 %v3500, 1.442695
        %v3503 = vpow.pop %v3502
        %v3504 = vmul.f32 %v3501, 1.442695
        %v3505 = vpow.pop %v3504
        %v3506 = vsel %vm1717, %v3503, 0.0
        %3507 = vadd.xlane.f32.xlu0 %v3506
        %v3508 = vpop.xlane.xlu0 %3507
        %v3509 = vsel %vm1717, %v3505, 0.0
        %3510 = vadd.xlane.f32.xlu0 %v3509
        %v3511 = vpop.xlane.xlu0 %3510
        %v3512 = vrcp.pop %v3508
        %v3513 = vrcp.pop %v3511
        %v3514 = vmul.f32 %v3503, %v3512
        %v3515 = vmul.f32 %v3505, %v3513
        %v3516 = vpack.c.bf16 %v3514, %v3514
        %v3517 = vpack.c.bf16 %v3515, %v3515
        %3518 = vrot.lane.b32.xlu0 %v2958, 64
        %v3519 = vpop.permute.xlu0 %3518
        %v3521 = vsel %vm1717, %v3516, 0
        %v3524 = vsel %vm1745, %v3519, 0
        %3526 = vmatprep.subr.bf16.mxu0 0
        %3527 = vmatpush1.bf16.msra.mxu0 0
        %3528 = vmatprep.subr.bf16.mxu0 0
        %3529 = vmatpush1.bf16.msra.mxu0 0
        %3530 = vmatprep.subr.bf16.mxu0 0
        %3531 = vmatpush1.bf16.msra.mxu0 0
        %3532 = vmatprep.subr.bf16.mxu0 0
        %3533 = vmatpush1.bf16.msra.mxu0 0
        %3534 = vmatprep.subr.bf16.mxu0 0
        %3535 = vmatpush1.bf16.msra.mxu0 0
        %3536 = vmatprep.subr.bf16.mxu0 0
        %3537 = vmatpush1.bf16.msra.mxu0 0
        %3538 = vmatprep.subr.bf16.mxu0 0
        %3539 = vmatpush1.bf16.msra.mxu0 0
        %3540 = vmatprep.subr.bf16.mxu0 0
        %3541 = vmatpush1.bf16.msra.mxu0 %v3524
        %3542 = vmatprep.subr.bf16.mxu0 0
        %3543 = vmatpush2.bf16.msra.mxu0 0
        %3544 = vmatprep.subr.bf16.mxu0 0
        %3545 = vmatpush2.bf16.msra.mxu0 0
        %3546 = vmatprep.subr.bf16.mxu0 0
        %3547 = vmatpush2.bf16.msra.mxu0 0
        %3548 = vmatprep.subr.bf16.mxu0 0
        %3549 = vmatpush2.bf16.msra.mxu0 0
        %3550 = vmatprep.subr.bf16.mxu0 0
        %3551 = vmatpush2.bf16.msra.mxu0 0
        %3552 = vmatprep.subr.bf16.mxu0 0
        %3553 = vmatpush2.bf16.msra.mxu0 0
        %3554 = vmatprep.subr.bf16.mxu0 0
        %3555 = vmatpush2.bf16.msra.mxu0 0
        %3556 = vmatprep.subr.bf16.mxu0 0
        %3557 = vmatpush2.bf16.msra.mxu0 0
        %3558 = vmatprep.mubr.bf16.mxu0 0
        %3559 = vmatmul.mubr.bf16.gmra.mxu0 %v3521
        %v3560 = vpop.f32.mrf.mxu0
        %v3561 = vadd.f32 0.0, %v3560
        %v3562 = vpop.f32.mrf.mxu0
        %v3563 = vpop.f32.mrf.mxu0
        %v3564 = vpop.f32.mrf.mxu0
        %3565 = vdwg.mxu0
        %3566 = vrot.lane.b32.xlu0 %v2959, 64
        %v3567 = vpop.permute.xlu0 %3566
        %v3569 = vsel %vm1717, %v3517, 0
        %v3572 = vsel %vm1745, %v3567, 0
        %3574 = vmatprep.subr.bf16.mxu0 0
        %3575 = vmatpush1.bf16.msra.mxu0 0
        %3576 = vmatprep.subr.bf16.mxu0 0
        %3577 = vmatpush1.bf16.msra.mxu0 0
        %3578 = vmatprep.subr.bf16.mxu0 0
        %3579 = vmatpush1.bf16.msra.mxu0 0
        %3580 = vmatprep.subr.bf16.mxu0 0
        %3581 = vmatpush1.bf16.msra.mxu0 0
        %3582 = vmatprep.subr.bf16.mxu0 0
        %3583 = vmatpush1.bf16.msra.mxu0 0
        %3584 = vmatprep.subr.bf16.mxu0 0
        %3585 = vmatpush1.bf16.msra.mxu0 0
        %3586 = vmatprep.subr.bf16.mxu0 0
        %3587 = vmatpush1.bf16.msra.mxu0 0
        %3588 = vmatprep.subr.bf16.mxu0 0
        %3589 = vmatpush1.bf16.msra.mxu0 %v3572
        %3590 = vmatprep.subr.bf16.mxu0 0
        %3591 = vmatpush2.bf16.msra.mxu0 0
        %3592 = vmatprep.subr.bf16.mxu0 0
        %3593 = vmatpush2.bf16.msra.mxu0 0
        %3594 = vmatprep.subr.bf16.mxu0 0
        %3595 = vmatpush2.bf16.msra.mxu0 0
        %3596 = vmatprep.subr.bf16.mxu0 0
        %3597 = vmatpush2.bf16.msra.mxu0 0
        %3598 = vmatprep.subr.bf16.mxu0 0
        %3599 = vmatpush2.bf16.msra.mxu0 0
        %3600 = vmatprep.subr.bf16.mxu0 0
        %3601 = vmatpush2.bf16.msra.mxu0 0
        %3602 = vmatprep.subr.bf16.mxu0 0
        %3603 = vmatpush2.bf16.msra.mxu0 0
        %3604 = vmatprep.subr.bf16.mxu0 0
        %3605 = vmatpush2.bf16.msra.mxu0 0
        %3606 = vmatprep.mubr.bf16.mxu0 0
        %3607 = vmatmul.mubr.bf16.gmra.mxu0 %v3569
        %v3608 = vpop.f32.mrf.mxu0
        %v3609 = vadd.f32 0.0, %v3608
        %v3610 = vpop.f32.mrf.mxu0
        %v3611 = vpop.f32.mrf.mxu0
        %v3612 = vpop.f32.mrf.mxu0
        %3613 = vdwg.mxu0
        %3614 = vrot.lane.b32.xlu0 %v2954, 32
        %v3615 = vpop.permute.xlu0 %3614
        %3616 = vrot.lane.b32.xlu0 %v2956, 32
        %v3617 = vpop.permute.xlu0 %3616
        %v3619 = vsel %vm1624, %v3615, 0
        %v3622 = vsel %vm1624, %v3617, 0
        %3624 = vmatprep.subr.bf16.mxu0 0
        %3625 = vmatpush1.bf16.xpose.msra.mxu0 0
        %3626 = vmatprep.subr.bf16.mxu0 0
        %3627 = vmatpush1.bf16.xpose.msra.mxu0 0
        %3628 = vmatprep.subr.bf16.mxu0 0
        %3629 = vmatpush1.bf16.xpose.msra.mxu0 0
        %3630 = vmatprep.subr.bf16.mxu0 0
        %3631 = vmatpush1.bf16.xpose.msra.mxu0 0
        %3632 = vmatprep.subr.bf16.mxu0 0
        %3633 = vmatpush1.bf16.xpose.msra.mxu0 0
        %3634 = vmatprep.subr.bf16.mxu0 0
        %3635 = vmatpush1.bf16.xpose.msra.mxu0 0
        %3636 = vmatprep.subr.bf16.mxu0 0
        %3637 = vmatpush1.bf16.xpose.msra.mxu0 0
        %3638 = vmatprep.subr.bf16.mxu0 0
        %3639 = vmatpush1.bf16.xpose.msra.mxu0 %v3622
        %3640 = vmatprep.subr.bf16.mxu0 0
        %3641 = vmatpush2.bf16.xpose.msra.mxu0 0
        %3642 = vmatprep.subr.bf16.mxu0 0
        %3643 = vmatpush2.bf16.xpose.msra.mxu0 0
        %3644 = vmatprep.subr.bf16.mxu0 0
        %3645 = vmatpush2.bf16.xpose.msra.mxu0 0
        %3646 = vmatprep.subr.bf16.mxu0 0
        %3647 = vmatpush2.bf16.xpose.msra.mxu0 0
        %3648 = vmatprep.subr.bf16.mxu0 0
        %3649 = vmatpush2.bf16.xpose.msra.mxu0 0
        %3650 = vmatprep.subr.bf16.mxu0 0
        %3651 = vmatpush2.bf16.xpose.msra.mxu0 0
        %3652 = vmatprep.subr.bf16.mxu0 0
        %3653 = vmatpush2.bf16.xpose.msra.mxu0 0
        %3654 = vmatprep.subr.bf16.mxu0 0
        %3655 = vmatpush2.bf16.xpose.msra.mxu0 0
        %3656 = vmatprep.mubr.bf16.mxu0 0
        %3657 = vmatmul.mubr.bf16.gmra.mxu0 %v3619
        %v3658 = vpop.f32.mrf.mxu0
        %v3659 = vadd.f32 0.0, %v3658
        %v3660 = vpop.f32.mrf.mxu0
        %v3661 = vpop.f32.mrf.mxu0
        %v3662 = vpop.f32.mrf.mxu0
        %3663 = vdwg.mxu0
        %3664 = vrot.lane.b32.xlu0 %v2955, 32
        %v3665 = vpop.permute.xlu0 %3664
        %3666 = vrot.lane.b32.xlu0 %v2957, 32
        %v3667 = vpop.permute.xlu0 %3666
        %v3669 = vsel %vm1624, %v3665, 0
        %v3672 = vsel %vm1624, %v3667, 0
        %3674 = vmatprep.subr.bf16.mxu0 0
        %3675 = vmatpush1.bf16.xpose.msra.mxu0 0
        %3676 = vmatprep.subr.bf16.mxu0 0
        %3677 = vmatpush1.bf16.xpose.msra.mxu0 0
        %3678 = vmatprep.subr.bf16.mxu0 0
        %3679 = vmatpush1.bf16.xpose.msra.mxu0 0
        %3680 = vmatprep.subr.bf16.mxu0 0
        %3681 = vmatpush1.bf16.xpose.msra.mxu0 0
        %3682 = vmatprep.subr.bf16.mxu0 0
        %3683 = vmatpush1.bf16.xpose.msra.mxu0 0
        %3684 = vmatprep.subr.bf16.mxu0 0
        %3685 = vmatpush1.bf16.xpose.msra.mxu0 0
        %3686 = vmatprep.subr.bf16.mxu0 0
        %3687 = vmatpush1.bf16.xpose.msra.mxu0 0
        %3688 = vmatprep.subr.bf16.mxu0 0
        %3689 = vmatpush1.bf16.xpose.msra.mxu0 %v3672
        %3690 = vmatprep.subr.bf16.mxu0 0
        %3691 = vmatpush2.bf16.xpose.msra.mxu0 0
        %3692 = vmatprep.subr.bf16.mxu0 0
        %3693 = vmatpush2.bf16.xpose.msra.mxu0 0
        %3694 = vmatprep.subr.bf16.mxu0 0
        %3695 = vmatpush2.bf16.xpose.msra.mxu0 0
        %3696 = vmatprep.subr.bf16.mxu0 0
        %3697 = vmatpush2.bf16.xpose.msra.mxu0 0
        %3698 = vmatprep.subr.bf16.mxu0 0
        %3699 = vmatpush2.bf16.xpose.msra.mxu0 0
        %3700 = vmatprep.subr.bf16.mxu0 0
        %3701 = vmatpush2.bf16.xpose.msra.mxu0 0
        %3702 = vmatprep.subr.bf16.mxu0 0
        %3703 = vmatpush2.bf16.xpose.msra.mxu0 0
        %3704 = vmatprep.subr.bf16.mxu0 0
        %3705 = vmatpush2.bf16.xpose.msra.mxu0 0
        %3706 = vmatprep.mubr.bf16.mxu0 0
        %3707 = vmatmul.mubr.bf16.gmra.mxu0 %v3669
        %v3708 = vpop.f32.mrf.mxu0
        %v3709 = vadd.f32 0.0, %v3708
        %v3710 = vpop.f32.mrf.mxu0
        %v3711 = vpop.f32.mrf.mxu0
        %v3712 = vpop.f32.mrf.mxu0
        %3713 = vdwg.mxu0
        %v3714 = vsel %vm1717, %v3659, -inf
        %3715 = vmax.xlane.f32.xlu0 %v3714
        %v3716 = vpop.xlane.xlu0 %3715
        %v3717 = vsel %vm1717, %v3709, -inf
        %3718 = vmax.xlane.f32.xlu0 %v3717
        %v3719 = vpop.xlane.xlu0 %3718
        %v3720 = vsub.f32 %v3659, %v3716
        %v3721 = vsub.f32 %v3709, %v3719
        %v3722 = vmul.f32 %v3720, 1.442695
        %v3723 = vpow.pop %v3722
        %v3724 = vmul.f32 %v3721, 1.442695
        %v3725 = vpow.pop %v3724
        %v3726 = vsel %vm1717, %v3723, 0.0
        %3727 = vadd.xlane.f32.xlu0 %v3726
        %v3728 = vpop.xlane.xlu0 %3727
        %v3729 = vsel %vm1717, %v3725, 0.0
        %3730 = vadd.xlane.f32.xlu0 %v3729
        %v3731 = vpop.xlane.xlu0 %3730
        %v3732 = vrcp.pop %v3728
        %v3733 = vrcp.pop %v3731
        %v3734 = vmul.f32 %v3723, %v3732
        %v3735 = vmul.f32 %v3725, %v3733
        %v3736 = vpack.c.bf16 %v3734, %v3734
        %v3737 = vpack.c.bf16 %v3735, %v3735
        %3738 = vrot.lane.b32.xlu0 %v2958, 32
        %v3739 = vpop.permute.xlu0 %3738
        %v3741 = vsel %vm1717, %v3736, 0
        %v3744 = vsel %vm1745, %v3739, 0
        %3746 = vmatprep.subr.bf16.mxu0 0
        %3747 = vmatpush1.bf16.msra.mxu0 0
        %3748 = vmatprep.subr.bf16.mxu0 0
        %3749 = vmatpush1.bf16.msra.mxu0 0
        %3750 = vmatprep.subr.bf16.mxu0 0
        %3751 = vmatpush1.bf16.msra.mxu0 0
        %3752 = vmatprep.subr.bf16.mxu0 0
        %3753 = vmatpush1.bf16.msra.mxu0 0
        %3754 = vmatprep.subr.bf16.mxu0 0
        %3755 = vmatpush1.bf16.msra.mxu0 0
        %3756 = vmatprep.subr.bf16.mxu0 0
        %3757 = vmatpush1.bf16.msra.mxu0 0
        %3758 = vmatprep.subr.bf16.mxu0 0
        %3759 = vmatpush1.bf16.msra.mxu0 0
        %3760 = vmatprep.subr.bf16.mxu0 0
        %3761 = vmatpush1.bf16.msra.mxu0 %v3744
        %3762 = vmatprep.subr.bf16.mxu0 0
        %3763 = vmatpush2.bf16.msra.mxu0 0
        %3764 = vmatprep.subr.bf16.mxu0 0
        %3765 = vmatpush2.bf16.msra.mxu0 0
        %3766 = vmatprep.subr.bf16.mxu0 0
        %3767 = vmatpush2.bf16.msra.mxu0 0
        %3768 = vmatprep.subr.bf16.mxu0 0
        %3769 = vmatpush2.bf16.msra.mxu0 0
        %3770 = vmatprep.subr.bf16.mxu0 0
        %3771 = vmatpush2.bf16.msra.mxu0 0
        %3772 = vmatprep.subr.bf16.mxu0 0
        %3773 = vmatpush2.bf16.msra.mxu0 0
        %3774 = vmatprep.subr.bf16.mxu0 0
        %3775 = vmatpush2.bf16.msra.mxu0 0
        %3776 = vmatprep.subr.bf16.mxu0 0
        %3777 = vmatpush2.bf16.msra.mxu0 0
        %3778 = vmatprep.mubr.bf16.mxu0 0
        %3779 = vmatmul.mubr.bf16.gmra.mxu0 %v3741
        %v3780 = vpop.f32.mrf.mxu0
        %v3781 = vadd.f32 0.0, %v3780
        %v3782 = vpop.f32.mrf.mxu0
        %v3783 = vpop.f32.mrf.mxu0
        %v3784 = vpop.f32.mrf.mxu0
        %3785 = vdwg.mxu0
        %3786 = vrot.lane.b32.xlu0 %v2959, 32
        %v3787 = vpop.permute.xlu0 %3786
        %v3789 = vsel %vm1717, %v3737, 0
        %v3792 = vsel %vm1745, %v3787, 0
        %3794 = vmatprep.subr.bf16.mxu0 0
        %3795 = vmatpush1.bf16.msra.mxu0 0
        %3796 = vmatprep.subr.bf16.mxu0 0
        %3797 = vmatpush1.bf16.msra.mxu0 0
        %3798 = vmatprep.subr.bf16.mxu0 0
        %3799 = vmatpush1.bf16.msra.mxu0 0
        %3800 = vmatprep.subr.bf16.mxu0 0
        %3801 = vmatpush1.bf16.msra.mxu0 0
        %3802 = vmatprep.subr.bf16.mxu0 0
        %3803 = vmatpush1.bf16.msra.mxu0 0
        %3804 = vmatprep.subr.bf16.mxu0 0
        %3805 = vmatpush1.bf16.msra.mxu0 0
        %3806 = vmatprep.subr.bf16.mxu0 0
        %3807 = vmatpush1.bf16.msra.mxu0 0
        %3808 = vmatprep.subr.bf16.mxu0 0
        %3809 = vmatpush1.bf16.msra.mxu0 %v3792
        %3810 = vmatprep.subr.bf16.mxu0 0
        %3811 = vmatpush2.bf16.msra.mxu0 0
        %3812 = vmatprep.subr.bf16.mxu0 0
        %3813 = vmatpush2.bf16.msra.mxu0 0
        %3814 = vmatprep.subr.bf16.mxu0 0
        %3815 = vmatpush2.bf16.msra.mxu0 0
        %3816 = vmatprep.subr.bf16.mxu0 0
        %3817 = vmatpush2.bf16.msra.mxu0 0
        %3818 = vmatprep.subr.bf16.mxu0 0
        %3819 = vmatpush2.bf16.msra.mxu0 0
        %3820 = vmatprep.subr.bf16.mxu0 0
        %3821 = vmatpush2.bf16.msra.mxu0 0
        %3822 = vmatprep.subr.bf16.mxu0 0
        %3823 = vmatpush2.bf16.msra.mxu0 0
        %3824 = vmatprep.subr.bf16.mxu0 0
        %3825 = vmatpush2.bf16.msra.mxu0 0
        %3826 = vmatprep.mubr.bf16.mxu0 0
        %3827 = vmatmul.mubr.bf16.gmra.mxu0 %v3789
        %v3828 = vpop.f32.mrf.mxu0
        %v3829 = vadd.f32 0.0, %v3828
        %v3830 = vpop.f32.mrf.mxu0
        %v3831 = vpop.f32.mrf.mxu0
        %v3832 = vpop.f32.mrf.mxu0
        %3833 = vdwg.mxu0
        %3836 = vrot.lane.b32.xlu0 %v3340, 32
        %v3837 = vpop.permute.xlu0 %3836
        %3838 = vrot.lane.b32.xlu0 %v3389, 32
        %v3839 = vpop.permute.xlu0 %3838
        %3844 = vrot.lane.b32.xlu0 %v3561, 64
        %v3845 = vpop.permute.xlu0 %3844
        %3846 = vrot.lane.b32.xlu0 %v3609, 64
        %v3847 = vpop.permute.xlu0 %3846
        %3852 = vrot.lane.b32.xlu0 %v3781, 96
        %v3853 = vpop.permute.xlu0 %3852
        %3854 = vrot.lane.b32.xlu0 %v3829, 96
        %v3855 = vpop.permute.xlu0 %3854
        %v3858 = vsel %vm1624, %v3117, %v3837
        %v3859 = vsel %vm1624, %v3163, %v3839
        %v3860 = vsel %vm2527, %v3858, %v3845
        %v3861 = vsel %vm2527, %v3859, %v3847
        %v3862 = vsel %vm2530, %v3860, %v3853
        %v3863 = vsel %vm2530, %v3861, %v3855
        %v3864 = vpack.c.bf16 %v3863, %v3862
        %v3865 = vld [vmem:[%s1110] sm:$0xf]
        %v3866 = vld [vmem:[%s1110 + $0x4] sm:$0xf]
        %v3867 = vld [vmem:[%s1110 + $0x8] sm:$0xf]
        %v3868 = vld [vmem:[%s1110 + $0xc] sm:$0xf]
        %v3869 = vld [vmem:[%s1110 + $0x10] sm:$0xf]
        %v3870 = vld [vmem:[%s1110 + $0x14] sm:$0xf]
        %v3871 = vld [vmem:[%s1110 + $0x18] sm:$0xf]
        %v3872 = vld [vmem:[%s1110 + $0x1c] sm:$0xf]
        %v3873 = vld [vmem:[%s1110 + $0x20] sm:$0xf]
        %v3874 = vld [vmem:[%s1110 + $0x24] sm:$0xf]
        %v3875 = vld [vmem:[%s1110 + $0x28] sm:$0xf]
        %v3876 = vld [vmem:[%s1110 + $0x2c] sm:$0xf]
        %v3877 = vld [vmem:[%s1110 + $0x30] sm:$0xf]
        %v3878 = vld [vmem:[%s1110 + $0x34] sm:$0xf]
        %v3879 = vld [vmem:[%s1110 + $0x38] sm:$0xf]
        %v3880 = vld [vmem:[%s1110 + $0x3c] sm:$0xf]
        %v3881 = vld [vmem:[%s1118] sm:$0x1]
        %v3883 = vlaneseq
        %v3884 = vshrl.u32 %v3883, 7
        %v3885 = vsub.s32 0, %v3884
        %v3886 = vrot.slane %v3881, %v3885
        %v3904 = vunpack.c.l.b16 %v3865
        %v3905 = vunpack.c.l.b16 %v3866
        %v3906 = vunpack.c.l.b16 %v3867
        %v3907 = vunpack.c.l.b16 %v3868
        %v3908 = vunpack.c.l.b16 %v3869
        %v3909 = vunpack.c.l.b16 %v3870
        %v3910 = vunpack.c.l.b16 %v3871
        %v3911 = vunpack.c.l.b16 %v3872
        %v3912 = vunpack.c.l.b16 %v3873
        %v3913 = vunpack.c.l.b16 %v3874
        %v3914 = vunpack.c.l.b16 %v3875
        %v3915 = vunpack.c.l.b16 %v3876
        %v3916 = vunpack.c.l.b16 %v3877
        %v3917 = vunpack.c.l.b16 %v3878
        %v3918 = vunpack.c.l.b16 %v3879
        %v3919 = vunpack.c.l.b16 %v3880
        %v3920 = vpack.c.b16 %v3905, %v3904
        %v3921 = vpack.c.b16 %v3907, %v3906
        %v3922 = vpack.c.b16 %v3909, %v3908
        %v3923 = vpack.c.b16 %v3911, %v3910
        %v3924 = vpack.c.b16 %v3913, %v3912
        %v3925 = vpack.c.b16 %v3915, %v3914
        %v3926 = vpack.c.b16 %v3917, %v3916
        %v3927 = vpack.c.b16 %v3919, %v3918
        %3936 = vmatprep.subr.bf16.mxu0 0
        %3937 = vmatpush1.bf16.msra.mxu0 %v3927
        %3938 = vmatprep.subr.bf16.mxu0 0
        %3939 = vmatpush1.bf16.msra.mxu0 %v3926
        %3940 = vmatprep.subr.bf16.mxu0 0
        %3941 = vmatpush1.bf16.msra.mxu0 %v3925
        %3942 = vmatprep.subr.bf16.mxu0 0
        %3943 = vmatpush1.bf16.msra.mxu0 %v3924
        %3944 = vmatprep.subr.bf16.mxu0 0
        %3945 = vmatpush1.bf16.msra.mxu0 %v3923
        %3946 = vmatprep.subr.bf16.mxu0 0
        %3947 = vmatpush1.bf16.msra.mxu0 %v3922
        %3948 = vmatprep.subr.bf16.mxu0 0
        %3949 = vmatpush1.bf16.msra.mxu0 %v3921
        %3950 = vmatprep.subr.bf16.mxu0 0
        %3951 = vmatpush1.bf16.msra.mxu0 %v3920
        %3952 = vmatprep.subr.bf16.mxu0 0
        %3953 = vmatpush2.bf16.msra.mxu0 0
        %3954 = vmatprep.subr.bf16.mxu0 0
        %3955 = vmatpush2.bf16.msra.mxu0 0
        %3956 = vmatprep.subr.bf16.mxu0 0
        %3957 = vmatpush2.bf16.msra.mxu0 0
        %3958 = vmatprep.subr.bf16.mxu0 0
        %3959 = vmatpush2.bf16.msra.mxu0 0
        %3960 = vmatprep.subr.bf16.mxu0 0
        %3961 = vmatpush2.bf16.msra.mxu0 0
        %3962 = vmatprep.subr.bf16.mxu0 0
        %3963 = vmatpush2.bf16.msra.mxu0 0
        %3964 = vmatprep.subr.bf16.mxu0 0
        %3965 = vmatpush2.bf16.msra.mxu0 0
        %3966 = vmatprep.subr.bf16.mxu0 0
        %3967 = vmatpush2.bf16.msra.mxu0 0
        %3968 = vmatprep.mubr.bf16.mxu0 0
        %3969 = vmatmul.mubr.bf16.gmra.mxu0 %v3864
        %v3970 = vpop.f32.mrf.mxu0
        %v3971 = vadd.f32 %v3886, %v3970
        %v3972 = vpop.f32.mrf.mxu0
        %v3973 = vpop.f32.mrf.mxu0
        %v3974 = vadd.f32 %v3886, %v3973
        %v3975 = vpop.f32.mrf.mxu0
        %3976 = vdwg.mxu0
        %v3977 = vadd.f32 %v2687, %v3971
        %v3978 = vadd.f32 %v2688, %v3974
        %v3979 = vld [vmem:[%s1126] sm:$0x1]
        %v3980 = vld [vmem:[%s1134] sm:$0x1]
        %3981 = vadd.xlane.f32.xlu0 %v3977
        %v3982 = vpop.xlane.xlu0 %3981
        %3983 = vadd.xlane.f32.xlu0 %v3978
        %v3984 = vpop.xlane.xlu0 %3983
        %v3985 = vmul.f32 %v3982, %v2654
        %v3986 = vmul.f32 %v3984, %v2654
        %v3987 = vsub.f32 %v3977, %v3985
        %v3988 = vsub.f32 %v3978, %v3986
        %v3989 = vmul.f32 %v3987, %v3987
        %v3990 = vmul.f32 %v3988, %v3988
        %3991 = vadd.xlane.f32.xlu0 %v3989
        %v3992 = vpop.xlane.xlu0 %3991
        %3993 = vadd.xlane.f32.xlu0 %v3990
        %v3994 = vpop.xlane.xlu0 %3993
        %v3995 = vmul.f32 %v3992, %v2654
        %v3996 = vmul.f32 %v3994, %v2654
        %v3997 = vadd.f32 %v3995, 1e-05
        %v3998 = vadd.f32 %v3996, 1e-05
        %v3999 = vrsqrt.pop %v3997
        %v4000 = vrsqrt.pop %v3998
        %v4001 = vmul.f32 %v3987, %v3999
        %v4002 = vmul.f32 %v3988, %v4000
        %v4004 = vlaneseq
        %v4005 = vshrl.u32 %v4004, 7
        %v4006 = vsub.s32 0, %v4005
        %v4007 = vrot.slane %v3979, %v4006
        %v4009 = vmul.f32 %v4001, %v4007
        %v4010 = vmul.f32 %v4002, %v4007
        %v4012 = vlaneseq
        %v4013 = vshrl.u32 %v4012, 7
        %v4014 = vsub.s32 0, %v4013
        %v4015 = vrot.slane %v3980, %v4014
        %v4017 = vadd.f32 %v4009, %v4015
        %v4018 = vadd.f32 %v4010, %v4015
        %v4019 = vpack.c.bf16 %v4018, %v4017
        %v4020 = vld [vmem:[%s1337] sm:$0xff]
        %v4021 = vld [vmem:[%s1337 + $0x8] sm:$0xff]
        %v4022 = vld [vmem:[%s1337 + $0x10] sm:$0xff]
        %v4023 = vld [vmem:[%s1337 + $0x18] sm:$0xff]
        %v4024 = vld [vmem:[%s1337 + $0x20] sm:$0xff]
        %v4025 = vld [vmem:[%s1337 + $0x28] sm:$0xff]
        %v4026 = vld [vmem:[%s1337 + $0x30] sm:$0xff]
        %v4027 = vld [vmem:[%s1337 + $0x38] sm:$0xff]
        %v4028 = vld [vmem:[%s1337 + $0x40] sm:$0xff]
        %v4029 = vld [vmem:[%s1337 + $0x48] sm:$0xff]
        %v4030 = vld [vmem:[%s1337 + $0x50] sm:$0xff]
        %v4031 = vld [vmem:[%s1337 + $0x58] sm:$0xff]
        %v4032 = vld [vmem:[%s1337 + $0x60] sm:$0xff]
        %v4033 = vld [vmem:[%s1337 + $0x68] sm:$0xff]
        %v4034 = vld [vmem:[%s1337 + $0x70] sm:$0xff]
        %v4035 = vld [vmem:[%s1337 + $0x78] sm:$0xff]
        %v4036 = vld [vmem:[%s1143] sm:$0x3]
        %v4038 = vlaneseq
        %v4039 = vshrl.u32 %v4038, 7
        %v4040 = vsub.s32 0, %v4039
        %v4041 = vrot.slane %v4036, %v4040
        %v4042 = vlaneseq
        %v4043 = vshrl.u32 %v4042, 7
        %v4044 = vsub.s32 1, %v4043
        %v4045 = vrot.slane %v4036, %v4044
        %v4064 = vunpack.c.l.b16 %v4020
        %v4065 = vunpack.c.h.b16 %v4020
        %v4066 = vunpack.c.l.b16 %v4021
        %v4067 = vunpack.c.h.b16 %v4021
        %v4068 = vunpack.c.l.b16 %v4022
        %v4069 = vunpack.c.h.b16 %v4022
        %v4070 = vunpack.c.l.b16 %v4023
        %v4071 = vunpack.c.h.b16 %v4023
        %v4072 = vunpack.c.l.b16 %v4024
        %v4073 = vunpack.c.h.b16 %v4024
        %v4074 = vunpack.c.l.b16 %v4025
        %v4075 = vunpack.c.h.b16 %v4025
        %v4076 = vunpack.c.l.b16 %v4026
        %v4077 = vunpack.c.h.b16 %v4026
        %v4078 = vunpack.c.l.b16 %v4027
        %v4079 = vunpack.c.h.b16 %v4027
        %v4080 = vunpack.c.l.b16 %v4028
        %v4081 = vunpack.c.h.b16 %v4028
        %v4082 = vunpack.c.l.b16 %v4029
        %v4083 = vunpack.c.h.b16 %v4029
        %v4084 = vunpack.c.l.b16 %v4030
        %v4085 = vunpack.c.h.b16 %v4030
        %v4086 = vunpack.c.l.b16 %v4031
        %v4087 = vunpack.c.h.b16 %v4031
        %v4088 = vunpack.c.l.b16 %v4032
        %v4089 = vunpack.c.h.b16 %v4032
        %v4090 = vunpack.c.l.b16 %v4033
        %v4091 = vunpack.c.h.b16 %v4033
        %v4092 = vunpack.c.l.b16 %v4034
        %v4093 = vunpack.c.h.b16 %v4034
        %v4094 = vunpack.c.l.b16 %v4035
        %v4095 = vunpack.c.h.b16 %v4035
        %v4096 = vpack.c.b16 %v4066, %v4064
        %v4097 = vpack.c.b16 %v4067, %v4065
        %v4098 = vpack.c.b16 %v4070, %v4068
        %v4099 = vpack.c.b16 %v4071, %v4069
        %v4100 = vpack.c.b16 %v4074, %v4072
        %v4101 = vpack.c.b16 %v4075, %v4073
        %v4102 = vpack.c.b16 %v4078, %v4076
        %v4103 = vpack.c.b16 %v4079, %v4077
        %v4104 = vpack.c.b16 %v4082, %v4080
        %v4105 = vpack.c.b16 %v4083, %v4081
        %v4106 = vpack.c.b16 %v4086, %v4084
        %v4107 = vpack.c.b16 %v4087, %v4085
        %v4108 = vpack.c.b16 %v4090, %v4088
        %v4109 = vpack.c.b16 %v4091, %v4089
        %v4110 = vpack.c.b16 %v4094, %v4092
        %v4111 = vpack.c.b16 %v4095, %v4093
        %4128 = vmatprep.subr.bf16.mxu0 %v4111
        %4129 = vmatpush1.bf16.msra.mxu0 %v4110
        %4130 = vmatprep.subr.bf16.mxu0 %v4109
        %4131 = vmatpush1.bf16.msra.mxu0 %v4108
        %4132 = vmatprep.subr.bf16.mxu0 %v4107
        %4133 = vmatpush1.bf16.msra.mxu0 %v4106
        %4134 = vmatprep.subr.bf16.mxu0 %v4105
        %4135 = vmatpush1.bf16.msra.mxu0 %v4104
        %4136 = vmatprep.subr.bf16.mxu0 %v4103
        %4137 = vmatpush1.bf16.msra.mxu0 %v4102
        %4138 = vmatprep.subr.bf16.mxu0 %v4101
        %4139 = vmatpush1.bf16.msra.mxu0 %v4100
        %4140 = vmatprep.subr.bf16.mxu0 %v4099
        %4141 = vmatpush1.bf16.msra.mxu0 %v4098
        %4142 = vmatprep.subr.bf16.mxu0 %v4097
        %4143 = vmatpush1.bf16.msra.mxu0 %v4096
        %4144 = vmatprep.subr.bf16.mxu0 0
        %4145 = vmatpush2.bf16.msra.mxu0 0
        %4146 = vmatprep.subr.bf16.mxu0 0
        %4147 = vmatpush2.bf16.msra.mxu0 0
        %4148 = vmatprep.subr.bf16.mxu0 0
        %4149 = vmatpush2.bf16.msra.mxu0 0
        %4150 = vmatprep.subr.bf16.mxu0 0
        %4151 = vmatpush2.bf16.msra.mxu0 0
        %4152 = vmatprep.subr.bf16.mxu0 0
        %4153 = vmatpush2.bf16.msra.mxu0 0
        %4154 = vmatprep.subr.bf16.mxu0 0
        %4155 = vmatpush2.bf16.msra.mxu0 0
        %4156 = vmatprep.subr.bf16.mxu0 0
        %4157 = vmatpush2.bf16.msra.mxu0 0
        %4158 = vmatprep.subr.bf16.mxu0 0
        %4159 = vmatpush2.bf16.msra.mxu0 0
        %4160 = vmatprep.mubr.bf16.mxu0 0
        %4161 = vmatmul.mubr.bf16.gmra.mxu0 %v4019
        %v4162 = vpop.f32.mrf.mxu0
        %v4163 = vadd.f32 %v4041, %v4162
        %v4164 = vpop.f32.mrf.mxu0
        %v4165 = vadd.f32 %v4045, %v4164
        %v4166 = vpop.f32.mrf.mxu0
        %v4167 = vadd.f32 %v4041, %v4166
        %v4168 = vpop.f32.mrf.mxu0
        %v4169 = vadd.f32 %v4045, %v4168
        %4170 = vdwg.mxu0
        %v4171 = vmax.f32 %v4163, 0.0
        %v4172 = vmax.f32 %v4165, 0.0
        %v4173 = vmax.f32 %v4167, 0.0
        %v4174 = vmax.f32 %v4169, 0.0
        %v4175 = vpack.c.bf16 %v4173, %v4171
        %v4176 = vpack.c.bf16 %v4174, %v4172
        %v4177 = vld [vmem:[%s1342] sm:$0xf]
        %v4178 = vld [vmem:[%s1342 + $0x4] sm:$0xf]
        %v4179 = vld [vmem:[%s1342 + $0x8] sm:$0xf]
        %v4180 = vld [vmem:[%s1342 + $0xc] sm:$0xf]
        %v4181 = vld [vmem:[%s1342 + $0x10] sm:$0xf]
        %v4182 = vld [vmem:[%s1342 + $0x14] sm:$0xf]
        %v4183 = vld [vmem:[%s1342 + $0x18] sm:$0xf]
        %v4184 = vld [vmem:[%s1342 + $0x1c] sm:$0xf]
        %v4185 = vld [vmem:[%s1342 + $0x20] sm:$0xf]
        %v4186 = vld [vmem:[%s1342 + $0x24] sm:$0xf]
        %v4187 = vld [vmem:[%s1342 + $0x28] sm:$0xf]
        %v4188 = vld [vmem:[%s1342 + $0x2c] sm:$0xf]
        %v4189 = vld [vmem:[%s1342 + $0x30] sm:$0xf]
        %v4190 = vld [vmem:[%s1342 + $0x34] sm:$0xf]
        %v4191 = vld [vmem:[%s1342 + $0x38] sm:$0xf]
        %v4192 = vld [vmem:[%s1342 + $0x3c] sm:$0xf]
        %v4193 = vld [vmem:[%s1342 + $0x40] sm:$0xf]
        %v4194 = vld [vmem:[%s1342 + $0x44] sm:$0xf]
        %v4195 = vld [vmem:[%s1342 + $0x48] sm:$0xf]
        %v4196 = vld [vmem:[%s1342 + $0x4c] sm:$0xf]
        %v4197 = vld [vmem:[%s1342 + $0x50] sm:$0xf]
        %v4198 = vld [vmem:[%s1342 + $0x54] sm:$0xf]
        %v4199 = vld [vmem:[%s1342 + $0x58] sm:$0xf]
        %v4200 = vld [vmem:[%s1342 + $0x5c] sm:$0xf]
        %v4201 = vld [vmem:[%s1342 + $0x60] sm:$0xf]
        %v4202 = vld [vmem:[%s1342 + $0x64] sm:$0xf]
        %v4203 = vld [vmem:[%s1342 + $0x68] sm:$0xf]
        %v4204 = vld [vmem:[%s1342 + $0x6c] sm:$0xf]
        %v4205 = vld [vmem:[%s1342 + $0x70] sm:$0xf]
        %v4206 = vld [vmem:[%s1342 + $0x74] sm:$0xf]
        %v4207 = vld [vmem:[%s1342 + $0x78] sm:$0xf]
        %v4208 = vld [vmem:[%s1342 + $0x7c] sm:$0xf]
        %v4209 = vld [vmem:[%s1151] sm:$0x1]
        %v4211 = vlaneseq
        %v4212 = vshrl.u32 %v4211, 7
        %v4213 = vsub.s32 0, %v4212
        %v4214 = vrot.slane %v4209, %v4213
        %v4248 = vunpack.c.l.b16 %v4177
        %v4249 = vunpack.c.l.b16 %v4178
        %v4250 = vunpack.c.l.b16 %v4179
        %v4251 = vunpack.c.l.b16 %v4180
        %v4252 = vunpack.c.l.b16 %v4181
        %v4253 = vunpack.c.l.b16 %v4182
        %v4254 = vunpack.c.l.b16 %v4183
        %v4255 = vunpack.c.l.b16 %v4184
        %v4256 = vunpack.c.l.b16 %v4185
        %v4257 = vunpack.c.l.b16 %v4186
        %v4258 = vunpack.c.l.b16 %v4187
        %v4259 = vunpack.c.l.b16 %v4188
        %v4260 = vunpack.c.l.b16 %v4189
        %v4261 = vunpack.c.l.b16 %v4190
        %v4262 = vunpack.c.l.b16 %v4191
        %v4263 = vunpack.c.l.b16 %v4192
        %v4264 = vunpack.c.l.b16 %v4193
        %v4265 = vunpack.c.l.b16 %v4194
        %v4266 = vunpack.c.l.b16 %v4195
        %v4267 = vunpack.c.l.b16 %v4196
        %v4268 = vunpack.c.l.b16 %v4197
        %v4269 = vunpack.c.l.b16 %v4198
        %v4270 = vunpack.c.l.b16 %v4199
        %v4271 = vunpack.c.l.b16 %v4200
        %v4272 = vunpack.c.l.b16 %v4201
        %v4273 = vunpack.c.l.b16 %v4202
        %v4274 = vunpack.c.l.b16 %v4203
        %v4275 = vunpack.c.l.b16 %v4204
        %v4276 = vunpack.c.l.b16 %v4205
        %v4277 = vunpack.c.l.b16 %v4206
        %v4278 = vunpack.c.l.b16 %v4207
        %v4279 = vunpack.c.l.b16 %v4208
        %v4280 = vpack.c.b16 %v4249, %v4248
        %v4281 = vpack.c.b16 %v4251, %v4250
        %v4282 = vpack.c.b16 %v4253, %v4252
        %v4283 = vpack.c.b16 %v4255, %v4254
        %v4284 = vpack.c.b16 %v4257, %v4256
        %v4285 = vpack.c.b16 %v4259, %v4258
        %v4286 = vpack.c.b16 %v4261, %v4260
        %v4287 = vpack.c.b16 %v4263, %v4262
        %v4288 = vpack.c.b16 %v4265, %v4264
        %v4289 = vpack.c.b16 %v4267, %v4266
        %v4290 = vpack.c.b16 %v4269, %v4268
        %v4291 = vpack.c.b16 %v4271, %v4270
        %v4292 = vpack.c.b16 %v4273, %v4272
        %v4293 = vpack.c.b16 %v4275, %v4274
        %v4294 = vpack.c.b16 %v4277, %v4276
        %v4295 = vpack.c.b16 %v4279, %v4278
        %4312 = vmatprep.subr.bf16.mxu0 0
        %4313 = vmatpush1.bf16.msra.mxu0 %v4287
        %4314 = vmatprep.subr.bf16.mxu0 0
        %4315 = vmatpush1.bf16.msra.mxu0 %v4286
        %4316 = vmatprep.subr.bf16.mxu0 0
        %4317 = vmatpush1.bf16.msra.mxu0 %v4285
        %4318 = vmatprep.subr.bf16.mxu0 0
        %4319 = vmatpush1.bf16.msra.mxu0 %v4284
        %4320 = vmatprep.subr.bf16.mxu0 0
        %4321 = vmatpush1.bf16.msra.mxu0 %v4283
        %4322 = vmatprep.subr.bf16.mxu0 0
        %4323 = vmatpush1.bf16.msra.mxu0 %v4282
        %4324 = vmatprep.subr.bf16.mxu0 0
        %4325 = vmatpush1.bf16.msra.mxu0 %v4281
        %4326 = vmatprep.subr.bf16.mxu0 0
        %4327 = vmatpush1.bf16.msra.mxu0 %v4280
        %4328 = vmatprep.subr.bf16.mxu0 0
        %4329 = vmatpush2.bf16.msra.mxu0 %v4295
        %4330 = vmatprep.subr.bf16.mxu0 0
        %4331 = vmatpush2.bf16.msra.mxu0 %v4294
        %4332 = vmatprep.subr.bf16.mxu0 0
        %4333 = vmatpush2.bf16.msra.mxu0 %v4293
        %4334 = vmatprep.subr.bf16.mxu0 0
        %4335 = vmatpush2.bf16.msra.mxu0 %v4292
        %4336 = vmatprep.subr.bf16.mxu0 0
        %4337 = vmatpush2.bf16.msra.mxu0 %v4291
        %4338 = vmatprep.subr.bf16.mxu0 0
        %4339 = vmatpush2.bf16.msra.mxu0 %v4290
        %4340 = vmatprep.subr.bf16.mxu0 0
        %4341 = vmatpush2.bf16.msra.mxu0 %v4289
        %4342 = vmatprep.subr.bf16.mxu0 0
        %4343 = vmatpush2.bf16.msra.mxu0 %v4288
        %4344 = vmatprep.mubr.bf16.mxu0 %v4176
        %4345 = vmatmul.mubr.bf16.gmra.mxu0 %v4175
        %v4346 = vpop.f32.mrf.mxu0
        %v4347 = vadd.f32 %v4214, %v4346
        %v4348 = vpop.f32.mrf.mxu0
        %v4349 = vpop.f32.mrf.mxu0
        %v4350 = vadd.f32 %v4214, %v4349
        %v4351 = vpop.f32.mrf.mxu0
        %4352 = vdwg.mxu0
        %v4353 = vadd.f32 %v4017, %v4347
        %v4354 = vadd.f32 %v4018, %v4350
        %v4355 = vld [vmem:[%s1159] sm:$0x1]
        %v4356 = vld [vmem:[%s1167] sm:$0x1]
        %4357 = vadd.xlane.f32.xlu0 %v4353
        %v4358 = vpop.xlane.xlu0 %4357
        %4359 = vadd.xlane.f32.xlu0 %v4354
        %v4360 = vpop.xlane.xlu0 %4359
        %v4361 = vmul.f32 %v4358, %v2654
        %v4362 = vmul.f32 %v4360, %v2654
        %v4363 = vsub.f32 %v4353, %v4361
        %v4364 = vsub.f32 %v4354, %v4362
        %v4365 = vmul.f32 %v4363, %v4363
        %v4366 = vmul.f32 %v4364, %v4364
        %4367 = vadd.xlane.f32.xlu0 %v4365
        %v4368 = vpop.xlane.xlu0 %4367
        %4369 = vadd.xlane.f32.xlu0 %v4366
        %v4370 = vpop.xlane.xlu0 %4369
        %v4371 = vmul.f32 %v4368, %v2654
        %v4372 = vmul.f32 %v4370, %v2654
        %v4373 = vadd.f32 %v4371, 1e-05
        %v4374 = vadd.f32 %v4372, 1e-05
        %v4375 = vrsqrt.pop %v4373
        %v4376 = vrsqrt.pop %v4374
        %v4377 = vmul.f32 %v4363, %v4375
        %v4378 = vmul.f32 %v4364, %v4376
        %v4380 = vlaneseq
        %v4381 = vshrl.u32 %v4380, 7
        %v4382 = vsub.s32 0, %v4381
        %v4383 = vrot.slane %v4355, %v4382
        %v4385 = vmul.f32 %v4377, %v4383
        %v4386 = vmul.f32 %v4378, %v4383
        %v4388 = vlaneseq
        %v4389 = vshrl.u32 %v4388, 7
        %v4390 = vsub.s32 0, %v4389
        %v4391 = vrot.slane %v4356, %v4390
        %v4393 = vadd.f32 %v4385, %v4391
        %v4394 = vadd.f32 %v4386, %v4391
        %4395 = vst [vmem:[#allocation2] sm:$0xff] %v4393
        %4396 = vst [vmem:[#allocation2 + $0x8] sm:$0xff] %v4394
        %p4397 = scmp.eq.s32.totalorder %s61, 1
        // Predicated region
        $region189: #{transformer_forward.3} parent=115 // pred_check
          %p4398 = pneg %p4397
        $region190: #{transformer_forward.3} parent=115 // pred_check_branch
          %4400 = sbr.rel (%p4398) target = $region192
        $region191: #{transformer_forward.3} parent=115 // pred_region
          %v4401 = vpack.c.bf16 %v4394, %v4393
          %v4402 = vld [vmem:[#allocation27] sm:$0xff]
          %v4403 = vld [vmem:[#allocation27 + $0x8] sm:$0xff]
          %v4404 = vld [vmem:[#allocation27 + $0x10] sm:$0xff]
          %v4405 = vld [vmem:[#allocation27 + $0x18] sm:$0xff]
          %v4406 = vld [vmem:[#allocation27 + $0x20] sm:$0xff]
          %v4407 = vld [vmem:[#allocation27 + $0x28] sm:$0xff]
          %v4408 = vld [vmem:[#allocation27 + $0x30] sm:$0xff]
          %v4409 = vld [vmem:[#allocation27 + $0x38] sm:$0xff]
          %v4410 = vld [vmem:[#allocation27 + $0x40] sm:$0xff]
          %v4411 = vld [vmem:[#allocation27 + $0x48] sm:$0xff]
          %v4412 = vld [vmem:[#allocation27 + $0x50] sm:$0xff]
          %v4413 = vld [vmem:[#allocation27 + $0x58] sm:$0xff]
          %v4414 = vld [vmem:[#allocation27 + $0x60] sm:$0xff]
          %v4415 = vld [vmem:[#allocation27 + $0x68] sm:$0xff]
          %v4416 = vld [vmem:[#allocation27 + $0x70] sm:$0xff]
          %v4417 = vld [vmem:[#allocation27 + $0x78] sm:$0xff]
          %v4418 = vld [vmem:[#allocation27 + $0x80] sm:$0xff]
          %v4419 = vld [vmem:[#allocation27 + $0x88] sm:$0xff]
          %v4420 = vld [vmem:[#allocation27 + $0x90] sm:$0xff]
          %v4421 = vld [vmem:[#allocation27 + $0x98] sm:$0xff]
          %v4422 = vld [vmem:[#allocation27 + $0xa0] sm:$0xff]
          %v4423 = vld [vmem:[#allocation27 + $0xa8] sm:$0xff]
          %v4424 = vld [vmem:[#allocation27 + $0xb0] sm:$0xff]
          %v4425 = vld [vmem:[#allocation27 + $0xb8] sm:$0xff]
          %v4426 = vld [vmem:[#allocation27 + $0xc0] sm:$0xff]
          %v4427 = vld [vmem:[#allocation27 + $0xc8] sm:$0xff]
          %v4428 = vld [vmem:[#allocation27 + $0xd0] sm:$0xff]
          %v4429 = vld [vmem:[#allocation27 + $0xd8] sm:$0xff]
          %v4430 = vld [vmem:[#allocation27 + $0xe0] sm:$0xff]
          %v4431 = vld [vmem:[#allocation27 + $0xe8] sm:$0xff]
          %v4432 = vld [vmem:[#allocation27 + $0xf0] sm:$0xff]
          %v4433 = vld [vmem:[#allocation27 + $0xf8] sm:$0xff]
          %v4434 = vld [vmem:[#allocation29] sm:$0xf]
          %v4436 = vlaneseq
          %v4437 = vshrl.u32 %v4436, 7
          %v4438 = vsub.s32 0, %v4437
          %v4439 = vrot.slane %v4434, %v4438
          %v4440 = vlaneseq
          %v4441 = vshrl.u32 %v4440, 7
          %v4442 = vsub.s32 1, %v4441
          %v4443 = vrot.slane %v4434, %v4442
          %v4444 = vlaneseq
          %v4445 = vshrl.u32 %v4444, 7
          %v4446 = vsub.s32 2, %v4445
          %v4447 = vrot.slane %v4434, %v4446
          %v4448 = vlaneseq
          %v4449 = vshrl.u32 %v4448, 7
          %v4450 = vsub.s32 3, %v4449
          %v4451 = vrot.slane %v4434, %v4450
          %v4488 = vunpack.c.l.b16 %v4402
          %v4489 = vunpack.c.h.b16 %v4402
          %v4490 = vunpack.c.l.b16 %v4403
          %v4491 = vunpack.c.h.b16 %v4403
          %v4492 = vunpack.c.l.b16 %v4404
          %v4493 = vunpack.c.h.b16 %v4404
          %v4494 = vunpack.c.l.b16 %v4405
          %v4495 = vunpack.c.h.b16 %v4405
          %v4496 = vunpack.c.l.b16 %v4406
          %v4497 = vunpack.c.h.b16 %v4406
          %v4498 = vunpack.c.l.b16 %v4407
          %v4499 = vunpack.c.h.b16 %v4407
          %v4500 = vunpack.c.l.b16 %v4408
          %v4501 = vunpack.c.h.b16 %v4408
          %v4502 = vunpack.c.l.b16 %v4409
          %v4503 = vunpack.c.h.b16 %v4409
          %v4504 = vunpack.c.l.b16 %v4410
          %v4505 = vunpack.c.h.b16 %v4410
          %v4506 = vunpack.c.l.b16 %v4411
          %v4507 = vunpack.c.h.b16 %v4411
          %v4508 = vunpack.c.l.b16 %v4412
          %v4509 = vunpack.c.h.b16 %v4412
          %v4510 = vunpack.c.l.b16 %v4413
          %v4511 = vunpack.c.h.b16 %v4413
          %v4512 = vunpack.c.l.b16 %v4414
          %v4513 = vunpack.c.h.b16 %v4414
          %v4514 = vunpack.c.l.b16 %v4415
          %v4515 = vunpack.c.h.b16 %v4415
          %v4516 = vunpack.c.l.b16 %v4416
          %v4517 = vunpack.c.h.b16 %v4416
          %v4518 = vunpack.c.l.b16 %v4417
          %v4519 = vunpack.c.h.b16 %v4417
          %v4520 = vunpack.c.l.b16 %v4418
          %v4521 = vunpack.c.h.b16 %v4418
          %v4522 = vunpack.c.l.b16 %v4419
          %v4523 = vunpack.c.h.b16 %v4419
          %v4524 = vunpack.c.l.b16 %v4420
          %v4525 = vunpack.c.h.b16 %v4420
          %v4526 = vunpack.c.l.b16 %v4421
          %v4527 = vunpack.c.h.b16 %v4421
          %v4528 = vunpack.c.l.b16 %v4422
          %v4529 = vunpack.c.h.b16 %v4422
          %v4530 = vunpack.c.l.b16 %v4423
          %v4531 = vunpack.c.h.b16 %v4423
          %v4532 = vunpack.c.l.b16 %v4424
          %v4533 = vunpack.c.h.b16 %v4424
          %v4534 = vunpack.c.l.b16 %v4425
          %v4535 = vunpack.c.h.b16 %v4425
          %v4536 = vunpack.c.l.b16 %v4426
          %v4537 = vunpack.c.h.b16 %v4426
          %v4538 = vunpack.c.l.b16 %v4427
          %v4539 = vunpack.c.h.b16 %v4427
          %v4540 = vunpack.c.l.b16 %v4428
          %v4541 = vunpack.c.h.b16 %v4428
          %v4542 = vunpack.c.l.b16 %v4429
          %v4543 = vunpack.c.h.b16 %v4429
          %v4544 = vunpack.c.l.b16 %v4430
          %v4545 = vunpack.c.h.b16 %v4430
          %v4546 = vunpack.c.l.b16 %v4431
          %v4547 = vunpack.c.h.b16 %v4431
          %v4548 = vunpack.c.l.b16 %v4432
          %v4549 = vunpack.c.h.b16 %v4432
          %v4550 = vunpack.c.l.b16 %v4433
          %v4551 = vunpack.c.h.b16 %v4433
          %v4552 = vpack.c.b16 %v4492, %v4488
          %v4553 = vpack.c.b16 %v4493, %v4489
          %v4554 = vpack.c.b16 %v4494, %v4490
          %v4555 = vpack.c.b16 %v4495, %v4491
          %v4556 = vpack.c.b16 %v4500, %v4496
          %v4557 = vpack.c.b16 %v4501, %v4497
          %v4558 = vpack.c.b16 %v4502, %v4498
          %v4559 = vpack.c.b16 %v4503, %v4499
          %v4560 = vpack.c.b16 %v4508, %v4504
          %v4561 = vpack.c.b16 %v4509, %v4505
          %v4562 = vpack.c.b16 %v4510, %v4506
          %v4563 = vpack.c.b16 %v4511, %v4507
          %v4564 = vpack.c.b16 %v4516, %v4512
          %v4565 = vpack.c.b16 %v4517, %v4513
          %v4566 = vpack.c.b16 %v4518, %v4514
          %v4567 = vpack.c.b16 %v4519, %v4515
          %v4568 = vpack.c.b16 %v4524, %v4520
          %v4569 = vpack.c.b16 %v4525, %v4521
          %v4570 = vpack.c.b16 %v4526, %v4522
          %v4571 = vpack.c.b16 %v4527, %v4523
          %v4572 = vpack.c.b16 %v4532, %v4528
          %v4573 = vpack.c.b16 %v4533, %v4529
          %v4574 = vpack.c.b16 %v4534, %v4530
          %v4575 = vpack.c.b16 %v4535, %v4531
          %v4576 = vpack.c.b16 %v4540, %v4536
          %v4577 = vpack.c.b16 %v4541, %v4537
          %v4578 = vpack.c.b16 %v4542, %v4538
          %v4579 = vpack.c.b16 %v4543, %v4539
          %v4580 = vpack.c.b16 %v4548, %v4544
          %v4581 = vpack.c.b16 %v4549, %v4545
          %v4582 = vpack.c.b16 %v4550, %v4546
          %v4583 = vpack.c.b16 %v4551, %v4547
          %4616 = vmatprep.subr.bf16.mxu0 %v4581
          %4617 = vmatpush1.bf16.msra.mxu0 %v4580
          %4618 = vmatprep.subr.bf16.mxu0 %v4577
          %4619 = vmatpush1.bf16.msra.mxu0 %v4576
          %4620 = vmatprep.subr.bf16.mxu0 %v4573
          %4621 = vmatpush1.bf16.msra.mxu0 %v4572
          %4622 = vmatprep.subr.bf16.mxu0 %v4569
          %4623 = vmatpush1.bf16.msra.mxu0 %v4568
          %4624 = vmatprep.subr.bf16.mxu0 %v4565
          %4625 = vmatpush1.bf16.msra.mxu0 %v4564
          %4626 = vmatprep.subr.bf16.mxu0 %v4561
          %4627 = vmatpush1.bf16.msra.mxu0 %v4560
          %4628 = vmatprep.subr.bf16.mxu0 %v4557
          %4629 = vmatpush1.bf16.msra.mxu0 %v4556
          %4630 = vmatprep.subr.bf16.mxu0 %v4553
          %4631 = vmatpush1.bf16.msra.mxu0 %v4552
          %4632 = vmatprep.subr.bf16.mxu0 0
          %4633 = vmatpush2.bf16.msra.mxu0 0
          %4634 = vmatprep.subr.bf16.mxu0 0
          %4635 = vmatpush2.bf16.msra.mxu0 0
          %4636 = vmatprep.subr.bf16.mxu0 0
          %4637 = vmatpush2.bf16.msra.mxu0 0
          %4638 = vmatprep.subr.bf16.mxu0 0
          %4639 = vmatpush2.bf16.msra.mxu0 0
          %4640 = vmatprep.subr.bf16.mxu0 0
          %4641 = vmatpush2.bf16.msra.mxu0 0
          %4642 = vmatprep.subr.bf16.mxu0 0
          %4643 = vmatpush2.bf16.msra.mxu0 0
          %4644 = vmatprep.subr.bf16.mxu0 0
          %4645 = vmatpush2.bf16.msra.mxu0 0
          %4646 = vmatprep.subr.bf16.mxu0 0
          %4647 = vmatpush2.bf16.msra.mxu0 0
          %4648 = vmatprep.mubr.bf16.mxu0 0
          %4649 = vmatmul.mubr.bf16.gmra.mxu0 %v4401
          %v4650 = vpop.f32.mrf.mxu0
          %v4651 = vadd.f32 %v4439, %v4650
          %v4652 = vpop.f32.mrf.mxu0
          %v4653 = vadd.f32 %v4443, %v4652
          %v4654 = vpop.f32.mrf.mxu0
          %v4655 = vadd.f32 %v4439, %v4654
          %v4656 = vpop.f32.mrf.mxu0
          %v4657 = vadd.f32 %v4443, %v4656
          %4658 = vdwg.mxu0
          %4659 = vmatprep.subr.bf16.mxu0 %v4583
          %4660 = vmatpush1.bf16.msra.mxu0 %v4582
          %4661 = vmatprep.subr.bf16.mxu0 %v4579
          %4662 = vmatpush1.bf16.msra.mxu0 %v4578
          %4663 = vmatprep.subr.bf16.mxu0 %v4575
          %4664 = vmatpush1.bf16.msra.mxu0 %v4574
          %4665 = vmatprep.subr.bf16.mxu0 %v4571
          %4666 = vmatpush1.bf16.msra.mxu0 %v4570
          %4667 = vmatprep.subr.bf16.mxu0 %v4567
          %4668 = vmatpush1.bf16.msra.mxu0 %v4566
          %4669 = vmatprep.subr.bf16.mxu0 %v4563
          %4670 = vmatpush1.bf16.msra.mxu0 %v4562
          %4671 = vmatprep.subr.bf16.mxu0 %v4559
          %4672 = vmatpush1.bf16.msra.mxu0 %v4558
          %4673 = vmatprep.subr.bf16.mxu0 %v4555
          %4674 = vmatpush1.bf16.msra.mxu0 %v4554
          %4675 = vmatprep.subr.bf16.mxu0 0
          %4676 = vmatpush2.bf16.msra.mxu0 0
          %4677 = vmatprep.subr.bf16.mxu0 0
          %4678 = vmatpush2.bf16.msra.mxu0 0
          %4679 = vmatprep.subr.bf16.mxu0 0
          %4680 = vmatpush2.bf16.msra.mxu0 0
          %4681 = vmatprep.subr.bf16.mxu0 0
          %4682 = vmatpush2.bf16.msra.mxu0 0
          %4683 = vmatprep.subr.bf16.mxu0 0
          %4684 = vmatpush2.bf16.msra.mxu0 0
          %4685 = vmatprep.subr.bf16.mxu0 0
          %4686 = vmatpush2.bf16.msra.mxu0 0
          %4687 = vmatprep.subr.bf16.mxu0 0
          %4688 = vmatpush2.bf16.msra.mxu0 0
          %4689 = vmatprep.subr.bf16.mxu0 0
          %4690 = vmatpush2.bf16.msra.mxu0 0
          %4691 = vmatprep.mubr.bf16.mxu0 0
          %4692 = vmatmul.mubr.bf16.gmra.mxu0 %v4401
          %v4693 = vpop.f32.mrf.mxu0
          %v4694 = vadd.f32 %v4447, %v4693
          %v4695 = vpop.f32.mrf.mxu0
          %v4696 = vadd.f32 %v4451, %v4695
          %v4697 = vpop.f32.mrf.mxu0
          %v4698 = vadd.f32 %v4447, %v4697
          %v4699 = vpop.f32.mrf.mxu0
          %v4700 = vadd.f32 %v4451, %v4699
          %4701 = vdwg.mxu0
          %4702 = vst [vmem:[#allocation30] sm:$0xff] %v4651
          %4703 = vst [vmem:[#allocation30 + $0x8] sm:$0xff] %v4653
          %4704 = vst [vmem:[#allocation30 + $0x10] sm:$0xff] %v4694
          %4705 = vst [vmem:[#allocation30 + $0x18] sm:$0xff] %v4696
          %4706 = vst [vmem:[#allocation30 + $0x20] sm:$0xff] %v4655
          %4707 = vst [vmem:[#allocation30 + $0x28] sm:$0xff] %v4657
          %4708 = vst [vmem:[#allocation30 + $0x30] sm:$0xff] %v4698
          %4709 = vst [vmem:[#allocation30 + $0x38] sm:$0xff] %v4700
        $region192: #{transformer_forward.3} parent=115 // pred_fallthru
          _
        // Predicated region
        $region193: #{transformer_forward.3} parent=115 // pred_check
          %p4710 = pneg %p678
        $region194: #{transformer_forward.3} parent=115 // pred_check_branch
          %4712 = sbr.rel (%p4710) target = $region196
        $region195: #{transformer_forward.3} parent=115 // pred_region
          %s4714 = ssub.s32 1024, 1024
          %4715 = vsyncadd [#allocation5], %s4714
          %s4716 = sshll.u32 [#allocation30], 4
          %s4717 = int_to_ptr.vmem [resolvable:$true] %s4716
          %4722 = dma.vmem_to_hbm [thread:$0]  %s4717, 1024, %s24, [#allocation5], 512, 512, 32
        $region196: #{transformer_forward.3} parent=115 // pred_fallthru
          _
        // Predicated region
        $region197: #{transformer_forward.3} parent=115 // pred_check
          %p4723 = pneg %p678
        $region198: #{transformer_forward.3} parent=115 // pred_check_branch
          %4725 = sbr.rel (%p4723) target = $region200
        $region199: #{transformer_forward.3} parent=115 // pred_region
          %4726 = dma.done [#allocation5], 1024
        $region200: #{transformer_forward.3} parent=115 // pred_fallthru
          _
      $region116: #{transformer_forward.3} parent=5 // pred_fallthru
        _
      %p4727 = scmp.le.s32.totalorder 2, %s56
      // Predicated region
      $region201: #{transformer_forward.3} parent=5 // pred_check
        %p4728 = pneg %p4727
      $region202: #{transformer_forward.3} parent=5 // pred_check_branch
        %4730 = sbr.rel (%p4728) target = $region204
      $region203: #{transformer_forward.3} parent=5 // pred_region
        %s4731 = ssub.s32 %s56, 2
      $region204: #{transformer_forward.3} parent=5 // pred_fallthru
        _
    $region6: #{transformer_forward.3} parent=1 // loop_footer
      %s60 = sadd.s32 1, %s56
    $region7: #{transformer_forward.3} parent=1 // loop_footer_branch
      %55 = sbr.rel target = $region3
    $region8: #{transformer_forward.3} parent=1 // loop_exit
      _
    %4732 = vsyncpa [#allocation4], 1
    %s4733 = scalar_lea.sflag [#allocation4], 1
    %4734 = vsyncpa %s4733, 1
    %4735 = vsyncpa [#allocation7], 1
    %s4736 = scalar_lea.sflag [#allocation7], 1
    %4737 = vsyncpa %s4736, 1
    %4738 = vsyncpa [#allocation10], 1
    %s4739 = scalar_lea.sflag [#allocation10], 1
    %4740 = vsyncpa %s4739, 1
    %4741 = vsyncpa [#allocation13], 1
    %s4742 = scalar_lea.sflag [#allocation13], 1
    %4743 = vsyncpa %s4742, 1
    %4744 = vsyncpa [#allocation16], 1
    %s4745 = scalar_lea.sflag [#allocation16], 1
    %4746 = vsyncpa %s4745, 1
    %4747 = vsyncpa [#allocation19], 1
    %s4748 = scalar_lea.sflag [#allocation19], 1
    %4749 = vsyncpa %s4748, 1
    %4750 = vsyncpa [#allocation22], 1
    %s4751 = scalar_lea.sflag [#allocation22], 1
    %4752 = vsyncpa %s4751, 1
    %4753 = vsyncpa [#allocation25], 1
    %s4754 = scalar_lea.sflag [#allocation25], 1
    %4755 = vsyncpa %s4754, 1
    %4756 = vsyncpa [#allocation28], 1
    %4757 = vsyncpa [#allocation5], 1
    %s4758 = scalar_lea.sflag [#allocation5], 1
    %4759 = vsyncpa %s4758, 1

</llo_original>
